<compile_context>
chip_gen: v7x
topology: tpu7x:2x2x1
jax: 0.10.0
libtpu: 0.0.40
codegen_flags: <defaults>
</compile_context>

<pallas_src>
import functools

import jax
import jax.numpy as jnp
import numpy as np
from jax.experimental import pallas as pl
from jax.experimental.pallas import tpu as pltpu


# -----------------------------------------------------------------------------
# Fused kernel: 1x1 qkv conv + 3x3 depthwise conv + channel attention + 1x1
# project_out.  grid = (B,), channel-first, HW on the 128-lane axis.
# -----------------------------------------------------------------------------
def _attention_kernel(x_ref, wq_ref, bq_ref, s_ref, wd_ref, bd_ref,
                      wp_ref, bp_ref, trow_ref, bdm_ref, o_ref, qkv_s,
                      *, H, W, dim, num_heads):
    HW = H * W
    C3 = 3 * dim
    cg = dim                        # channel chunk size: bounds vreg live ranges

    x = x_ref[0]                    # (C, HW)   bf16
    wd = wd_ref[...]                # (C3, 16)  f32 (cols 0..8 = depthwise taps)

    # ---- fused 1x1 qkv conv + 3x3 depthwise conv, chunked over channels ----
    for c0 in range(0, C3, cg):
        wq_c = wq_ref[c0:c0 + cg, :]                               # (cg, C) bf16
        z = jnp.dot(wq_c, x, preferred_element_type=jnp.float32)
        z = z + bq_ref[c0:c0 + cg, :]                              # (cg, HW) f32
        zb = z.astype(jnp.bfloat16)

        acc = jnp.zeros((cg, HW), jnp.float32)
        for t in range(9):
            # s_ref[t] is the (HW, HW) 0/1 shift+boundary-mask matrix for tap t:
            # (zb @ S_t)[c, n] == z[c, n + d_t] for in-bounds taps, 0 otherwise.
            shifted = jnp.dot(zb, s_ref[t],
                              preferred_element_type=jnp.float32)  # MXU
            acc = acc + shifted * wd[c0:c0 + cg, t:t + 1]
        qkv_s[c0:c0 + cg, :] = acc + bd_ref[c0:c0 + cg, :]

    # ---- channel attention: all heads as one block-diagonal softmax ----
    q = qkv_s[0:dim, :]
    k = qkv_s[dim:2 * dim, :]
    v = qkv_s[2 * dim:3 * dim, :]

    # torch.nn.functional.normalize: x / max(||x||, 1e-12)
    inv_q = jax.lax.rsqrt(jnp.maximum(jnp.sum(q * q, axis=-1, keepdims=True),
                                      1e-24))
    inv_k = jax.lax.rsqrt(jnp.maximum(jnp.sum(k * k, axis=-1, keepdims=True),
                                      1e-24))
    qn = (q * inv_q).astype(jnp.bfloat16)
    kn = (k * inv_k).astype(jnp.bfloat16)

    s = jax.lax.dot_general(qn, kn, (((1,), (1,)), ((), ())),
                            preferred_element_type=jnp.float32)    # (dim, dim)
    # per-row temperature + additive -1e30 off-block mask (block-diagonal heads)
    logits = s * trow_ref[...] + bdm_ref[...]
    m = jnp.max(logits, axis=-1, keepdims=True)
    e = jnp.exp(logits - m)
    p = e * pl.reciprocal(jnp.sum(e, axis=-1, keepdims=True), approx=True)

    out_h = jnp.dot(p.astype(jnp.bfloat16), v.astype(jnp.bfloat16),
                    preferred_element_type=jnp.float32)            # (dim, HW)

    proj = jnp.dot(wp_ref[...], out_h.astype(jnp.bfloat16),
                   preferred_element_type=jnp.float32) + bp_ref[...]
    o_ref[...] = proj[None]


# -----------------------------------------------------------------------------
# Host wrapper: free reshapes, bf16 pre-casts and precomputed constants only.
# -----------------------------------------------------------------------------
def attention_forward(x, w_qkv, b_qkv, w_dw, b_dw, w_proj, b_proj, temperature,
                      num_heads):
    B, C, H, W = x.shape
    HW = H * W
    C3 = 3 * C
    ch = C // num_heads
    assert C % num_heads == 0 and C % 8 == 0 and HW % 128 == 0

    x3 = x.reshape(B, C, HW).astype(jnp.bfloat16)
    wq = w_qkv.reshape(C3, C).astype(jnp.bfloat16)
    bq = b_qkv.reshape(C3, 1).astype(jnp.float32)
    wd = jnp.pad(w_dw.reshape(C3, 9), ((0, 0), (0, 7))).astype(jnp.float32)
    bd = b_dw.reshape(C3, 1).astype(jnp.float32)
    wp = w_proj.reshape(C, C).astype(jnp.bfloat16)
    bp = b_proj.reshape(C, 1).astype(jnp.float32)

    # Per-row temperature and block-diagonal (per-head) additive mask.
    head_id = np.arange(C) // ch
    trow = jnp.asarray(np.asarray(temperature).reshape(num_heads)[head_id]
                       .reshape(C, 1), jnp.float32)
    bdm = jnp.asarray(np.where(head_id[:, None] == head_id[None, :],
                               0.0, -1e30), jnp.float32)

    # Shift + boundary-mask matrices for the 3x3 depthwise conv (zero-pad 1):
    # S[t, m, n] = 1  iff  m == n + d_t  and the tap is in-bounds at pixel n.
    n = np.arange(HW)
    h_idx, w_idx = n // W, n % W
    S = np.zeros((9, HW, HW), np.float32)
    for t in range(9):
        i, j = t // 3, t % 3
        d = (i - 1) * W + (j - 1)
        valid = ((h_idx + i - 1 >= 0) & (h_idx + i - 1 < H) &
                 (w_idx + j - 1 >= 0) & (w_idx + j - 1 < W))
        nv = n[valid]
        S[t, nv + d, nv] = 1.0
    S = jnp.asarray(S, jnp.bfloat16)                               # exact 0/1

    kernel = functools.partial(_attention_kernel, H=H, W=W, dim=C,
                               num_heads=num_heads)
    out = pl.pallas_call(
        kernel,
        out_shape=jax.ShapeDtypeStruct((B, C, HW), jnp.float32),
        grid=(B,),
        in_specs=[
            pl.BlockSpec((1, C, HW), lambda b: (b, 0, 0)),     # x
            pl.BlockSpec((C3, C), lambda b: (0, 0)),           # wq
            pl.BlockSpec((C3, 1), lambda b: (0, 0)),           # bq
            pl.BlockSpec((9, HW, HW), lambda b: (0, 0, 0)),    # shift matrices
            pl.BlockSpec((C3, 16), lambda b: (0, 0)),          # dw taps (lane-dense)
            pl.BlockSpec((C3, 1), lambda b: (0, 0)),           # bd
            pl.BlockSpec((C, C), lambda b: (0, 0)),            # wp
            pl.BlockSpec((C, 1), lambda b: (0, 0)),            # bp
            pl.BlockSpec((C, 1), lambda b: (0, 0)),            # temperature rows
            pl.BlockSpec((C, C), lambda b: (0, 0)),            # block-diag mask
        ],
        out_specs=pl.BlockSpec((1, C, HW), lambda b: (b, 0, 0)),
        scratch_shapes=[pltpu.VMEM((C3, HW), jnp.float32)],        # qkv stays in VMEM
        compiler_params=pltpu.CompilerParams(
            dimension_semantics=("parallel",)),
    )(x3, wq, bq, S, wd, bd, wp, bp, trow, bdm)
    # TODO(synk): for real Restormer shapes (HW up to 64K) the (3C, HW) block
    # needs an HW reduction grid axis; fine at this problem size on v5e/v6e/v7x.
    return out.reshape(B, C, H, W)


# -----------------------------------------------------------------------------
# Pure-JAX f32 reference for correctness checking
# -----------------------------------------------------------------------------
def reference_forward(x, w_qkv, b_qkv, w_dw, b_dw, w_proj, b_proj, temperature,
                      num_heads):
    B, C, H, W = x.shape
    dn = ('NCHW', 'OIHW', 'NCHW')
    qkv = jax.lax.conv_general_dilated(x, w_qkv, (1, 1), 'VALID',
                                       dimension_numbers=dn)
    qkv = qkv + b_qkv[None, :, None, None]
    qkv = jax.lax.conv_general_dilated(qkv, w_dw, (1, 1), ((1, 1), (1, 1)),
                                       dimension_numbers=dn,
                                       feature_group_count=3 * C)
    qkv = qkv + b_dw[None, :, None, None]
    q, k, v = jnp.split(qkv, 3, axis=1)
    ch = C // num_heads
    q = q.reshape(B, num_heads, ch, H * W)
    k = k.reshape(B, num_heads, ch, H * W)
    v = v.reshape(B, num_heads, ch, H * W)
    qn = q / jnp.maximum(jnp.linalg.norm(q, axis=-1, keepdims=True), 1e-12)
    kn = k / jnp.maximum(jnp.linalg.norm(k, axis=-1, keepdims=True), 1e-12)
    attn = jnp.einsum('bhcd,bhed->bhce', qn, kn) * temperature[None]
    attn = jax.nn.softmax(attn, axis=-1)
    out = jnp.einsum('bhce,bhed->bhcd', attn, v)
    out = out.reshape(B, C, H, W)
    out = jax.lax.conv_general_dilated(out, w_proj, (1, 1), 'VALID',
                                       dimension_numbers=dn)
    return out + b_proj[None, :, None, None]


if __name__ == "__main__":
    B, dim, H, W = 2, 32, 16, 16
    num_heads = 4

    key = jax.random.PRNGKey(0)
    ks = jax.random.split(key, 7)
    x = jax.random.normal(ks[0], (B, dim, H, W), jnp.float32)

    # Synthetic parameters (shapes from Attention.__init__, bias=True)
    w_qkv = jax.random.normal(ks[1], (3 * dim, dim, 1, 1), jnp.float32) * 0.1
    b_qkv = jax.random.normal(ks[2], (3 * dim,), jnp.float32) * 0.1
    w_dw = jax.random.normal(ks[3], (3 * dim, 1, 3, 3), jnp.float32) * 0.1
    b_dw = jax.random.normal(ks[4], (3 * dim,), jnp.float32) * 0.1
    w_proj = jax.random.normal(ks[5], (dim, dim, 1, 1), jnp.float32) * 0.1
    b_proj = jax.random.normal(ks[6], (dim,), jnp.float32) * 0.1
    temperature = jnp.ones((num_heads, 1, 1), jnp.float32)

    out = attention_forward(x, w_qkv, b_qkv, w_dw, b_dw, w_proj, b_proj,
                            temperature, num_heads)
    out = jax.block_until_ready(out)

    ref = reference_forward(x, w_qkv, b_qkv, w_dw, b_dw, w_proj, b_proj,
                            temperature, num_heads)
    assert out.shape == (B, dim, H, W)
    max_err = float(jnp.max(jnp.abs(out - ref)))
    # bf16 MXU operands -> relaxed tolerance vs. the pure-f32 reference.
    assert jnp.allclose(out, ref, atol=2e-2, rtol=2e-2), \
        f"mismatch vs reference (max abs err {max_err})"
    print("KERNEL_OK")
</pallas_src>

<mosaic_0001>
module attributes {stable_mosaic.version = 11 : i64} {
  func.func @_attention_kernel(%arg0: i32, %arg1: memref<1x32x256xbf16, #tpu.memory_space<vmem>>, %arg2: memref<96x32xbf16, #tpu.memory_space<vmem>>, %arg3: memref<96x1xf32, #tpu.memory_space<vmem>>, %arg4: memref<9x256x256xbf16, #tpu.memory_space<vmem>>, %arg5: memref<96x16xf32, #tpu.memory_space<vmem>>, %arg6: memref<96x1xf32, #tpu.memory_space<vmem>>, %arg7: memref<32x32xbf16, #tpu.memory_space<vmem>>, %arg8: memref<32x1xf32, #tpu.memory_space<vmem>>, %arg9: memref<32x1xf32, #tpu.memory_space<vmem>>, %arg10: memref<32x32xf32, #tpu.memory_space<vmem>>, %arg11: memref<1x32x256xf32, #tpu.memory_space<vmem>>, %arg12: memref<96x256xf32, #tpu.memory_space<vmem>>) attributes {dimension_semantics = [#tpu.dimension_semantics<parallel>], iteration_bounds = array<i64: 2>, scalar_prefetch = 0 : i64, scratch_operands = 1 : i64, tpu.core_type = #tpu.core_type<tc>, window_params = [{transform_indices = @transform_0, window_bounds = array<i64: 1, 32, 256>}, {pipeline_mode = #tpu.pipeline_mode<synchronous>, transform_indices = @transform_1, window_bounds = array<i64: 96, 32>}, {pipeline_mode = #tpu.pipeline_mode<synchronous>, transform_indices = @transform_2, window_bounds = array<i64: 96, 1>}, {pipeline_mode = #tpu.pipeline_mode<synchronous>, transform_indices = @transform_3, window_bounds = array<i64: 9, 256, 256>}, {pipeline_mode = #tpu.pipeline_mode<synchronous>, transform_indices = @transform_4, window_bounds = array<i64: 96, 16>}, {pipeline_mode = #tpu.pipeline_mode<synchronous>, transform_indices = @transform_5, window_bounds = array<i64: 96, 1>}, {pipeline_mode = #tpu.pipeline_mode<synchronous>, transform_indices = @transform_6, window_bounds = array<i64: 32, 32>}, {pipeline_mode = #tpu.pipeline_mode<synchronous>, transform_indices = @transform_7, window_bounds = array<i64: 32, 1>}, {pipeline_mode = #tpu.pipeline_mode<synchronous>, transform_indices = @transform_8, window_bounds = array<i64: 32, 1>}, {pipeline_mode = #tpu.pipeline_mode<synchronous>, transform_indices = @transform_9, window_bounds = array<i64: 32, 32>}, {transform_indices = @transform_10, window_bounds = array<i64: 1, 32, 256>}]} {
    %c0 = arith.constant 0 : index
    %c0_0 = arith.constant 0 : index
    %c0_1 = arith.constant 0 : index
    %0 = vector.load %arg1[%c0, %c0_0, %c0_1] : memref<1x32x256xbf16, #tpu.memory_space<vmem>>, vector<1x32x256xbf16>
    %1 = vector.shape_cast %0 : vector<1x32x256xbf16> to vector<32x256xbf16>
    %c0_2 = arith.constant 0 : index
    %c0_3 = arith.constant 0 : index
    %2 = vector.load %arg5[%c0_2, %c0_3] : memref<96x16xf32, #tpu.memory_space<vmem>>, vector<96x16xf32>
    %c0_4 = arith.constant 0 : index
    %c0_5 = arith.constant 0 : index
    %3 = vector.load %arg2[%c0_4, %c0_5] : memref<96x32xbf16, #tpu.memory_space<vmem>>, vector<32x32xbf16>
    %cst = arith.constant dense<0.000000e+00> : vector<32x256xf32>
    %4 = tpu.matmul %3, %1, %cst {dimension_numbers = #tpu.dot_dimension_numbers<[1], [0], [0], [1], [0, 0, 1, 1], [], []>} : vector<32x32xbf16>, vector<32x256xbf16>, vector<32x256xf32> -> vector<32x256xf32>
    %c0_6 = arith.constant 0 : index
    %c0_7 = arith.constant 0 : index
    %5 = vector.load %arg3[%c0_6, %c0_7] : memref<96x1xf32, #tpu.memory_space<vmem>>, vector<32x1xf32>
    %6 = vector.broadcast %5 : vector<32x1xf32> to vector<32x256xf32>
    %7 = arith.addf %4, %6 : vector<32x256xf32>
    %8 = arith.truncf %7 : vector<32x256xf32> to vector<32x256xbf16>
    %cst_8 = arith.constant 0.000000e+00 : f32
    %9 = vector.broadcast %cst_8 : f32 to vector<32x256xf32>
    %c0_9 = arith.constant 0 : index
    %c0_10 = arith.constant 0 : index
    %c0_11 = arith.constant 0 : index
    %10 = vector.load %arg4[%c0_9, %c0_10, %c0_11] : memref<9x256x256xbf16, #tpu.memory_space<vmem>>, vector<1x256x256xbf16>
    %11 = vector.shape_cast %10 : vector<1x256x256xbf16> to vector<256x256xbf16>
    %cst_12 = arith.constant dense<0.000000e+00> : vector<32x256xf32>
    %12 = tpu.matmul %8, %11, %cst_12 {dimension_numbers = #tpu.dot_dimension_numbers<[1], [0], [0], [1], [0, 0, 1, 1], [], []>} : vector<32x256xbf16>, vector<256x256xbf16>, vector<32x256xf32> -> vector<32x256xf32>
    %13 = vector.extract_strided_slice %2 {offsets = [0, 0], sizes = [32, 1], strides = [1, 1]} : vector<96x16xf32> to vector<32x1xf32>
    %14 = vector.broadcast %13 : vector<32x1xf32> to vector<32x256xf32>
    %15 = arith.mulf %12, %14 : vector<32x256xf32>
    %16 = arith.addf %9, %15 : vector<32x256xf32>
    %c1 = arith.constant 1 : index
    %c0_13 = arith.constant 0 : index
    %c0_14 = arith.constant 0 : index
    %17 = vector.load %arg4[%c1, %c0_13, %c0_14] : memref<9x256x256xbf16, #tpu.memory_space<vmem>>, vector<1x256x256xbf16>
    %18 = vector.shape_cast %17 : vector<1x256x256xbf16> to vector<256x256xbf16>
    %cst_15 = arith.constant dense<0.000000e+00> : vector<32x256xf32>
    %19 = tpu.matmul %8, %18, %cst_15 {dimension_numbers = #tpu.dot_dimension_numbers<[1], [0], [0], [1], [0, 0, 1, 1], [], []>} : vector<32x256xbf16>, vector<256x256xbf16>, vector<32x256xf32> -> vector<32x256xf32>
    %20 = vector.extract_strided_slice %2 {offsets = [0, 1], sizes = [32, 1], strides = [1, 1]} : vector<96x16xf32> to vector<32x1xf32>
    %21 = vector.broadcast %20 : vector<32x1xf32> to vector<32x256xf32>
    %22 = arith.mulf %19, %21 : vector<32x256xf32>
    %23 = arith.addf %16, %22 : vector<32x256xf32>
    %c2 = arith.constant 2 : index
    %c0_16 = arith.constant 0 : index
    %c0_17 = arith.constant 0 : index
    %24 = vector.load %arg4[%c2, %c0_16, %c0_17] : memref<9x256x256xbf16, #tpu.memory_space<vmem>>, vector<1x256x256xbf16>
    %25 = vector.shape_cast %24 : vector<1x256x256xbf16> to vector<256x256xbf16>
    %cst_18 = arith.constant dense<0.000000e+00> : vector<32x256xf32>
    %26 = tpu.matmul %8, %25, %cst_18 {dimension_numbers = #tpu.dot_dimension_numbers<[1], [0], [0], [1], [0, 0, 1, 1], [], []>} : vector<32x256xbf16>, vector<256x256xbf16>, vector<32x256xf32> -> vector<32x256xf32>
    %27 = vector.extract_strided_slice %2 {offsets = [0, 2], sizes = [32, 1], strides = [1, 1]} : vector<96x16xf32> to vector<32x1xf32>
    %28 = vector.broadcast %27 : vector<32x1xf32> to vector<32x256xf32>
    %29 = arith.mulf %26, %28 : vector<32x256xf32>
    %30 = arith.addf %23, %29 : vector<32x256xf32>
    %c3 = arith.constant 3 : index
    %c0_19 = arith.constant 0 : index
    %c0_20 = arith.constant 0 : index
    %31 = vector.load %arg4[%c3, %c0_19, %c0_20] : memref<9x256x256xbf16, #tpu.memory_space<vmem>>, vector<1x256x256xbf16>
    %32 = vector.shape_cast %31 : vector<1x256x256xbf16> to vector<256x256xbf16>
    %cst_21 = arith.constant dense<0.000000e+00> : vector<32x256xf32>
    %33 = tpu.matmul %8, %32, %cst_21 {dimension_numbers = #tpu.dot_dimension_numbers<[1], [0], [0], [1], [0, 0, 1, 1], [], []>} : vector<32x256xbf16>, vector<256x256xbf16>, vector<32x256xf32> -> vector<32x256xf32>
    %34 = vector.extract_strided_slice %2 {offsets = [0, 3], sizes = [32, 1], strides = [1, 1]} : vector<96x16xf32> to vector<32x1xf32>
    %35 = vector.broadcast %34 : vector<32x1xf32> to vector<32x256xf32>
    %36 = arith.mulf %33, %35 : vector<32x256xf32>
    %37 = arith.addf %30, %36 : vector<32x256xf32>
    %c4 = arith.constant 4 : index
    %c0_22 = arith.constant 0 : index
    %c0_23 = arith.constant 0 : index
    %38 = vector.load %arg4[%c4, %c0_22, %c0_23] : memref<9x256x256xbf16, #tpu.memory_space<vmem>>, vector<1x256x256xbf16>
    %39 = vector.shape_cast %38 : vector<1x256x256xbf16> to vector<256x256xbf16>
    %cst_24 = arith.constant dense<0.000000e+00> : vector<32x256xf32>
    %40 = tpu.matmul %8, %39, %cst_24 {dimension_numbers = #tpu.dot_dimension_numbers<[1], [0], [0], [1], [0, 0, 1, 1], [], []>} : vector<32x256xbf16>, vector<256x256xbf16>, vector<32x256xf32> -> vector<32x256xf32>
    %41 = vector.extract_strided_slice %2 {offsets = [0, 4], sizes = [32, 1], strides = [1, 1]} : vector<96x16xf32> to vector<32x1xf32>
    %42 = vector.broadcast %41 : vector<32x1xf32> to vector<32x256xf32>
    %43 = arith.mulf %40, %42 : vector<32x256xf32>
    %44 = arith.addf %37, %43 : vector<32x256xf32>
    %c5 = arith.constant 5 : index
    %c0_25 = arith.constant 0 : index
    %c0_26 = arith.constant 0 : index
    %45 = vector.load %arg4[%c5, %c0_25, %c0_26] : memref<9x256x256xbf16, #tpu.memory_space<vmem>>, vector<1x256x256xbf16>
    %46 = vector.shape_cast %45 : vector<1x256x256xbf16> to vector<256x256xbf16>
    %cst_27 = arith.constant dense<0.000000e+00> : vector<32x256xf32>
    %47 = tpu.matmul %8, %46, %cst_27 {dimension_numbers = #tpu.dot_dimension_numbers<[1], [0], [0], [1], [0, 0, 1, 1], [], []>} : vector<32x256xbf16>, vector<256x256xbf16>, vector<32x256xf32> -> vector<32x256xf32>
    %48 = vector.extract_strided_slice %2 {offsets = [0, 5], sizes = [32, 1], strides = [1, 1]} : vector<96x16xf32> to vector<32x1xf32>
    %49 = vector.broadcast %48 : vector<32x1xf32> to vector<32x256xf32>
    %50 = arith.mulf %47, %49 : vector<32x256xf32>
    %51 = arith.addf %44, %50 : vector<32x256xf32>
    %c6 = arith.constant 6 : index
    %c0_28 = arith.constant 0 : index
    %c0_29 = arith.constant 0 : index
    %52 = vector.load %arg4[%c6, %c0_28, %c0_29] : memref<9x256x256xbf16, #tpu.memory_space<vmem>>, vector<1x256x256xbf16>
    %53 = vector.shape_cast %52 : vector<1x256x256xbf16> to vector<256x256xbf16>
    %cst_30 = arith.constant dense<0.000000e+00> : vector<32x256xf32>
    %54 = tpu.matmul %8, %53, %cst_30 {dimension_numbers = #tpu.dot_dimension_numbers<[1], [0], [0], [1], [0, 0, 1, 1], [], []>} : vector<32x256xbf16>, vector<256x256xbf16>, vector<32x256xf32> -> vector<32x256xf32>
    %55 = vector.extract_strided_slice %2 {offsets = [0, 6], sizes = [32, 1], strides = [1, 1]} : vector<96x16xf32> to vector<32x1xf32>
    %56 = vector.broadcast %55 : vector<32x1xf32> to vector<32x256xf32>
    %57 = arith.mulf %54, %56 : vector<32x256xf32>
    %58 = arith.addf %51, %57 : vector<32x256xf32>
    %c7 = arith.constant 7 : index
    %c0_31 = arith.constant 0 : index
    %c0_32 = arith.constant 0 : index
    %59 = vector.load %arg4[%c7, %c0_31, %c0_32] : memref<9x256x256xbf16, #tpu.memory_space<vmem>>, vector<1x256x256xbf16>
    %60 = vector.shape_cast %59 : vector<1x256x256xbf16> to vector<256x256xbf16>
    %cst_33 = arith.constant dense<0.000000e+00> : vector<32x256xf32>
    %61 = tpu.matmul %8, %60, %cst_33 {dimension_numbers = #tpu.dot_dimension_numbers<[1], [0], [0], [1], [0, 0, 1, 1], [], []>} : vector<32x256xbf16>, vector<256x256xbf16>, vector<32x256xf32> -> vector<32x256xf32>
    %62 = vector.extract_strided_slice %2 {offsets = [0, 7], sizes = [32, 1], strides = [1, 1]} : vector<96x16xf32> to vector<32x1xf32>
    %63 = vector.broadcast %62 : vector<32x1xf32> to vector<32x256xf32>
    %64 = arith.mulf %61, %63 : vector<32x256xf32>
    %65 = arith.addf %58, %64 : vector<32x256xf32>
    %c8 = arith.constant 8 : index
    %c0_34 = arith.constant 0 : index
    %c0_35 = arith.constant 0 : index
    %66 = vector.load %arg4[%c8, %c0_34, %c0_35] : memref<9x256x256xbf16, #tpu.memory_space<vmem>>, vector<1x256x256xbf16>
    %67 = vector.shape_cast %66 : vector<1x256x256xbf16> to vector<256x256xbf16>
    %cst_36 = arith.constant dense<0.000000e+00> : vector<32x256xf32>
    %68 = tpu.matmul %8, %67, %cst_36 {dimension_numbers = #tpu.dot_dimension_numbers<[1], [0], [0], [1], [0, 0, 1, 1], [], []>} : vector<32x256xbf16>, vector<256x256xbf16>, vector<32x256xf32> -> vector<32x256xf32>
    %69 = vector.extract_strided_slice %2 {offsets = [0, 8], sizes = [32, 1], strides = [1, 1]} : vector<96x16xf32> to vector<32x1xf32>
    %70 = vector.broadcast %69 : vector<32x1xf32> to vector<32x256xf32>
    %71 = arith.mulf %68, %70 : vector<32x256xf32>
    %72 = arith.addf %65, %71 : vector<32x256xf32>
    %c0_37 = arith.constant 0 : index
    %c0_38 = arith.constant 0 : index
    %73 = vector.load %arg6[%c0_37, %c0_38] : memref<96x1xf32, #tpu.memory_space<vmem>>, vector<32x1xf32>
    %74 = vector.broadcast %73 : vector<32x1xf32> to vector<32x256xf32>
    %75 = arith.addf %72, %74 : vector<32x256xf32>
    %c0_39 = arith.constant 0 : index
    %c0_40 = arith.constant 0 : index
    %76 = vector.load %arg12[%c0_39, %c0_40] : memref<96x256xf32, #tpu.memory_space<vmem>>, vector<32x256xf32>
    tpu.vector_store %arg12[%c0_39, %c0_40], %75 {strides = array<i32>} : memref<96x256xf32, #tpu.memory_space<vmem>>, vector<32x256xf32>,
    %c32 = arith.constant 32 : index
    %c0_41 = arith.constant 0 : index
    %77 = vector.load %arg2[%c32, %c0_41] : memref<96x32xbf16, #tpu.memory_space<vmem>>, vector<32x32xbf16>
    %cst_42 = arith.constant dense<0.000000e+00> : vector<32x256xf32>
    %78 = tpu.matmul %77, %1, %cst_42 {dimension_numbers = #tpu.dot_dimension_numbers<[1], [0], [0], [1], [0, 0, 1, 1], [], []>} : vector<32x32xbf16>, vector<32x256xbf16>, vector<32x256xf32> -> vector<32x256xf32>
    %c32_43 = arith.constant 32 : index
    %c0_44 = arith.constant 0 : index
    %79 = vector.load %arg3[%c32_43, %c0_44] : memref<96x1xf32, #tpu.memory_space<vmem>>, vector<32x1xf32>
    %80 = vector.broadcast %79 : vector<32x1xf32> to vector<32x256xf32>
    %81 = arith.addf %78, %80 : vector<32x256xf32>
    %82 = arith.truncf %81 : vector<32x256xf32> to vector<32x256xbf16>
    %cst_45 = arith.constant 0.000000e+00 : f32
    %83 = vector.broadcast %cst_45 : f32 to vector<32x256xf32>
    %c0_46 = arith.constant 0 : index
    %c0_47 = arith.constant 0 : index
    %c0_48 = arith.constant 0 : index
    %84 = vector.load %arg4[%c0_46, %c0_47, %c0_48] : memref<9x256x256xbf16, #tpu.memory_space<vmem>>, vector<1x256x256xbf16>
    %85 = vector.shape_cast %84 : vector<1x256x256xbf16> to vector<256x256xbf16>
    %cst_49 = arith.constant dense<0.000000e+00> : vector<32x256xf32>
    %86 = tpu.matmul %82, %85, %cst_49 {dimension_numbers = #tpu.dot_dimension_numbers<[1], [0], [0], [1], [0, 0, 1, 1], [], []>} : vector<32x256xbf16>, vector<256x256xbf16>, vector<32x256xf32> -> vector<32x256xf32>
    %87 = vector.extract_strided_slice %2 {offsets = [32, 0], sizes = [32, 1], strides = [1, 1]} : vector<96x16xf32> to vector<32x1xf32>
    %88 = vector.broadcast %87 : vector<32x1xf32> to vector<32x256xf32>
    %89 = arith.mulf %86, %88 : vector<32x256xf32>
    %90 = arith.addf %83, %89 : vector<32x256xf32>
    %c1_50 = arith.constant 1 : index
    %c0_51 = arith.constant 0 : index
    %c0_52 = arith.constant 0 : index
    %91 = vector.load %arg4[%c1_50, %c0_51, %c0_52] : memref<9x256x256xbf16, #tpu.memory_space<vmem>>, vector<1x256x256xbf16>
    %92 = vector.shape_cast %91 : vector<1x256x256xbf16> to vector<256x256xbf16>
    %cst_53 = arith.constant dense<0.000000e+00> : vector<32x256xf32>
    %93 = tpu.matmul %82, %92, %cst_53 {dimension_numbers = #tpu.dot_dimension_numbers<[1], [0], [0], [1], [0, 0, 1, 1], [], []>} : vector<32x256xbf16>, vector<256x256xbf16>, vector<32x256xf32> -> vector<32x256xf32>
    %94 = vector.extract_strided_slice %2 {offsets = [32, 1], sizes = [32, 1], strides = [1, 1]} : vector<96x16xf32> to vector<32x1xf32>
    %95 = vector.broadcast %94 : vector<32x1xf32> to vector<32x256xf32>
    %96 = arith.mulf %93, %95 : vector<32x256xf32>
    %97 = arith.addf %90, %96 : vector<32x256xf32>
    %c2_54 = arith.constant 2 : index
    %c0_55 = arith.constant 0 : index
    %c0_56 = arith.constant 0 : index
    %98 = vector.load %arg4[%c2_54, %c0_55, %c0_56] : memref<9x256x256xbf16, #tpu.memory_space<vmem>>, vector<1x256x256xbf16>
    %99 = vector.shape_cast %98 : vector<1x256x256xbf16> to vector<256x256xbf16>
    %cst_57 = arith.constant dense<0.000000e+00> : vector<32x256xf32>
    %100 = tpu.matmul %82, %99, %cst_57 {dimension_numbers = #tpu.dot_dimension_numbers<[1], [0], [0], [1], [0, 0, 1, 1], [], []>} : vector<32x256xbf16>, vector<256x256xbf16>, vector<32x256xf32> -> vector<32x256xf32>
    %101 = vector.extract_strided_slice %2 {offsets = [32, 2], sizes = [32, 1], strides = [1, 1]} : vector<96x16xf32> to vector<32x1xf32>
    %102 = vector.broadcast %101 : vector<32x1xf32> to vector<32x256xf32>
    %103 = arith.mulf %100, %102 : vector<32x256xf32>
    %104 = arith.addf %97, %103 : vector<32x256xf32>
    %c3_58 = arith.constant 3 : index
    %c0_59 = arith.constant 0 : index
    %c0_60 = arith.constant 0 : index
    %105 = vector.load %arg4[%c3_58, %c0_59, %c0_60] : memref<9x256x256xbf16, #tpu.memory_space<vmem>>, vector<1x256x256xbf16>
    %106 = vector.shape_cast %105 : vector<1x256x256xbf16> to vector<256x256xbf16>
    %cst_61 = arith.constant dense<0.000000e+00> : vector<32x256xf32>
    %107 = tpu.matmul %82, %106, %cst_61 {dimension_numbers = #tpu.dot_dimension_numbers<[1], [0], [0], [1], [0, 0, 1, 1], [], []>} : vector<32x256xbf16>, vector<256x256xbf16>, vector<32x256xf32> -> vector<32x256xf32>
    %108 = vector.extract_strided_slice %2 {offsets = [32, 3], sizes = [32, 1], strides = [1, 1]} : vector<96x16xf32> to vector<32x1xf32>
    %109 = vector.broadcast %108 : vector<32x1xf32> to vector<32x256xf32>
    %110 = arith.mulf %107, %109 : vector<32x256xf32>
    %111 = arith.addf %104, %110 : vector<32x256xf32>
    %c4_62 = arith.constant 4 : index
    %c0_63 = arith.constant 0 : index
    %c0_64 = arith.constant 0 : index
    %112 = vector.load %arg4[%c4_62, %c0_63, %c0_64] : memref<9x256x256xbf16, #tpu.memory_space<vmem>>, vector<1x256x256xbf16>
    %113 = vector.shape_cast %112 : vector<1x256x256xbf16> to vector<256x256xbf16>
    %cst_65 = arith.constant dense<0.000000e+00> : vector<32x256xf32>
    %114 = tpu.matmul %82, %113, %cst_65 {dimension_numbers = #tpu.dot_dimension_numbers<[1], [0], [0], [1], [0, 0, 1, 1], [], []>} : vector<32x256xbf16>, vector<256x256xbf16>, vector<32x256xf32> -> vector<32x256xf32>
    %115 = vector.extract_strided_slice %2 {offsets = [32, 4], sizes = [32, 1], strides = [1, 1]} : vector<96x16xf32> to vector<32x1xf32>
    %116 = vector.broadcast %115 : vector<32x1xf32> to vector<32x256xf32>
    %117 = arith.mulf %114, %116 : vector<32x256xf32>
    %118 = arith.addf %111, %117 : vector<32x256xf32>
    %c5_66 = arith.constant 5 : index
    %c0_67 = arith.constant 0 : index
    %c0_68 = arith.constant 0 : index
    %119 = vector.load %arg4[%c5_66, %c0_67, %c0_68] : memref<9x256x256xbf16, #tpu.memory_space<vmem>>, vector<1x256x256xbf16>
    %120 = vector.shape_cast %119 : vector<1x256x256xbf16> to vector<256x256xbf16>
    %cst_69 = arith.constant dense<0.000000e+00> : vector<32x256xf32>
    %121 = tpu.matmul %82, %120, %cst_69 {dimension_numbers = #tpu.dot_dimension_numbers<[1], [0], [0], [1], [0, 0, 1, 1], [], []>} : vector<32x256xbf16>, vector<256x256xbf16>, vector<32x256xf32> -> vector<32x256xf32>
    %122 = vector.extract_strided_slice %2 {offsets = [32, 5], sizes = [32, 1], strides = [1, 1]} : vector<96x16xf32> to vector<32x1xf32>
    %123 = vector.broadcast %122 : vector<32x1xf32> to vector<32x256xf32>
    %124 = arith.mulf %121, %123 : vector<32x256xf32>
    %125 = arith.addf %118, %124 : vector<32x256xf32>
    %c6_70 = arith.constant 6 : index
    %c0_71 = arith.constant 0 : index
    %c0_72 = arith.constant 0 : index
    %126 = vector.load %arg4[%c6_70, %c0_71, %c0_72] : memref<9x256x256xbf16, #tpu.memory_space<vmem>>, vector<1x256x256xbf16>
    %127 = vector.shape_cast %126 : vector<1x256x256xbf16> to vector<256x256xbf16>
    %cst_73 = arith.constant dense<0.000000e+00> : vector<32x256xf32>
    %128 = tpu.matmul %82, %127, %cst_73 {dimension_numbers = #tpu.dot_dimension_numbers<[1], [0], [0], [1], [0, 0, 1, 1], [], []>} : vector<32x256xbf16>, vector<256x256xbf16>, vector<32x256xf32> -> vector<32x256xf32>
    %129 = vector.extract_strided_slice %2 {offsets = [32, 6], sizes = [32, 1], strides = [1, 1]} : vector<96x16xf32> to vector<32x1xf32>
    %130 = vector.broadcast %129 : vector<32x1xf32> to vector<32x256xf32>
    %131 = arith.mulf %128, %130 : vector<32x256xf32>
    %132 = arith.addf %125, %131 : vector<32x256xf32>
    %c7_74 = arith.constant 7 : index
    %c0_75 = arith.constant 0 : index
    %c0_76 = arith.constant 0 : index
    %133 = vector.load %arg4[%c7_74, %c0_75, %c0_76] : memref<9x256x256xbf16, #tpu.memory_space<vmem>>, vector<1x256x256xbf16>
    %134 = vector.shape_cast %133 : vector<1x256x256xbf16> to vector<256x256xbf16>
    %cst_77 = arith.constant dense<0.000000e+00> : vector<32x256xf32>
    %135 = tpu.matmul %82, %134, %cst_77 {dimension_numbers = #tpu.dot_dimension_numbers<[1], [0], [0], [1], [0, 0, 1, 1], [], []>} : vector<32x256xbf16>, vector<256x256xbf16>, vector<32x256xf32> -> vector<32x256xf32>
    %136 = vector.extract_strided_slice %2 {offsets = [32, 7], sizes = [32, 1], strides = [1, 1]} : vector<96x16xf32> to vector<32x1xf32>
    %137 = vector.broadcast %136 : vector<32x1xf32> to vector<32x256xf32>
    %138 = arith.mulf %135, %137 : vector<32x256xf32>
    %139 = arith.addf %132, %138 : vector<32x256xf32>
    %c8_78 = arith.constant 8 : index
    %c0_79 = arith.constant 0 : index
    %c0_80 = arith.constant 0 : index
    %140 = vector.load %arg4[%c8_78, %c0_79, %c0_80] : memref<9x256x256xbf16, #tpu.memory_space<vmem>>, vector<1x256x256xbf16>
    %141 = vector.shape_cast %140 : vector<1x256x256xbf16> to vector<256x256xbf16>
    %cst_81 = arith.constant dense<0.000000e+00> : vector<32x256xf32>
    %142 = tpu.matmul %82, %141, %cst_81 {dimension_numbers = #tpu.dot_dimension_numbers<[1], [0], [0], [1], [0, 0, 1, 1], [], []>} : vector<32x256xbf16>, vector<256x256xbf16>, vector<32x256xf32> -> vector<32x256xf32>
    %143 = vector.extract_strided_slice %2 {offsets = [32, 8], sizes = [32, 1], strides = [1, 1]} : vector<96x16xf32> to vector<32x1xf32>
    %144 = vector.broadcast %143 : vector<32x1xf32> to vector<32x256xf32>
    %145 = arith.mulf %142, %144 : vector<32x256xf32>
    %146 = arith.addf %139, %145 : vector<32x256xf32>
    %c32_82 = arith.constant 32 : index
    %c0_83 = arith.constant 0 : index
    %147 = vector.load %arg6[%c32_82, %c0_83] : memref<96x1xf32, #tpu.memory_space<vmem>>, vector<32x1xf32>
    %148 = vector.broadcast %147 : vector<32x1xf32> to vector<32x256xf32>
    %149 = arith.addf %146, %148 : vector<32x256xf32>
    %c32_84 = arith.constant 32 : index
    %c0_85 = arith.constant 0 : index
    %150 = vector.load %arg12[%c32_84, %c0_85] : memref<96x256xf32, #tpu.memory_space<vmem>>, vector<32x256xf32>
    tpu.vector_store %arg12[%c32_84, %c0_85], %149 {strides = array<i32>} : memref<96x256xf32, #tpu.memory_space<vmem>>, vector<32x256xf32>,
    %c64 = arith.constant 64 : index
    %c0_86 = arith.constant 0 : index
    %151 = vector.load %arg2[%c64, %c0_86] : memref<96x32xbf16, #tpu.memory_space<vmem>>, vector<32x32xbf16>
    %cst_87 = arith.constant dense<0.000000e+00> : vector<32x256xf32>
    %152 = tpu.matmul %151, %1, %cst_87 {dimension_numbers = #tpu.dot_dimension_numbers<[1], [0], [0], [1], [0, 0, 1, 1], [], []>} : vector<32x32xbf16>, vector<32x256xbf16>, vector<32x256xf32> -> vector<32x256xf32>
    %c64_88 = arith.constant 64 : index
    %c0_89 = arith.constant 0 : index
    %153 = vector.load %arg3[%c64_88, %c0_89] : memref<96x1xf32, #tpu.memory_space<vmem>>, vector<32x1xf32>
    %154 = vector.broadcast %153 : vector<32x1xf32> to vector<32x256xf32>
    %155 = arith.addf %152, %154 : vector<32x256xf32>
    %156 = arith.truncf %155 : vector<32x256xf32> to vector<32x256xbf16>
    %cst_90 = arith.constant 0.000000e+00 : f32
    %157 = vector.broadcast %cst_90 : f32 to vector<32x256xf32>
    %c0_91 = arith.constant 0 : index
    %c0_92 = arith.constant 0 : index
    %c0_93 = arith.constant 0 : index
    %158 = vector.load %arg4[%c0_91, %c0_92, %c0_93] : memref<9x256x256xbf16, #tpu.memory_space<vmem>>, vector<1x256x256xbf16>
    %159 = vector.shape_cast %158 : vector<1x256x256xbf16> to vector<256x256xbf16>
    %cst_94 = arith.constant dense<0.000000e+00> : vector<32x256xf32>
    %160 = tpu.matmul %156, %159, %cst_94 {dimension_numbers = #tpu.dot_dimension_numbers<[1], [0], [0], [1], [0, 0, 1, 1], [], []>} : vector<32x256xbf16>, vector<256x256xbf16>, vector<32x256xf32> -> vector<32x256xf32>
    %161 = vector.extract_strided_slice %2 {offsets = [64, 0], sizes = [32, 1], strides = [1, 1]} : vector<96x16xf32> to vector<32x1xf32>
    %162 = vector.broadcast %161 : vector<32x1xf32> to vector<32x256xf32>
    %163 = arith.mulf %160, %162 : vector<32x256xf32>
    %164 = arith.addf %157, %163 : vector<32x256xf32>
    %c1_95 = arith.constant 1 : index
    %c0_96 = arith.constant 0 : index
    %c0_97 = arith.constant 0 : index
    %165 = vector.load %arg4[%c1_95, %c0_96, %c0_97] : memref<9x256x256xbf16, #tpu.memory_space<vmem>>, vector<1x256x256xbf16>
    %166 = vector.shape_cast %165 : vector<1x256x256xbf16> to vector<256x256xbf16>
    %cst_98 = arith.constant dense<0.000000e+00> : vector<32x256xf32>
    %167 = tpu.matmul %156, %166, %cst_98 {dimension_numbers = #tpu.dot_dimension_numbers<[1], [0], [0], [1], [0, 0, 1, 1], [], []>} : vector<32x256xbf16>, vector<256x256xbf16>, vector<32x256xf32> -> vector<32x256xf32>
    %168 = vector.extract_strided_slice %2 {offsets = [64, 1], sizes = [32, 1], strides = [1, 1]} : vector<96x16xf32> to vector<32x1xf32>
    %169 = vector.broadcast %168 : vector<32x1xf32> to vector<32x256xf32>
    %170 = arith.mulf %167, %169 : vector<32x256xf32>
    %171 = arith.addf %164, %170 : vector<32x256xf32>
    %c2_99 = arith.constant 2 : index
    %c0_100 = arith.constant 0 : index
    %c0_101 = arith.constant 0 : index
    %172 = vector.load %arg4[%c2_99, %c0_100, %c0_101] : memref<9x256x256xbf16, #tpu.memory_space<vmem>>, vector<1x256x256xbf16>
    %173 = vector.shape_cast %172 : vector<1x256x256xbf16> to vector<256x256xbf16>
    %cst_102 = arith.constant dense<0.000000e+00> : vector<32x256xf32>
    %174 = tpu.matmul %156, %173, %cst_102 {dimension_numbers = #tpu.dot_dimension_numbers<[1], [0], [0], [1], [0, 0, 1, 1], [], []>} : vector<32x256xbf16>, vector<256x256xbf16>, vector<32x256xf32> -> vector<32x256xf32>
    %175 = vector.extract_strided_slice %2 {offsets = [64, 2], sizes = [32, 1], strides = [1, 1]} : vector<96x16xf32> to vector<32x1xf32>
    %176 = vector.broadcast %175 : vector<32x1xf32> to vector<32x256xf32>
    %177 = arith.mulf %174, %176 : vector<32x256xf32>
    %178 = arith.addf %171, %177 : vector<32x256xf32>
    %c3_103 = arith.constant 3 : index
    %c0_104 = arith.constant 0 : index
    %c0_105 = arith.constant 0 : index
    %179 = vector.load %arg4[%c3_103, %c0_104, %c0_105] : memref<9x256x256xbf16, #tpu.memory_space<vmem>>, vector<1x256x256xbf16>
    %180 = vector.shape_cast %179 : vector<1x256x256xbf16> to vector<256x256xbf16>
    %cst_106 = arith.constant dense<0.000000e+00> : vector<32x256xf32>
    %181 = tpu.matmul %156, %180, %cst_106 {dimension_numbers = #tpu.dot_dimension_numbers<[1], [0], [0], [1], [0, 0, 1, 1], [], []>} : vector<32x256xbf16>, vector<256x256xbf16>, vector<32x256xf32> -> vector<32x256xf32>
    %182 = vector.extract_strided_slice %2 {offsets = [64, 3], sizes = [32, 1], strides = [1, 1]} : vector<96x16xf32> to vector<32x1xf32>
    %183 = vector.broadcast %182 : vector<32x1xf32> to vector<32x256xf32>
    %184 = arith.mulf %181, %183 : vector<32x256xf32>
    %185 = arith.addf %178, %184 : vector<32x256xf32>
    %c4_107 = arith.constant 4 : index
    %c0_108 = arith.constant 0 : index
    %c0_109 = arith.constant 0 : index
    %186 = vector.load %arg4[%c4_107, %c0_108, %c0_109] : memref<9x256x256xbf16, #tpu.memory_space<vmem>>, vector<1x256x256xbf16>
    %187 = vector.shape_cast %186 : vector<1x256x256xbf16> to vector<256x256xbf16>
    %cst_110 = arith.constant dense<0.000000e+00> : vector<32x256xf32>
    %188 = tpu.matmul %156, %187, %cst_110 {dimension_numbers = #tpu.dot_dimension_numbers<[1], [0], [0], [1], [0, 0, 1, 1], [], []>} : vector<32x256xbf16>, vector<256x256xbf16>, vector<32x256xf32> -> vector<32x256xf32>
    %189 = vector.extract_strided_slice %2 {offsets = [64, 4], sizes = [32, 1], strides = [1, 1]} : vector<96x16xf32> to vector<32x1xf32>
    %190 = vector.broadcast %189 : vector<32x1xf32> to vector<32x256xf32>
    %191 = arith.mulf %188, %190 : vector<32x256xf32>
    %192 = arith.addf %185, %191 : vector<32x256xf32>
    %c5_111 = arith.constant 5 : index
    %c0_112 = arith.constant 0 : index
    %c0_113 = arith.constant 0 : index
    %193 = vector.load %arg4[%c5_111, %c0_112, %c0_113] : memref<9x256x256xbf16, #tpu.memory_space<vmem>>, vector<1x256x256xbf16>
    %194 = vector.shape_cast %193 : vector<1x256x256xbf16> to vector<256x256xbf16>
    %cst_114 = arith.constant dense<0.000000e+00> : vector<32x256xf32>
    %195 = tpu.matmul %156, %194, %cst_114 {dimension_numbers = #tpu.dot_dimension_numbers<[1], [0], [0], [1], [0, 0, 1, 1], [], []>} : vector<32x256xbf16>, vector<256x256xbf16>, vector<32x256xf32> -> vector<32x256xf32>
    %196 = vector.extract_strided_slice %2 {offsets = [64, 5], sizes = [32, 1], strides = [1, 1]} : vector<96x16xf32> to vector<32x1xf32>
    %197 = vector.broadcast %196 : vector<32x1xf32> to vector<32x256xf32>
    %198 = arith.mulf %195, %197 : vector<32x256xf32>
    %199 = arith.addf %192, %198 : vector<32x256xf32>
    %c6_115 = arith.constant 6 : index
    %c0_116 = arith.constant 0 : index
    %c0_117 = arith.constant 0 : index
    %200 = vector.load %arg4[%c6_115, %c0_116, %c0_117] : memref<9x256x256xbf16, #tpu.memory_space<vmem>>, vector<1x256x256xbf16>
    %201 = vector.shape_cast %200 : vector<1x256x256xbf16> to vector<256x256xbf16>
    %cst_118 = arith.constant dense<0.000000e+00> : vector<32x256xf32>
    %202 = tpu.matmul %156, %201, %cst_118 {dimension_numbers = #tpu.dot_dimension_numbers<[1], [0], [0], [1], [0, 0, 1, 1], [], []>} : vector<32x256xbf16>, vector<256x256xbf16>, vector<32x256xf32> -> vector<32x256xf32>
    %203 = vector.extract_strided_slice %2 {offsets = [64, 6], sizes = [32, 1], strides = [1, 1]} : vector<96x16xf32> to vector<32x1xf32>
    %204 = vector.broadcast %203 : vector<32x1xf32> to vector<32x256xf32>
    %205 = arith.mulf %202, %204 : vector<32x256xf32>
    %206 = arith.addf %199, %205 : vector<32x256xf32>
    %c7_119 = arith.constant 7 : index
    %c0_120 = arith.constant 0 : index
    %c0_121 = arith.constant 0 : index
    %207 = vector.load %arg4[%c7_119, %c0_120, %c0_121] : memref<9x256x256xbf16, #tpu.memory_space<vmem>>, vector<1x256x256xbf16>
    %208 = vector.shape_cast %207 : vector<1x256x256xbf16> to vector<256x256xbf16>
    %cst_122 = arith.constant dense<0.000000e+00> : vector<32x256xf32>
    %209 = tpu.matmul %156, %208, %cst_122 {dimension_numbers = #tpu.dot_dimension_numbers<[1], [0], [0], [1], [0, 0, 1, 1], [], []>} : vector<32x256xbf16>, vector<256x256xbf16>, vector<32x256xf32> -> vector<32x256xf32>
    %210 = vector.extract_strided_slice %2 {offsets = [64, 7], sizes = [32, 1], strides = [1, 1]} : vector<96x16xf32> to vector<32x1xf32>
    %211 = vector.broadcast %210 : vector<32x1xf32> to vector<32x256xf32>
    %212 = arith.mulf %209, %211 : vector<32x256xf32>
    %213 = arith.addf %206, %212 : vector<32x256xf32>
    %c8_123 = arith.constant 8 : index
    %c0_124 = arith.constant 0 : index
    %c0_125 = arith.constant 0 : index
    %214 = vector.load %arg4[%c8_123, %c0_124, %c0_125] : memref<9x256x256xbf16, #tpu.memory_space<vmem>>, vector<1x256x256xbf16>
    %215 = vector.shape_cast %214 : vector<1x256x256xbf16> to vector<256x256xbf16>
    %cst_126 = arith.constant dense<0.000000e+00> : vector<32x256xf32>
    %216 = tpu.matmul %156, %215, %cst_126 {dimension_numbers = #tpu.dot_dimension_numbers<[1], [0], [0], [1], [0, 0, 1, 1], [], []>} : vector<32x256xbf16>, vector<256x256xbf16>, vector<32x256xf32> -> vector<32x256xf32>
    %217 = vector.extract_strided_slice %2 {offsets = [64, 8], sizes = [32, 1], strides = [1, 1]} : vector<96x16xf32> to vector<32x1xf32>
    %218 = vector.broadcast %217 : vector<32x1xf32> to vector<32x256xf32>
    %219 = arith.mulf %216, %218 : vector<32x256xf32>
    %220 = arith.addf %213, %219 : vector<32x256xf32>
    %c64_127 = arith.constant 64 : index
    %c0_128 = arith.constant 0 : index
    %221 = vector.load %arg6[%c64_127, %c0_128] : memref<96x1xf32, #tpu.memory_space<vmem>>, vector<32x1xf32>
    %222 = vector.broadcast %221 : vector<32x1xf32> to vector<32x256xf32>
    %223 = arith.addf %220, %222 : vector<32x256xf32>
    %c64_129 = arith.constant 64 : index
    %c0_130 = arith.constant 0 : index
    %224 = vector.load %arg12[%c64_129, %c0_130] : memref<96x256xf32, #tpu.memory_space<vmem>>, vector<32x256xf32>
    tpu.vector_store %arg12[%c64_129, %c0_130], %223 {strides = array<i32>} : memref<96x256xf32, #tpu.memory_space<vmem>>, vector<32x256xf32>,
    %c0_131 = arith.constant 0 : index
    %c0_132 = arith.constant 0 : index
    %225 = vector.load %arg12[%c0_131, %c0_132] : memref<96x256xf32, #tpu.memory_space<vmem>>, vector<32x256xf32>
    %c32_133 = arith.constant 32 : index
    %c0_134 = arith.constant 0 : index
    %226 = vector.load %arg12[%c32_133, %c0_134] : memref<96x256xf32, #tpu.memory_space<vmem>>, vector<32x256xf32>
    %c64_135 = arith.constant 64 : index
    %c0_136 = arith.constant 0 : index
    %227 = vector.load %arg12[%c64_135, %c0_136] : memref<96x256xf32, #tpu.memory_space<vmem>>, vector<32x256xf32>
    %228 = arith.mulf %225, %225 : vector<32x256xf32>
    %cst_137 = arith.constant dense<0.000000e+00> : vector<32xf32>
    %229 = vector.multi_reduction <add>, %228, %cst_137 [1] : vector<32x256xf32> to vector<32xf32>
    %230 = vector.shape_cast %229 : vector<32xf32> to vector<32x1xf32>
    %cst_138 = arith.constant 1.000000e-24 : f32
    %231 = vector.broadcast %cst_138 : f32 to vector<32x1xf32>
    %232 = arith.maximumf %230, %231 : vector<32x1xf32>
    %233 = math.rsqrt %232 : vector<32x1xf32>
    %234 = arith.mulf %226, %226 : vector<32x256xf32>
    %cst_139 = arith.constant dense<0.000000e+00> : vector<32xf32>
    %235 = vector.multi_reduction <add>, %234, %cst_139 [1] : vector<32x256xf32> to vector<32xf32>
    %236 = vector.shape_cast %235 : vector<32xf32> to vector<32x1xf32>
    %cst_140 = arith.constant 1.000000e-24 : f32
    %237 = vector.broadcast %cst_140 : f32 to vector<32x1xf32>
    %238 = arith.maximumf %236, %237 : vector<32x1xf32>
    %239 = math.rsqrt %238 : vector<32x1xf32>
    %240 = vector.broadcast %233 : vector<32x1xf32> to vector<32x256xf32>
    %241 = arith.mulf %225, %240 : vector<32x256xf32>
    %242 = arith.truncf %241 : vector<32x256xf32> to vector<32x256xbf16>
    %243 = vector.broadcast %239 : vector<32x1xf32> to vector<32x256xf32>
    %244 = arith.mulf %226, %243 : vector<32x256xf32>
    %245 = arith.truncf %244 : vector<32x256xf32> to vector<32x256xbf16>
    %cst_141 = arith.constant dense<0.000000e+00> : vector<32x32xf32>
    %246 = tpu.matmul %242, %245, %cst_141 {dimension_numbers = #tpu.dot_dimension_numbers<[1], [1], [0], [0], [0, 0, 1, 0], [], []>} : vector<32x256xbf16>, vector<32x256xbf16>, vector<32x32xf32> -> vector<32x32xf32>
    %c0_142 = arith.constant 0 : index
    %c0_143 = arith.constant 0 : index
    %247 = vector.load %arg9[%c0_142, %c0_143] : memref<32x1xf32, #tpu.memory_space<vmem>>, vector<32x1xf32>
    %248 = vector.broadcast %247 : vector<32x1xf32> to vector<32x32xf32>
    %249 = arith.mulf %246, %248 : vector<32x32xf32>
    %c0_144 = arith.constant 0 : index
    %c0_145 = arith.constant 0 : index
    %250 = vector.load %arg10[%c0_144, %c0_145] : memref<32x32xf32, #tpu.memory_space<vmem>>, vector<32x32xf32>
    %251 = arith.addf %249, %250 : vector<32x32xf32>
    %cst_146 = arith.constant dense<0xFF800000> : vector<32xf32>
    %252 = vector.multi_reduction <maximumf>, %251, %cst_146 [1] : vector<32x32xf32> to vector<32xf32>
    %253 = vector.shape_cast %252 : vector<32xf32> to vector<32x1xf32>
    %254 = vector.broadcast %253 : vector<32x1xf32> to vector<32x32xf32>
    %255 = arith.subf %251, %254 : vector<32x32xf32>
    %256 = math.exp %255 : vector<32x32xf32>
    %cst_147 = arith.constant dense<0.000000e+00> : vector<32xf32>
    %257 = vector.multi_reduction <add>, %256, %cst_147 [1] : vector<32x32xf32> to vector<32xf32>
    %258 = vector.shape_cast %257 : vector<32xf32> to vector<32x1xf32>
    %259 = tpu.reciprocal %258 {approx = true} : vector<32x1xf32> -> vector<32x1xf32>
    %260 = vector.broadcast %259 : vector<32x1xf32> to vector<32x32xf32>
    %261 = arith.mulf %256, %260 : vector<32x32xf32>
    %262 = arith.truncf %261 : vector<32x32xf32> to vector<32x32xbf16>
    %263 = arith.truncf %227 : vector<32x256xf32> to vector<32x256xbf16>
    %cst_148 = arith.constant dense<0.000000e+00> : vector<32x256xf32>
    %264 = tpu.matmul %262, %263, %cst_148 {dimension_numbers = #tpu.dot_dimension_numbers<[1], [0], [0], [1], [0, 0, 1, 1], [], []>} : vector<32x32xbf16>, vector<32x256xbf16>, vector<32x256xf32> -> vector<32x256xf32>
    %c0_149 = arith.constant 0 : index
    %c0_150 = arith.constant 0 : index
    %265 = vector.load %arg7[%c0_149, %c0_150] : memref<32x32xbf16, #tpu.memory_space<vmem>>, vector<32x32xbf16>
    %266 = arith.truncf %264 : vector<32x256xf32> to vector<32x256xbf16>
    %cst_151 = arith.constant dense<0.000000e+00> : vector<32x256xf32>
    %267 = tpu.matmul %265, %266, %cst_151 {dimension_numbers = #tpu.dot_dimension_numbers<[1], [0], [0], [1], [0, 0, 1, 1], [], []>} : vector<32x32xbf16>, vector<32x256xbf16>, vector<32x256xf32> -> vector<32x256xf32>
    %c0_152 = arith.constant 0 : index
    %c0_153 = arith.constant 0 : index
    %268 = vector.load %arg8[%c0_152, %c0_153] : memref<32x1xf32, #tpu.memory_space<vmem>>, vector<32x1xf32>
    %269 = vector.broadcast %268 : vector<32x1xf32> to vector<32x256xf32>
    %270 = arith.addf %267, %269 : vector<32x256xf32>
    %271 = vector.shape_cast %270 : vector<32x256xf32> to vector<1x32x256xf32>
    %c0_154 = arith.constant 0 : index
    %c0_155 = arith.constant 0 : index
    %c0_156 = arith.constant 0 : index
    %272 = vector.load %arg11[%c0_154, %c0_155, %c0_156] : memref<1x32x256xf32, #tpu.memory_space<vmem>>, vector<1x32x256xf32>
    tpu.vector_store %arg11[%c0_154, %c0_155, %c0_156], %271 {strides = array<i32>} : memref<1x32x256xf32, #tpu.memory_space<vmem>>, vector<1x32x256xf32>,
    return
  }
  func.func @transform_0(%arg0: i32) -> (i32, i32, i32) {
    %c0_i32 = arith.constant 0 : i32
    %c0_i32_0 = arith.constant 0 : i32
    %c0_i32_1 = arith.constant 0 : i32
    return %arg0, %c0_i32, %c0_i32_0 : i32, i32, i32
  }
  func.func @transform_1(%arg0: i32) -> (i32, i32) {
    %c0_i32 = arith.constant 0 : i32
    %c0_i32_0 = arith.constant 0 : i32
    %c0_i32_1 = arith.constant 0 : i32
    return %c0_i32, %c0_i32_0 : i32, i32
  }
  func.func @transform_2(%arg0: i32) -> (i32, i32) {
    %c0_i32 = arith.constant 0 : i32
    %c0_i32_0 = arith.constant 0 : i32
    %c0_i32_1 = arith.constant 0 : i32
    return %c0_i32, %c0_i32_0 : i32, i32
  }
  func.func @transform_3(%arg0: i32) -> (i32, i32, i32) {
    %c0_i32 = arith.constant 0 : i32
    %c0_i32_0 = arith.constant 0 : i32
    %c0_i32_1 = arith.constant 0 : i32
    %c0_i32_2 = arith.constant 0 : i32
    return %c0_i32, %c0_i32_0, %c0_i32_1 : i32, i32, i32
  }
  func.func @transform_4(%arg0: i32) -> (i32, i32) {
    %c0_i32 = arith.constant 0 : i32
    %c0_i32_0 = arith.constant 0 : i32
    %c0_i32_1 = arith.constant 0 : i32
    return %c0_i32, %c0_i32_0 : i32, i32
  }
  func.func @transform_5(%arg0: i32) -> (i32, i32) {
    %c0_i32 = arith.constant 0 : i32
    %c0_i32_0 = arith.constant 0 : i32
    %c0_i32_1 = arith.constant 0 : i32
    return %c0_i32, %c0_i32_0 : i32, i32
  }
  func.func @transform_6(%arg0: i32) -> (i32, i32) {
    %c0_i32 = arith.constant 0 : i32
    %c0_i32_0 = arith.constant 0 : i32
    %c0_i32_1 = arith.constant 0 : i32
    return %c0_i32, %c0_i32_0 : i32, i32
  }
  func.func @transform_7(%arg0: i32) -> (i32, i32) {
    %c0_i32 = arith.constant 0 : i32
    %c0_i32_0 = arith.constant 0 : i32
    %c0_i32_1 = arith.constant 0 : i32
    return %c0_i32, %c0_i32_0 : i32, i32
  }
  func.func @transform_8(%arg0: i32) -> (i32, i32) {
    %c0_i32 = arith.constant 0 : i32
    %c0_i32_0 = arith.constant 0 : i32
    %c0_i32_1 = arith.constant 0 : i32
    return %c0_i32, %c0_i32_0 : i32, i32
  }
  func.func @transform_9(%arg0: i32) -> (i32, i32) {
    %c0_i32 = arith.constant 0 : i32
    %c0_i32_0 = arith.constant 0 : i32
    %c0_i32_1 = arith.constant 0 : i32
    return %c0_i32, %c0_i32_0 : i32, i32
  }
  func.func @transform_10(%arg0: i32) -> (i32, i32, i32) {
    %c0_i32 = arith.constant 0 : i32
    %c0_i32_0 = arith.constant 0 : i32
    %c0_i32_1 = arith.constant 0 : i32
    return %arg0, %c0_i32, %c0_i32_0 : i32, i32, i32
  }
}

</mosaic_0001>

<llo_original>
// kernel: tpu_custom_call.1
$region0: #{tpu_custom_call.1}
  #allocation0 [shape = 'u32[]', space=smem, size = 0x4, offset = 0x4, fixed_abs, tag = 'smem constant byte address 0x4 - core index']
  #allocation1 [shape = 'u32[144,128]{1,0:T(1,128)}', space=vmem, size = 0x12000, scoped, tag = 'internal scratch']
  #allocation2 [shape = 'f32[96,256]{1,0:T(8,128)}', space=vmem, size = 0x18000, scoped, tag = 'scratch operand']
  %s0 = inlined_call_operand.hbm [shape: bf16[2,32,256], index: 0, kind: input, shape index: {}]
  %s1 = inlined_call_operand.vmem [shape: bf16[96,32], index: 1, kind: input, shape index: {}]
  %s2 = inlined_call_operand.vmem [shape: f32[96,1], index: 2, kind: input, shape index: {}]
  %s3 = inlined_call_operand.hbm [shape: bf16[9,256,256], index: 3, kind: input, shape index: {}]
  %s4 = inlined_call_operand.vmem [shape: f32[96,16], index: 4, kind: input, shape index: {}]
  %s5 = inlined_call_operand.vmem [shape: f32[96,1], index: 5, kind: input, shape index: {}]
  %s6 = inlined_call_operand.hbm [shape: bf16[32,32], index: 6, kind: input, shape index: {}]
  %s7 = inlined_call_operand.vmem [shape: f32[32,1], index: 7, kind: input, shape index: {}]
  %s8 = inlined_call_operand.vmem [shape: f32[32,1], index: 8, kind: input, shape index: {}]
  %s9 = inlined_call_operand.hbm [shape: f32[32,32], index: 9, kind: input, shape index: {}]
  %s10 = inlined_call_operand.hbm [shape: f32[2,32,256], index: 10, kind: output, shape index: {}]
  %s11 = sld [smem:[#allocation0]]
  $region89: #{tpu_custom_call.1} parent=0
    _
  %s13 = ssub.s32 1, %s11
  %s14 = scalar_select 0, %s13, %s11
  $region1: #{tpu_custom_call.1} parent=0
    #allocation3 [shape = 'u8[32768]{0}', space=vmem, size = 0x8000, scoped, tag = 'input window, operand 0']
    #allocation4 [shape = 's32[2]{0}', space=sflag, size = 0x8, scoped, tag = 'scoped memory for tpu_custom_call.1']
    #allocation5 [shape = 's32[2]{0}', space=sflag, size = 0x8, scoped, tag = 'scoped memory for tpu_custom_call.1']
    #allocation6 [shape = 'u8[1179648]{0}', space=vmem, size = 0x120000, scoped, tag = 'input window, operand 3, single buffered']
    #allocation7 [shape = 's32[1]{0}', space=sflag, size = 0x4, scoped, tag = 'scoped memory for tpu_custom_call.1']
    #allocation8 [shape = 'u8[8192]{0}', space=vmem, size = 0x2000, scoped, tag = 'input window, operand 6, single buffered']
    #allocation9 [shape = 'u8[16384]{0}', space=vmem, size = 0x4000, scoped, tag = 'input window, operand 9, single buffered']
    #allocation10 [shape = 's32[1]{0}', space=sflag, size = 0x4, scoped, tag = 'scoped memory for tpu_custom_call.1']
    #allocation11 [shape = 'u8[65536]{0}', space=vmem, size = 0x10000, scoped, tag = 'output window, operand 0']
    %15 = vsyncpa [#allocation4], 0
    %s16 = scalar_lea.sflag [#allocation4], 1
    %17 = vsyncpa %s16, 0
    %18 = vsyncpa [#allocation7], 0
    %19 = vsyncpa [#allocation10], 0
    %20 = vsyncpa [#allocation5], 0
    %s21 = scalar_lea.sflag [#allocation5], 1
    %22 = vsyncpa %s21, 0
    loop: start=0, step=1, limit=4
    $region2: #{tpu_custom_call.1} parent=1 // loop_pre_header
      _
    $region3: #{tpu_custom_call.1} parent=1 // loop_header
      %s24 = sphi 0, %s28
      %p25 = scmp.ge.s32.totalorder %s24, 4
      %s34 = sphi 0, %s36
      %s37 = sphi 0, %s34
      %s38 = sphi 0, %s37
      %s54 = sphi 0, %s38
      %s58 = sphi 0, %s58
      %s60 = sphi 0, %s58
      %s61 = sphi 0, %s60
      %s75 = sphi 0, %s61
      %s79 = sphi 0, %s79
      %s81 = sphi 0, %s79
      %s82 = sphi 0, %s81
      %s96 = sphi 0, %s82
      %s100 = sphi 0, %s100
      %s102 = sphi 0, %s100
      %s103 = sphi 0, %s102
      %s117 = sphi 0, %s103
      %s121 = sphi 0, %s121
      %s123 = sphi 0, %s121
      %s124 = sphi 0, %s123
      %s138 = sphi 0, %s124
      %s142 = sphi 0, %s142
      %s144 = sphi 0, %s142
      %s145 = sphi 0, %s144
      %s159 = sphi 0, %s145
      %s163 = sphi 0, %s163
      %s165 = sphi 0, %s163
      %s166 = sphi 0, %s165
      %s180 = sphi 0, %s166
      %s184 = sphi 0, %s184
      %s186 = sphi 0, %s184
      %s187 = sphi 0, %s186
      %s201 = sphi 0, %s187
      %s205 = sphi 0, %s205
      %s207 = sphi 0, %s205
      %s208 = sphi 0, %s207
      %s222 = sphi 0, %s208
      %s226 = sphi 0, %s226
      %s228 = sphi 0, %s226
      %s229 = sphi 0, %s228
      %s243 = sphi 0, %s229
      %s249 = sphi 0, %s251
      %s252 = sphi 0, %s249
      %s253 = sphi 0, %s252
      %s269 = sphi 0, %s253
    $region4: #{tpu_custom_call.1} parent=1 // loop_header_branch
      %27 = sbr.rel (%p25) target = $region8
    $region5: #{tpu_custom_call.1} parent=1 // loop_body
      %s29 = ssub.s32 %s24, 1
      %s30 = ssub.s32 %s24, 2
      %s31 = sadd.s32 %s24, 1
      %s32 = ssub.s32 %s24, %s31
      %p33 = scmp.eq.s32.totalorder %s32, 0
      %s35 = sadd.s32 %s34, 1
      %s36 = scalar_select %p33, %s34, %s35
      %p39 = pneg %p33
      %p40 = scmp.eq.s32.totalorder %s24, 1
      %p41 = por %p39, %p40
      %p42 = scmp.ne.s32.totalorder %s34, %s37
      %p43 = scmp.eq.s32.totalorder %s24, 0
      %p44 = por %p42, %p43
      %p45 = scmp.ne.s32.totalorder %s34, %s37
      %p46 = scmp.eq.s32.totalorder %s29, 1
      %p47 = por %p45, %p46
      %p48 = scmp.ne.s32.totalorder %s37, %s38
      %p49 = scmp.eq.s32.totalorder %s29, 0
      %p50 = por %p48, %p49
      %p51 = scmp.ne.s32.totalorder %s37, %s38
      %p52 = scmp.eq.s32.totalorder %s30, 1
      %p53 = por %p51, %p52
      %p55 = scmp.ne.s32.totalorder %s38, %s54
      %p56 = scmp.eq.s32.totalorder %s30, 0
      %p57 = por %p55, %p56
      %s59 = sadd.s32 %s58, 1
      %p62 = scmp.eq.s32.totalorder %s24, 1
      %p63 = scmp.ne.s32.totalorder %s58, %s60
      %p64 = scmp.eq.s32.totalorder %s24, 0
      %p65 = por %p63, %p64
      %p66 = scmp.ne.s32.totalorder %s58, %s60
      %p67 = scmp.eq.s32.totalorder %s29, 1
      %p68 = por %p66, %p67
      %p69 = scmp.ne.s32.totalorder %s60, %s61
      %p70 = scmp.eq.s32.totalorder %s29, 0
      %p71 = por %p69, %p70
      %p72 = scmp.ne.s32.totalorder %s60, %s61
      %p73 = scmp.eq.s32.totalorder %s30, 1
      %p74 = por %p72, %p73
      %p76 = scmp.ne.s32.totalorder %s61, %s75
      %p77 = scmp.eq.s32.totalorder %s30, 0
      %p78 = por %p76, %p77
      %s80 = sadd.s32 %s79, 1
      %p83 = scmp.eq.s32.totalorder %s24, 1
      %p84 = scmp.ne.s32.totalorder %s79, %s81
      %p85 = scmp.eq.s32.totalorder %s24, 0
      %p86 = por %p84, %p85
      %p87 = scmp.ne.s32.totalorder %s79, %s81
      %p88 = scmp.eq.s32.totalorder %s29, 1
      %p89 = por %p87, %p88
      %p90 = scmp.ne.s32.totalorder %s81, %s82
      %p91 = scmp.eq.s32.totalorder %s29, 0
      %p92 = por %p90, %p91
      %p93 = scmp.ne.s32.totalorder %s81, %s82
      %p94 = scmp.eq.s32.totalorder %s30, 1
      %p95 = por %p93, %p94
      %p97 = scmp.ne.s32.totalorder %s82, %s96
      %p98 = scmp.eq.s32.totalorder %s30, 0
      %p99 = por %p97, %p98
      %s101 = sadd.s32 %s100, 1
      %p104 = scmp.eq.s32.totalorder %s24, 1
      %p105 = scmp.ne.s32.totalorder %s100, %s102
      %p106 = scmp.eq.s32.totalorder %s24, 0
      %p107 = por %p105, %p106
      %p108 = scmp.ne.s32.totalorder %s100, %s102
      %p109 = scmp.eq.s32.totalorder %s29, 1
      %p110 = por %p108, %p109
      %p111 = scmp.ne.s32.totalorder %s102, %s103
      %p112 = scmp.eq.s32.totalorder %s29, 0
      %p113 = por %p111, %p112
      %p114 = scmp.ne.s32.totalorder %s102, %s103
      %p115 = scmp.eq.s32.totalorder %s30, 1
      %p116 = por %p114, %p115
      %p118 = scmp.ne.s32.totalorder %s103, %s117
      %p119 = scmp.eq.s32.totalorder %s30, 0
      %p120 = por %p118, %p119
      %s122 = sadd.s32 %s121, 1
      %p125 = scmp.eq.s32.totalorder %s24, 1
      %p126 = scmp.ne.s32.totalorder %s121, %s123
      %p127 = scmp.eq.s32.totalorder %s24, 0
      %p128 = por %p126, %p127
      %p129 = scmp.ne.s32.totalorder %s121, %s123
      %p130 = scmp.eq.s32.totalorder %s29, 1
      %p131 = por %p129, %p130
      %p132 = scmp.ne.s32.totalorder %s123, %s124
      %p133 = scmp.eq.s32.totalorder %s29, 0
      %p134 = por %p132, %p133
      %p135 = scmp.ne.s32.totalorder %s123, %s124
      %p136 = scmp.eq.s32.totalorder %s30, 1
      %p137 = por %p135, %p136
      %p139 = scmp.ne.s32.totalorder %s124, %s138
      %p140 = scmp.eq.s32.totalorder %s30, 0
      %p141 = por %p139, %p140
      %s143 = sadd.s32 %s142, 1
      %p146 = scmp.eq.s32.totalorder %s24, 1
      %p147 = scmp.ne.s32.totalorder %s142, %s144
      %p148 = scmp.eq.s32.totalorder %s24, 0
      %p149 = por %p147, %p148
      %p150 = scmp.ne.s32.totalorder %s142, %s144
      %p151 = scmp.eq.s32.totalorder %s29, 1
      %p152 = por %p150, %p151
      %p153 = scmp.ne.s32.totalorder %s144, %s145
      %p154 = scmp.eq.s32.totalorder %s29, 0
      %p155 = por %p153, %p154
      %p156 = scmp.ne.s32.totalorder %s144, %s145
      %p157 = scmp.eq.s32.totalorder %s30, 1
      %p158 = por %p156, %p157
      %p160 = scmp.ne.s32.totalorder %s145, %s159
      %p161 = scmp.eq.s32.totalorder %s30, 0
      %p162 = por %p160, %p161
      %s164 = sadd.s32 %s163, 1
      %p167 = scmp.eq.s32.totalorder %s24, 1
      %p168 = scmp.ne.s32.totalorder %s163, %s165
      %p169 = scmp.eq.s32.totalorder %s24, 0
      %p170 = por %p168, %p169
      %p171 = scmp.ne.s32.totalorder %s163, %s165
      %p172 = scmp.eq.s32.totalorder %s29, 1
      %p173 = por %p171, %p172
      %p174 = scmp.ne.s32.totalorder %s165, %s166
      %p175 = scmp.eq.s32.totalorder %s29, 0
      %p176 = por %p174, %p175
      %p177 = scmp.ne.s32.totalorder %s165, %s166
      %p178 = scmp.eq.s32.totalorder %s30, 1
      %p179 = por %p177, %p178
      %p181 = scmp.ne.s32.totalorder %s166, %s180
      %p182 = scmp.eq.s32.totalorder %s30, 0
      %p183 = por %p181, %p182
      %s185 = sadd.s32 %s184, 1
      %p188 = scmp.eq.s32.totalorder %s24, 1
      %p189 = scmp.ne.s32.totalorder %s184, %s186
      %p190 = scmp.eq.s32.totalorder %s24, 0
      %p191 = por %p189, %p190
      %p192 = scmp.ne.s32.totalorder %s184, %s186
      %p193 = scmp.eq.s32.totalorder %s29, 1
      %p194 = por %p192, %p193
      %p195 = scmp.ne.s32.totalorder %s186, %s187
      %p196 = scmp.eq.s32.totalorder %s29, 0
      %p197 = por %p195, %p196
      %p198 = scmp.ne.s32.totalorder %s186, %s187
      %p199 = scmp.eq.s32.totalorder %s30, 1
      %p200 = por %p198, %p199
      %p202 = scmp.ne.s32.totalorder %s187, %s201
      %p203 = scmp.eq.s32.totalorder %s30, 0
      %p204 = por %p202, %p203
      %s206 = sadd.s32 %s205, 1
      %p209 = scmp.eq.s32.totalorder %s24, 1
      %p210 = scmp.ne.s32.totalorder %s205, %s207
      %p211 = scmp.eq.s32.totalorder %s24, 0
      %p212 = por %p210, %p211
      %p213 = scmp.ne.s32.totalorder %s205, %s207
      %p214 = scmp.eq.s32.totalorder %s29, 1
      %p215 = por %p213, %p214
      %p216 = scmp.ne.s32.totalorder %s207, %s208
      %p217 = scmp.eq.s32.totalorder %s29, 0
      %p218 = por %p216, %p217
      %p219 = scmp.ne.s32.totalorder %s207, %s208
      %p220 = scmp.eq.s32.totalorder %s30, 1
      %p221 = por %p219, %p220
      %p223 = scmp.ne.s32.totalorder %s208, %s222
      %p224 = scmp.eq.s32.totalorder %s30, 0
      %p225 = por %p223, %p224
      %s227 = sadd.s32 %s226, 1
      %p230 = scmp.eq.s32.totalorder %s24, 1
      %p231 = scmp.ne.s32.totalorder %s226, %s228
      %p232 = scmp.eq.s32.totalorder %s24, 0
      %p233 = por %p231, %p232
      %p234 = scmp.ne.s32.totalorder %s226, %s228
      %p235 = scmp.eq.s32.totalorder %s29, 1
      %p236 = por %p234, %p235
      %p237 = scmp.ne.s32.totalorder %s228, %s229
      %p238 = scmp.eq.s32.totalorder %s29, 0
      %p239 = por %p237, %p238
      %p240 = scmp.ne.s32.totalorder %s228, %s229
      %p241 = scmp.eq.s32.totalorder %s30, 1
      %p242 = por %p240, %p241
      %p244 = scmp.ne.s32.totalorder %s229, %s243
      %p245 = scmp.eq.s32.totalorder %s30, 0
      %p246 = por %p244, %p245
      %s247 = ssub.s32 %s24, %s31
      %p248 = scmp.eq.s32.totalorder %s247, 0
      %s250 = sadd.s32 %s249, 1
      %s251 = scalar_select %p248, %s249, %s250
      %p254 = pneg %p248
      %p255 = scmp.eq.s32.totalorder %s24, 1
      %p256 = por %p254, %p255
      %p257 = scmp.ne.s32.totalorder %s249, %s252
      %p258 = scmp.eq.s32.totalorder %s24, 0
      %p259 = por %p257, %p258
      %p260 = scmp.ne.s32.totalorder %s249, %s252
      %p261 = scmp.eq.s32.totalorder %s29, 1
      %p262 = por %p260, %p261
      %p263 = scmp.ne.s32.totalorder %s252, %s253
      %p264 = scmp.eq.s32.totalorder %s29, 0
      %p265 = por %p263, %p264
      %p266 = scmp.ne.s32.totalorder %s252, %s253
      %p267 = scmp.eq.s32.totalorder %s30, 1
      %p268 = por %p266, %p267
      %p270 = scmp.ne.s32.totalorder %s253, %s269
      %p271 = scmp.eq.s32.totalorder %s30, 0
      %p272 = por %p270, %p271
      %p273 = scmp.le.s32.totalorder 1, %s24
      %p274 = scmp.lt.s32.totalorder %s24, 3
      %p275 = pnand %p273, %p274
      %p276 = pneg %p275
      // Predicated region
      $region9: #{tpu_custom_call.1} parent=5 // pred_check
        _
      $region10: #{tpu_custom_call.1} parent=5 // pred_check_branch
        %278 = sbr.rel (%p275) target = $region12
      $region11: #{tpu_custom_call.1} parent=5 // pred_region
        %s279 = ssub.s32 %s24, 1
        // Predicated region
        $region13: #{tpu_custom_call.1} parent=11 // pred_check
          %p280 = pneg %p71
        $region14: #{tpu_custom_call.1} parent=11 // pred_check_branch
          %282 = sbr.rel (%p280) target = $region16
        $region15: #{tpu_custom_call.1} parent=11 // pred_region
          _
        $region16: #{tpu_custom_call.1} parent=11 // pred_fallthru
          _
        // Predicated region
        $region17: #{tpu_custom_call.1} parent=11 // pred_check
          %p283 = pneg %p92
        $region18: #{tpu_custom_call.1} parent=11 // pred_check_branch
          %285 = sbr.rel (%p283) target = $region20
        $region19: #{tpu_custom_call.1} parent=11 // pred_region
          _
        $region20: #{tpu_custom_call.1} parent=11 // pred_fallthru
          _
        // Predicated region
        $region21: #{tpu_custom_call.1} parent=11 // pred_check
          %p286 = pneg %p113
        $region22: #{tpu_custom_call.1} parent=11 // pred_check_branch
          %288 = sbr.rel (%p286) target = $region24
        $region23: #{tpu_custom_call.1} parent=11 // pred_region
          %s290 = ssub.s32 36864, 36864
          %291 = vsyncadd [#allocation7], %s290
          %s292 = sshll.u32 [#allocation6], 4
          %s293 = int_to_ptr.vmem [resolvable:$true] %s292
          %298 = dma.hbm_to_vmem [thread:$0]  %s3, 36864, %s293, [#allocation7], 128, 128, 8
        $region24: #{tpu_custom_call.1} parent=11 // pred_fallthru
          _
        // Predicated region
        $region25: #{tpu_custom_call.1} parent=11 // pred_check
          %p299 = pneg %p134
        $region26: #{tpu_custom_call.1} parent=11 // pred_check_branch
          %301 = sbr.rel (%p299) target = $region28
        $region27: #{tpu_custom_call.1} parent=11 // pred_region
          _
        $region28: #{tpu_custom_call.1} parent=11 // pred_fallthru
          _
        // Predicated region
        $region29: #{tpu_custom_call.1} parent=11 // pred_check
          %p302 = pneg %p155
        $region30: #{tpu_custom_call.1} parent=11 // pred_check_branch
          %304 = sbr.rel (%p302) target = $region32
        $region31: #{tpu_custom_call.1} parent=11 // pred_region
          _
        $region32: #{tpu_custom_call.1} parent=11 // pred_fallthru
          _
        // Predicated region
        $region33: #{tpu_custom_call.1} parent=11 // pred_check
          %p305 = pneg %p176
        $region34: #{tpu_custom_call.1} parent=11 // pred_check_branch
          %307 = sbr.rel (%p305) target = $region36
        $region35: #{tpu_custom_call.1} parent=11 // pred_region
          %s309 = ssub.s32 256, 256
          %310 = vsyncadd [#allocation7], %s309
          %s311 = sshll.u32 [#allocation8], 4
          %s312 = int_to_ptr.vmem [resolvable:$true] %s311
          %317 = dma.hbm_to_vmem [thread:$0]  %s6, 256, %s312, [#allocation7], 64, 64, 4
        $region36: #{tpu_custom_call.1} parent=11 // pred_fallthru
          _
        // Predicated region
        $region37: #{tpu_custom_call.1} parent=11 // pred_check
          %p318 = pneg %p197
        $region38: #{tpu_custom_call.1} parent=11 // pred_check_branch
          %320 = sbr.rel (%p318) target = $region40
        $region39: #{tpu_custom_call.1} parent=11 // pred_region
          _
        $region40: #{tpu_custom_call.1} parent=11 // pred_fallthru
          _
        // Predicated region
        $region41: #{tpu_custom_call.1} parent=11 // pred_check
          %p321 = pneg %p218
        $region42: #{tpu_custom_call.1} parent=11 // pred_check_branch
          %323 = sbr.rel (%p321) target = $region44
        $region43: #{tpu_custom_call.1} parent=11 // pred_region
          _
        $region44: #{tpu_custom_call.1} parent=11 // pred_fallthru
          _
        // Predicated region
        $region45: #{tpu_custom_call.1} parent=11 // pred_check
          %p324 = pneg %p239
        $region46: #{tpu_custom_call.1} parent=11 // pred_check_branch
          %326 = sbr.rel (%p324) target = $region48
        $region47: #{tpu_custom_call.1} parent=11 // pred_region
          %s328 = ssub.s32 512, 512
          %329 = vsyncadd [#allocation10], %s328
          %s330 = sshll.u32 [#allocation9], 4
          %s331 = int_to_ptr.vmem [resolvable:$true] %s330
          %336 = dma.hbm_to_vmem [thread:$0]  %s9, 512, %s331, [#allocation10], 128, 128, 8
        $region48: #{tpu_custom_call.1} parent=11 // pred_fallthru
          _
      $region12: #{tpu_custom_call.1} parent=5 // pred_fallthru
        _
      %p337 = scmp.lt.s32.totalorder %s24, 2
      // Predicated region
      $region49: #{tpu_custom_call.1} parent=5 // pred_check
        %p338 = pneg %p337
      $region50: #{tpu_custom_call.1} parent=5 // pred_check_branch
        %340 = sbr.rel (%p338) target = $region52
      $region51: #{tpu_custom_call.1} parent=5 // pred_region
        // Predicated region
        $region53: #{tpu_custom_call.1} parent=51 // pred_check
          %p341 = pneg %p44
        $region54: #{tpu_custom_call.1} parent=51 // pred_check_branch
          %343 = sbr.rel (%p341) target = $region56
        $region55: #{tpu_custom_call.1} parent=51 // pred_region
          %s344 = sand.u32 %s34, 1
          %s345 = scalar_lea.sflag [#allocation4], %s344
          %s346 = sand.u32 %s34, 1
          %s347 = smul.addr %s346, 32
          %s348 = scalar_lea.vmem [#allocation3], %s347
          %s350 = ssub.s32 512, 512
          %351 = vsyncadd %s345, %s350
          %s352 = smul.addr %s24, 8
          %s353 = smul.addr %s352, 64
          %s354 = scalar_lea.hbm %s0, %s353
          %s355 = sshll.u32 %s348, 4
          %s356 = int_to_ptr.vmem [resolvable:$true] %s355
          %361 = dma.hbm_to_vmem [thread:$0]  %s354, 512, %s356, %s345, 128, 128, 8
        $region56: #{tpu_custom_call.1} parent=51 // pred_fallthru
          _
      $region52: #{tpu_custom_call.1} parent=5 // pred_fallthru
        _
      %p362 = scmp.le.s32.totalorder 1, %s24
      %p363 = scmp.lt.s32.totalorder %s24, 3
      %p364 = pnand %p362, %p363
      %p365 = pneg %p364
      // Predicated region
      $region57: #{tpu_custom_call.1} parent=5 // pred_check
        _
      $region58: #{tpu_custom_call.1} parent=5 // pred_check_branch
        %367 = sbr.rel (%p364) target = $region60
      $region59: #{tpu_custom_call.1} parent=5 // pred_region
        %s368 = ssub.s32 %s24, 1
        %s369 = sand.u32 %s37, 1
        %s370 = scalar_lea.sflag [#allocation4], %s369
        %s371 = sand.u32 %s37, 1
        %s372 = smul.addr %s371, 32
        %s373 = scalar_lea.vmem [#allocation3], %s372
        // Predicated region
        $region61: #{tpu_custom_call.1} parent=59 // pred_check
          %p374 = pneg %p50
        $region62: #{tpu_custom_call.1} parent=59 // pred_check_branch
          %376 = sbr.rel (%p374) target = $region64
        $region63: #{tpu_custom_call.1} parent=59 // pred_region
          %377 = dma.done %s370, 512
        $region64: #{tpu_custom_call.1} parent=59 // pred_fallthru
          _
        // Predicated region
        $region65: #{tpu_custom_call.1} parent=59 // pred_check
          %p378 = pneg %p113
        $region66: #{tpu_custom_call.1} parent=59 // pred_check_branch
          %380 = sbr.rel (%p378) target = $region68
        $region67: #{tpu_custom_call.1} parent=59 // pred_region
          %381 = dma.done [#allocation7], 36864
        $region68: #{tpu_custom_call.1} parent=59 // pred_fallthru
          _
        // Predicated region
        $region69: #{tpu_custom_call.1} parent=59 // pred_check
          %p382 = pneg %p176
        $region70: #{tpu_custom_call.1} parent=59 // pred_check_branch
          %384 = sbr.rel (%p382) target = $region72
        $region71: #{tpu_custom_call.1} parent=59 // pred_region
          %385 = dma.done [#allocation7], 256
        $region72: #{tpu_custom_call.1} parent=59 // pred_fallthru
          _
        // Predicated region
        $region73: #{tpu_custom_call.1} parent=59 // pred_check
          %p386 = pneg %p239
        $region74: #{tpu_custom_call.1} parent=59 // pred_check_branch
          %388 = sbr.rel (%p386) target = $region76
        $region75: #{tpu_custom_call.1} parent=59 // pred_region
          %389 = dma.done [#allocation10], 512
        $region76: #{tpu_custom_call.1} parent=59 // pred_fallthru
          _
        %s390 = sand.u32 %s37, 1
        %s391 = scalar_lea.sflag [#allocation4], %s390
        %s392 = sand.u32 %s37, 1
        %s393 = smul.addr %s392, 32
        %s394 = scalar_lea.vmem [#allocation3], %s393
        %p395 = pneg %p50
        %p396 = pneg %p47
        %p397 = pneg %p71
        %p398 = pneg %p68
        %p399 = pneg %p92
        %p400 = pneg %p89
        %p401 = pneg %p113
        %p402 = pneg %p110
        %p403 = pneg %p134
        %p404 = pneg %p131
        %p405 = pneg %p155
        %p406 = pneg %p152
        %p407 = pneg %p176
        %p408 = pneg %p173
        %p409 = pneg %p197
        %p410 = pneg %p194
        %p411 = pneg %p218
        %p412 = pneg %p215
        %p413 = pneg %p239
        %p414 = pneg %p236
        %p415 = pneg %p265
        %p416 = pneg %p262
        %s417 = sand.u32 %s252, 1
        %s418 = scalar_lea.sflag [#allocation5], %s417
        %s419 = sand.u32 %s252, 1
        %s420 = smul.addr %s419, 64
        %s421 = scalar_lea.vmem [#allocation11], %s420
        %v423 = vld [vmem:[%s373] sm:$0xff]
        %v424 = vld [vmem:[%s373 + $0x8] sm:$0xff]
        %v425 = vld [vmem:[%s373 + $0x10] sm:$0xff]
        %v426 = vld [vmem:[%s373 + $0x18] sm:$0xff]
        %v427 = vld [vmem:[%s4] sm:$0xff]
        %v428 = vld [vmem:[%s4 + $0x8] sm:$0xff]
        %v429 = vld [vmem:[%s4 + $0x10] sm:$0xff]
        %v430 = vld [vmem:[%s4 + $0x18] sm:$0xff]
        %v431 = vld [vmem:[%s4 + $0x20] sm:$0xff]
        %v432 = vld [vmem:[%s4 + $0x28] sm:$0xff]
        %v433 = vld [vmem:[%s4 + $0x30] sm:$0xff]
        %v434 = vld [vmem:[%s4 + $0x38] sm:$0xff]
        %v435 = vld [vmem:[%s4 + $0x40] sm:$0xff]
        %v436 = vld [vmem:[%s4 + $0x48] sm:$0xff]
        %v437 = vld [vmem:[%s4 + $0x50] sm:$0xff]
        %v438 = vld [vmem:[%s4 + $0x58] sm:$0xff]
        %v439 = vld [vmem:[%s1] sm:$0xf]
        %v440 = vld [vmem:[%s1 + $0x4] sm:$0xf]
        %v441 = vld [vmem:[%s1 + $0x8] sm:$0xf]
        %v442 = vld [vmem:[%s1 + $0xc] sm:$0xf]
        %v443 = vld [vmem:[%s2] sm:$0xff]
        %v444 = vld [vmem:[%s2 + $0x8] sm:$0xff]
        %v445 = vld [vmem:[%s2 + $0x10] sm:$0xff]
        %v446 = vld [vmem:[%s2 + $0x18] sm:$0xff]
        %448 = vset.pattern.permute.xlu0 0
        %449 = vperm.xlu0 %448, %v443
        %v450 = vpop.permute.xlu0 %449
        %453 = vset.pattern.permute.xlu0 0
        %454 = vperm.xlu0 %453, %v444
        %v455 = vpop.permute.xlu0 %454
        %458 = vset.pattern.permute.xlu0 0
        %459 = vperm.xlu0 %458, %v445
        %v460 = vpop.permute.xlu0 %459
        %463 = vset.pattern.permute.xlu0 0
        %464 = vperm.xlu0 %463, %v446
        %v465 = vpop.permute.xlu0 %464
        %v471 = vunpack.c.l.b16 %v439
        %v472 = vunpack.c.l.b16 %v440
        %v473 = vunpack.c.l.b16 %v441
        %v474 = vunpack.c.l.b16 %v442
        %v475 = vpack.c.b16 %v472, %v471
        %v476 = vpack.c.b16 %v474, %v473
        %v481 = vunpack.c.l.b16 %v423
        %v482 = vunpack.c.h.b16 %v423
        %v483 = vunpack.c.l.b16 %v424
        %v484 = vunpack.c.h.b16 %v424
        %v485 = vunpack.c.l.b16 %v425
        %v486 = vunpack.c.h.b16 %v425
        %v487 = vunpack.c.l.b16 %v426
        %v488 = vunpack.c.h.b16 %v426
        %v489 = vpack.c.b16 %v483, %v481
        %v490 = vpack.c.b16 %v484, %v482
        %v491 = vpack.c.b16 %v487, %v485
        %v492 = vpack.c.b16 %v488, %v486
        %vm497 = vcmask 261120
        %v499 = vsel %vm497, %v475, 0
        %v502 = vsel %vm497, %v476, 0
        %504 = vmatprep.subr.bf16.mxu0 %v490
        %505 = vmatpush1.bf16.msra.mxu0 %v489
        %506 = vmatprep.subr.bf16.mxu0 %v492
        %507 = vmatpush1.bf16.msra.mxu0 %v491
        %508 = vmatprep.subr.bf16.mxu0 0
        %509 = vmatpush1.bf16.msra.mxu0 0
        %510 = vmatprep.subr.bf16.mxu0 0
        %511 = vmatpush1.bf16.msra.mxu0 0
        %512 = vmatprep.subr.bf16.mxu0 0
        %513 = vmatpush1.bf16.msra.mxu0 0
        %514 = vmatprep.subr.bf16.mxu0 0
        %515 = vmatpush1.bf16.msra.mxu0 0
        %516 = vmatprep.subr.bf16.mxu0 0
        %517 = vmatpush1.bf16.msra.mxu0 0
        %518 = vmatprep.subr.bf16.mxu0 0
        %519 = vmatpush1.bf16.msra.mxu0 0
        %520 = vmatprep.subr.bf16.mxu0 0
        %521 = vmatpush1.bf16.msra.mxu0 0
        %522 = vmatprep.subr.bf16.mxu0 0
        %523 = vmatpush1.bf16.msra.mxu0 0
        %524 = vmatprep.subr.bf16.mxu0 0
        %525 = vmatpush1.bf16.msra.mxu0 0
        %526 = vmatprep.subr.bf16.mxu0 0
        %527 = vmatpush1.bf16.msra.mxu0 0
        %528 = vmatprep.subr.bf16.mxu0 0
        %529 = vmatpush1.bf16.msra.mxu0 0
        %530 = vmatprep.subr.bf16.mxu0 0
        %531 = vmatpush1.bf16.msra.mxu0 0
        %532 = vmatprep.subr.bf16.mxu0 0
        %533 = vmatpush1.bf16.msra.mxu0 0
        %534 = vmatprep.subr.bf16.mxu0 0
        %535 = vmatpush1.bf16.msra.mxu0 0
        %536 = vmatprep.mubr.bf16.mxu0 0
        %537 = vmatmul.mubr.bf16.gmra.mrb[0].mxu0 %v499
        %v538 = vpop.f32.mrb[0].mxu0
        %v539 = vadd.f32 %v450, %v538
        %v540 = vpop.f32.mrb[0].mxu0
        %v541 = vadd.f32 %v450, %v540
        %v542 = vpop.f32.mrb[0].mxu0
        %v543 = vadd.f32 %v455, %v542
        %v544 = vpop.f32.mrb[0].mxu0
        %v545 = vadd.f32 %v455, %v544
        %546 = vmatprep.mubr.bf16.mxu0 0
        %547 = vmatmul.mubr.bf16.gmra.mrb[0].mxu0 %v502
        %v548 = vpop.f32.mrb[0].mxu0
        %v549 = vadd.f32 %v460, %v548
        %v550 = vpop.f32.mrb[0].mxu0
        %v551 = vadd.f32 %v460, %v550
        %v552 = vpop.f32.mrb[0].mxu0
        %v553 = vadd.f32 %v465, %v552
        %v554 = vpop.f32.mrb[0].mxu0
        %v555 = vadd.f32 %v465, %v554
        %556 = vdwg.mxu0
        %v557 = vpack.c.bf16 %v543, %v539
        %v558 = vpack.c.bf16 %v545, %v541
        %v559 = vpack.c.bf16 %v553, %v549
        %v560 = vpack.c.bf16 %v555, %v551
        %v561 = vld [vmem:[#allocation6] sm:$0xff]
        %v562 = vld [vmem:[#allocation6 + $0x8] sm:$0xff]
        %v563 = vld [vmem:[#allocation6 + $0x10] sm:$0xff]
        %v564 = vld [vmem:[#allocation6 + $0x18] sm:$0xff]
        %v565 = vld [vmem:[#allocation6 + $0x20] sm:$0xff]
        %v566 = vld [vmem:[#allocation6 + $0x28] sm:$0xff]
        %v567 = vld [vmem:[#allocation6 + $0x30] sm:$0xff]
        %v568 = vld [vmem:[#allocation6 + $0x38] sm:$0xff]
        %v569 = vld [vmem:[#allocation6 + $0x40] sm:$0xff]
        %v570 = vld [vmem:[#allocation6 + $0x48] sm:$0xff]
        %v571 = vld [vmem:[#allocation6 + $0x50] sm:$0xff]
        %v572 = vld [vmem:[#allocation6 + $0x58] sm:$0xff]
        %v573 = vld [vmem:[#allocation6 + $0x60] sm:$0xff]
        %v574 = vld [vmem:[#allocation6 + $0x68] sm:$0xff]
        %v575 = vld [vmem:[#allocation6 + $0x70] sm:$0xff]
        %v576 = vld [vmem:[#allocation6 + $0x78] sm:$0xff]
        %v577 = vld [vmem:[#allocation6 + $0x80] sm:$0xff]
        %v578 = vld [vmem:[#allocation6 + $0x88] sm:$0xff]
        %v579 = vld [vmem:[#allocation6 + $0x90] sm:$0xff]
        %v580 = vld [vmem:[#allocation6 + $0x98] sm:$0xff]
        %v581 = vld [vmem:[#allocation6 + $0xa0] sm:$0xff]
        %v582 = vld [vmem:[#allocation6 + $0xa8] sm:$0xff]
        %v583 = vld [vmem:[#allocation6 + $0xb0] sm:$0xff]
        %v584 = vld [vmem:[#allocation6 + $0xb8] sm:$0xff]
        %v585 = vld [vmem:[#allocation6 + $0xc0] sm:$0xff]
        %v586 = vld [vmem:[#allocation6 + $0xc8] sm:$0xff]
        %v587 = vld [vmem:[#allocation6 + $0xd0] sm:$0xff]
        %v588 = vld [vmem:[#allocation6 + $0xd8] sm:$0xff]
        %v589 = vld [vmem:[#allocation6 + $0xe0] sm:$0xff]
        %v590 = vld [vmem:[#allocation6 + $0xe8] sm:$0xff]
        %v591 = vld [vmem:[#allocation6 + $0xf0] sm:$0xff]
        %v592 = vld [vmem:[#allocation6 + $0xf8] sm:$0xff]
        %v625 = vunpack.c.l.b16 %v561
        %v626 = vunpack.c.h.b16 %v561
        %v627 = vunpack.c.l.b16 %v562
        %v628 = vunpack.c.h.b16 %v562
        %v629 = vunpack.c.l.b16 %v563
        %v630 = vunpack.c.h.b16 %v563
        %v631 = vunpack.c.l.b16 %v564
        %v632 = vunpack.c.h.b16 %v564
        %v633 = vunpack.c.l.b16 %v565
        %v634 = vunpack.c.h.b16 %v565
        %v635 = vunpack.c.l.b16 %v566
        %v636 = vunpack.c.h.b16 %v566
        %v637 = vunpack.c.l.b16 %v567
        %v638 = vunpack.c.h.b16 %v567
        %v639 = vunpack.c.l.b16 %v568
        %v640 = vunpack.c.h.b16 %v568
        %v641 = vunpack.c.l.b16 %v569
        %v642 = vunpack.c.h.b16 %v569
        %v643 = vunpack.c.l.b16 %v570
        %v644 = vunpack.c.h.b16 %v570
        %v645 = vunpack.c.l.b16 %v571
        %v646 = vunpack.c.h.b16 %v571
        %v647 = vunpack.c.l.b16 %v572
        %v648 = vunpack.c.h.b16 %v572
        %v649 = vunpack.c.l.b16 %v573
        %v650 = vunpack.c.h.b16 %v573
        %v651 = vunpack.c.l.b16 %v574
        %v652 = vunpack.c.h.b16 %v574
        %v653 = vunpack.c.l.b16 %v575
        %v654 = vunpack.c.h.b16 %v575
        %v655 = vunpack.c.l.b16 %v576
        %v656 = vunpack.c.h.b16 %v576
        %v657 = vunpack.c.l.b16 %v577
        %v658 = vunpack.c.h.b16 %v577
        %v659 = vunpack.c.l.b16 %v578
        %v660 = vunpack.c.h.b16 %v578
        %v661 = vunpack.c.l.b16 %v579
        %v662 = vunpack.c.h.b16 %v579
        %v663 = vunpack.c.l.b16 %v580
        %v664 = vunpack.c.h.b16 %v580
        %v665 = vunpack.c.l.b16 %v581
        %v666 = vunpack.c.h.b16 %v581
        %v667 = vunpack.c.l.b16 %v582
        %v668 = vunpack.c.h.b16 %v582
        %v669 = vunpack.c.l.b16 %v583
        %v670 = vunpack.c.h.b16 %v583
        %v671 = vunpack.c.l.b16 %v584
        %v672 = vunpack.c.h.b16 %v584
        %v673 = vunpack.c.l.b16 %v585
        %v674 = vunpack.c.h.b16 %v585
        %v675 = vunpack.c.l.b16 %v586
        %v676 = vunpack.c.h.b16 %v586
        %v677 = vunpack.c.l.b16 %v587
        %v678 = vunpack.c.h.b16 %v587
        %v679 = vunpack.c.l.b16 %v588
        %v680 = vunpack.c.h.b16 %v588
        %v681 = vunpack.c.l.b16 %v589
        %v682 = vunpack.c.h.b16 %v589
        %v683 = vunpack.c.l.b16 %v590
        %v684 = vunpack.c.h.b16 %v590
        %v685 = vunpack.c.l.b16 %v591
        %v686 = vunpack.c.h.b16 %v591
        %v687 = vunpack.c.l.b16 %v592
        %v688 = vunpack.c.h.b16 %v592
        %v689 = vpack.c.b16 %v627, %v625
        %v690 = vpack.c.b16 %v628, %v626
        %v691 = vpack.c.b16 %v631, %v629
        %v692 = vpack.c.b16 %v632, %v630
        %v693 = vpack.c.b16 %v635, %v633
        %v694 = vpack.c.b16 %v636, %v634
        %v695 = vpack.c.b16 %v639, %v637
        %v696 = vpack.c.b16 %v640, %v638
        %v697 = vpack.c.b16 %v643, %v641
        %v698 = vpack.c.b16 %v644, %v642
        %v699 = vpack.c.b16 %v647, %v645
        %v700 = vpack.c.b16 %v648, %v646
        %v701 = vpack.c.b16 %v651, %v649
        %v702 = vpack.c.b16 %v652, %v650
        %v703 = vpack.c.b16 %v655, %v653
        %v704 = vpack.c.b16 %v656, %v654
        %v705 = vpack.c.b16 %v659, %v657
        %v706 = vpack.c.b16 %v660, %v658
        %v707 = vpack.c.b16 %v663, %v661
        %v708 = vpack.c.b16 %v664, %v662
        %v709 = vpack.c.b16 %v667, %v665
        %v710 = vpack.c.b16 %v668, %v666
        %v711 = vpack.c.b16 %v671, %v669
        %v712 = vpack.c.b16 %v672, %v670
        %v713 = vpack.c.b16 %v675, %v673
        %v714 = vpack.c.b16 %v676, %v674
        %v715 = vpack.c.b16 %v679, %v677
        %v716 = vpack.c.b16 %v680, %v678
        %v717 = vpack.c.b16 %v683, %v681
        %v718 = vpack.c.b16 %v684, %v682
        %v719 = vpack.c.b16 %v687, %v685
        %v720 = vpack.c.b16 %v688, %v686
        %753 = vmatprep.subr.bf16.mxu0 %v690
        %754 = vmatpush1.bf16.msra.mxu0 %v689
        %755 = vmatprep.subr.bf16.mxu0 %v692
        %756 = vmatpush1.bf16.msra.mxu0 %v691
        %757 = vmatprep.subr.bf16.mxu0 %v694
        %758 = vmatpush1.bf16.msra.mxu0 %v693
        %759 = vmatprep.subr.bf16.mxu0 %v696
        %760 = vmatpush1.bf16.msra.mxu0 %v695
        %761 = vmatprep.subr.bf16.mxu0 %v698
        %762 = vmatpush1.bf16.msra.mxu0 %v697
        %763 = vmatprep.subr.bf16.mxu0 %v700
        %764 = vmatpush1.bf16.msra.mxu0 %v699
        %765 = vmatprep.subr.bf16.mxu0 %v702
        %766 = vmatpush1.bf16.msra.mxu0 %v701
        %767 = vmatprep.subr.bf16.mxu0 %v704
        %768 = vmatpush1.bf16.msra.mxu0 %v703
        %769 = vmatprep.subr.bf16.mxu0 %v706
        %770 = vmatpush1.bf16.msra.mxu0 %v705
        %771 = vmatprep.subr.bf16.mxu0 %v708
        %772 = vmatpush1.bf16.msra.mxu0 %v707
        %773 = vmatprep.subr.bf16.mxu0 %v710
        %774 = vmatpush1.bf16.msra.mxu0 %v709
        %775 = vmatprep.subr.bf16.mxu0 %v712
        %776 = vmatpush1.bf16.msra.mxu0 %v711
        %777 = vmatprep.subr.bf16.mxu0 %v714
        %778 = vmatpush1.bf16.msra.mxu0 %v713
        %779 = vmatprep.subr.bf16.mxu0 %v716
        %780 = vmatpush1.bf16.msra.mxu0 %v715
        %781 = vmatprep.subr.bf16.mxu0 %v718
        %782 = vmatpush1.bf16.msra.mxu0 %v717
        %783 = vmatprep.subr.bf16.mxu0 %v720
        %784 = vmatpush1.bf16.msra.mxu0 %v719
        %785 = vmatprep.mubr.bf16.mxu0 %v558
        %786 = vmatmul.mubr.bf16.gmra.mrb[0].mxu0 %v557
        %v787 = vpop.f32.mrb[0].mxu0
        %v788 = vadd.f32 0.0, %v787
        %v789 = vpop.f32.mrb[0].mxu0
        %v790 = vadd.f32 0.0, %v789
        %v791 = vpop.f32.mrb[0].mxu0
        %v792 = vadd.f32 0.0, %v791
        %v793 = vpop.f32.mrb[0].mxu0
        %v794 = vadd.f32 0.0, %v793
        %795 = vmatprep.mubr.bf16.mxu0 %v560
        %796 = vmatmul.mubr.bf16.gmra.mrb[0].mxu0 %v559
        %v797 = vpop.f32.mrb[0].mxu0
        %v798 = vadd.f32 0.0, %v797
        %v799 = vpop.f32.mrb[0].mxu0
        %v800 = vadd.f32 0.0, %v799
        %v801 = vpop.f32.mrb[0].mxu0
        %v802 = vadd.f32 0.0, %v801
        %v803 = vpop.f32.mrb[0].mxu0
        %v804 = vadd.f32 0.0, %v803
        %805 = vdwg.mxu0
        %807 = vset.pattern.permute.xlu0 0
        %808 = vperm.xlu0 %807, %v427
        %v809 = vpop.permute.xlu0 %808
        %812 = vset.pattern.permute.xlu0 0
        %813 = vperm.xlu0 %812, %v428
        %v814 = vpop.permute.xlu0 %813
        %817 = vset.pattern.permute.xlu0 0
        %818 = vperm.xlu0 %817, %v429
        %v819 = vpop.permute.xlu0 %818
        %822 = vset.pattern.permute.xlu0 0
        %823 = vperm.xlu0 %822, %v430
        %v824 = vpop.permute.xlu0 %823
        %v826 = vmul.f32 %v788, %v809
        %v827 = vmul.f32 %v790, %v809
        %v828 = vmul.f32 %v792, %v814
        %v829 = vmul.f32 %v794, %v814
        %v830 = vmul.f32 %v798, %v819
        %v831 = vmul.f32 %v800, %v819
        %v832 = vmul.f32 %v802, %v824
        %v833 = vmul.f32 %v804, %v824
        %v834 = vadd.f32 %v826, 0.0
        %v835 = vadd.f32 %v827, 0.0
        %v836 = vadd.f32 %v828, 0.0
        %v837 = vadd.f32 %v829, 0.0
        %v838 = vadd.f32 %v830, 0.0
        %v839 = vadd.f32 %v831, 0.0
        %v840 = vadd.f32 %v832, 0.0
        %v841 = vadd.f32 %v833, 0.0
        %s842 = scalar_lea.vmem [#allocation6], 256
        %v843 = vld [vmem:[%s842] sm:$0xff]
        %v844 = vld [vmem:[%s842 + $0x8] sm:$0xff]
        %v845 = vld [vmem:[%s842 + $0x10] sm:$0xff]
        %v846 = vld [vmem:[%s842 + $0x18] sm:$0xff]
        %v847 = vld [vmem:[%s842 + $0x20] sm:$0xff]
        %v848 = vld [vmem:[%s842 + $0x28] sm:$0xff]
        %v849 = vld [vmem:[%s842 + $0x30] sm:$0xff]
        %v850 = vld [vmem:[%s842 + $0x38] sm:$0xff]
        %v851 = vld [vmem:[%s842 + $0x40] sm:$0xff]
        %v852 = vld [vmem:[%s842 + $0x48] sm:$0xff]
        %v853 = vld [vmem:[%s842 + $0x50] sm:$0xff]
        %v854 = vld [vmem:[%s842 + $0x58] sm:$0xff]
        %v855 = vld [vmem:[%s842 + $0x60] sm:$0xff]
        %v856 = vld [vmem:[%s842 + $0x68] sm:$0xff]
        %v857 = vld [vmem:[%s842 + $0x70] sm:$0xff]
        %v858 = vld [vmem:[%s842 + $0x78] sm:$0xff]
        %v859 = vld [vmem:[%s842 + $0x80] sm:$0xff]
        %v860 = vld [vmem:[%s842 + $0x88] sm:$0xff]
        %v861 = vld [vmem:[%s842 + $0x90] sm:$0xff]
        %v862 = vld [vmem:[%s842 + $0x98] sm:$0xff]
        %v863 = vld [vmem:[%s842 + $0xa0] sm:$0xff]
        %v864 = vld [vmem:[%s842 + $0xa8] sm:$0xff]
        %v865 = vld [vmem:[%s842 + $0xb0] sm:$0xff]
        %v866 = vld [vmem:[%s842 + $0xb8] sm:$0xff]
        %v867 = vld [vmem:[%s842 + $0xc0] sm:$0xff]
        %v868 = vld [vmem:[%s842 + $0xc8] sm:$0xff]
        %v869 = vld [vmem:[%s842 + $0xd0] sm:$0xff]
        %v870 = vld [vmem:[%s842 + $0xd8] sm:$0xff]
        %v871 = vld [vmem:[%s842 + $0xe0] sm:$0xff]
        %v872 = vld [vmem:[%s842 + $0xe8] sm:$0xff]
        %v873 = vld [vmem:[%s842 + $0xf0] sm:$0xff]
        %v874 = vld [vmem:[%s842 + $0xf8] sm:$0xff]
        %v907 = vunpack.c.l.b16 %v843
        %v908 = vunpack.c.h.b16 %v843
        %v909 = vunpack.c.l.b16 %v844
        %v910 = vunpack.c.h.b16 %v844
        %v911 = vunpack.c.l.b16 %v845
        %v912 = vunpack.c.h.b16 %v845
        %v913 = vunpack.c.l.b16 %v846
        %v914 = vunpack.c.h.b16 %v846
        %v915 = vunpack.c.l.b16 %v847
        %v916 = vunpack.c.h.b16 %v847
        %v917 = vunpack.c.l.b16 %v848
        %v918 = vunpack.c.h.b16 %v848
        %v919 = vunpack.c.l.b16 %v849
        %v920 = vunpack.c.h.b16 %v849
        %v921 = vunpack.c.l.b16 %v850
        %v922 = vunpack.c.h.b16 %v850
        %v923 = vunpack.c.l.b16 %v851
        %v924 = vunpack.c.h.b16 %v851
        %v925 = vunpack.c.l.b16 %v852
        %v926 = vunpack.c.h.b16 %v852
        %v927 = vunpack.c.l.b16 %v853
        %v928 = vunpack.c.h.b16 %v853
        %v929 = vunpack.c.l.b16 %v854
        %v930 = vunpack.c.h.b16 %v854
        %v931 = vunpack.c.l.b16 %v855
        %v932 = vunpack.c.h.b16 %v855
        %v933 = vunpack.c.l.b16 %v856
        %v934 = vunpack.c.h.b16 %v856
        %v935 = vunpack.c.l.b16 %v857
        %v936 = vunpack.c.h.b16 %v857
        %v937 = vunpack.c.l.b16 %v858
        %v938 = vunpack.c.h.b16 %v858
        %v939 = vunpack.c.l.b16 %v859
        %v940 = vunpack.c.h.b16 %v859
        %v941 = vunpack.c.l.b16 %v860
        %v942 = vunpack.c.h.b16 %v860
        %v943 = vunpack.c.l.b16 %v861
        %v944 = vunpack.c.h.b16 %v861
        %v945 = vunpack.c.l.b16 %v862
        %v946 = vunpack.c.h.b16 %v862
        %v947 = vunpack.c.l.b16 %v863
        %v948 = vunpack.c.h.b16 %v863
        %v949 = vunpack.c.l.b16 %v864
        %v950 = vunpack.c.h.b16 %v864
        %v951 = vunpack.c.l.b16 %v865
        %v952 = vunpack.c.h.b16 %v865
        %v953 = vunpack.c.l.b16 %v866
        %v954 = vunpack.c.h.b16 %v866
        %v955 = vunpack.c.l.b16 %v867
        %v956 = vunpack.c.h.b16 %v867
        %v957 = vunpack.c.l.b16 %v868
        %v958 = vunpack.c.h.b16 %v868
        %v959 = vunpack.c.l.b16 %v869
        %v960 = vunpack.c.h.b16 %v869
        %v961 = vunpack.c.l.b16 %v870
        %v962 = vunpack.c.h.b16 %v870
        %v963 = vunpack.c.l.b16 %v871
        %v964 = vunpack.c.h.b16 %v871
        %v965 = vunpack.c.l.b16 %v872
        %v966 = vunpack.c.h.b16 %v872
        %v967 = vunpack.c.l.b16 %v873
        %v968 = vunpack.c.h.b16 %v873
        %v969 = vunpack.c.l.b16 %v874
        %v970 = vunpack.c.h.b16 %v874
        %v971 = vpack.c.b16 %v909, %v907
        %v972 = vpack.c.b16 %v910, %v908
        %v973 = vpack.c.b16 %v913, %v911
        %v974 = vpack.c.b16 %v914, %v912
        %v975 = vpack.c.b16 %v917, %v915
        %v976 = vpack.c.b16 %v918, %v916
        %v977 = vpack.c.b16 %v921, %v919
        %v978 = vpack.c.b16 %v922, %v920
        %v979 = vpack.c.b16 %v925, %v923
        %v980 = vpack.c.b16 %v926, %v924
        %v981 = vpack.c.b16 %v929, %v927
        %v982 = vpack.c.b16 %v930, %v928
        %v983 = vpack.c.b16 %v933, %v931
        %v984 = vpack.c.b16 %v934, %v932
        %v985 = vpack.c.b16 %v937, %v935
        %v986 = vpack.c.b16 %v938, %v936
        %v987 = vpack.c.b16 %v941, %v939
        %v988 = vpack.c.b16 %v942, %v940
        %v989 = vpack.c.b16 %v945, %v943
        %v990 = vpack.c.b16 %v946, %v944
        %v991 = vpack.c.b16 %v949, %v947
        %v992 = vpack.c.b16 %v950, %v948
        %v993 = vpack.c.b16 %v953, %v951
        %v994 = vpack.c.b16 %v954, %v952
        %v995 = vpack.c.b16 %v957, %v955
        %v996 = vpack.c.b16 %v958, %v956
        %v997 = vpack.c.b16 %v961, %v959
        %v998 = vpack.c.b16 %v962, %v960
        %v999 = vpack.c.b16 %v965, %v963
        %v1000 = vpack.c.b16 %v966, %v964
        %v1001 = vpack.c.b16 %v969, %v967
        %v1002 = vpack.c.b16 %v970, %v968
        %1035 = vmatprep.subr.bf16.mxu0 %v972
        %1036 = vmatpush1.bf16.msra.mxu0 %v971
        %1037 = vmatprep.subr.bf16.mxu0 %v974
        %1038 = vmatpush1.bf16.msra.mxu0 %v973
        %1039 = vmatprep.subr.bf16.mxu0 %v976
        %1040 = vmatpush1.bf16.msra.mxu0 %v975
        %1041 = vmatprep.subr.bf16.mxu0 %v978
        %1042 = vmatpush1.bf16.msra.mxu0 %v977
        %1043 = vmatprep.subr.bf16.mxu0 %v980
        %1044 = vmatpush1.bf16.msra.mxu0 %v979
        %1045 = vmatprep.subr.bf16.mxu0 %v982
        %1046 = vmatpush1.bf16.msra.mxu0 %v981
        %1047 = vmatprep.subr.bf16.mxu0 %v984
        %1048 = vmatpush1.bf16.msra.mxu0 %v983
        %1049 = vmatprep.subr.bf16.mxu0 %v986
        %1050 = vmatpush1.bf16.msra.mxu0 %v985
        %1051 = vmatprep.subr.bf16.mxu0 %v988
        %1052 = vmatpush1.bf16.msra.mxu0 %v987
        %1053 = vmatprep.subr.bf16.mxu0 %v990
        %1054 = vmatpush1.bf16.msra.mxu0 %v989
        %1055 = vmatprep.subr.bf16.mxu0 %v992
        %1056 = vmatpush1.bf16.msra.mxu0 %v991
        %1057 = vmatprep.subr.bf16.mxu0 %v994
        %1058 = vmatpush1.bf16.msra.mxu0 %v993
        %1059 = vmatprep.subr.bf16.mxu0 %v996
        %1060 = vmatpush1.bf16.msra.mxu0 %v995
        %1061 = vmatprep.subr.bf16.mxu0 %v998
        %1062 = vmatpush1.bf16.msra.mxu0 %v997
        %1063 = vmatprep.subr.bf16.mxu0 %v1000
        %1064 = vmatpush1.bf16.msra.mxu0 %v999
        %1065 = vmatprep.subr.bf16.mxu0 %v1002
        %1066 = vmatpush1.bf16.msra.mxu0 %v1001
        %1067 = vmatprep.mubr.bf16.mxu0 %v558
        %1068 = vmatmul.mubr.bf16.gmra.mrb[0].mxu0 %v557
        %v1069 = vpop.f32.mrb[0].mxu0
        %v1070 = vadd.f32 0.0, %v1069
        %v1071 = vpop.f32.mrb[0].mxu0
        %v1072 = vadd.f32 0.0, %v1071
        %v1073 = vpop.f32.mrb[0].mxu0
        %v1074 = vadd.f32 0.0, %v1073
        %v1075 = vpop.f32.mrb[0].mxu0
        %v1076 = vadd.f32 0.0, %v1075
        %1077 = vmatprep.mubr.bf16.mxu0 %v560
        %1078 = vmatmul.mubr.bf16.gmra.mrb[0].mxu0 %v559
        %v1079 = vpop.f32.mrb[0].mxu0
        %v1080 = vadd.f32 0.0, %v1079
        %v1081 = vpop.f32.mrb[0].mxu0
        %v1082 = vadd.f32 0.0, %v1081
        %v1083 = vpop.f32.mrb[0].mxu0
        %v1084 = vadd.f32 0.0, %v1083
        %v1085 = vpop.f32.mrb[0].mxu0
        %v1086 = vadd.f32 0.0, %v1085
        %1087 = vdwg.mxu0
        %1088 = vset.pattern.permute.xlu0 1
        %1089 = vperm.xlu0 %1088, %v427
        %v1090 = vpop.permute.xlu0 %1089
        %1092 = vset.pattern.permute.xlu0 1
        %1093 = vperm.xlu0 %1092, %v428
        %v1094 = vpop.permute.xlu0 %1093
        %1096 = vset.pattern.permute.xlu0 1
        %1097 = vperm.xlu0 %1096, %v429
        %v1098 = vpop.permute.xlu0 %1097
        %1100 = vset.pattern.permute.xlu0 1
        %1101 = vperm.xlu0 %1100, %v430
        %v1102 = vpop.permute.xlu0 %1101
        %v1104 = vmul.f32 %v1070, %v1090
        %v1105 = vmul.f32 %v1072, %v1090
        %v1106 = vmul.f32 %v1074, %v1094
        %v1107 = vmul.f32 %v1076, %v1094
        %v1108 = vmul.f32 %v1080, %v1098
        %v1109 = vmul.f32 %v1082, %v1098
        %v1110 = vmul.f32 %v1084, %v1102
        %v1111 = vmul.f32 %v1086, %v1102
        %v1112 = vadd.f32 %v834, %v1104
        %v1113 = vadd.f32 %v835, %v1105
        %v1114 = vadd.f32 %v836, %v1106
        %v1115 = vadd.f32 %v837, %v1107
        %v1116 = vadd.f32 %v838, %v1108
        %v1117 = vadd.f32 %v839, %v1109
        %v1118 = vadd.f32 %v840, %v1110
        %v1119 = vadd.f32 %v841, %v1111
        %s1120 = scalar_lea.vmem [#allocation6], 512
        %v1121 = vld [vmem:[%s1120] sm:$0xff]
        %v1122 = vld [vmem:[%s1120 + $0x8] sm:$0xff]
        %v1123 = vld [vmem:[%s1120 + $0x10] sm:$0xff]
        %v1124 = vld [vmem:[%s1120 + $0x18] sm:$0xff]
        %v1125 = vld [vmem:[%s1120 + $0x20] sm:$0xff]
        %v1126 = vld [vmem:[%s1120 + $0x28] sm:$0xff]
        %v1127 = vld [vmem:[%s1120 + $0x30] sm:$0xff]
        %v1128 = vld [vmem:[%s1120 + $0x38] sm:$0xff]
        %v1129 = vld [vmem:[%s1120 + $0x40] sm:$0xff]
        %v1130 = vld [vmem:[%s1120 + $0x48] sm:$0xff]
        %v1131 = vld [vmem:[%s1120 + $0x50] sm:$0xff]
        %v1132 = vld [vmem:[%s1120 + $0x58] sm:$0xff]
        %v1133 = vld [vmem:[%s1120 + $0x60] sm:$0xff]
        %v1134 = vld [vmem:[%s1120 + $0x68] sm:$0xff]
        %v1135 = vld [vmem:[%s1120 + $0x70] sm:$0xff]
        %v1136 = vld [vmem:[%s1120 + $0x78] sm:$0xff]
        %v1137 = vld [vmem:[%s1120 + $0x80] sm:$0xff]
        %v1138 = vld [vmem:[%s1120 + $0x88] sm:$0xff]
        %v1139 = vld [vmem:[%s1120 + $0x90] sm:$0xff]
        %v1140 = vld [vmem:[%s1120 + $0x98] sm:$0xff]
        %v1141 = vld [vmem:[%s1120 + $0xa0] sm:$0xff]
        %v1142 = vld [vmem:[%s1120 + $0xa8] sm:$0xff]
        %v1143 = vld [vmem:[%s1120 + $0xb0] sm:$0xff]
        %v1144 = vld [vmem:[%s1120 + $0xb8] sm:$0xff]
        %v1145 = vld [vmem:[%s1120 + $0xc0] sm:$0xff]
        %v1146 = vld [vmem:[%s1120 + $0xc8] sm:$0xff]
        %v1147 = vld [vmem:[%s1120 + $0xd0] sm:$0xff]
        %v1148 = vld [vmem:[%s1120 + $0xd8] sm:$0xff]
        %v1149 = vld [vmem:[%s1120 + $0xe0] sm:$0xff]
        %v1150 = vld [vmem:[%s1120 + $0xe8] sm:$0xff]
        %v1151 = vld [vmem:[%s1120 + $0xf0] sm:$0xff]
        %v1152 = vld [vmem:[%s1120 + $0xf8] sm:$0xff]
        %v1185 = vunpack.c.l.b16 %v1121
        %v1186 = vunpack.c.h.b16 %v1121
        %v1187 = vunpack.c.l.b16 %v1122
        %v1188 = vunpack.c.h.b16 %v1122
        %v1189 = vunpack.c.l.b16 %v1123
        %v1190 = vunpack.c.h.b16 %v1123
        %v1191 = vunpack.c.l.b16 %v1124
        %v1192 = vunpack.c.h.b16 %v1124
        %v1193 = vunpack.c.l.b16 %v1125
        %v1194 = vunpack.c.h.b16 %v1125
        %v1195 = vunpack.c.l.b16 %v1126
        %v1196 = vunpack.c.h.b16 %v1126
        %v1197 = vunpack.c.l.b16 %v1127
        %v1198 = vunpack.c.h.b16 %v1127
        %v1199 = vunpack.c.l.b16 %v1128
        %v1200 = vunpack.c.h.b16 %v1128
        %v1201 = vunpack.c.l.b16 %v1129
        %v1202 = vunpack.c.h.b16 %v1129
        %v1203 = vunpack.c.l.b16 %v1130
        %v1204 = vunpack.c.h.b16 %v1130
        %v1205 = vunpack.c.l.b16 %v1131
        %v1206 = vunpack.c.h.b16 %v1131
        %v1207 = vunpack.c.l.b16 %v1132
        %v1208 = vunpack.c.h.b16 %v1132
        %v1209 = vunpack.c.l.b16 %v1133
        %v1210 = vunpack.c.h.b16 %v1133
        %v1211 = vunpack.c.l.b16 %v1134
        %v1212 = vunpack.c.h.b16 %v1134
        %v1213 = vunpack.c.l.b16 %v1135
        %v1214 = vunpack.c.h.b16 %v1135
        %v1215 = vunpack.c.l.b16 %v1136
        %v1216 = vunpack.c.h.b16 %v1136
        %v1217 = vunpack.c.l.b16 %v1137
        %v1218 = vunpack.c.h.b16 %v1137
        %v1219 = vunpack.c.l.b16 %v1138
        %v1220 = vunpack.c.h.b16 %v1138
        %v1221 = vunpack.c.l.b16 %v1139
        %v1222 = vunpack.c.h.b16 %v1139
        %v1223 = vunpack.c.l.b16 %v1140
        %v1224 = vunpack.c.h.b16 %v1140
        %v1225 = vunpack.c.l.b16 %v1141
        %v1226 = vunpack.c.h.b16 %v1141
        %v1227 = vunpack.c.l.b16 %v1142
        %v1228 = vunpack.c.h.b16 %v1142
        %v1229 = vunpack.c.l.b16 %v1143
        %v1230 = vunpack.c.h.b16 %v1143
        %v1231 = vunpack.c.l.b16 %v1144
        %v1232 = vunpack.c.h.b16 %v1144
        %v1233 = vunpack.c.l.b16 %v1145
        %v1234 = vunpack.c.h.b16 %v1145
        %v1235 = vunpack.c.l.b16 %v1146
        %v1236 = vunpack.c.h.b16 %v1146
        %v1237 = vunpack.c.l.b16 %v1147
        %v1238 = vunpack.c.h.b16 %v1147
        %v1239 = vunpack.c.l.b16 %v1148
        %v1240 = vunpack.c.h.b16 %v1148
        %v1241 = vunpack.c.l.b16 %v1149
        %v1242 = vunpack.c.h.b16 %v1149
        %v1243 = vunpack.c.l.b16 %v1150
        %v1244 = vunpack.c.h.b16 %v1150
        %v1245 = vunpack.c.l.b16 %v1151
        %v1246 = vunpack.c.h.b16 %v1151
        %v1247 = vunpack.c.l.b16 %v1152
        %v1248 = vunpack.c.h.b16 %v1152
        %v1249 = vpack.c.b16 %v1187, %v1185
        %v1250 = vpack.c.b16 %v1188, %v1186
        %v1251 = vpack.c.b16 %v1191, %v1189
        %v1252 = vpack.c.b16 %v1192, %v1190
        %v1253 = vpack.c.b16 %v1195, %v1193
        %v1254 = vpack.c.b16 %v1196, %v1194
        %v1255 = vpack.c.b16 %v1199, %v1197
        %v1256 = vpack.c.b16 %v1200, %v1198
        %v1257 = vpack.c.b16 %v1203, %v1201
        %v1258 = vpack.c.b16 %v1204, %v1202
        %v1259 = vpack.c.b16 %v1207, %v1205
        %v1260 = vpack.c.b16 %v1208, %v1206
        %v1261 = vpack.c.b16 %v1211, %v1209
        %v1262 = vpack.c.b16 %v1212, %v1210
        %v1263 = vpack.c.b16 %v1215, %v1213
        %v1264 = vpack.c.b16 %v1216, %v1214
        %v1265 = vpack.c.b16 %v1219, %v1217
        %v1266 = vpack.c.b16 %v1220, %v1218
        %v1267 = vpack.c.b16 %v1223, %v1221
        %v1268 = vpack.c.b16 %v1224, %v1222
        %v1269 = vpack.c.b16 %v1227, %v1225
        %v1270 = vpack.c.b16 %v1228, %v1226
        %v1271 = vpack.c.b16 %v1231, %v1229
        %v1272 = vpack.c.b16 %v1232, %v1230
        %v1273 = vpack.c.b16 %v1235, %v1233
        %v1274 = vpack.c.b16 %v1236, %v1234
        %v1275 = vpack.c.b16 %v1239, %v1237
        %v1276 = vpack.c.b16 %v1240, %v1238
        %v1277 = vpack.c.b16 %v1243, %v1241
        %v1278 = vpack.c.b16 %v1244, %v1242
        %v1279 = vpack.c.b16 %v1247, %v1245
        %v1280 = vpack.c.b16 %v1248, %v1246
        %1313 = vmatprep.subr.bf16.mxu0 %v1250
        %1314 = vmatpush1.bf16.msra.mxu0 %v1249
        %1315 = vmatprep.subr.bf16.mxu0 %v1252
        %1316 = vmatpush1.bf16.msra.mxu0 %v1251
        %1317 = vmatprep.subr.bf16.mxu0 %v1254
        %1318 = vmatpush1.bf16.msra.mxu0 %v1253
        %1319 = vmatprep.subr.bf16.mxu0 %v1256
        %1320 = vmatpush1.bf16.msra.mxu0 %v1255
        %1321 = vmatprep.subr.bf16.mxu0 %v1258
        %1322 = vmatpush1.bf16.msra.mxu0 %v1257
        %1323 = vmatprep.subr.bf16.mxu0 %v1260
        %1324 = vmatpush1.bf16.msra.mxu0 %v1259
        %1325 = vmatprep.subr.bf16.mxu0 %v1262
        %1326 = vmatpush1.bf16.msra.mxu0 %v1261
        %1327 = vmatprep.subr.bf16.mxu0 %v1264
        %1328 = vmatpush1.bf16.msra.mxu0 %v1263
        %1329 = vmatprep.subr.bf16.mxu0 %v1266
        %1330 = vmatpush1.bf16.msra.mxu0 %v1265
        %1331 = vmatprep.subr.bf16.mxu0 %v1268
        %1332 = vmatpush1.bf16.msra.mxu0 %v1267
        %1333 = vmatprep.subr.bf16.mxu0 %v1270
        %1334 = vmatpush1.bf16.msra.mxu0 %v1269
        %1335 = vmatprep.subr.bf16.mxu0 %v1272
        %1336 = vmatpush1.bf16.msra.mxu0 %v1271
        %1337 = vmatprep.subr.bf16.mxu0 %v1274
        %1338 = vmatpush1.bf16.msra.mxu0 %v1273
        %1339 = vmatprep.subr.bf16.mxu0 %v1276
        %1340 = vmatpush1.bf16.msra.mxu0 %v1275
        %1341 = vmatprep.subr.bf16.mxu0 %v1278
        %1342 = vmatpush1.bf16.msra.mxu0 %v1277
        %1343 = vmatprep.subr.bf16.mxu0 %v1280
        %1344 = vmatpush1.bf16.msra.mxu0 %v1279
        %1345 = vmatprep.mubr.bf16.mxu0 %v558
        %1346 = vmatmul.mubr.bf16.gmra.mrb[0].mxu0 %v557
        %v1347 = vpop.f32.mrb[0].mxu0
        %v1348 = vadd.f32 0.0, %v1347
        %v1349 = vpop.f32.mrb[0].mxu0
        %v1350 = vadd.f32 0.0, %v1349
        %v1351 = vpop.f32.mrb[0].mxu0
        %v1352 = vadd.f32 0.0, %v1351
        %v1353 = vpop.f32.mrb[0].mxu0
        %v1354 = vadd.f32 0.0, %v1353
        %1355 = vmatprep.mubr.bf16.mxu0 %v560
        %1356 = vmatmul.mubr.bf16.gmra.mrb[0].mxu0 %v559
        %v1357 = vpop.f32.mrb[0].mxu0
        %v1358 = vadd.f32 0.0, %v1357
        %v1359 = vpop.f32.mrb[0].mxu0
        %v1360 = vadd.f32 0.0, %v1359
        %v1361 = vpop.f32.mrb[0].mxu0
        %v1362 = vadd.f32 0.0, %v1361
        %v1363 = vpop.f32.mrb[0].mxu0
        %v1364 = vadd.f32 0.0, %v1363
        %1365 = vdwg.mxu0
        %1366 = vset.pattern.permute.xlu0 2
        %1367 = vperm.xlu0 %1366, %v427
        %v1368 = vpop.permute.xlu0 %1367
        %1370 = vset.pattern.permute.xlu0 2
        %1371 = vperm.xlu0 %1370, %v428
        %v1372 = vpop.permute.xlu0 %1371
        %1374 = vset.pattern.permute.xlu0 2
        %1375 = vperm.xlu0 %1374, %v429
        %v1376 = vpop.permute.xlu0 %1375
        %1378 = vset.pattern.permute.xlu0 2
        %1379 = vperm.xlu0 %1378, %v430
        %v1380 = vpop.permute.xlu0 %1379
        %v1382 = vmul.f32 %v1348, %v1368
        %v1383 = vmul.f32 %v1350, %v1368
        %v1384 = vmul.f32 %v1352, %v1372
        %v1385 = vmul.f32 %v1354, %v1372
        %v1386 = vmul.f32 %v1358, %v1376
        %v1387 = vmul.f32 %v1360, %v1376
        %v1388 = vmul.f32 %v1362, %v1380
        %v1389 = vmul.f32 %v1364, %v1380
        %v1390 = vadd.f32 %v1112, %v1382
        %v1391 = vadd.f32 %v1113, %v1383
        %v1392 = vadd.f32 %v1114, %v1384
        %v1393 = vadd.f32 %v1115, %v1385
        %v1394 = vadd.f32 %v1116, %v1386
        %v1395 = vadd.f32 %v1117, %v1387
        %v1396 = vadd.f32 %v1118, %v1388
        %v1397 = vadd.f32 %v1119, %v1389
        %s1398 = scalar_lea.vmem [#allocation6], 768
        %v1399 = vld [vmem:[%s1398] sm:$0xff]
        %v1400 = vld [vmem:[%s1398 + $0x8] sm:$0xff]
        %v1401 = vld [vmem:[%s1398 + $0x10] sm:$0xff]
        %v1402 = vld [vmem:[%s1398 + $0x18] sm:$0xff]
        %v1403 = vld [vmem:[%s1398 + $0x20] sm:$0xff]
        %v1404 = vld [vmem:[%s1398 + $0x28] sm:$0xff]
        %v1405 = vld [vmem:[%s1398 + $0x30] sm:$0xff]
        %v1406 = vld [vmem:[%s1398 + $0x38] sm:$0xff]
        %v1407 = vld [vmem:[%s1398 + $0x40] sm:$0xff]
        %v1408 = vld [vmem:[%s1398 + $0x48] sm:$0xff]
        %v1409 = vld [vmem:[%s1398 + $0x50] sm:$0xff]
        %v1410 = vld [vmem:[%s1398 + $0x58] sm:$0xff]
        %v1411 = vld [vmem:[%s1398 + $0x60] sm:$0xff]
        %v1412 = vld [vmem:[%s1398 + $0x68] sm:$0xff]
        %v1413 = vld [vmem:[%s1398 + $0x70] sm:$0xff]
        %v1414 = vld [vmem:[%s1398 + $0x78] sm:$0xff]
        %v1415 = vld [vmem:[%s1398 + $0x80] sm:$0xff]
        %v1416 = vld [vmem:[%s1398 + $0x88] sm:$0xff]
        %v1417 = vld [vmem:[%s1398 + $0x90] sm:$0xff]
        %v1418 = vld [vmem:[%s1398 + $0x98] sm:$0xff]
        %v1419 = vld [vmem:[%s1398 + $0xa0] sm:$0xff]
        %v1420 = vld [vmem:[%s1398 + $0xa8] sm:$0xff]
        %v1421 = vld [vmem:[%s1398 + $0xb0] sm:$0xff]
        %v1422 = vld [vmem:[%s1398 + $0xb8] sm:$0xff]
        %v1423 = vld [vmem:[%s1398 + $0xc0] sm:$0xff]
        %v1424 = vld [vmem:[%s1398 + $0xc8] sm:$0xff]
        %v1425 = vld [vmem:[%s1398 + $0xd0] sm:$0xff]
        %v1426 = vld [vmem:[%s1398 + $0xd8] sm:$0xff]
        %v1427 = vld [vmem:[%s1398 + $0xe0] sm:$0xff]
        %v1428 = vld [vmem:[%s1398 + $0xe8] sm:$0xff]
        %v1429 = vld [vmem:[%s1398 + $0xf0] sm:$0xff]
        %v1430 = vld [vmem:[%s1398 + $0xf8] sm:$0xff]
        %v1463 = vunpack.c.l.b16 %v1399
        %v1464 = vunpack.c.h.b16 %v1399
        %v1465 = vunpack.c.l.b16 %v1400
        %v1466 = vunpack.c.h.b16 %v1400
        %v1467 = vunpack.c.l.b16 %v1401
        %v1468 = vunpack.c.h.b16 %v1401
        %v1469 = vunpack.c.l.b16 %v1402
        %v1470 = vunpack.c.h.b16 %v1402
        %v1471 = vunpack.c.l.b16 %v1403
        %v1472 = vunpack.c.h.b16 %v1403
        %v1473 = vunpack.c.l.b16 %v1404
        %v1474 = vunpack.c.h.b16 %v1404
        %v1475 = vunpack.c.l.b16 %v1405
        %v1476 = vunpack.c.h.b16 %v1405
        %v1477 = vunpack.c.l.b16 %v1406
        %v1478 = vunpack.c.h.b16 %v1406
        %v1479 = vunpack.c.l.b16 %v1407
        %v1480 = vunpack.c.h.b16 %v1407
        %v1481 = vunpack.c.l.b16 %v1408
        %v1482 = vunpack.c.h.b16 %v1408
        %v1483 = vunpack.c.l.b16 %v1409
        %v1484 = vunpack.c.h.b16 %v1409
        %v1485 = vunpack.c.l.b16 %v1410
        %v1486 = vunpack.c.h.b16 %v1410
        %v1487 = vunpack.c.l.b16 %v1411
        %v1488 = vunpack.c.h.b16 %v1411
        %v1489 = vunpack.c.l.b16 %v1412
        %v1490 = vunpack.c.h.b16 %v1412
        %v1491 = vunpack.c.l.b16 %v1413
        %v1492 = vunpack.c.h.b16 %v1413
        %v1493 = vunpack.c.l.b16 %v1414
        %v1494 = vunpack.c.h.b16 %v1414
        %v1495 = vunpack.c.l.b16 %v1415
        %v1496 = vunpack.c.h.b16 %v1415
        %v1497 = vunpack.c.l.b16 %v1416
        %v1498 = vunpack.c.h.b16 %v1416
        %v1499 = vunpack.c.l.b16 %v1417
        %v1500 = vunpack.c.h.b16 %v1417
        %v1501 = vunpack.c.l.b16 %v1418
        %v1502 = vunpack.c.h.b16 %v1418
        %v1503 = vunpack.c.l.b16 %v1419
        %v1504 = vunpack.c.h.b16 %v1419
        %v1505 = vunpack.c.l.b16 %v1420
        %v1506 = vunpack.c.h.b16 %v1420
        %v1507 = vunpack.c.l.b16 %v1421
        %v1508 = vunpack.c.h.b16 %v1421
        %v1509 = vunpack.c.l.b16 %v1422
        %v1510 = vunpack.c.h.b16 %v1422
        %v1511 = vunpack.c.l.b16 %v1423
        %v1512 = vunpack.c.h.b16 %v1423
        %v1513 = vunpack.c.l.b16 %v1424
        %v1514 = vunpack.c.h.b16 %v1424
        %v1515 = vunpack.c.l.b16 %v1425
        %v1516 = vunpack.c.h.b16 %v1425
        %v1517 = vunpack.c.l.b16 %v1426
        %v1518 = vunpack.c.h.b16 %v1426
        %v1519 = vunpack.c.l.b16 %v1427
        %v1520 = vunpack.c.h.b16 %v1427
        %v1521 = vunpack.c.l.b16 %v1428
        %v1522 = vunpack.c.h.b16 %v1428
        %v1523 = vunpack.c.l.b16 %v1429
        %v1524 = vunpack.c.h.b16 %v1429
        %v1525 = vunpack.c.l.b16 %v1430
        %v1526 = vunpack.c.h.b16 %v1430
        %v1527 = vpack.c.b16 %v1465, %v1463
        %v1528 = vpack.c.b16 %v1466, %v1464
        %v1529 = vpack.c.b16 %v1469, %v1467
        %v1530 = vpack.c.b16 %v1470, %v1468
        %v1531 = vpack.c.b16 %v1473, %v1471
        %v1532 = vpack.c.b16 %v1474, %v1472
        %v1533 = vpack.c.b16 %v1477, %v1475
        %v1534 = vpack.c.b16 %v1478, %v1476
        %v1535 = vpack.c.b16 %v1481, %v1479
        %v1536 = vpack.c.b16 %v1482, %v1480
        %v1537 = vpack.c.b16 %v1485, %v1483
        %v1538 = vpack.c.b16 %v1486, %v1484
        %v1539 = vpack.c.b16 %v1489, %v1487
        %v1540 = vpack.c.b16 %v1490, %v1488
        %v1541 = vpack.c.b16 %v1493, %v1491
        %v1542 = vpack.c.b16 %v1494, %v1492
        %v1543 = vpack.c.b16 %v1497, %v1495
        %v1544 = vpack.c.b16 %v1498, %v1496
        %v1545 = vpack.c.b16 %v1501, %v1499
        %v1546 = vpack.c.b16 %v1502, %v1500
        %v1547 = vpack.c.b16 %v1505, %v1503
        %v1548 = vpack.c.b16 %v1506, %v1504
        %v1549 = vpack.c.b16 %v1509, %v1507
        %v1550 = vpack.c.b16 %v1510, %v1508
        %v1551 = vpack.c.b16 %v1513, %v1511
        %v1552 = vpack.c.b16 %v1514, %v1512
        %v1553 = vpack.c.b16 %v1517, %v1515
        %v1554 = vpack.c.b16 %v1518, %v1516
        %v1555 = vpack.c.b16 %v1521, %v1519
        %v1556 = vpack.c.b16 %v1522, %v1520
        %v1557 = vpack.c.b16 %v1525, %v1523
        %v1558 = vpack.c.b16 %v1526, %v1524
        %1591 = vmatprep.subr.bf16.mxu0 %v1528
        %1592 = vmatpush1.bf16.msra.mxu0 %v1527
        %1593 = vmatprep.subr.bf16.mxu0 %v1530
        %1594 = vmatpush1.bf16.msra.mxu0 %v1529
        %1595 = vmatprep.subr.bf16.mxu0 %v1532
        %1596 = vmatpush1.bf16.msra.mxu0 %v1531
        %1597 = vmatprep.subr.bf16.mxu0 %v1534
        %1598 = vmatpush1.bf16.msra.mxu0 %v1533
        %1599 = vmatprep.subr.bf16.mxu0 %v1536
        %1600 = vmatpush1.bf16.msra.mxu0 %v1535
        %1601 = vmatprep.subr.bf16.mxu0 %v1538
        %1602 = vmatpush1.bf16.msra.mxu0 %v1537
        %1603 = vmatprep.subr.bf16.mxu0 %v1540
        %1604 = vmatpush1.bf16.msra.mxu0 %v1539
        %1605 = vmatprep.subr.bf16.mxu0 %v1542
        %1606 = vmatpush1.bf16.msra.mxu0 %v1541
        %1607 = vmatprep.subr.bf16.mxu0 %v1544
        %1608 = vmatpush1.bf16.msra.mxu0 %v1543
        %1609 = vmatprep.subr.bf16.mxu0 %v1546
        %1610 = vmatpush1.bf16.msra.mxu0 %v1545
        %1611 = vmatprep.subr.bf16.mxu0 %v1548
        %1612 = vmatpush1.bf16.msra.mxu0 %v1547
        %1613 = vmatprep.subr.bf16.mxu0 %v1550
        %1614 = vmatpush1.bf16.msra.mxu0 %v1549
        %1615 = vmatprep.subr.bf16.mxu0 %v1552
        %1616 = vmatpush1.bf16.msra.mxu0 %v1551
        %1617 = vmatprep.subr.bf16.mxu0 %v1554
        %1618 = vmatpush1.bf16.msra.mxu0 %v1553
        %1619 = vmatprep.subr.bf16.mxu0 %v1556
        %1620 = vmatpush1.bf16.msra.mxu0 %v1555
        %1621 = vmatprep.subr.bf16.mxu0 %v1558
        %1622 = vmatpush1.bf16.msra.mxu0 %v1557
        %1623 = vmatprep.mubr.bf16.mxu0 %v558
        %1624 = vmatmul.mubr.bf16.gmra.mrb[0].mxu0 %v557
        %v1625 = vpop.f32.mrb[0].mxu0
        %v1626 = vadd.f32 0.0, %v1625
        %v1627 = vpop.f32.mrb[0].mxu0
        %v1628 = vadd.f32 0.0, %v1627
        %v1629 = vpop.f32.mrb[0].mxu0
        %v1630 = vadd.f32 0.0, %v1629
        %v1631 = vpop.f32.mrb[0].mxu0
        %v1632 = vadd.f32 0.0, %v1631
        %1633 = vmatprep.mubr.bf16.mxu0 %v560
        %1634 = vmatmul.mubr.bf16.gmra.mrb[0].mxu0 %v559
        %v1635 = vpop.f32.mrb[0].mxu0
        %v1636 = vadd.f32 0.0, %v1635
        %v1637 = vpop.f32.mrb[0].mxu0
        %v1638 = vadd.f32 0.0, %v1637
        %v1639 = vpop.f32.mrb[0].mxu0
        %v1640 = vadd.f32 0.0, %v1639
        %v1641 = vpop.f32.mrb[0].mxu0
        %v1642 = vadd.f32 0.0, %v1641
        %1643 = vdwg.mxu0
        %1644 = vset.pattern.permute.xlu0 3
        %1645 = vperm.xlu0 %1644, %v427
        %v1646 = vpop.permute.xlu0 %1645
        %1648 = vset.pattern.permute.xlu0 3
        %1649 = vperm.xlu0 %1648, %v428
        %v1650 = vpop.permute.xlu0 %1649
        %1652 = vset.pattern.permute.xlu0 3
        %1653 = vperm.xlu0 %1652, %v429
        %v1654 = vpop.permute.xlu0 %1653
        %1656 = vset.pattern.permute.xlu0 3
        %1657 = vperm.xlu0 %1656, %v430
        %v1658 = vpop.permute.xlu0 %1657
        %v1660 = vmul.f32 %v1626, %v1646
        %v1661 = vmul.f32 %v1628, %v1646
        %v1662 = vmul.f32 %v1630, %v1650
        %v1663 = vmul.f32 %v1632, %v1650
        %v1664 = vmul.f32 %v1636, %v1654
        %v1665 = vmul.f32 %v1638, %v1654
        %v1666 = vmul.f32 %v1640, %v1658
        %v1667 = vmul.f32 %v1642, %v1658
        %v1668 = vadd.f32 %v1390, %v1660
        %v1669 = vadd.f32 %v1391, %v1661
        %v1670 = vadd.f32 %v1392, %v1662
        %v1671 = vadd.f32 %v1393, %v1663
        %v1672 = vadd.f32 %v1394, %v1664
        %v1673 = vadd.f32 %v1395, %v1665
        %v1674 = vadd.f32 %v1396, %v1666
        %v1675 = vadd.f32 %v1397, %v1667
        %s1676 = scalar_lea.vmem [#allocation6], 1024
        %v1677 = vld [vmem:[%s1676] sm:$0xff]
        %v1678 = vld [vmem:[%s1676 + $0x8] sm:$0xff]
        %v1679 = vld [vmem:[%s1676 + $0x10] sm:$0xff]
        %v1680 = vld [vmem:[%s1676 + $0x18] sm:$0xff]
        %v1681 = vld [vmem:[%s1676 + $0x20] sm:$0xff]
        %v1682 = vld [vmem:[%s1676 + $0x28] sm:$0xff]
        %v1683 = vld [vmem:[%s1676 + $0x30] sm:$0xff]
        %v1684 = vld [vmem:[%s1676 + $0x38] sm:$0xff]
        %v1685 = vld [vmem:[%s1676 + $0x40] sm:$0xff]
        %v1686 = vld [vmem:[%s1676 + $0x48] sm:$0xff]
        %v1687 = vld [vmem:[%s1676 + $0x50] sm:$0xff]
        %v1688 = vld [vmem:[%s1676 + $0x58] sm:$0xff]
        %v1689 = vld [vmem:[%s1676 + $0x60] sm:$0xff]
        %v1690 = vld [vmem:[%s1676 + $0x68] sm:$0xff]
        %v1691 = vld [vmem:[%s1676 + $0x70] sm:$0xff]
        %v1692 = vld [vmem:[%s1676 + $0x78] sm:$0xff]
        %v1693 = vld [vmem:[%s1676 + $0x80] sm:$0xff]
        %v1694 = vld [vmem:[%s1676 + $0x88] sm:$0xff]
        %v1695 = vld [vmem:[%s1676 + $0x90] sm:$0xff]
        %v1696 = vld [vmem:[%s1676 + $0x98] sm:$0xff]
        %v1697 = vld [vmem:[%s1676 + $0xa0] sm:$0xff]
        %v1698 = vld [vmem:[%s1676 + $0xa8] sm:$0xff]
        %v1699 = vld [vmem:[%s1676 + $0xb0] sm:$0xff]
        %v1700 = vld [vmem:[%s1676 + $0xb8] sm:$0xff]
        %v1701 = vld [vmem:[%s1676 + $0xc0] sm:$0xff]
        %v1702 = vld [vmem:[%s1676 + $0xc8] sm:$0xff]
        %v1703 = vld [vmem:[%s1676 + $0xd0] sm:$0xff]
        %v1704 = vld [vmem:[%s1676 + $0xd8] sm:$0xff]
        %v1705 = vld [vmem:[%s1676 + $0xe0] sm:$0xff]
        %v1706 = vld [vmem:[%s1676 + $0xe8] sm:$0xff]
        %v1707 = vld [vmem:[%s1676 + $0xf0] sm:$0xff]
        %v1708 = vld [vmem:[%s1676 + $0xf8] sm:$0xff]
        %v1741 = vunpack.c.l.b16 %v1677
        %v1742 = vunpack.c.h.b16 %v1677
        %v1743 = vunpack.c.l.b16 %v1678
        %v1744 = vunpack.c.h.b16 %v1678
        %v1745 = vunpack.c.l.b16 %v1679
        %v1746 = vunpack.c.h.b16 %v1679
        %v1747 = vunpack.c.l.b16 %v1680
        %v1748 = vunpack.c.h.b16 %v1680
        %v1749 = vunpack.c.l.b16 %v1681
        %v1750 = vunpack.c.h.b16 %v1681
        %v1751 = vunpack.c.l.b16 %v1682
        %v1752 = vunpack.c.h.b16 %v1682
        %v1753 = vunpack.c.l.b16 %v1683
        %v1754 = vunpack.c.h.b16 %v1683
        %v1755 = vunpack.c.l.b16 %v1684
        %v1756 = vunpack.c.h.b16 %v1684
        %v1757 = vunpack.c.l.b16 %v1685
        %v1758 = vunpack.c.h.b16 %v1685
        %v1759 = vunpack.c.l.b16 %v1686
        %v1760 = vunpack.c.h.b16 %v1686
        %v1761 = vunpack.c.l.b16 %v1687
        %v1762 = vunpack.c.h.b16 %v1687
        %v1763 = vunpack.c.l.b16 %v1688
        %v1764 = vunpack.c.h.b16 %v1688
        %v1765 = vunpack.c.l.b16 %v1689
        %v1766 = vunpack.c.h.b16 %v1689
        %v1767 = vunpack.c.l.b16 %v1690
        %v1768 = vunpack.c.h.b16 %v1690
        %v1769 = vunpack.c.l.b16 %v1691
        %v1770 = vunpack.c.h.b16 %v1691
        %v1771 = vunpack.c.l.b16 %v1692
        %v1772 = vunpack.c.h.b16 %v1692
        %v1773 = vunpack.c.l.b16 %v1693
        %v1774 = vunpack.c.h.b16 %v1693
        %v1775 = vunpack.c.l.b16 %v1694
        %v1776 = vunpack.c.h.b16 %v1694
        %v1777 = vunpack.c.l.b16 %v1695
        %v1778 = vunpack.c.h.b16 %v1695
        %v1779 = vunpack.c.l.b16 %v1696
        %v1780 = vunpack.c.h.b16 %v1696
        %v1781 = vunpack.c.l.b16 %v1697
        %v1782 = vunpack.c.h.b16 %v1697
        %v1783 = vunpack.c.l.b16 %v1698
        %v1784 = vunpack.c.h.b16 %v1698
        %v1785 = vunpack.c.l.b16 %v1699
        %v1786 = vunpack.c.h.b16 %v1699
        %v1787 = vunpack.c.l.b16 %v1700
        %v1788 = vunpack.c.h.b16 %v1700
        %v1789 = vunpack.c.l.b16 %v1701
        %v1790 = vunpack.c.h.b16 %v1701
        %v1791 = vunpack.c.l.b16 %v1702
        %v1792 = vunpack.c.h.b16 %v1702
        %v1793 = vunpack.c.l.b16 %v1703
        %v1794 = vunpack.c.h.b16 %v1703
        %v1795 = vunpack.c.l.b16 %v1704
        %v1796 = vunpack.c.h.b16 %v1704
        %v1797 = vunpack.c.l.b16 %v1705
        %v1798 = vunpack.c.h.b16 %v1705
        %v1799 = vunpack.c.l.b16 %v1706
        %v1800 = vunpack.c.h.b16 %v1706
        %v1801 = vunpack.c.l.b16 %v1707
        %v1802 = vunpack.c.h.b16 %v1707
        %v1803 = vunpack.c.l.b16 %v1708
        %v1804 = vunpack.c.h.b16 %v1708
        %v1805 = vpack.c.b16 %v1743, %v1741
        %v1806 = vpack.c.b16 %v1744, %v1742
        %v1807 = vpack.c.b16 %v1747, %v1745
        %v1808 = vpack.c.b16 %v1748, %v1746
        %v1809 = vpack.c.b16 %v1751, %v1749
        %v1810 = vpack.c.b16 %v1752, %v1750
        %v1811 = vpack.c.b16 %v1755, %v1753
        %v1812 = vpack.c.b16 %v1756, %v1754
        %v1813 = vpack.c.b16 %v1759, %v1757
        %v1814 = vpack.c.b16 %v1760, %v1758
        %v1815 = vpack.c.b16 %v1763, %v1761
        %v1816 = vpack.c.b16 %v1764, %v1762
        %v1817 = vpack.c.b16 %v1767, %v1765
        %v1818 = vpack.c.b16 %v1768, %v1766
        %v1819 = vpack.c.b16 %v1771, %v1769
        %v1820 = vpack.c.b16 %v1772, %v1770
        %v1821 = vpack.c.b16 %v1775, %v1773
        %v1822 = vpack.c.b16 %v1776, %v1774
        %v1823 = vpack.c.b16 %v1779, %v1777
        %v1824 = vpack.c.b16 %v1780, %v1778
        %v1825 = vpack.c.b16 %v1783, %v1781
        %v1826 = vpack.c.b16 %v1784, %v1782
        %v1827 = vpack.c.b16 %v1787, %v1785
        %v1828 = vpack.c.b16 %v1788, %v1786
        %v1829 = vpack.c.b16 %v1791, %v1789
        %v1830 = vpack.c.b16 %v1792, %v1790
        %v1831 = vpack.c.b16 %v1795, %v1793
        %v1832 = vpack.c.b16 %v1796, %v1794
        %v1833 = vpack.c.b16 %v1799, %v1797
        %v1834 = vpack.c.b16 %v1800, %v1798
        %v1835 = vpack.c.b16 %v1803, %v1801
        %v1836 = vpack.c.b16 %v1804, %v1802
        %1869 = vmatprep.subr.bf16.mxu0 %v1806
        %1870 = vmatpush1.bf16.msra.mxu0 %v1805
        %1871 = vmatprep.subr.bf16.mxu0 %v1808
        %1872 = vmatpush1.bf16.msra.mxu0 %v1807
        %1873 = vmatprep.subr.bf16.mxu0 %v1810
        %1874 = vmatpush1.bf16.msra.mxu0 %v1809
        %1875 = vmatprep.subr.bf16.mxu0 %v1812
        %1876 = vmatpush1.bf16.msra.mxu0 %v1811
        %1877 = vmatprep.subr.bf16.mxu0 %v1814
        %1878 = vmatpush1.bf16.msra.mxu0 %v1813
        %1879 = vmatprep.subr.bf16.mxu0 %v1816
        %1880 = vmatpush1.bf16.msra.mxu0 %v1815
        %1881 = vmatprep.subr.bf16.mxu0 %v1818
        %1882 = vmatpush1.bf16.msra.mxu0 %v1817
        %1883 = vmatprep.subr.bf16.mxu0 %v1820
        %1884 = vmatpush1.bf16.msra.mxu0 %v1819
        %1885 = vmatprep.subr.bf16.mxu0 %v1822
        %1886 = vmatpush1.bf16.msra.mxu0 %v1821
        %1887 = vmatprep.subr.bf16.mxu0 %v1824
        %1888 = vmatpush1.bf16.msra.mxu0 %v1823
        %1889 = vmatprep.subr.bf16.mxu0 %v1826
        %1890 = vmatpush1.bf16.msra.mxu0 %v1825
        %1891 = vmatprep.subr.bf16.mxu0 %v1828
        %1892 = vmatpush1.bf16.msra.mxu0 %v1827
        %1893 = vmatprep.subr.bf16.mxu0 %v1830
        %1894 = vmatpush1.bf16.msra.mxu0 %v1829
        %1895 = vmatprep.subr.bf16.mxu0 %v1832
        %1896 = vmatpush1.bf16.msra.mxu0 %v1831
        %1897 = vmatprep.subr.bf16.mxu0 %v1834
        %1898 = vmatpush1.bf16.msra.mxu0 %v1833
        %1899 = vmatprep.subr.bf16.mxu0 %v1836
        %1900 = vmatpush1.bf16.msra.mxu0 %v1835
        %1901 = vmatprep.mubr.bf16.mxu0 %v558
        %1902 = vmatmul.mubr.bf16.gmra.mrb[0].mxu0 %v557
        %v1903 = vpop.f32.mrb[0].mxu0
        %v1904 = vadd.f32 0.0, %v1903
        %v1905 = vpop.f32.mrb[0].mxu0
        %v1906 = vadd.f32 0.0, %v1905
        %v1907 = vpop.f32.mrb[0].mxu0
        %v1908 = vadd.f32 0.0, %v1907
        %v1909 = vpop.f32.mrb[0].mxu0
        %v1910 = vadd.f32 0.0, %v1909
        %1911 = vmatprep.mubr.bf16.mxu0 %v560
        %1912 = vmatmul.mubr.bf16.gmra.mrb[0].mxu0 %v559
        %v1913 = vpop.f32.mrb[0].mxu0
        %v1914 = vadd.f32 0.0, %v1913
        %v1915 = vpop.f32.mrb[0].mxu0
        %v1916 = vadd.f32 0.0, %v1915
        %v1917 = vpop.f32.mrb[0].mxu0
        %v1918 = vadd.f32 0.0, %v1917
        %v1919 = vpop.f32.mrb[0].mxu0
        %v1920 = vadd.f32 0.0, %v1919
        %1921 = vdwg.mxu0
        %1922 = vset.pattern.permute.xlu0 4
        %1923 = vperm.xlu0 %1922, %v427
        %v1924 = vpop.permute.xlu0 %1923
        %1926 = vset.pattern.permute.xlu0 4
        %1927 = vperm.xlu0 %1926, %v428
        %v1928 = vpop.permute.xlu0 %1927
        %1930 = vset.pattern.permute.xlu0 4
        %1931 = vperm.xlu0 %1930, %v429
        %v1932 = vpop.permute.xlu0 %1931
        %1934 = vset.pattern.permute.xlu0 4
        %1935 = vperm.xlu0 %1934, %v430
        %v1936 = vpop.permute.xlu0 %1935
        %v1938 = vmul.f32 %v1904, %v1924
        %v1939 = vmul.f32 %v1906, %v1924
        %v1940 = vmul.f32 %v1908, %v1928
        %v1941 = vmul.f32 %v1910, %v1928
        %v1942 = vmul.f32 %v1914, %v1932
        %v1943 = vmul.f32 %v1916, %v1932
        %v1944 = vmul.f32 %v1918, %v1936
        %v1945 = vmul.f32 %v1920, %v1936
        %v1946 = vadd.f32 %v1668, %v1938
        %v1947 = vadd.f32 %v1669, %v1939
        %v1948 = vadd.f32 %v1670, %v1940
        %v1949 = vadd.f32 %v1671, %v1941
        %v1950 = vadd.f32 %v1672, %v1942
        %v1951 = vadd.f32 %v1673, %v1943
        %v1952 = vadd.f32 %v1674, %v1944
        %v1953 = vadd.f32 %v1675, %v1945
        %s1954 = scalar_lea.vmem [#allocation6], 1280
        %v1955 = vld [vmem:[%s1954] sm:$0xff]
        %v1956 = vld [vmem:[%s1954 + $0x8] sm:$0xff]
        %v1957 = vld [vmem:[%s1954 + $0x10] sm:$0xff]
        %v1958 = vld [vmem:[%s1954 + $0x18] sm:$0xff]
        %v1959 = vld [vmem:[%s1954 + $0x20] sm:$0xff]
        %v1960 = vld [vmem:[%s1954 + $0x28] sm:$0xff]
        %v1961 = vld [vmem:[%s1954 + $0x30] sm:$0xff]
        %v1962 = vld [vmem:[%s1954 + $0x38] sm:$0xff]
        %v1963 = vld [vmem:[%s1954 + $0x40] sm:$0xff]
        %v1964 = vld [vmem:[%s1954 + $0x48] sm:$0xff]
        %v1965 = vld [vmem:[%s1954 + $0x50] sm:$0xff]
        %v1966 = vld [vmem:[%s1954 + $0x58] sm:$0xff]
        %v1967 = vld [vmem:[%s1954 + $0x60] sm:$0xff]
        %v1968 = vld [vmem:[%s1954 + $0x68] sm:$0xff]
        %v1969 = vld [vmem:[%s1954 + $0x70] sm:$0xff]
        %v1970 = vld [vmem:[%s1954 + $0x78] sm:$0xff]
        %v1971 = vld [vmem:[%s1954 + $0x80] sm:$0xff]
        %v1972 = vld [vmem:[%s1954 + $0x88] sm:$0xff]
        %v1973 = vld [vmem:[%s1954 + $0x90] sm:$0xff]
        %v1974 = vld [vmem:[%s1954 + $0x98] sm:$0xff]
        %v1975 = vld [vmem:[%s1954 + $0xa0] sm:$0xff]
        %v1976 = vld [vmem:[%s1954 + $0xa8] sm:$0xff]
        %v1977 = vld [vmem:[%s1954 + $0xb0] sm:$0xff]
        %v1978 = vld [vmem:[%s1954 + $0xb8] sm:$0xff]
        %v1979 = vld [vmem:[%s1954 + $0xc0] sm:$0xff]
        %v1980 = vld [vmem:[%s1954 + $0xc8] sm:$0xff]
        %v1981 = vld [vmem:[%s1954 + $0xd0] sm:$0xff]
        %v1982 = vld [vmem:[%s1954 + $0xd8] sm:$0xff]
        %v1983 = vld [vmem:[%s1954 + $0xe0] sm:$0xff]
        %v1984 = vld [vmem:[%s1954 + $0xe8] sm:$0xff]
        %v1985 = vld [vmem:[%s1954 + $0xf0] sm:$0xff]
        %v1986 = vld [vmem:[%s1954 + $0xf8] sm:$0xff]
        %v2019 = vunpack.c.l.b16 %v1955
        %v2020 = vunpack.c.h.b16 %v1955
        %v2021 = vunpack.c.l.b16 %v1956
        %v2022 = vunpack.c.h.b16 %v1956
        %v2023 = vunpack.c.l.b16 %v1957
        %v2024 = vunpack.c.h.b16 %v1957
        %v2025 = vunpack.c.l.b16 %v1958
        %v2026 = vunpack.c.h.b16 %v1958
        %v2027 = vunpack.c.l.b16 %v1959
        %v2028 = vunpack.c.h.b16 %v1959
        %v2029 = vunpack.c.l.b16 %v1960
        %v2030 = vunpack.c.h.b16 %v1960
        %v2031 = vunpack.c.l.b16 %v1961
        %v2032 = vunpack.c.h.b16 %v1961
        %v2033 = vunpack.c.l.b16 %v1962
        %v2034 = vunpack.c.h.b16 %v1962
        %v2035 = vunpack.c.l.b16 %v1963
        %v2036 = vunpack.c.h.b16 %v1963
        %v2037 = vunpack.c.l.b16 %v1964
        %v2038 = vunpack.c.h.b16 %v1964
        %v2039 = vunpack.c.l.b16 %v1965
        %v2040 = vunpack.c.h.b16 %v1965
        %v2041 = vunpack.c.l.b16 %v1966
        %v2042 = vunpack.c.h.b16 %v1966
        %v2043 = vunpack.c.l.b16 %v1967
        %v2044 = vunpack.c.h.b16 %v1967
        %v2045 = vunpack.c.l.b16 %v1968
        %v2046 = vunpack.c.h.b16 %v1968
        %v2047 = vunpack.c.l.b16 %v1969
        %v2048 = vunpack.c.h.b16 %v1969
        %v2049 = vunpack.c.l.b16 %v1970
        %v2050 = vunpack.c.h.b16 %v1970
        %v2051 = vunpack.c.l.b16 %v1971
        %v2052 = vunpack.c.h.b16 %v1971
        %v2053 = vunpack.c.l.b16 %v1972
        %v2054 = vunpack.c.h.b16 %v1972
        %v2055 = vunpack.c.l.b16 %v1973
        %v2056 = vunpack.c.h.b16 %v1973
        %v2057 = vunpack.c.l.b16 %v1974
        %v2058 = vunpack.c.h.b16 %v1974
        %v2059 = vunpack.c.l.b16 %v1975
        %v2060 = vunpack.c.h.b16 %v1975
        %v2061 = vunpack.c.l.b16 %v1976
        %v2062 = vunpack.c.h.b16 %v1976
        %v2063 = vunpack.c.l.b16 %v1977
        %v2064 = vunpack.c.h.b16 %v1977
        %v2065 = vunpack.c.l.b16 %v1978
        %v2066 = vunpack.c.h.b16 %v1978
        %v2067 = vunpack.c.l.b16 %v1979
        %v2068 = vunpack.c.h.b16 %v1979
        %v2069 = vunpack.c.l.b16 %v1980
        %v2070 = vunpack.c.h.b16 %v1980
        %v2071 = vunpack.c.l.b16 %v1981
        %v2072 = vunpack.c.h.b16 %v1981
        %v2073 = vunpack.c.l.b16 %v1982
        %v2074 = vunpack.c.h.b16 %v1982
        %v2075 = vunpack.c.l.b16 %v1983
        %v2076 = vunpack.c.h.b16 %v1983
        %v2077 = vunpack.c.l.b16 %v1984
        %v2078 = vunpack.c.h.b16 %v1984
        %v2079 = vunpack.c.l.b16 %v1985
        %v2080 = vunpack.c.h.b16 %v1985
        %v2081 = vunpack.c.l.b16 %v1986
        %v2082 = vunpack.c.h.b16 %v1986
        %v2083 = vpack.c.b16 %v2021, %v2019
        %v2084 = vpack.c.b16 %v2022, %v2020
        %v2085 = vpack.c.b16 %v2025, %v2023
        %v2086 = vpack.c.b16 %v2026, %v2024
        %v2087 = vpack.c.b16 %v2029, %v2027
        %v2088 = vpack.c.b16 %v2030, %v2028
        %v2089 = vpack.c.b16 %v2033, %v2031
        %v2090 = vpack.c.b16 %v2034, %v2032
        %v2091 = vpack.c.b16 %v2037, %v2035
        %v2092 = vpack.c.b16 %v2038, %v2036
        %v2093 = vpack.c.b16 %v2041, %v2039
        %v2094 = vpack.c.b16 %v2042, %v2040
        %v2095 = vpack.c.b16 %v2045, %v2043
        %v2096 = vpack.c.b16 %v2046, %v2044
        %v2097 = vpack.c.b16 %v2049, %v2047
        %v2098 = vpack.c.b16 %v2050, %v2048
        %v2099 = vpack.c.b16 %v2053, %v2051
        %v2100 = vpack.c.b16 %v2054, %v2052
        %v2101 = vpack.c.b16 %v2057, %v2055
        %v2102 = vpack.c.b16 %v2058, %v2056
        %v2103 = vpack.c.b16 %v2061, %v2059
        %v2104 = vpack.c.b16 %v2062, %v2060
        %v2105 = vpack.c.b16 %v2065, %v2063
        %v2106 = vpack.c.b16 %v2066, %v2064
        %v2107 = vpack.c.b16 %v2069, %v2067
        %v2108 = vpack.c.b16 %v2070, %v2068
        %v2109 = vpack.c.b16 %v2073, %v2071
        %v2110 = vpack.c.b16 %v2074, %v2072
        %v2111 = vpack.c.b16 %v2077, %v2075
        %v2112 = vpack.c.b16 %v2078, %v2076
        %v2113 = vpack.c.b16 %v2081, %v2079
        %v2114 = vpack.c.b16 %v2082, %v2080
        %2147 = vmatprep.subr.bf16.mxu0 %v2084
        %2148 = vmatpush1.bf16.msra.mxu0 %v2083
        %2149 = vmatprep.subr.bf16.mxu0 %v2086
        %2150 = vmatpush1.bf16.msra.mxu0 %v2085
        %2151 = vmatprep.subr.bf16.mxu0 %v2088
        %2152 = vmatpush1.bf16.msra.mxu0 %v2087
        %2153 = vmatprep.subr.bf16.mxu0 %v2090
        %2154 = vmatpush1.bf16.msra.mxu0 %v2089
        %2155 = vmatprep.subr.bf16.mxu0 %v2092
        %2156 = vmatpush1.bf16.msra.mxu0 %v2091
        %2157 = vmatprep.subr.bf16.mxu0 %v2094
        %2158 = vmatpush1.bf16.msra.mxu0 %v2093
        %2159 = vmatprep.subr.bf16.mxu0 %v2096
        %2160 = vmatpush1.bf16.msra.mxu0 %v2095
        %2161 = vmatprep.subr.bf16.mxu0 %v2098
        %2162 = vmatpush1.bf16.msra.mxu0 %v2097
        %2163 = vmatprep.subr.bf16.mxu0 %v2100
        %2164 = vmatpush1.bf16.msra.mxu0 %v2099
        %2165 = vmatprep.subr.bf16.mxu0 %v2102
        %2166 = vmatpush1.bf16.msra.mxu0 %v2101
        %2167 = vmatprep.subr.bf16.mxu0 %v2104
        %2168 = vmatpush1.bf16.msra.mxu0 %v2103
        %2169 = vmatprep.subr.bf16.mxu0 %v2106
        %2170 = vmatpush1.bf16.msra.mxu0 %v2105
        %2171 = vmatprep.subr.bf16.mxu0 %v2108
        %2172 = vmatpush1.bf16.msra.mxu0 %v2107
        %2173 = vmatprep.subr.bf16.mxu0 %v2110
        %2174 = vmatpush1.bf16.msra.mxu0 %v2109
        %2175 = vmatprep.subr.bf16.mxu0 %v2112
        %2176 = vmatpush1.bf16.msra.mxu0 %v2111
        %2177 = vmatprep.subr.bf16.mxu0 %v2114
        %2178 = vmatpush1.bf16.msra.mxu0 %v2113
        %2179 = vmatprep.mubr.bf16.mxu0 %v558
        %2180 = vmatmul.mubr.bf16.gmra.mrb[0].mxu0 %v557
        %v2181 = vpop.f32.mrb[0].mxu0
        %v2182 = vadd.f32 0.0, %v2181
        %v2183 = vpop.f32.mrb[0].mxu0
        %v2184 = vadd.f32 0.0, %v2183
        %v2185 = vpop.f32.mrb[0].mxu0
        %v2186 = vadd.f32 0.0, %v2185
        %v2187 = vpop.f32.mrb[0].mxu0
        %v2188 = vadd.f32 0.0, %v2187
        %2189 = vmatprep.mubr.bf16.mxu0 %v560
        %2190 = vmatmul.mubr.bf16.gmra.mrb[0].mxu0 %v559
        %v2191 = vpop.f32.mrb[0].mxu0
        %v2192 = vadd.f32 0.0, %v2191
        %v2193 = vpop.f32.mrb[0].mxu0
        %v2194 = vadd.f32 0.0, %v2193
        %v2195 = vpop.f32.mrb[0].mxu0
        %v2196 = vadd.f32 0.0, %v2195
        %v2197 = vpop.f32.mrb[0].mxu0
        %v2198 = vadd.f32 0.0, %v2197
        %2199 = vdwg.mxu0
        %2200 = vset.pattern.permute.xlu0 5
        %2201 = vperm.xlu0 %2200, %v427
        %v2202 = vpop.permute.xlu0 %2201
        %2204 = vset.pattern.permute.xlu0 5
        %2205 = vperm.xlu0 %2204, %v428
        %v2206 = vpop.permute.xlu0 %2205
        %2208 = vset.pattern.permute.xlu0 5
        %2209 = vperm.xlu0 %2208, %v429
        %v2210 = vpop.permute.xlu0 %2209
        %2212 = vset.pattern.permute.xlu0 5
        %2213 = vperm.xlu0 %2212, %v430
        %v2214 = vpop.permute.xlu0 %2213
        %v2216 = vmul.f32 %v2182, %v2202
        %v2217 = vmul.f32 %v2184, %v2202
        %v2218 = vmul.f32 %v2186, %v2206
        %v2219 = vmul.f32 %v2188, %v2206
        %v2220 = vmul.f32 %v2192, %v2210
        %v2221 = vmul.f32 %v2194, %v2210
        %v2222 = vmul.f32 %v2196, %v2214
        %v2223 = vmul.f32 %v2198, %v2214
        %v2224 = vadd.f32 %v1946, %v2216
        %v2225 = vadd.f32 %v1947, %v2217
        %v2226 = vadd.f32 %v1948, %v2218
        %v2227 = vadd.f32 %v1949, %v2219
        %v2228 = vadd.f32 %v1950, %v2220
        %v2229 = vadd.f32 %v1951, %v2221
        %v2230 = vadd.f32 %v1952, %v2222
        %v2231 = vadd.f32 %v1953, %v2223
        %s2232 = scalar_lea.vmem [#allocation6], 1536
        %v2233 = vld [vmem:[%s2232] sm:$0xff]
        %v2234 = vld [vmem:[%s2232 + $0x8] sm:$0xff]
        %v2235 = vld [vmem:[%s2232 + $0x10] sm:$0xff]
        %v2236 = vld [vmem:[%s2232 + $0x18] sm:$0xff]
        %v2237 = vld [vmem:[%s2232 + $0x20] sm:$0xff]
        %v2238 = vld [vmem:[%s2232 + $0x28] sm:$0xff]
        %v2239 = vld [vmem:[%s2232 + $0x30] sm:$0xff]
        %v2240 = vld [vmem:[%s2232 + $0x38] sm:$0xff]
        %v2241 = vld [vmem:[%s2232 + $0x40] sm:$0xff]
        %v2242 = vld [vmem:[%s2232 + $0x48] sm:$0xff]
        %v2243 = vld [vmem:[%s2232 + $0x50] sm:$0xff]
        %v2244 = vld [vmem:[%s2232 + $0x58] sm:$0xff]
        %v2245 = vld [vmem:[%s2232 + $0x60] sm:$0xff]
        %v2246 = vld [vmem:[%s2232 + $0x68] sm:$0xff]
        %v2247 = vld [vmem:[%s2232 + $0x70] sm:$0xff]
        %v2248 = vld [vmem:[%s2232 + $0x78] sm:$0xff]
        %v2249 = vld [vmem:[%s2232 + $0x80] sm:$0xff]
        %v2250 = vld [vmem:[%s2232 + $0x88] sm:$0xff]
        %v2251 = vld [vmem:[%s2232 + $0x90] sm:$0xff]
        %v2252 = vld [vmem:[%s2232 + $0x98] sm:$0xff]
        %v2253 = vld [vmem:[%s2232 + $0xa0] sm:$0xff]
        %v2254 = vld [vmem:[%s2232 + $0xa8] sm:$0xff]
        %v2255 = vld [vmem:[%s2232 + $0xb0] sm:$0xff]
        %v2256 = vld [vmem:[%s2232 + $0xb8] sm:$0xff]
        %v2257 = vld [vmem:[%s2232 + $0xc0] sm:$0xff]
        %v2258 = vld [vmem:[%s2232 + $0xc8] sm:$0xff]
        %v2259 = vld [vmem:[%s2232 + $0xd0] sm:$0xff]
        %v2260 = vld [vmem:[%s2232 + $0xd8] sm:$0xff]
        %v2261 = vld [vmem:[%s2232 + $0xe0] sm:$0xff]
        %v2262 = vld [vmem:[%s2232 + $0xe8] sm:$0xff]
        %v2263 = vld [vmem:[%s2232 + $0xf0] sm:$0xff]
        %v2264 = vld [vmem:[%s2232 + $0xf8] sm:$0xff]
        %v2297 = vunpack.c.l.b16 %v2233
        %v2298 = vunpack.c.h.b16 %v2233
        %v2299 = vunpack.c.l.b16 %v2234
        %v2300 = vunpack.c.h.b16 %v2234
        %v2301 = vunpack.c.l.b16 %v2235
        %v2302 = vunpack.c.h.b16 %v2235
        %v2303 = vunpack.c.l.b16 %v2236
        %v2304 = vunpack.c.h.b16 %v2236
        %v2305 = vunpack.c.l.b16 %v2237
        %v2306 = vunpack.c.h.b16 %v2237
        %v2307 = vunpack.c.l.b16 %v2238
        %v2308 = vunpack.c.h.b16 %v2238
        %v2309 = vunpack.c.l.b16 %v2239
        %v2310 = vunpack.c.h.b16 %v2239
        %v2311 = vunpack.c.l.b16 %v2240
        %v2312 = vunpack.c.h.b16 %v2240
        %v2313 = vunpack.c.l.b16 %v2241
        %v2314 = vunpack.c.h.b16 %v2241
        %v2315 = vunpack.c.l.b16 %v2242
        %v2316 = vunpack.c.h.b16 %v2242
        %v2317 = vunpack.c.l.b16 %v2243
        %v2318 = vunpack.c.h.b16 %v2243
        %v2319 = vunpack.c.l.b16 %v2244
        %v2320 = vunpack.c.h.b16 %v2244
        %v2321 = vunpack.c.l.b16 %v2245
        %v2322 = vunpack.c.h.b16 %v2245
        %v2323 = vunpack.c.l.b16 %v2246
        %v2324 = vunpack.c.h.b16 %v2246
        %v2325 = vunpack.c.l.b16 %v2247
        %v2326 = vunpack.c.h.b16 %v2247
        %v2327 = vunpack.c.l.b16 %v2248
        %v2328 = vunpack.c.h.b16 %v2248
        %v2329 = vunpack.c.l.b16 %v2249
        %v2330 = vunpack.c.h.b16 %v2249
        %v2331 = vunpack.c.l.b16 %v2250
        %v2332 = vunpack.c.h.b16 %v2250
        %v2333 = vunpack.c.l.b16 %v2251
        %v2334 = vunpack.c.h.b16 %v2251
        %v2335 = vunpack.c.l.b16 %v2252
        %v2336 = vunpack.c.h.b16 %v2252
        %v2337 = vunpack.c.l.b16 %v2253
        %v2338 = vunpack.c.h.b16 %v2253
        %v2339 = vunpack.c.l.b16 %v2254
        %v2340 = vunpack.c.h.b16 %v2254
        %v2341 = vunpack.c.l.b16 %v2255
        %v2342 = vunpack.c.h.b16 %v2255
        %v2343 = vunpack.c.l.b16 %v2256
        %v2344 = vunpack.c.h.b16 %v2256
        %v2345 = vunpack.c.l.b16 %v2257
        %v2346 = vunpack.c.h.b16 %v2257
        %v2347 = vunpack.c.l.b16 %v2258
        %v2348 = vunpack.c.h.b16 %v2258
        %v2349 = vunpack.c.l.b16 %v2259
        %v2350 = vunpack.c.h.b16 %v2259
        %v2351 = vunpack.c.l.b16 %v2260
        %v2352 = vunpack.c.h.b16 %v2260
        %v2353 = vunpack.c.l.b16 %v2261
        %v2354 = vunpack.c.h.b16 %v2261
        %v2355 = vunpack.c.l.b16 %v2262
        %v2356 = vunpack.c.h.b16 %v2262
        %v2357 = vunpack.c.l.b16 %v2263
        %v2358 = vunpack.c.h.b16 %v2263
        %v2359 = vunpack.c.l.b16 %v2264
        %v2360 = vunpack.c.h.b16 %v2264
        %v2361 = vpack.c.b16 %v2299, %v2297
        %v2362 = vpack.c.b16 %v2300, %v2298
        %v2363 = vpack.c.b16 %v2303, %v2301
        %v2364 = vpack.c.b16 %v2304, %v2302
        %v2365 = vpack.c.b16 %v2307, %v2305
        %v2366 = vpack.c.b16 %v2308, %v2306
        %v2367 = vpack.c.b16 %v2311, %v2309
        %v2368 = vpack.c.b16 %v2312, %v2310
        %v2369 = vpack.c.b16 %v2315, %v2313
        %v2370 = vpack.c.b16 %v2316, %v2314
        %v2371 = vpack.c.b16 %v2319, %v2317
        %v2372 = vpack.c.b16 %v2320, %v2318
        %v2373 = vpack.c.b16 %v2323, %v2321
        %v2374 = vpack.c.b16 %v2324, %v2322
        %v2375 = vpack.c.b16 %v2327, %v2325
        %v2376 = vpack.c.b16 %v2328, %v2326
        %v2377 = vpack.c.b16 %v2331, %v2329
        %v2378 = vpack.c.b16 %v2332, %v2330
        %v2379 = vpack.c.b16 %v2335, %v2333
        %v2380 = vpack.c.b16 %v2336, %v2334
        %v2381 = vpack.c.b16 %v2339, %v2337
        %v2382 = vpack.c.b16 %v2340, %v2338
        %v2383 = vpack.c.b16 %v2343, %v2341
        %v2384 = vpack.c.b16 %v2344, %v2342
        %v2385 = vpack.c.b16 %v2347, %v2345
        %v2386 = vpack.c.b16 %v2348, %v2346
        %v2387 = vpack.c.b16 %v2351, %v2349
        %v2388 = vpack.c.b16 %v2352, %v2350
        %v2389 = vpack.c.b16 %v2355, %v2353
        %v2390 = vpack.c.b16 %v2356, %v2354
        %v2391 = vpack.c.b16 %v2359, %v2357
        %v2392 = vpack.c.b16 %v2360, %v2358
        %2425 = vmatprep.subr.bf16.mxu0 %v2362
        %2426 = vmatpush1.bf16.msra.mxu0 %v2361
        %2427 = vmatprep.subr.bf16.mxu0 %v2364
        %2428 = vmatpush1.bf16.msra.mxu0 %v2363
        %2429 = vmatprep.subr.bf16.mxu0 %v2366
        %2430 = vmatpush1.bf16.msra.mxu0 %v2365
        %2431 = vmatprep.subr.bf16.mxu0 %v2368
        %2432 = vmatpush1.bf16.msra.mxu0 %v2367
        %2433 = vmatprep.subr.bf16.mxu0 %v2370
        %2434 = vmatpush1.bf16.msra.mxu0 %v2369
        %2435 = vmatprep.subr.bf16.mxu0 %v2372
        %2436 = vmatpush1.bf16.msra.mxu0 %v2371
        %2437 = vmatprep.subr.bf16.mxu0 %v2374
        %2438 = vmatpush1.bf16.msra.mxu0 %v2373
        %2439 = vmatprep.subr.bf16.mxu0 %v2376
        %2440 = vmatpush1.bf16.msra.mxu0 %v2375
        %2441 = vmatprep.subr.bf16.mxu0 %v2378
        %2442 = vmatpush1.bf16.msra.mxu0 %v2377
        %2443 = vmatprep.subr.bf16.mxu0 %v2380
        %2444 = vmatpush1.bf16.msra.mxu0 %v2379
        %2445 = vmatprep.subr.bf16.mxu0 %v2382
        %2446 = vmatpush1.bf16.msra.mxu0 %v2381
        %2447 = vmatprep.subr.bf16.mxu0 %v2384
        %2448 = vmatpush1.bf16.msra.mxu0 %v2383
        %2449 = vmatprep.subr.bf16.mxu0 %v2386
        %2450 = vmatpush1.bf16.msra.mxu0 %v2385
        %2451 = vmatprep.subr.bf16.mxu0 %v2388
        %2452 = vmatpush1.bf16.msra.mxu0 %v2387
        %2453 = vmatprep.subr.bf16.mxu0 %v2390
        %2454 = vmatpush1.bf16.msra.mxu0 %v2389
        %2455 = vmatprep.subr.bf16.mxu0 %v2392
        %2456 = vmatpush1.bf16.msra.mxu0 %v2391
        %2457 = vmatprep.mubr.bf16.mxu0 %v558
        %2458 = vmatmul.mubr.bf16.gmra.mrb[0].mxu0 %v557
        %v2459 = vpop.f32.mrb[0].mxu0
        %v2460 = vadd.f32 0.0, %v2459
        %v2461 = vpop.f32.mrb[0].mxu0
        %v2462 = vadd.f32 0.0, %v2461
        %v2463 = vpop.f32.mrb[0].mxu0
        %v2464 = vadd.f32 0.0, %v2463
        %v2465 = vpop.f32.mrb[0].mxu0
        %v2466 = vadd.f32 0.0, %v2465
        %2467 = vmatprep.mubr.bf16.mxu0 %v560
        %2468 = vmatmul.mubr.bf16.gmra.mrb[0].mxu0 %v559
        %v2469 = vpop.f32.mrb[0].mxu0
        %v2470 = vadd.f32 0.0, %v2469
        %v2471 = vpop.f32.mrb[0].mxu0
        %v2472 = vadd.f32 0.0, %v2471
        %v2473 = vpop.f32.mrb[0].mxu0
        %v2474 = vadd.f32 0.0, %v2473
        %v2475 = vpop.f32.mrb[0].mxu0
        %v2476 = vadd.f32 0.0, %v2475
        %2477 = vdwg.mxu0
        %2478 = vset.pattern.permute.xlu0 6
        %2479 = vperm.xlu0 %2478, %v427
        %v2480 = vpop.permute.xlu0 %2479
        %2482 = vset.pattern.permute.xlu0 6
        %2483 = vperm.xlu0 %2482, %v428
        %v2484 = vpop.permute.xlu0 %2483
        %2486 = vset.pattern.permute.xlu0 6
        %2487 = vperm.xlu0 %2486, %v429
        %v2488 = vpop.permute.xlu0 %2487
        %2490 = vset.pattern.permute.xlu0 6
        %2491 = vperm.xlu0 %2490, %v430
        %v2492 = vpop.permute.xlu0 %2491
        %v2494 = vmul.f32 %v2460, %v2480
        %v2495 = vmul.f32 %v2462, %v2480
        %v2496 = vmul.f32 %v2464, %v2484
        %v2497 = vmul.f32 %v2466, %v2484
        %v2498 = vmul.f32 %v2470, %v2488
        %v2499 = vmul.f32 %v2472, %v2488
        %v2500 = vmul.f32 %v2474, %v2492
        %v2501 = vmul.f32 %v2476, %v2492
        %v2502 = vadd.f32 %v2224, %v2494
        %v2503 = vadd.f32 %v2225, %v2495
        %v2504 = vadd.f32 %v2226, %v2496
        %v2505 = vadd.f32 %v2227, %v2497
        %v2506 = vadd.f32 %v2228, %v2498
        %v2507 = vadd.f32 %v2229, %v2499
        %v2508 = vadd.f32 %v2230, %v2500
        %v2509 = vadd.f32 %v2231, %v2501
        %s2510 = scalar_lea.vmem [#allocation6], 1792
        %v2511 = vld [vmem:[%s2510] sm:$0xff]
        %v2512 = vld [vmem:[%s2510 + $0x8] sm:$0xff]
        %v2513 = vld [vmem:[%s2510 + $0x10] sm:$0xff]
        %v2514 = vld [vmem:[%s2510 + $0x18] sm:$0xff]
        %v2515 = vld [vmem:[%s2510 + $0x20] sm:$0xff]
        %v2516 = vld [vmem:[%s2510 + $0x28] sm:$0xff]
        %v2517 = vld [vmem:[%s2510 + $0x30] sm:$0xff]
        %v2518 = vld [vmem:[%s2510 + $0x38] sm:$0xff]
        %v2519 = vld [vmem:[%s2510 + $0x40] sm:$0xff]
        %v2520 = vld [vmem:[%s2510 + $0x48] sm:$0xff]
        %v2521 = vld [vmem:[%s2510 + $0x50] sm:$0xff]
        %v2522 = vld [vmem:[%s2510 + $0x58] sm:$0xff]
        %v2523 = vld [vmem:[%s2510 + $0x60] sm:$0xff]
        %v2524 = vld [vmem:[%s2510 + $0x68] sm:$0xff]
        %v2525 = vld [vmem:[%s2510 + $0x70] sm:$0xff]
        %v2526 = vld [vmem:[%s2510 + $0x78] sm:$0xff]
        %v2527 = vld [vmem:[%s2510 + $0x80] sm:$0xff]
        %v2528 = vld [vmem:[%s2510 + $0x88] sm:$0xff]
        %v2529 = vld [vmem:[%s2510 + $0x90] sm:$0xff]
        %v2530 = vld [vmem:[%s2510 + $0x98] sm:$0xff]
        %v2531 = vld [vmem:[%s2510 + $0xa0] sm:$0xff]
        %v2532 = vld [vmem:[%s2510 + $0xa8] sm:$0xff]
        %v2533 = vld [vmem:[%s2510 + $0xb0] sm:$0xff]
        %v2534 = vld [vmem:[%s2510 + $0xb8] sm:$0xff]
        %v2535 = vld [vmem:[%s2510 + $0xc0] sm:$0xff]
        %v2536 = vld [vmem:[%s2510 + $0xc8] sm:$0xff]
        %v2537 = vld [vmem:[%s2510 + $0xd0] sm:$0xff]
        %v2538 = vld [vmem:[%s2510 + $0xd8] sm:$0xff]
        %v2539 = vld [vmem:[%s2510 + $0xe0] sm:$0xff]
        %v2540 = vld [vmem:[%s2510 + $0xe8] sm:$0xff]
        %v2541 = vld [vmem:[%s2510 + $0xf0] sm:$0xff]
        %v2542 = vld [vmem:[%s2510 + $0xf8] sm:$0xff]
        %v2575 = vunpack.c.l.b16 %v2511
        %v2576 = vunpack.c.h.b16 %v2511
        %v2577 = vunpack.c.l.b16 %v2512
        %v2578 = vunpack.c.h.b16 %v2512
        %v2579 = vunpack.c.l.b16 %v2513
        %v2580 = vunpack.c.h.b16 %v2513
        %v2581 = vunpack.c.l.b16 %v2514
        %v2582 = vunpack.c.h.b16 %v2514
        %v2583 = vunpack.c.l.b16 %v2515
        %v2584 = vunpack.c.h.b16 %v2515
        %v2585 = vunpack.c.l.b16 %v2516
        %v2586 = vunpack.c.h.b16 %v2516
        %v2587 = vunpack.c.l.b16 %v2517
        %v2588 = vunpack.c.h.b16 %v2517
        %v2589 = vunpack.c.l.b16 %v2518
        %v2590 = vunpack.c.h.b16 %v2518
        %v2591 = vunpack.c.l.b16 %v2519
        %v2592 = vunpack.c.h.b16 %v2519
        %v2593 = vunpack.c.l.b16 %v2520
        %v2594 = vunpack.c.h.b16 %v2520
        %v2595 = vunpack.c.l.b16 %v2521
        %v2596 = vunpack.c.h.b16 %v2521
        %v2597 = vunpack.c.l.b16 %v2522
        %v2598 = vunpack.c.h.b16 %v2522
        %v2599 = vunpack.c.l.b16 %v2523
        %v2600 = vunpack.c.h.b16 %v2523
        %v2601 = vunpack.c.l.b16 %v2524
        %v2602 = vunpack.c.h.b16 %v2524
        %v2603 = vunpack.c.l.b16 %v2525
        %v2604 = vunpack.c.h.b16 %v2525
        %v2605 = vunpack.c.l.b16 %v2526
        %v2606 = vunpack.c.h.b16 %v2526
        %v2607 = vunpack.c.l.b16 %v2527
        %v2608 = vunpack.c.h.b16 %v2527
        %v2609 = vunpack.c.l.b16 %v2528
        %v2610 = vunpack.c.h.b16 %v2528
        %v2611 = vunpack.c.l.b16 %v2529
        %v2612 = vunpack.c.h.b16 %v2529
        %v2613 = vunpack.c.l.b16 %v2530
        %v2614 = vunpack.c.h.b16 %v2530
        %v2615 = vunpack.c.l.b16 %v2531
        %v2616 = vunpack.c.h.b16 %v2531
        %v2617 = vunpack.c.l.b16 %v2532
        %v2618 = vunpack.c.h.b16 %v2532
        %v2619 = vunpack.c.l.b16 %v2533
        %v2620 = vunpack.c.h.b16 %v2533
        %v2621 = vunpack.c.l.b16 %v2534
        %v2622 = vunpack.c.h.b16 %v2534
        %v2623 = vunpack.c.l.b16 %v2535
        %v2624 = vunpack.c.h.b16 %v2535
        %v2625 = vunpack.c.l.b16 %v2536
        %v2626 = vunpack.c.h.b16 %v2536
        %v2627 = vunpack.c.l.b16 %v2537
        %v2628 = vunpack.c.h.b16 %v2537
        %v2629 = vunpack.c.l.b16 %v2538
        %v2630 = vunpack.c.h.b16 %v2538
        %v2631 = vunpack.c.l.b16 %v2539
        %v2632 = vunpack.c.h.b16 %v2539
        %v2633 = vunpack.c.l.b16 %v2540
        %v2634 = vunpack.c.h.b16 %v2540
        %v2635 = vunpack.c.l.b16 %v2541
        %v2636 = vunpack.c.h.b16 %v2541
        %v2637 = vunpack.c.l.b16 %v2542
        %v2638 = vunpack.c.h.b16 %v2542
        %v2639 = vpack.c.b16 %v2577, %v2575
        %v2640 = vpack.c.b16 %v2578, %v2576
        %v2641 = vpack.c.b16 %v2581, %v2579
        %v2642 = vpack.c.b16 %v2582, %v2580
        %v2643 = vpack.c.b16 %v2585, %v2583
        %v2644 = vpack.c.b16 %v2586, %v2584
        %v2645 = vpack.c.b16 %v2589, %v2587
        %v2646 = vpack.c.b16 %v2590, %v2588
        %v2647 = vpack.c.b16 %v2593, %v2591
        %v2648 = vpack.c.b16 %v2594, %v2592
        %v2649 = vpack.c.b16 %v2597, %v2595
        %v2650 = vpack.c.b16 %v2598, %v2596
        %v2651 = vpack.c.b16 %v2601, %v2599
        %v2652 = vpack.c.b16 %v2602, %v2600
        %v2653 = vpack.c.b16 %v2605, %v2603
        %v2654 = vpack.c.b16 %v2606, %v2604
        %v2655 = vpack.c.b16 %v2609, %v2607
        %v2656 = vpack.c.b16 %v2610, %v2608
        %v2657 = vpack.c.b16 %v2613, %v2611
        %v2658 = vpack.c.b16 %v2614, %v2612
        %v2659 = vpack.c.b16 %v2617, %v2615
        %v2660 = vpack.c.b16 %v2618, %v2616
        %v2661 = vpack.c.b16 %v2621, %v2619
        %v2662 = vpack.c.b16 %v2622, %v2620
        %v2663 = vpack.c.b16 %v2625, %v2623
        %v2664 = vpack.c.b16 %v2626, %v2624
        %v2665 = vpack.c.b16 %v2629, %v2627
        %v2666 = vpack.c.b16 %v2630, %v2628
        %v2667 = vpack.c.b16 %v2633, %v2631
        %v2668 = vpack.c.b16 %v2634, %v2632
        %v2669 = vpack.c.b16 %v2637, %v2635
        %v2670 = vpack.c.b16 %v2638, %v2636
        %2703 = vmatprep.subr.bf16.mxu0 %v2640
        %2704 = vmatpush1.bf16.msra.mxu0 %v2639
        %2705 = vmatprep.subr.bf16.mxu0 %v2642
        %2706 = vmatpush1.bf16.msra.mxu0 %v2641
        %2707 = vmatprep.subr.bf16.mxu0 %v2644
        %2708 = vmatpush1.bf16.msra.mxu0 %v2643
        %2709 = vmatprep.subr.bf16.mxu0 %v2646
        %2710 = vmatpush1.bf16.msra.mxu0 %v2645
        %2711 = vmatprep.subr.bf16.mxu0 %v2648
        %2712 = vmatpush1.bf16.msra.mxu0 %v2647
        %2713 = vmatprep.subr.bf16.mxu0 %v2650
        %2714 = vmatpush1.bf16.msra.mxu0 %v2649
        %2715 = vmatprep.subr.bf16.mxu0 %v2652
        %2716 = vmatpush1.bf16.msra.mxu0 %v2651
        %2717 = vmatprep.subr.bf16.mxu0 %v2654
        %2718 = vmatpush1.bf16.msra.mxu0 %v2653
        %2719 = vmatprep.subr.bf16.mxu0 %v2656
        %2720 = vmatpush1.bf16.msra.mxu0 %v2655
        %2721 = vmatprep.subr.bf16.mxu0 %v2658
        %2722 = vmatpush1.bf16.msra.mxu0 %v2657
        %2723 = vmatprep.subr.bf16.mxu0 %v2660
        %2724 = vmatpush1.bf16.msra.mxu0 %v2659
        %2725 = vmatprep.subr.bf16.mxu0 %v2662
        %2726 = vmatpush1.bf16.msra.mxu0 %v2661
        %2727 = vmatprep.subr.bf16.mxu0 %v2664
        %2728 = vmatpush1.bf16.msra.mxu0 %v2663
        %2729 = vmatprep.subr.bf16.mxu0 %v2666
        %2730 = vmatpush1.bf16.msra.mxu0 %v2665
        %2731 = vmatprep.subr.bf16.mxu0 %v2668
        %2732 = vmatpush1.bf16.msra.mxu0 %v2667
        %2733 = vmatprep.subr.bf16.mxu0 %v2670
        %2734 = vmatpush1.bf16.msra.mxu0 %v2669
        %2735 = vmatprep.mubr.bf16.mxu0 %v558
        %2736 = vmatmul.mubr.bf16.gmra.mrb[0].mxu0 %v557
        %v2737 = vpop.f32.mrb[0].mxu0
        %v2738 = vadd.f32 0.0, %v2737
        %v2739 = vpop.f32.mrb[0].mxu0
        %v2740 = vadd.f32 0.0, %v2739
        %v2741 = vpop.f32.mrb[0].mxu0
        %v2742 = vadd.f32 0.0, %v2741
        %v2743 = vpop.f32.mrb[0].mxu0
        %v2744 = vadd.f32 0.0, %v2743
        %2745 = vmatprep.mubr.bf16.mxu0 %v560
        %2746 = vmatmul.mubr.bf16.gmra.mrb[0].mxu0 %v559
        %v2747 = vpop.f32.mrb[0].mxu0
        %v2748 = vadd.f32 0.0, %v2747
        %v2749 = vpop.f32.mrb[0].mxu0
        %v2750 = vadd.f32 0.0, %v2749
        %v2751 = vpop.f32.mrb[0].mxu0
        %v2752 = vadd.f32 0.0, %v2751
        %v2753 = vpop.f32.mrb[0].mxu0
        %v2754 = vadd.f32 0.0, %v2753
        %2755 = vdwg.mxu0
        %2756 = vset.pattern.permute.xlu0 7
        %2757 = vperm.xlu0 %2756, %v427
        %v2758 = vpop.permute.xlu0 %2757
        %2760 = vset.pattern.permute.xlu0 7
        %2761 = vperm.xlu0 %2760, %v428
        %v2762 = vpop.permute.xlu0 %2761
        %2764 = vset.pattern.permute.xlu0 7
        %2765 = vperm.xlu0 %2764, %v429
        %v2766 = vpop.permute.xlu0 %2765
        %2768 = vset.pattern.permute.xlu0 7
        %2769 = vperm.xlu0 %2768, %v430
        %v2770 = vpop.permute.xlu0 %2769
        %v2772 = vmul.f32 %v2738, %v2758
        %v2773 = vmul.f32 %v2740, %v2758
        %v2774 = vmul.f32 %v2742, %v2762
        %v2775 = vmul.f32 %v2744, %v2762
        %v2776 = vmul.f32 %v2748, %v2766
        %v2777 = vmul.f32 %v2750, %v2766
        %v2778 = vmul.f32 %v2752, %v2770
        %v2779 = vmul.f32 %v2754, %v2770
        %v2780 = vadd.f32 %v2502, %v2772
        %v2781 = vadd.f32 %v2503, %v2773
        %v2782 = vadd.f32 %v2504, %v2774
        %v2783 = vadd.f32 %v2505, %v2775
        %v2784 = vadd.f32 %v2506, %v2776
        %v2785 = vadd.f32 %v2507, %v2777
        %v2786 = vadd.f32 %v2508, %v2778
        %v2787 = vadd.f32 %v2509, %v2779
        %s2788 = scalar_lea.vmem [#allocation6], 2048
        %v2789 = vld [vmem:[%s2788] sm:$0xff]
        %v2790 = vld [vmem:[%s2788 + $0x8] sm:$0xff]
        %v2791 = vld [vmem:[%s2788 + $0x10] sm:$0xff]
        %v2792 = vld [vmem:[%s2788 + $0x18] sm:$0xff]
        %v2793 = vld [vmem:[%s2788 + $0x20] sm:$0xff]
        %v2794 = vld [vmem:[%s2788 + $0x28] sm:$0xff]
        %v2795 = vld [vmem:[%s2788 + $0x30] sm:$0xff]
        %v2796 = vld [vmem:[%s2788 + $0x38] sm:$0xff]
        %v2797 = vld [vmem:[%s2788 + $0x40] sm:$0xff]
        %v2798 = vld [vmem:[%s2788 + $0x48] sm:$0xff]
        %v2799 = vld [vmem:[%s2788 + $0x50] sm:$0xff]
        %v2800 = vld [vmem:[%s2788 + $0x58] sm:$0xff]
        %v2801 = vld [vmem:[%s2788 + $0x60] sm:$0xff]
        %v2802 = vld [vmem:[%s2788 + $0x68] sm:$0xff]
        %v2803 = vld [vmem:[%s2788 + $0x70] sm:$0xff]
        %v2804 = vld [vmem:[%s2788 + $0x78] sm:$0xff]
        %v2805 = vld [vmem:[%s2788 + $0x80] sm:$0xff]
        %v2806 = vld [vmem:[%s2788 + $0x88] sm:$0xff]
        %v2807 = vld [vmem:[%s2788 + $0x90] sm:$0xff]
        %v2808 = vld [vmem:[%s2788 + $0x98] sm:$0xff]
        %v2809 = vld [vmem:[%s2788 + $0xa0] sm:$0xff]
        %v2810 = vld [vmem:[%s2788 + $0xa8] sm:$0xff]
        %v2811 = vld [vmem:[%s2788 + $0xb0] sm:$0xff]
        %v2812 = vld [vmem:[%s2788 + $0xb8] sm:$0xff]
        %v2813 = vld [vmem:[%s2788 + $0xc0] sm:$0xff]
        %v2814 = vld [vmem:[%s2788 + $0xc8] sm:$0xff]
        %v2815 = vld [vmem:[%s2788 + $0xd0] sm:$0xff]
        %v2816 = vld [vmem:[%s2788 + $0xd8] sm:$0xff]
        %v2817 = vld [vmem:[%s2788 + $0xe0] sm:$0xff]
        %v2818 = vld [vmem:[%s2788 + $0xe8] sm:$0xff]
        %v2819 = vld [vmem:[%s2788 + $0xf0] sm:$0xff]
        %v2820 = vld [vmem:[%s2788 + $0xf8] sm:$0xff]
        %v2853 = vunpack.c.l.b16 %v2789
        %v2854 = vunpack.c.h.b16 %v2789
        %v2855 = vunpack.c.l.b16 %v2790
        %v2856 = vunpack.c.h.b16 %v2790
        %v2857 = vunpack.c.l.b16 %v2791
        %v2858 = vunpack.c.h.b16 %v2791
        %v2859 = vunpack.c.l.b16 %v2792
        %v2860 = vunpack.c.h.b16 %v2792
        %v2861 = vunpack.c.l.b16 %v2793
        %v2862 = vunpack.c.h.b16 %v2793
        %v2863 = vunpack.c.l.b16 %v2794
        %v2864 = vunpack.c.h.b16 %v2794
        %v2865 = vunpack.c.l.b16 %v2795
        %v2866 = vunpack.c.h.b16 %v2795
        %v2867 = vunpack.c.l.b16 %v2796
        %v2868 = vunpack.c.h.b16 %v2796
        %v2869 = vunpack.c.l.b16 %v2797
        %v2870 = vunpack.c.h.b16 %v2797
        %v2871 = vunpack.c.l.b16 %v2798
        %v2872 = vunpack.c.h.b16 %v2798
        %v2873 = vunpack.c.l.b16 %v2799
        %v2874 = vunpack.c.h.b16 %v2799
        %v2875 = vunpack.c.l.b16 %v2800
        %v2876 = vunpack.c.h.b16 %v2800
        %v2877 = vunpack.c.l.b16 %v2801
        %v2878 = vunpack.c.h.b16 %v2801
        %v2879 = vunpack.c.l.b16 %v2802
        %v2880 = vunpack.c.h.b16 %v2802
        %v2881 = vunpack.c.l.b16 %v2803
        %v2882 = vunpack.c.h.b16 %v2803
        %v2883 = vunpack.c.l.b16 %v2804
        %v2884 = vunpack.c.h.b16 %v2804
        %v2885 = vunpack.c.l.b16 %v2805
        %v2886 = vunpack.c.h.b16 %v2805
        %v2887 = vunpack.c.l.b16 %v2806
        %v2888 = vunpack.c.h.b16 %v2806
        %v2889 = vunpack.c.l.b16 %v2807
        %v2890 = vunpack.c.h.b16 %v2807
        %v2891 = vunpack.c.l.b16 %v2808
        %v2892 = vunpack.c.h.b16 %v2808
        %v2893 = vunpack.c.l.b16 %v2809
        %v2894 = vunpack.c.h.b16 %v2809
        %v2895 = vunpack.c.l.b16 %v2810
        %v2896 = vunpack.c.h.b16 %v2810
        %v2897 = vunpack.c.l.b16 %v2811
        %v2898 = vunpack.c.h.b16 %v2811
        %v2899 = vunpack.c.l.b16 %v2812
        %v2900 = vunpack.c.h.b16 %v2812
        %v2901 = vunpack.c.l.b16 %v2813
        %v2902 = vunpack.c.h.b16 %v2813
        %v2903 = vunpack.c.l.b16 %v2814
        %v2904 = vunpack.c.h.b16 %v2814
        %v2905 = vunpack.c.l.b16 %v2815
        %v2906 = vunpack.c.h.b16 %v2815
        %v2907 = vunpack.c.l.b16 %v2816
        %v2908 = vunpack.c.h.b16 %v2816
        %v2909 = vunpack.c.l.b16 %v2817
        %v2910 = vunpack.c.h.b16 %v2817
        %v2911 = vunpack.c.l.b16 %v2818
        %v2912 = vunpack.c.h.b16 %v2818
        %v2913 = vunpack.c.l.b16 %v2819
        %v2914 = vunpack.c.h.b16 %v2819
        %v2915 = vunpack.c.l.b16 %v2820
        %v2916 = vunpack.c.h.b16 %v2820
        %v2917 = vpack.c.b16 %v2855, %v2853
        %v2918 = vpack.c.b16 %v2856, %v2854
        %v2919 = vpack.c.b16 %v2859, %v2857
        %v2920 = vpack.c.b16 %v2860, %v2858
        %v2921 = vpack.c.b16 %v2863, %v2861
        %v2922 = vpack.c.b16 %v2864, %v2862
        %v2923 = vpack.c.b16 %v2867, %v2865
        %v2924 = vpack.c.b16 %v2868, %v2866
        %v2925 = vpack.c.b16 %v2871, %v2869
        %v2926 = vpack.c.b16 %v2872, %v2870
        %v2927 = vpack.c.b16 %v2875, %v2873
        %v2928 = vpack.c.b16 %v2876, %v2874
        %v2929 = vpack.c.b16 %v2879, %v2877
        %v2930 = vpack.c.b16 %v2880, %v2878
        %v2931 = vpack.c.b16 %v2883, %v2881
        %v2932 = vpack.c.b16 %v2884, %v2882
        %v2933 = vpack.c.b16 %v2887, %v2885
        %v2934 = vpack.c.b16 %v2888, %v2886
        %v2935 = vpack.c.b16 %v2891, %v2889
        %v2936 = vpack.c.b16 %v2892, %v2890
        %v2937 = vpack.c.b16 %v2895, %v2893
        %v2938 = vpack.c.b16 %v2896, %v2894
        %v2939 = vpack.c.b16 %v2899, %v2897
        %v2940 = vpack.c.b16 %v2900, %v2898
        %v2941 = vpack.c.b16 %v2903, %v2901
        %v2942 = vpack.c.b16 %v2904, %v2902
        %v2943 = vpack.c.b16 %v2907, %v2905
        %v2944 = vpack.c.b16 %v2908, %v2906
        %v2945 = vpack.c.b16 %v2911, %v2909
        %v2946 = vpack.c.b16 %v2912, %v2910
        %v2947 = vpack.c.b16 %v2915, %v2913
        %v2948 = vpack.c.b16 %v2916, %v2914
        %2981 = vmatprep.subr.bf16.mxu0 %v2918
        %2982 = vmatpush1.bf16.msra.mxu0 %v2917
        %2983 = vmatprep.subr.bf16.mxu0 %v2920
        %2984 = vmatpush1.bf16.msra.mxu0 %v2919
        %2985 = vmatprep.subr.bf16.mxu0 %v2922
        %2986 = vmatpush1.bf16.msra.mxu0 %v2921
        %2987 = vmatprep.subr.bf16.mxu0 %v2924
        %2988 = vmatpush1.bf16.msra.mxu0 %v2923
        %2989 = vmatprep.subr.bf16.mxu0 %v2926
        %2990 = vmatpush1.bf16.msra.mxu0 %v2925
        %2991 = vmatprep.subr.bf16.mxu0 %v2928
        %2992 = vmatpush1.bf16.msra.mxu0 %v2927
        %2993 = vmatprep.subr.bf16.mxu0 %v2930
        %2994 = vmatpush1.bf16.msra.mxu0 %v2929
        %2995 = vmatprep.subr.bf16.mxu0 %v2932
        %2996 = vmatpush1.bf16.msra.mxu0 %v2931
        %2997 = vmatprep.subr.bf16.mxu0 %v2934
        %2998 = vmatpush1.bf16.msra.mxu0 %v2933
        %2999 = vmatprep.subr.bf16.mxu0 %v2936
        %3000 = vmatpush1.bf16.msra.mxu0 %v2935
        %3001 = vmatprep.subr.bf16.mxu0 %v2938
        %3002 = vmatpush1.bf16.msra.mxu0 %v2937
        %3003 = vmatprep.subr.bf16.mxu0 %v2940
        %3004 = vmatpush1.bf16.msra.mxu0 %v2939
        %3005 = vmatprep.subr.bf16.mxu0 %v2942
        %3006 = vmatpush1.bf16.msra.mxu0 %v2941
        %3007 = vmatprep.subr.bf16.mxu0 %v2944
        %3008 = vmatpush1.bf16.msra.mxu0 %v2943
        %3009 = vmatprep.subr.bf16.mxu0 %v2946
        %3010 = vmatpush1.bf16.msra.mxu0 %v2945
        %3011 = vmatprep.subr.bf16.mxu0 %v2948
        %3012 = vmatpush1.bf16.msra.mxu0 %v2947
        %3013 = vmatprep.mubr.bf16.mxu0 %v558
        %3014 = vmatmul.mubr.bf16.gmra.mrb[0].mxu0 %v557
        %v3015 = vpop.f32.mrb[0].mxu0
        %v3016 = vadd.f32 0.0, %v3015
        %v3017 = vpop.f32.mrb[0].mxu0
        %v3018 = vadd.f32 0.0, %v3017
        %v3019 = vpop.f32.mrb[0].mxu0
        %v3020 = vadd.f32 0.0, %v3019
        %v3021 = vpop.f32.mrb[0].mxu0
        %v3022 = vadd.f32 0.0, %v3021
        %3023 = vmatprep.mubr.bf16.mxu0 %v560
        %3024 = vmatmul.mubr.bf16.gmra.mrb[0].mxu0 %v559
        %v3025 = vpop.f32.mrb[0].mxu0
        %v3026 = vadd.f32 0.0, %v3025
        %v3027 = vpop.f32.mrb[0].mxu0
        %v3028 = vadd.f32 0.0, %v3027
        %v3029 = vpop.f32.mrb[0].mxu0
        %v3030 = vadd.f32 0.0, %v3029
        %v3031 = vpop.f32.mrb[0].mxu0
        %v3032 = vadd.f32 0.0, %v3031
        %3033 = vdwg.mxu0
        %3034 = vset.pattern.permute.xlu0 8
        %3035 = vperm.xlu0 %3034, %v427
        %v3036 = vpop.permute.xlu0 %3035
        %3038 = vset.pattern.permute.xlu0 8
        %3039 = vperm.xlu0 %3038, %v428
        %v3040 = vpop.permute.xlu0 %3039
        %3042 = vset.pattern.permute.xlu0 8
        %3043 = vperm.xlu0 %3042, %v429
        %v3044 = vpop.permute.xlu0 %3043
        %3046 = vset.pattern.permute.xlu0 8
        %3047 = vperm.xlu0 %3046, %v430
        %v3048 = vpop.permute.xlu0 %3047
        %v3050 = vmul.f32 %v3016, %v3036
        %v3051 = vmul.f32 %v3018, %v3036
        %v3052 = vmul.f32 %v3020, %v3040
        %v3053 = vmul.f32 %v3022, %v3040
        %v3054 = vmul.f32 %v3026, %v3044
        %v3055 = vmul.f32 %v3028, %v3044
        %v3056 = vmul.f32 %v3030, %v3048
        %v3057 = vmul.f32 %v3032, %v3048
        %v3058 = vadd.f32 %v2780, %v3050
        %v3059 = vadd.f32 %v2781, %v3051
        %v3060 = vadd.f32 %v2782, %v3052
        %v3061 = vadd.f32 %v2783, %v3053
        %v3062 = vadd.f32 %v2784, %v3054
        %v3063 = vadd.f32 %v2785, %v3055
        %v3064 = vadd.f32 %v2786, %v3056
        %v3065 = vadd.f32 %v2787, %v3057
        %v3066 = vld [vmem:[%s5] sm:$0xff]
        %v3067 = vld [vmem:[%s5 + $0x8] sm:$0xff]
        %v3068 = vld [vmem:[%s5 + $0x10] sm:$0xff]
        %v3069 = vld [vmem:[%s5 + $0x18] sm:$0xff]
        %3071 = vset.pattern.permute.xlu0 0
        %3072 = vperm.xlu0 %3071, %v3066
        %v3073 = vpop.permute.xlu0 %3072
        %3076 = vset.pattern.permute.xlu0 0
        %3077 = vperm.xlu0 %3076, %v3067
        %v3078 = vpop.permute.xlu0 %3077
        %3081 = vset.pattern.permute.xlu0 0
        %3082 = vperm.xlu0 %3081, %v3068
        %v3083 = vpop.permute.xlu0 %3082
        %3086 = vset.pattern.permute.xlu0 0
        %3087 = vperm.xlu0 %3086, %v3069
        %v3088 = vpop.permute.xlu0 %3087
        %v3090 = vadd.f32 %v3058, %v3073
        %v3091 = vadd.f32 %v3059, %v3073
        %v3092 = vadd.f32 %v3060, %v3078
        %v3093 = vadd.f32 %v3061, %v3078
        %v3094 = vadd.f32 %v3062, %v3083
        %v3095 = vadd.f32 %v3063, %v3083
        %v3096 = vadd.f32 %v3064, %v3088
        %v3097 = vadd.f32 %v3065, %v3088
        %3098 = vst [vmem:[#allocation2] sm:$0xff] %v3090
        %3099 = vst [vmem:[#allocation2 + $0x8] sm:$0xff] %v3091
        %3100 = vst [vmem:[#allocation2 + $0x10] sm:$0xff] %v3092
        %3101 = vst [vmem:[#allocation2 + $0x18] sm:$0xff] %v3093
        %3102 = vst [vmem:[#allocation2 + $0x20] sm:$0xff] %v3094
        %3103 = vst [vmem:[#allocation2 + $0x28] sm:$0xff] %v3095
        %3104 = vst [vmem:[#allocation2 + $0x30] sm:$0xff] %v3096
        %3105 = vst [vmem:[#allocation2 + $0x38] sm:$0xff] %v3097
        %v3106 = vld [vmem:[%s1 + $0x10] sm:$0xf]
        %v3107 = vld [vmem:[%s1 + $0x14] sm:$0xf]
        %v3108 = vld [vmem:[%s1 + $0x18] sm:$0xf]
        %v3109 = vld [vmem:[%s1 + $0x1c] sm:$0xf]
        %v3110 = vld [vmem:[%s2 + $0x20] sm:$0xff]
        %v3111 = vld [vmem:[%s2 + $0x28] sm:$0xff]
        %v3112 = vld [vmem:[%s2 + $0x30] sm:$0xff]
        %v3113 = vld [vmem:[%s2 + $0x38] sm:$0xff]
        %3115 = vset.pattern.permute.xlu0 0
        %3116 = vperm.xlu0 %3115, %v3110
        %v3117 = vpop.permute.xlu0 %3116
        %3120 = vset.pattern.permute.xlu0 0
        %3121 = vperm.xlu0 %3120, %v3111
        %v3122 = vpop.permute.xlu0 %3121
        %3125 = vset.pattern.permute.xlu0 0
        %3126 = vperm.xlu0 %3125, %v3112
        %v3127 = vpop.permute.xlu0 %3126
        %3130 = vset.pattern.permute.xlu0 0
        %3131 = vperm.xlu0 %3130, %v3113
        %v3132 = vpop.permute.xlu0 %3131
        %v3138 = vunpack.c.l.b16 %v3106
        %v3139 = vunpack.c.l.b16 %v3107
        %v3140 = vunpack.c.l.b16 %v3108
        %v3141 = vunpack.c.l.b16 %v3109
        %v3142 = vpack.c.b16 %v3139, %v3138
        %v3143 = vpack.c.b16 %v3141, %v3140
        %v3145 = vsel %vm497, %v3142, 0
        %v3148 = vsel %vm497, %v3143, 0
        %3150 = vmatprep.subr.bf16.mxu0 %v490
        %3151 = vmatpush1.bf16.msra.mxu0 %v489
        %3152 = vmatprep.subr.bf16.mxu0 %v492
        %3153 = vmatpush1.bf16.msra.mxu0 %v491
        %3154 = vmatprep.subr.bf16.mxu0 0
        %3155 = vmatpush1.bf16.msra.mxu0 0
        %3156 = vmatprep.subr.bf16.mxu0 0
        %3157 = vmatpush1.bf16.msra.mxu0 0
        %3158 = vmatprep.subr.bf16.mxu0 0
        %3159 = vmatpush1.bf16.msra.mxu0 0
        %3160 = vmatprep.subr.bf16.mxu0 0
        %3161 = vmatpush1.bf16.msra.mxu0 0
        %3162 = vmatprep.subr.bf16.mxu0 0
        %3163 = vmatpush1.bf16.msra.mxu0 0
        %3164 = vmatprep.subr.bf16.mxu0 0
        %3165 = vmatpush1.bf16.msra.mxu0 0
        %3166 = vmatprep.subr.bf16.mxu0 0
        %3167 = vmatpush1.bf16.msra.mxu0 0
        %3168 = vmatprep.subr.bf16.mxu0 0
        %3169 = vmatpush1.bf16.msra.mxu0 0
        %3170 = vmatprep.subr.bf16.mxu0 0
        %3171 = vmatpush1.bf16.msra.mxu0 0
        %3172 = vmatprep.subr.bf16.mxu0 0
        %3173 = vmatpush1.bf16.msra.mxu0 0
        %3174 = vmatprep.subr.bf16.mxu0 0
        %3175 = vmatpush1.bf16.msra.mxu0 0
        %3176 = vmatprep.subr.bf16.mxu0 0
        %3177 = vmatpush1.bf16.msra.mxu0 0
        %3178 = vmatprep.subr.bf16.mxu0 0
        %3179 = vmatpush1.bf16.msra.mxu0 0
        %3180 = vmatprep.subr.bf16.mxu0 0
        %3181 = vmatpush1.bf16.msra.mxu0 0
        %3182 = vmatprep.mubr.bf16.mxu0 0
        %3183 = vmatmul.mubr.bf16.gmra.mrb[0].mxu0 %v3145
        %v3184 = vpop.f32.mrb[0].mxu0
        %v3185 = vadd.f32 %v3117, %v3184
        %v3186 = vpop.f32.mrb[0].mxu0
        %v3187 = vadd.f32 %v3117, %v3186
        %v3188 = vpop.f32.mrb[0].mxu0
        %v3189 = vadd.f32 %v3122, %v3188
        %v3190 = vpop.f32.mrb[0].mxu0
        %v3191 = vadd.f32 %v3122, %v3190
        %3192 = vmatprep.mubr.bf16.mxu0 0
        %3193 = vmatmul.mubr.bf16.gmra.mrb[0].mxu0 %v3148
        %v3194 = vpop.f32.mrb[0].mxu0
        %v3195 = vadd.f32 %v3127, %v3194
        %v3196 = vpop.f32.mrb[0].mxu0
        %v3197 = vadd.f32 %v3127, %v3196
        %v3198 = vpop.f32.mrb[0].mxu0
        %v3199 = vadd.f32 %v3132, %v3198
        %v3200 = vpop.f32.mrb[0].mxu0
        %v3201 = vadd.f32 %v3132, %v3200
        %3202 = vdwg.mxu0
        %v3203 = vpack.c.bf16 %v3189, %v3185
        %v3204 = vpack.c.bf16 %v3191, %v3187
        %v3205 = vpack.c.bf16 %v3199, %v3195
        %v3206 = vpack.c.bf16 %v3201, %v3197
        %v3207 = vld [vmem:[#allocation6] sm:$0xff]
        %v3208 = vld [vmem:[#allocation6 + $0x8] sm:$0xff]
        %v3209 = vld [vmem:[#allocation6 + $0x10] sm:$0xff]
        %v3210 = vld [vmem:[#allocation6 + $0x18] sm:$0xff]
        %v3211 = vld [vmem:[#allocation6 + $0x20] sm:$0xff]
        %v3212 = vld [vmem:[#allocation6 + $0x28] sm:$0xff]
        %v3213 = vld [vmem:[#allocation6 + $0x30] sm:$0xff]
        %v3214 = vld [vmem:[#allocation6 + $0x38] sm:$0xff]
        %v3215 = vld [vmem:[#allocation6 + $0x40] sm:$0xff]
        %v3216 = vld [vmem:[#allocation6 + $0x48] sm:$0xff]
        %v3217 = vld [vmem:[#allocation6 + $0x50] sm:$0xff]
        %v3218 = vld [vmem:[#allocation6 + $0x58] sm:$0xff]
        %v3219 = vld [vmem:[#allocation6 + $0x60] sm:$0xff]
        %v3220 = vld [vmem:[#allocation6 + $0x68] sm:$0xff]
        %v3221 = vld [vmem:[#allocation6 + $0x70] sm:$0xff]
        %v3222 = vld [vmem:[#allocation6 + $0x78] sm:$0xff]
        %v3223 = vld [vmem:[#allocation6 + $0x80] sm:$0xff]
        %v3224 = vld [vmem:[#allocation6 + $0x88] sm:$0xff]
        %v3225 = vld [vmem:[#allocation6 + $0x90] sm:$0xff]
        %v3226 = vld [vmem:[#allocation6 + $0x98] sm:$0xff]
        %v3227 = vld [vmem:[#allocation6 + $0xa0] sm:$0xff]
        %v3228 = vld [vmem:[#allocation6 + $0xa8] sm:$0xff]
        %v3229 = vld [vmem:[#allocation6 + $0xb0] sm:$0xff]
        %v3230 = vld [vmem:[#allocation6 + $0xb8] sm:$0xff]
        %v3231 = vld [vmem:[#allocation6 + $0xc0] sm:$0xff]
        %v3232 = vld [vmem:[#allocation6 + $0xc8] sm:$0xff]
        %v3233 = vld [vmem:[#allocation6 + $0xd0] sm:$0xff]
        %v3234 = vld [vmem:[#allocation6 + $0xd8] sm:$0xff]
        %v3235 = vld [vmem:[#allocation6 + $0xe0] sm:$0xff]
        %v3236 = vld [vmem:[#allocation6 + $0xe8] sm:$0xff]
        %v3237 = vld [vmem:[#allocation6 + $0xf0] sm:$0xff]
        %v3238 = vld [vmem:[#allocation6 + $0xf8] sm:$0xff]
        %v3271 = vunpack.c.l.b16 %v3207
        %v3272 = vunpack.c.h.b16 %v3207
        %v3273 = vunpack.c.l.b16 %v3208
        %v3274 = vunpack.c.h.b16 %v3208
        %v3275 = vunpack.c.l.b16 %v3209
        %v3276 = vunpack.c.h.b16 %v3209
        %v3277 = vunpack.c.l.b16 %v3210
        %v3278 = vunpack.c.h.b16 %v3210
        %v3279 = vunpack.c.l.b16 %v3211
        %v3280 = vunpack.c.h.b16 %v3211
        %v3281 = vunpack.c.l.b16 %v3212
        %v3282 = vunpack.c.h.b16 %v3212
        %v3283 = vunpack.c.l.b16 %v3213
        %v3284 = vunpack.c.h.b16 %v3213
        %v3285 = vunpack.c.l.b16 %v3214
        %v3286 = vunpack.c.h.b16 %v3214
        %v3287 = vunpack.c.l.b16 %v3215
        %v3288 = vunpack.c.h.b16 %v3215
        %v3289 = vunpack.c.l.b16 %v3216
        %v3290 = vunpack.c.h.b16 %v3216
        %v3291 = vunpack.c.l.b16 %v3217
        %v3292 = vunpack.c.h.b16 %v3217
        %v3293 = vunpack.c.l.b16 %v3218
        %v3294 = vunpack.c.h.b16 %v3218
        %v3295 = vunpack.c.l.b16 %v3219
        %v3296 = vunpack.c.h.b16 %v3219
        %v3297 = vunpack.c.l.b16 %v3220
        %v3298 = vunpack.c.h.b16 %v3220
        %v3299 = vunpack.c.l.b16 %v3221
        %v3300 = vunpack.c.h.b16 %v3221
        %v3301 = vunpack.c.l.b16 %v3222
        %v3302 = vunpack.c.h.b16 %v3222
        %v3303 = vunpack.c.l.b16 %v3223
        %v3304 = vunpack.c.h.b16 %v3223
        %v3305 = vunpack.c.l.b16 %v3224
        %v3306 = vunpack.c.h.b16 %v3224
        %v3307 = vunpack.c.l.b16 %v3225
        %v3308 = vunpack.c.h.b16 %v3225
        %v3309 = vunpack.c.l.b16 %v3226
        %v3310 = vunpack.c.h.b16 %v3226
        %v3311 = vunpack.c.l.b16 %v3227
        %v3312 = vunpack.c.h.b16 %v3227
        %v3313 = vunpack.c.l.b16 %v3228
        %v3314 = vunpack.c.h.b16 %v3228
        %v3315 = vunpack.c.l.b16 %v3229
        %v3316 = vunpack.c.h.b16 %v3229
        %v3317 = vunpack.c.l.b16 %v3230
        %v3318 = vunpack.c.h.b16 %v3230
        %v3319 = vunpack.c.l.b16 %v3231
        %v3320 = vunpack.c.h.b16 %v3231
        %v3321 = vunpack.c.l.b16 %v3232
        %v3322 = vunpack.c.h.b16 %v3232
        %v3323 = vunpack.c.l.b16 %v3233
        %v3324 = vunpack.c.h.b16 %v3233
        %v3325 = vunpack.c.l.b16 %v3234
        %v3326 = vunpack.c.h.b16 %v3234
        %v3327 = vunpack.c.l.b16 %v3235
        %v3328 = vunpack.c.h.b16 %v3235
        %v3329 = vunpack.c.l.b16 %v3236
        %v3330 = vunpack.c.h.b16 %v3236
        %v3331 = vunpack.c.l.b16 %v3237
        %v3332 = vunpack.c.h.b16 %v3237
        %v3333 = vunpack.c.l.b16 %v3238
        %v3334 = vunpack.c.h.b16 %v3238
        %v3335 = vpack.c.b16 %v3273, %v3271
        %v3336 = vpack.c.b16 %v3274, %v3272
        %v3337 = vpack.c.b16 %v3277, %v3275
        %v3338 = vpack.c.b16 %v3278, %v3276
        %v3339 = vpack.c.b16 %v3281, %v3279
        %v3340 = vpack.c.b16 %v3282, %v3280
        %v3341 = vpack.c.b16 %v3285, %v3283
        %v3342 = vpack.c.b16 %v3286, %v3284
        %v3343 = vpack.c.b16 %v3289, %v3287
        %v3344 = vpack.c.b16 %v3290, %v3288
        %v3345 = vpack.c.b16 %v3293, %v3291
        %v3346 = vpack.c.b16 %v3294, %v3292
        %v3347 = vpack.c.b16 %v3297, %v3295
        %v3348 = vpack.c.b16 %v3298, %v3296
        %v3349 = vpack.c.b16 %v3301, %v3299
        %v3350 = vpack.c.b16 %v3302, %v3300
        %v3351 = vpack.c.b16 %v3305, %v3303
        %v3352 = vpack.c.b16 %v3306, %v3304
        %v3353 = vpack.c.b16 %v3309, %v3307
        %v3354 = vpack.c.b16 %v3310, %v3308
        %v3355 = vpack.c.b16 %v3313, %v3311
        %v3356 = vpack.c.b16 %v3314, %v3312
        %v3357 = vpack.c.b16 %v3317, %v3315
        %v3358 = vpack.c.b16 %v3318, %v3316
        %v3359 = vpack.c.b16 %v3321, %v3319
        %v3360 = vpack.c.b16 %v3322, %v3320
        %v3361 = vpack.c.b16 %v3325, %v3323
        %v3362 = vpack.c.b16 %v3326, %v3324
        %v3363 = vpack.c.b16 %v3329, %v3327
        %v3364 = vpack.c.b16 %v3330, %v3328
        %v3365 = vpack.c.b16 %v3333, %v3331
        %v3366 = vpack.c.b16 %v3334, %v3332
        %3399 = vmatprep.subr.bf16.mxu0 %v3336
        %3400 = vmatpush1.bf16.msra.mxu0 %v3335
        %3401 = vmatprep.subr.bf16.mxu0 %v3338
        %3402 = vmatpush1.bf16.msra.mxu0 %v3337
        %3403 = vmatprep.subr.bf16.mxu0 %v3340
        %3404 = vmatpush1.bf16.msra.mxu0 %v3339
        %3405 = vmatprep.subr.bf16.mxu0 %v3342
        %3406 = vmatpush1.bf16.msra.mxu0 %v3341
        %3407 = vmatprep.subr.bf16.mxu0 %v3344
        %3408 = vmatpush1.bf16.msra.mxu0 %v3343
        %3409 = vmatprep.subr.bf16.mxu0 %v3346
        %3410 = vmatpush1.bf16.msra.mxu0 %v3345
        %3411 = vmatprep.subr.bf16.mxu0 %v3348
        %3412 = vmatpush1.bf16.msra.mxu0 %v3347
        %3413 = vmatprep.subr.bf16.mxu0 %v3350
        %3414 = vmatpush1.bf16.msra.mxu0 %v3349
        %3415 = vmatprep.subr.bf16.mxu0 %v3352
        %3416 = vmatpush1.bf16.msra.mxu0 %v3351
        %3417 = vmatprep.subr.bf16.mxu0 %v3354
        %3418 = vmatpush1.bf16.msra.mxu0 %v3353
        %3419 = vmatprep.subr.bf16.mxu0 %v3356
        %3420 = vmatpush1.bf16.msra.mxu0 %v3355
        %3421 = vmatprep.subr.bf16.mxu0 %v3358
        %3422 = vmatpush1.bf16.msra.mxu0 %v3357
        %3423 = vmatprep.subr.bf16.mxu0 %v3360
        %3424 = vmatpush1.bf16.msra.mxu0 %v3359
        %3425 = vmatprep.subr.bf16.mxu0 %v3362
        %3426 = vmatpush1.bf16.msra.mxu0 %v3361
        %3427 = vmatprep.subr.bf16.mxu0 %v3364
        %3428 = vmatpush1.bf16.msra.mxu0 %v3363
        %3429 = vmatprep.subr.bf16.mxu0 %v3366
        %3430 = vmatpush1.bf16.msra.mxu0 %v3365
        %3431 = vmatprep.mubr.bf16.mxu0 %v3204
        %3432 = vmatmul.mubr.bf16.gmra.mrb[0].mxu0 %v3203
        %v3433 = vpop.f32.mrb[0].mxu0
        %v3434 = vadd.f32 0.0, %v3433
        %v3435 = vpop.f32.mrb[0].mxu0
        %v3436 = vadd.f32 0.0, %v3435
        %v3437 = vpop.f32.mrb[0].mxu0
        %v3438 = vadd.f32 0.0, %v3437
        %v3439 = vpop.f32.mrb[0].mxu0
        %v3440 = vadd.f32 0.0, %v3439
        %3441 = vmatprep.mubr.bf16.mxu0 %v3206
        %3442 = vmatmul.mubr.bf16.gmra.mrb[0].mxu0 %v3205
        %v3443 = vpop.f32.mrb[0].mxu0
        %v3444 = vadd.f32 0.0, %v3443
        %v3445 = vpop.f32.mrb[0].mxu0
        %v3446 = vadd.f32 0.0, %v3445
        %v3447 = vpop.f32.mrb[0].mxu0
        %v3448 = vadd.f32 0.0, %v3447
        %v3449 = vpop.f32.mrb[0].mxu0
        %v3450 = vadd.f32 0.0, %v3449
        %3451 = vdwg.mxu0
        %3453 = vset.pattern.permute.xlu0 0
        %3454 = vperm.xlu0 %3453, %v431
        %v3455 = vpop.permute.xlu0 %3454
        %3458 = vset.pattern.permute.xlu0 0
        %3459 = vperm.xlu0 %3458, %v432
        %v3460 = vpop.permute.xlu0 %3459
        %3463 = vset.pattern.permute.xlu0 0
        %3464 = vperm.xlu0 %3463, %v433
        %v3465 = vpop.permute.xlu0 %3464
        %3468 = vset.pattern.permute.xlu0 0
        %3469 = vperm.xlu0 %3468, %v434
        %v3470 = vpop.permute.xlu0 %3469
        %v3472 = vmul.f32 %v3434, %v3455
        %v3473 = vmul.f32 %v3436, %v3455
        %v3474 = vmul.f32 %v3438, %v3460
        %v3475 = vmul.f32 %v3440, %v3460
        %v3476 = vmul.f32 %v3444, %v3465
        %v3477 = vmul.f32 %v3446, %v3465
        %v3478 = vmul.f32 %v3448, %v3470
        %v3479 = vmul.f32 %v3450, %v3470
        %v3480 = vadd.f32 %v3472, 0.0
        %v3481 = vadd.f32 %v3473, 0.0
        %v3482 = vadd.f32 %v3474, 0.0
        %v3483 = vadd.f32 %v3475, 0.0
        %v3484 = vadd.f32 %v3476, 0.0
        %v3485 = vadd.f32 %v3477, 0.0
        %v3486 = vadd.f32 %v3478, 0.0
        %v3487 = vadd.f32 %v3479, 0.0
        %v3488 = vld [vmem:[%s842] sm:$0xff]
        %v3489 = vld [vmem:[%s842 + $0x8] sm:$0xff]
        %v3490 = vld [vmem:[%s842 + $0x10] sm:$0xff]
        %v3491 = vld [vmem:[%s842 + $0x18] sm:$0xff]
        %v3492 = vld [vmem:[%s842 + $0x20] sm:$0xff]
        %v3493 = vld [vmem:[%s842 + $0x28] sm:$0xff]
        %v3494 = vld [vmem:[%s842 + $0x30] sm:$0xff]
        %v3495 = vld [vmem:[%s842 + $0x38] sm:$0xff]
        %v3496 = vld [vmem:[%s842 + $0x40] sm:$0xff]
        %v3497 = vld [vmem:[%s842 + $0x48] sm:$0xff]
        %v3498 = vld [vmem:[%s842 + $0x50] sm:$0xff]
        %v3499 = vld [vmem:[%s842 + $0x58] sm:$0xff]
        %v3500 = vld [vmem:[%s842 + $0x60] sm:$0xff]
        %v3501 = vld [vmem:[%s842 + $0x68] sm:$0xff]
        %v3502 = vld [vmem:[%s842 + $0x70] sm:$0xff]
        %v3503 = vld [vmem:[%s842 + $0x78] sm:$0xff]
        %v3504 = vld [vmem:[%s842 + $0x80] sm:$0xff]
        %v3505 = vld [vmem:[%s842 + $0x88] sm:$0xff]
        %v3506 = vld [vmem:[%s842 + $0x90] sm:$0xff]
        %v3507 = vld [vmem:[%s842 + $0x98] sm:$0xff]
        %v3508 = vld [vmem:[%s842 + $0xa0] sm:$0xff]
        %v3509 = vld [vmem:[%s842 + $0xa8] sm:$0xff]
        %v3510 = vld [vmem:[%s842 + $0xb0] sm:$0xff]
        %v3511 = vld [vmem:[%s842 + $0xb8] sm:$0xff]
        %v3512 = vld [vmem:[%s842 + $0xc0] sm:$0xff]
        %v3513 = vld [vmem:[%s842 + $0xc8] sm:$0xff]
        %v3514 = vld [vmem:[%s842 + $0xd0] sm:$0xff]
        %v3515 = vld [vmem:[%s842 + $0xd8] sm:$0xff]
        %v3516 = vld [vmem:[%s842 + $0xe0] sm:$0xff]
        %v3517 = vld [vmem:[%s842 + $0xe8] sm:$0xff]
        %v3518 = vld [vmem:[%s842 + $0xf0] sm:$0xff]
        %v3519 = vld [vmem:[%s842 + $0xf8] sm:$0xff]
        %v3552 = vunpack.c.l.b16 %v3488
        %v3553 = vunpack.c.h.b16 %v3488
        %v3554 = vunpack.c.l.b16 %v3489
        %v3555 = vunpack.c.h.b16 %v3489
        %v3556 = vunpack.c.l.b16 %v3490
        %v3557 = vunpack.c.h.b16 %v3490
        %v3558 = vunpack.c.l.b16 %v3491
        %v3559 = vunpack.c.h.b16 %v3491
        %v3560 = vunpack.c.l.b16 %v3492
        %v3561 = vunpack.c.h.b16 %v3492
        %v3562 = vunpack.c.l.b16 %v3493
        %v3563 = vunpack.c.h.b16 %v3493
        %v3564 = vunpack.c.l.b16 %v3494
        %v3565 = vunpack.c.h.b16 %v3494
        %v3566 = vunpack.c.l.b16 %v3495
        %v3567 = vunpack.c.h.b16 %v3495
        %v3568 = vunpack.c.l.b16 %v3496
        %v3569 = vunpack.c.h.b16 %v3496
        %v3570 = vunpack.c.l.b16 %v3497
        %v3571 = vunpack.c.h.b16 %v3497
        %v3572 = vunpack.c.l.b16 %v3498
        %v3573 = vunpack.c.h.b16 %v3498
        %v3574 = vunpack.c.l.b16 %v3499
        %v3575 = vunpack.c.h.b16 %v3499
        %v3576 = vunpack.c.l.b16 %v3500
        %v3577 = vunpack.c.h.b16 %v3500
        %v3578 = vunpack.c.l.b16 %v3501
        %v3579 = vunpack.c.h.b16 %v3501
        %v3580 = vunpack.c.l.b16 %v3502
        %v3581 = vunpack.c.h.b16 %v3502
        %v3582 = vunpack.c.l.b16 %v3503
        %v3583 = vunpack.c.h.b16 %v3503
        %v3584 = vunpack.c.l.b16 %v3504
        %v3585 = vunpack.c.h.b16 %v3504
        %v3586 = vunpack.c.l.b16 %v3505
        %v3587 = vunpack.c.h.b16 %v3505
        %v3588 = vunpack.c.l.b16 %v3506
        %v3589 = vunpack.c.h.b16 %v3506
        %v3590 = vunpack.c.l.b16 %v3507
        %v3591 = vunpack.c.h.b16 %v3507
        %v3592 = vunpack.c.l.b16 %v3508
        %v3593 = vunpack.c.h.b16 %v3508
        %v3594 = vunpack.c.l.b16 %v3509
        %v3595 = vunpack.c.h.b16 %v3509
        %v3596 = vunpack.c.l.b16 %v3510
        %v3597 = vunpack.c.h.b16 %v3510
        %v3598 = vunpack.c.l.b16 %v3511
        %v3599 = vunpack.c.h.b16 %v3511
        %v3600 = vunpack.c.l.b16 %v3512
        %v3601 = vunpack.c.h.b16 %v3512
        %v3602 = vunpack.c.l.b16 %v3513
        %v3603 = vunpack.c.h.b16 %v3513
        %v3604 = vunpack.c.l.b16 %v3514
        %v3605 = vunpack.c.h.b16 %v3514
        %v3606 = vunpack.c.l.b16 %v3515
        %v3607 = vunpack.c.h.b16 %v3515
        %v3608 = vunpack.c.l.b16 %v3516
        %v3609 = vunpack.c.h.b16 %v3516
        %v3610 = vunpack.c.l.b16 %v3517
        %v3611 = vunpack.c.h.b16 %v3517
        %v3612 = vunpack.c.l.b16 %v3518
        %v3613 = vunpack.c.h.b16 %v3518
        %v3614 = vunpack.c.l.b16 %v3519
        %v3615 = vunpack.c.h.b16 %v3519
        %v3616 = vpack.c.b16 %v3554, %v3552
        %v3617 = vpack.c.b16 %v3555, %v3553
        %v3618 = vpack.c.b16 %v3558, %v3556
        %v3619 = vpack.c.b16 %v3559, %v3557
        %v3620 = vpack.c.b16 %v3562, %v3560
        %v3621 = vpack.c.b16 %v3563, %v3561
        %v3622 = vpack.c.b16 %v3566, %v3564
        %v3623 = vpack.c.b16 %v3567, %v3565
        %v3624 = vpack.c.b16 %v3570, %v3568
        %v3625 = vpack.c.b16 %v3571, %v3569
        %v3626 = vpack.c.b16 %v3574, %v3572
        %v3627 = vpack.c.b16 %v3575, %v3573
        %v3628 = vpack.c.b16 %v3578, %v3576
        %v3629 = vpack.c.b16 %v3579, %v3577
        %v3630 = vpack.c.b16 %v3582, %v3580
        %v3631 = vpack.c.b16 %v3583, %v3581
        %v3632 = vpack.c.b16 %v3586, %v3584
        %v3633 = vpack.c.b16 %v3587, %v3585
        %v3634 = vpack.c.b16 %v3590, %v3588
        %v3635 = vpack.c.b16 %v3591, %v3589
        %v3636 = vpack.c.b16 %v3594, %v3592
        %v3637 = vpack.c.b16 %v3595, %v3593
        %v3638 = vpack.c.b16 %v3598, %v3596
        %v3639 = vpack.c.b16 %v3599, %v3597
        %v3640 = vpack.c.b16 %v3602, %v3600
        %v3641 = vpack.c.b16 %v3603, %v3601
        %v3642 = vpack.c.b16 %v3606, %v3604
        %v3643 = vpack.c.b16 %v3607, %v3605
        %v3644 = vpack.c.b16 %v3610, %v3608
        %v3645 = vpack.c.b16 %v3611, %v3609
        %v3646 = vpack.c.b16 %v3614, %v3612
        %v3647 = vpack.c.b16 %v3615, %v3613
        %3680 = vmatprep.subr.bf16.mxu0 %v3617
        %3681 = vmatpush1.bf16.msra.mxu0 %v3616
        %3682 = vmatprep.subr.bf16.mxu0 %v3619
        %3683 = vmatpush1.bf16.msra.mxu0 %v3618
        %3684 = vmatprep.subr.bf16.mxu0 %v3621
        %3685 = vmatpush1.bf16.msra.mxu0 %v3620
        %3686 = vmatprep.subr.bf16.mxu0 %v3623
        %3687 = vmatpush1.bf16.msra.mxu0 %v3622
        %3688 = vmatprep.subr.bf16.mxu0 %v3625
        %3689 = vmatpush1.bf16.msra.mxu0 %v3624
        %3690 = vmatprep.subr.bf16.mxu0 %v3627
        %3691 = vmatpush1.bf16.msra.mxu0 %v3626
        %3692 = vmatprep.subr.bf16.mxu0 %v3629
        %3693 = vmatpush1.bf16.msra.mxu0 %v3628
        %3694 = vmatprep.subr.bf16.mxu0 %v3631
        %3695 = vmatpush1.bf16.msra.mxu0 %v3630
        %3696 = vmatprep.subr.bf16.mxu0 %v3633
        %3697 = vmatpush1.bf16.msra.mxu0 %v3632
        %3698 = vmatprep.subr.bf16.mxu0 %v3635
        %3699 = vmatpush1.bf16.msra.mxu0 %v3634
        %3700 = vmatprep.subr.bf16.mxu0 %v3637
        %3701 = vmatpush1.bf16.msra.mxu0 %v3636
        %3702 = vmatprep.subr.bf16.mxu0 %v3639
        %3703 = vmatpush1.bf16.msra.mxu0 %v3638
        %3704 = vmatprep.subr.bf16.mxu0 %v3641
        %3705 = vmatpush1.bf16.msra.mxu0 %v3640
        %3706 = vmatprep.subr.bf16.mxu0 %v3643
        %3707 = vmatpush1.bf16.msra.mxu0 %v3642
        %3708 = vmatprep.subr.bf16.mxu0 %v3645
        %3709 = vmatpush1.bf16.msra.mxu0 %v3644
        %3710 = vmatprep.subr.bf16.mxu0 %v3647
        %3711 = vmatpush1.bf16.msra.mxu0 %v3646
        %3712 = vmatprep.mubr.bf16.mxu0 %v3204
        %3713 = vmatmul.mubr.bf16.gmra.mrb[0].mxu0 %v3203
        %v3714 = vpop.f32.mrb[0].mxu0
        %v3715 = vadd.f32 0.0, %v3714
        %v3716 = vpop.f32.mrb[0].mxu0
        %v3717 = vadd.f32 0.0, %v3716
        %v3718 = vpop.f32.mrb[0].mxu0
        %v3719 = vadd.f32 0.0, %v3718
        %v3720 = vpop.f32.mrb[0].mxu0
        %v3721 = vadd.f32 0.0, %v3720
        %3722 = vmatprep.mubr.bf16.mxu0 %v3206
        %3723 = vmatmul.mubr.bf16.gmra.mrb[0].mxu0 %v3205
        %v3724 = vpop.f32.mrb[0].mxu0
        %v3725 = vadd.f32 0.0, %v3724
        %v3726 = vpop.f32.mrb[0].mxu0
        %v3727 = vadd.f32 0.0, %v3726
        %v3728 = vpop.f32.mrb[0].mxu0
        %v3729 = vadd.f32 0.0, %v3728
        %v3730 = vpop.f32.mrb[0].mxu0
        %v3731 = vadd.f32 0.0, %v3730
        %3732 = vdwg.mxu0
        %3733 = vset.pattern.permute.xlu0 1
        %3734 = vperm.xlu0 %3733, %v431
        %v3735 = vpop.permute.xlu0 %3734
        %3737 = vset.pattern.permute.xlu0 1
        %3738 = vperm.xlu0 %3737, %v432
        %v3739 = vpop.permute.xlu0 %3738
        %3741 = vset.pattern.permute.xlu0 1
        %3742 = vperm.xlu0 %3741, %v433
        %v3743 = vpop.permute.xlu0 %3742
        %3745 = vset.pattern.permute.xlu0 1
        %3746 = vperm.xlu0 %3745, %v434
        %v3747 = vpop.permute.xlu0 %3746
        %v3749 = vmul.f32 %v3715, %v3735
        %v3750 = vmul.f32 %v3717, %v3735
        %v3751 = vmul.f32 %v3719, %v3739
        %v3752 = vmul.f32 %v3721, %v3739
        %v3753 = vmul.f32 %v3725, %v3743
        %v3754 = vmul.f32 %v3727, %v3743
        %v3755 = vmul.f32 %v3729, %v3747
        %v3756 = vmul.f32 %v3731, %v3747
        %v3757 = vadd.f32 %v3480, %v3749
        %v3758 = vadd.f32 %v3481, %v3750
        %v3759 = vadd.f32 %v3482, %v3751
        %v3760 = vadd.f32 %v3483, %v3752
        %v3761 = vadd.f32 %v3484, %v3753
        %v3762 = vadd.f32 %v3485, %v3754
        %v3763 = vadd.f32 %v3486, %v3755
        %v3764 = vadd.f32 %v3487, %v3756
        %v3765 = vld [vmem:[%s1120] sm:$0xff]
        %v3766 = vld [vmem:[%s1120 + $0x8] sm:$0xff]
        %v3767 = vld [vmem:[%s1120 + $0x10] sm:$0xff]
        %v3768 = vld [vmem:[%s1120 + $0x18] sm:$0xff]
        %v3769 = vld [vmem:[%s1120 + $0x20] sm:$0xff]
        %v3770 = vld [vmem:[%s1120 + $0x28] sm:$0xff]
        %v3771 = vld [vmem:[%s1120 + $0x30] sm:$0xff]
        %v3772 = vld [vmem:[%s1120 + $0x38] sm:$0xff]
        %v3773 = vld [vmem:[%s1120 + $0x40] sm:$0xff]
        %v3774 = vld [vmem:[%s1120 + $0x48] sm:$0xff]
        %v3775 = vld [vmem:[%s1120 + $0x50] sm:$0xff]
        %v3776 = vld [vmem:[%s1120 + $0x58] sm:$0xff]
        %v3777 = vld [vmem:[%s1120 + $0x60] sm:$0xff]
        %v3778 = vld [vmem:[%s1120 + $0x68] sm:$0xff]
        %v3779 = vld [vmem:[%s1120 + $0x70] sm:$0xff]
        %v3780 = vld [vmem:[%s1120 + $0x78] sm:$0xff]
        %v3781 = vld [vmem:[%s1120 + $0x80] sm:$0xff]
        %v3782 = vld [vmem:[%s1120 + $0x88] sm:$0xff]
        %v3783 = vld [vmem:[%s1120 + $0x90] sm:$0xff]
        %v3784 = vld [vmem:[%s1120 + $0x98] sm:$0xff]
        %v3785 = vld [vmem:[%s1120 + $0xa0] sm:$0xff]
        %v3786 = vld [vmem:[%s1120 + $0xa8] sm:$0xff]
        %v3787 = vld [vmem:[%s1120 + $0xb0] sm:$0xff]
        %v3788 = vld [vmem:[%s1120 + $0xb8] sm:$0xff]
        %v3789 = vld [vmem:[%s1120 + $0xc0] sm:$0xff]
        %v3790 = vld [vmem:[%s1120 + $0xc8] sm:$0xff]
        %v3791 = vld [vmem:[%s1120 + $0xd0] sm:$0xff]
        %v3792 = vld [vmem:[%s1120 + $0xd8] sm:$0xff]
        %v3793 = vld [vmem:[%s1120 + $0xe0] sm:$0xff]
        %v3794 = vld [vmem:[%s1120 + $0xe8] sm:$0xff]
        %v3795 = vld [vmem:[%s1120 + $0xf0] sm:$0xff]
        %v3796 = vld [vmem:[%s1120 + $0xf8] sm:$0xff]
        %v3829 = vunpack.c.l.b16 %v3765
        %v3830 = vunpack.c.h.b16 %v3765
        %v3831 = vunpack.c.l.b16 %v3766
        %v3832 = vunpack.c.h.b16 %v3766
        %v3833 = vunpack.c.l.b16 %v3767
        %v3834 = vunpack.c.h.b16 %v3767
        %v3835 = vunpack.c.l.b16 %v3768
        %v3836 = vunpack.c.h.b16 %v3768
        %v3837 = vunpack.c.l.b16 %v3769
        %v3838 = vunpack.c.h.b16 %v3769
        %v3839 = vunpack.c.l.b16 %v3770
        %v3840 = vunpack.c.h.b16 %v3770
        %v3841 = vunpack.c.l.b16 %v3771
        %v3842 = vunpack.c.h.b16 %v3771
        %v3843 = vunpack.c.l.b16 %v3772
        %v3844 = vunpack.c.h.b16 %v3772
        %v3845 = vunpack.c.l.b16 %v3773
        %v3846 = vunpack.c.h.b16 %v3773
        %v3847 = vunpack.c.l.b16 %v3774
        %v3848 = vunpack.c.h.b16 %v3774
        %v3849 = vunpack.c.l.b16 %v3775
        %v3850 = vunpack.c.h.b16 %v3775
        %v3851 = vunpack.c.l.b16 %v3776
        %v3852 = vunpack.c.h.b16 %v3776
        %v3853 = vunpack.c.l.b16 %v3777
        %v3854 = vunpack.c.h.b16 %v3777
        %v3855 = vunpack.c.l.b16 %v3778
        %v3856 = vunpack.c.h.b16 %v3778
        %v3857 = vunpack.c.l.b16 %v3779
        %v3858 = vunpack.c.h.b16 %v3779
        %v3859 = vunpack.c.l.b16 %v3780
        %v3860 = vunpack.c.h.b16 %v3780
        %v3861 = vunpack.c.l.b16 %v3781
        %v3862 = vunpack.c.h.b16 %v3781
        %v3863 = vunpack.c.l.b16 %v3782
        %v3864 = vunpack.c.h.b16 %v3782
        %v3865 = vunpack.c.l.b16 %v3783
        %v3866 = vunpack.c.h.b16 %v3783
        %v3867 = vunpack.c.l.b16 %v3784
        %v3868 = vunpack.c.h.b16 %v3784
        %v3869 = vunpack.c.l.b16 %v3785
        %v3870 = vunpack.c.h.b16 %v3785
        %v3871 = vunpack.c.l.b16 %v3786
        %v3872 = vunpack.c.h.b16 %v3786
        %v3873 = vunpack.c.l.b16 %v3787
        %v3874 = vunpack.c.h.b16 %v3787
        %v3875 = vunpack.c.l.b16 %v3788
        %v3876 = vunpack.c.h.b16 %v3788
        %v3877 = vunpack.c.l.b16 %v3789
        %v3878 = vunpack.c.h.b16 %v3789
        %v3879 = vunpack.c.l.b16 %v3790
        %v3880 = vunpack.c.h.b16 %v3790
        %v3881 = vunpack.c.l.b16 %v3791
        %v3882 = vunpack.c.h.b16 %v3791
        %v3883 = vunpack.c.l.b16 %v3792
        %v3884 = vunpack.c.h.b16 %v3792
        %v3885 = vunpack.c.l.b16 %v3793
        %v3886 = vunpack.c.h.b16 %v3793
        %v3887 = vunpack.c.l.b16 %v3794
        %v3888 = vunpack.c.h.b16 %v3794
        %v3889 = vunpack.c.l.b16 %v3795
        %v3890 = vunpack.c.h.b16 %v3795
        %v3891 = vunpack.c.l.b16 %v3796
        %v3892 = vunpack.c.h.b16 %v3796
        %v3893 = vpack.c.b16 %v3831, %v3829
        %v3894 = vpack.c.b16 %v3832, %v3830
        %v3895 = vpack.c.b16 %v3835, %v3833
        %v3896 = vpack.c.b16 %v3836, %v3834
        %v3897 = vpack.c.b16 %v3839, %v3837
        %v3898 = vpack.c.b16 %v3840, %v3838
        %v3899 = vpack.c.b16 %v3843, %v3841
        %v3900 = vpack.c.b16 %v3844, %v3842
        %v3901 = vpack.c.b16 %v3847, %v3845
        %v3902 = vpack.c.b16 %v3848, %v3846
        %v3903 = vpack.c.b16 %v3851, %v3849
        %v3904 = vpack.c.b16 %v3852, %v3850
        %v3905 = vpack.c.b16 %v3855, %v3853
        %v3906 = vpack.c.b16 %v3856, %v3854
        %v3907 = vpack.c.b16 %v3859, %v3857
        %v3908 = vpack.c.b16 %v3860, %v3858
        %v3909 = vpack.c.b16 %v3863, %v3861
        %v3910 = vpack.c.b16 %v3864, %v3862
        %v3911 = vpack.c.b16 %v3867, %v3865
        %v3912 = vpack.c.b16 %v3868, %v3866
        %v3913 = vpack.c.b16 %v3871, %v3869
        %v3914 = vpack.c.b16 %v3872, %v3870
        %v3915 = vpack.c.b16 %v3875, %v3873
        %v3916 = vpack.c.b16 %v3876, %v3874
        %v3917 = vpack.c.b16 %v3879, %v3877
        %v3918 = vpack.c.b16 %v3880, %v3878
        %v3919 = vpack.c.b16 %v3883, %v3881
        %v3920 = vpack.c.b16 %v3884, %v3882
        %v3921 = vpack.c.b16 %v3887, %v3885
        %v3922 = vpack.c.b16 %v3888, %v3886
        %v3923 = vpack.c.b16 %v3891, %v3889
        %v3924 = vpack.c.b16 %v3892, %v3890
        %3957 = vmatprep.subr.bf16.mxu0 %v3894
        %3958 = vmatpush1.bf16.msra.mxu0 %v3893
        %3959 = vmatprep.subr.bf16.mxu0 %v3896
        %3960 = vmatpush1.bf16.msra.mxu0 %v3895
        %3961 = vmatprep.subr.bf16.mxu0 %v3898
        %3962 = vmatpush1.bf16.msra.mxu0 %v3897
        %3963 = vmatprep.subr.bf16.mxu0 %v3900
        %3964 = vmatpush1.bf16.msra.mxu0 %v3899
        %3965 = vmatprep.subr.bf16.mxu0 %v3902
        %3966 = vmatpush1.bf16.msra.mxu0 %v3901
        %3967 = vmatprep.subr.bf16.mxu0 %v3904
        %3968 = vmatpush1.bf16.msra.mxu0 %v3903
        %3969 = vmatprep.subr.bf16.mxu0 %v3906
        %3970 = vmatpush1.bf16.msra.mxu0 %v3905
        %3971 = vmatprep.subr.bf16.mxu0 %v3908
        %3972 = vmatpush1.bf16.msra.mxu0 %v3907
        %3973 = vmatprep.subr.bf16.mxu0 %v3910
        %3974 = vmatpush1.bf16.msra.mxu0 %v3909
        %3975 = vmatprep.subr.bf16.mxu0 %v3912
        %3976 = vmatpush1.bf16.msra.mxu0 %v3911
        %3977 = vmatprep.subr.bf16.mxu0 %v3914
        %3978 = vmatpush1.bf16.msra.mxu0 %v3913
        %3979 = vmatprep.subr.bf16.mxu0 %v3916
        %3980 = vmatpush1.bf16.msra.mxu0 %v3915
        %3981 = vmatprep.subr.bf16.mxu0 %v3918
        %3982 = vmatpush1.bf16.msra.mxu0 %v3917
        %3983 = vmatprep.subr.bf16.mxu0 %v3920
        %3984 = vmatpush1.bf16.msra.mxu0 %v3919
        %3985 = vmatprep.subr.bf16.mxu0 %v3922
        %3986 = vmatpush1.bf16.msra.mxu0 %v3921
        %3987 = vmatprep.subr.bf16.mxu0 %v3924
        %3988 = vmatpush1.bf16.msra.mxu0 %v3923
        %3989 = vmatprep.mubr.bf16.mxu0 %v3204
        %3990 = vmatmul.mubr.bf16.gmra.mrb[0].mxu0 %v3203
        %v3991 = vpop.f32.mrb[0].mxu0
        %v3992 = vadd.f32 0.0, %v3991
        %v3993 = vpop.f32.mrb[0].mxu0
        %v3994 = vadd.f32 0.0, %v3993
        %v3995 = vpop.f32.mrb[0].mxu0
        %v3996 = vadd.f32 0.0, %v3995
        %v3997 = vpop.f32.mrb[0].mxu0
        %v3998 = vadd.f32 0.0, %v3997
        %3999 = vmatprep.mubr.bf16.mxu0 %v3206
        %4000 = vmatmul.mubr.bf16.gmra.mrb[0].mxu0 %v3205
        %v4001 = vpop.f32.mrb[0].mxu0
        %v4002 = vadd.f32 0.0, %v4001
        %v4003 = vpop.f32.mrb[0].mxu0
        %v4004 = vadd.f32 0.0, %v4003
        %v4005 = vpop.f32.mrb[0].mxu0
        %v4006 = vadd.f32 0.0, %v4005
        %v4007 = vpop.f32.mrb[0].mxu0
        %v4008 = vadd.f32 0.0, %v4007
        %4009 = vdwg.mxu0
        %4010 = vset.pattern.permute.xlu0 2
        %4011 = vperm.xlu0 %4010, %v431
        %v4012 = vpop.permute.xlu0 %4011
        %4014 = vset.pattern.permute.xlu0 2
        %4015 = vperm.xlu0 %4014, %v432
        %v4016 = vpop.permute.xlu0 %4015
        %4018 = vset.pattern.permute.xlu0 2
        %4019 = vperm.xlu0 %4018, %v433
        %v4020 = vpop.permute.xlu0 %4019
        %4022 = vset.pattern.permute.xlu0 2
        %4023 = vperm.xlu0 %4022, %v434
        %v4024 = vpop.permute.xlu0 %4023
        %v4026 = vmul.f32 %v3992, %v4012
        %v4027 = vmul.f32 %v3994, %v4012
        %v4028 = vmul.f32 %v3996, %v4016
        %v4029 = vmul.f32 %v3998, %v4016
        %v4030 = vmul.f32 %v4002, %v4020
        %v4031 = vmul.f32 %v4004, %v4020
        %v4032 = vmul.f32 %v4006, %v4024
        %v4033 = vmul.f32 %v4008, %v4024
        %v4034 = vadd.f32 %v3757, %v4026
        %v4035 = vadd.f32 %v3758, %v4027
        %v4036 = vadd.f32 %v3759, %v4028
        %v4037 = vadd.f32 %v3760, %v4029
        %v4038 = vadd.f32 %v3761, %v4030
        %v4039 = vadd.f32 %v3762, %v4031
        %v4040 = vadd.f32 %v3763, %v4032
        %v4041 = vadd.f32 %v3764, %v4033
        %v4042 = vld [vmem:[%s1398] sm:$0xff]
        %v4043 = vld [vmem:[%s1398 + $0x8] sm:$0xff]
        %v4044 = vld [vmem:[%s1398 + $0x10] sm:$0xff]
        %v4045 = vld [vmem:[%s1398 + $0x18] sm:$0xff]
        %v4046 = vld [vmem:[%s1398 + $0x20] sm:$0xff]
        %v4047 = vld [vmem:[%s1398 + $0x28] sm:$0xff]
        %v4048 = vld [vmem:[%s1398 + $0x30] sm:$0xff]
        %v4049 = vld [vmem:[%s1398 + $0x38] sm:$0xff]
        %v4050 = vld [vmem:[%s1398 + $0x40] sm:$0xff]
        %v4051 = vld [vmem:[%s1398 + $0x48] sm:$0xff]
        %v4052 = vld [vmem:[%s1398 + $0x50] sm:$0xff]
        %v4053 = vld [vmem:[%s1398 + $0x58] sm:$0xff]
        %v4054 = vld [vmem:[%s1398 + $0x60] sm:$0xff]
        %v4055 = vld [vmem:[%s1398 + $0x68] sm:$0xff]
        %v4056 = vld [vmem:[%s1398 + $0x70] sm:$0xff]
        %v4057 = vld [vmem:[%s1398 + $0x78] sm:$0xff]
        %v4058 = vld [vmem:[%s1398 + $0x80] sm:$0xff]
        %v4059 = vld [vmem:[%s1398 + $0x88] sm:$0xff]
        %v4060 = vld [vmem:[%s1398 + $0x90] sm:$0xff]
        %v4061 = vld [vmem:[%s1398 + $0x98] sm:$0xff]
        %v4062 = vld [vmem:[%s1398 + $0xa0] sm:$0xff]
        %v4063 = vld [vmem:[%s1398 + $0xa8] sm:$0xff]
        %v4064 = vld [vmem:[%s1398 + $0xb0] sm:$0xff]
        %v4065 = vld [vmem:[%s1398 + $0xb8] sm:$0xff]
        %v4066 = vld [vmem:[%s1398 + $0xc0] sm:$0xff]
        %v4067 = vld [vmem:[%s1398 + $0xc8] sm:$0xff]
        %v4068 = vld [vmem:[%s1398 + $0xd0] sm:$0xff]
        %v4069 = vld [vmem:[%s1398 + $0xd8] sm:$0xff]
        %v4070 = vld [vmem:[%s1398 + $0xe0] sm:$0xff]
        %v4071 = vld [vmem:[%s1398 + $0xe8] sm:$0xff]
        %v4072 = vld [vmem:[%s1398 + $0xf0] sm:$0xff]
        %v4073 = vld [vmem:[%s1398 + $0xf8] sm:$0xff]
        %v4106 = vunpack.c.l.b16 %v4042
        %v4107 = vunpack.c.h.b16 %v4042
        %v4108 = vunpack.c.l.b16 %v4043
        %v4109 = vunpack.c.h.b16 %v4043
        %v4110 = vunpack.c.l.b16 %v4044
        %v4111 = vunpack.c.h.b16 %v4044
        %v4112 = vunpack.c.l.b16 %v4045
        %v4113 = vunpack.c.h.b16 %v4045
        %v4114 = vunpack.c.l.b16 %v4046
        %v4115 = vunpack.c.h.b16 %v4046
        %v4116 = vunpack.c.l.b16 %v4047
        %v4117 = vunpack.c.h.b16 %v4047
        %v4118 = vunpack.c.l.b16 %v4048
        %v4119 = vunpack.c.h.b16 %v4048
        %v4120 = vunpack.c.l.b16 %v4049
        %v4121 = vunpack.c.h.b16 %v4049
        %v4122 = vunpack.c.l.b16 %v4050
        %v4123 = vunpack.c.h.b16 %v4050
        %v4124 = vunpack.c.l.b16 %v4051
        %v4125 = vunpack.c.h.b16 %v4051
        %v4126 = vunpack.c.l.b16 %v4052
        %v4127 = vunpack.c.h.b16 %v4052
        %v4128 = vunpack.c.l.b16 %v4053
        %v4129 = vunpack.c.h.b16 %v4053
        %v4130 = vunpack.c.l.b16 %v4054
        %v4131 = vunpack.c.h.b16 %v4054
        %v4132 = vunpack.c.l.b16 %v4055
        %v4133 = vunpack.c.h.b16 %v4055
        %v4134 = vunpack.c.l.b16 %v4056
        %v4135 = vunpack.c.h.b16 %v4056
        %v4136 = vunpack.c.l.b16 %v4057
        %v4137 = vunpack.c.h.b16 %v4057
        %v4138 = vunpack.c.l.b16 %v4058
        %v4139 = vunpack.c.h.b16 %v4058
        %v4140 = vunpack.c.l.b16 %v4059
        %v4141 = vunpack.c.h.b16 %v4059
        %v4142 = vunpack.c.l.b16 %v4060
        %v4143 = vunpack.c.h.b16 %v4060
        %v4144 = vunpack.c.l.b16 %v4061
        %v4145 = vunpack.c.h.b16 %v4061
        %v4146 = vunpack.c.l.b16 %v4062
        %v4147 = vunpack.c.h.b16 %v4062
        %v4148 = vunpack.c.l.b16 %v4063
        %v4149 = vunpack.c.h.b16 %v4063
        %v4150 = vunpack.c.l.b16 %v4064
        %v4151 = vunpack.c.h.b16 %v4064
        %v4152 = vunpack.c.l.b16 %v4065
        %v4153 = vunpack.c.h.b16 %v4065
        %v4154 = vunpack.c.l.b16 %v4066
        %v4155 = vunpack.c.h.b16 %v4066
        %v4156 = vunpack.c.l.b16 %v4067
        %v4157 = vunpack.c.h.b16 %v4067
        %v4158 = vunpack.c.l.b16 %v4068
        %v4159 = vunpack.c.h.b16 %v4068
        %v4160 = vunpack.c.l.b16 %v4069
        %v4161 = vunpack.c.h.b16 %v4069
        %v4162 = vunpack.c.l.b16 %v4070
        %v4163 = vunpack.c.h.b16 %v4070
        %v4164 = vunpack.c.l.b16 %v4071
        %v4165 = vunpack.c.h.b16 %v4071
        %v4166 = vunpack.c.l.b16 %v4072
        %v4167 = vunpack.c.h.b16 %v4072
        %v4168 = vunpack.c.l.b16 %v4073
        %v4169 = vunpack.c.h.b16 %v4073
        %v4170 = vpack.c.b16 %v4108, %v4106
        %v4171 = vpack.c.b16 %v4109, %v4107
        %v4172 = vpack.c.b16 %v4112, %v4110
        %v4173 = vpack.c.b16 %v4113, %v4111
        %v4174 = vpack.c.b16 %v4116, %v4114
        %v4175 = vpack.c.b16 %v4117, %v4115
        %v4176 = vpack.c.b16 %v4120, %v4118
        %v4177 = vpack.c.b16 %v4121, %v4119
        %v4178 = vpack.c.b16 %v4124, %v4122
        %v4179 = vpack.c.b16 %v4125, %v4123
        %v4180 = vpack.c.b16 %v4128, %v4126
        %v4181 = vpack.c.b16 %v4129, %v4127
        %v4182 = vpack.c.b16 %v4132, %v4130
        %v4183 = vpack.c.b16 %v4133, %v4131
        %v4184 = vpack.c.b16 %v4136, %v4134
        %v4185 = vpack.c.b16 %v4137, %v4135
        %v4186 = vpack.c.b16 %v4140, %v4138
        %v4187 = vpack.c.b16 %v4141, %v4139
        %v4188 = vpack.c.b16 %v4144, %v4142
        %v4189 = vpack.c.b16 %v4145, %v4143
        %v4190 = vpack.c.b16 %v4148, %v4146
        %v4191 = vpack.c.b16 %v4149, %v4147
        %v4192 = vpack.c.b16 %v4152, %v4150
        %v4193 = vpack.c.b16 %v4153, %v4151
        %v4194 = vpack.c.b16 %v4156, %v4154
        %v4195 = vpack.c.b16 %v4157, %v4155
        %v4196 = vpack.c.b16 %v4160, %v4158
        %v4197 = vpack.c.b16 %v4161, %v4159
        %v4198 = vpack.c.b16 %v4164, %v4162
        %v4199 = vpack.c.b16 %v4165, %v4163
        %v4200 = vpack.c.b16 %v4168, %v4166
        %v4201 = vpack.c.b16 %v4169, %v4167
        %4234 = vmatprep.subr.bf16.mxu0 %v4171
        %4235 = vmatpush1.bf16.msra.mxu0 %v4170
        %4236 = vmatprep.subr.bf16.mxu0 %v4173
        %4237 = vmatpush1.bf16.msra.mxu0 %v4172
        %4238 = vmatprep.subr.bf16.mxu0 %v4175
        %4239 = vmatpush1.bf16.msra.mxu0 %v4174
        %4240 = vmatprep.subr.bf16.mxu0 %v4177
        %4241 = vmatpush1.bf16.msra.mxu0 %v4176
        %4242 = vmatprep.subr.bf16.mxu0 %v4179
        %4243 = vmatpush1.bf16.msra.mxu0 %v4178
        %4244 = vmatprep.subr.bf16.mxu0 %v4181
        %4245 = vmatpush1.bf16.msra.mxu0 %v4180
        %4246 = vmatprep.subr.bf16.mxu0 %v4183
        %4247 = vmatpush1.bf16.msra.mxu0 %v4182
        %4248 = vmatprep.subr.bf16.mxu0 %v4185
        %4249 = vmatpush1.bf16.msra.mxu0 %v4184
        %4250 = vmatprep.subr.bf16.mxu0 %v4187
        %4251 = vmatpush1.bf16.msra.mxu0 %v4186
        %4252 = vmatprep.subr.bf16.mxu0 %v4189
        %4253 = vmatpush1.bf16.msra.mxu0 %v4188
        %4254 = vmatprep.subr.bf16.mxu0 %v4191
        %4255 = vmatpush1.bf16.msra.mxu0 %v4190
        %4256 = vmatprep.subr.bf16.mxu0 %v4193
        %4257 = vmatpush1.bf16.msra.mxu0 %v4192
        %4258 = vmatprep.subr.bf16.mxu0 %v4195
        %4259 = vmatpush1.bf16.msra.mxu0 %v4194
        %4260 = vmatprep.subr.bf16.mxu0 %v4197
        %4261 = vmatpush1.bf16.msra.mxu0 %v4196
        %4262 = vmatprep.subr.bf16.mxu0 %v4199
        %4263 = vmatpush1.bf16.msra.mxu0 %v4198
        %4264 = vmatprep.subr.bf16.mxu0 %v4201
        %4265 = vmatpush1.bf16.msra.mxu0 %v4200
        %4266 = vmatprep.mubr.bf16.mxu0 %v3204
        %4267 = vmatmul.mubr.bf16.gmra.mrb[0].mxu0 %v3203
        %v4268 = vpop.f32.mrb[0].mxu0
        %v4269 = vadd.f32 0.0, %v4268
        %v4270 = vpop.f32.mrb[0].mxu0
        %v4271 = vadd.f32 0.0, %v4270
        %v4272 = vpop.f32.mrb[0].mxu0
        %v4273 = vadd.f32 0.0, %v4272
        %v4274 = vpop.f32.mrb[0].mxu0
        %v4275 = vadd.f32 0.0, %v4274
        %4276 = vmatprep.mubr.bf16.mxu0 %v3206
        %4277 = vmatmul.mubr.bf16.gmra.mrb[0].mxu0 %v3205
        %v4278 = vpop.f32.mrb[0].mxu0
        %v4279 = vadd.f32 0.0, %v4278
        %v4280 = vpop.f32.mrb[0].mxu0
        %v4281 = vadd.f32 0.0, %v4280
        %v4282 = vpop.f32.mrb[0].mxu0
        %v4283 = vadd.f32 0.0, %v4282
        %v4284 = vpop.f32.mrb[0].mxu0
        %v4285 = vadd.f32 0.0, %v4284
        %4286 = vdwg.mxu0
        %4287 = vset.pattern.permute.xlu0 3
        %4288 = vperm.xlu0 %4287, %v431
        %v4289 = vpop.permute.xlu0 %4288
        %4291 = vset.pattern.permute.xlu0 3
        %4292 = vperm.xlu0 %4291, %v432
        %v4293 = vpop.permute.xlu0 %4292
        %4295 = vset.pattern.permute.xlu0 3
        %4296 = vperm.xlu0 %4295, %v433
        %v4297 = vpop.permute.xlu0 %4296
        %4299 = vset.pattern.permute.xlu0 3
        %4300 = vperm.xlu0 %4299, %v434
        %v4301 = vpop.permute.xlu0 %4300
        %v4303 = vmul.f32 %v4269, %v4289
        %v4304 = vmul.f32 %v4271, %v4289
        %v4305 = vmul.f32 %v4273, %v4293
        %v4306 = vmul.f32 %v4275, %v4293
        %v4307 = vmul.f32 %v4279, %v4297
        %v4308 = vmul.f32 %v4281, %v4297
        %v4309 = vmul.f32 %v4283, %v4301
        %v4310 = vmul.f32 %v4285, %v4301
        %v4311 = vadd.f32 %v4034, %v4303
        %v4312 = vadd.f32 %v4035, %v4304
        %v4313 = vadd.f32 %v4036, %v4305
        %v4314 = vadd.f32 %v4037, %v4306
        %v4315 = vadd.f32 %v4038, %v4307
        %v4316 = vadd.f32 %v4039, %v4308
        %v4317 = vadd.f32 %v4040, %v4309
        %v4318 = vadd.f32 %v4041, %v4310
        %v4319 = vld [vmem:[%s1676] sm:$0xff]
        %v4320 = vld [vmem:[%s1676 + $0x8] sm:$0xff]
        %v4321 = vld [vmem:[%s1676 + $0x10] sm:$0xff]
        %v4322 = vld [vmem:[%s1676 + $0x18] sm:$0xff]
        %v4323 = vld [vmem:[%s1676 + $0x20] sm:$0xff]
        %v4324 = vld [vmem:[%s1676 + $0x28] sm:$0xff]
        %v4325 = vld [vmem:[%s1676 + $0x30] sm:$0xff]
        %v4326 = vld [vmem:[%s1676 + $0x38] sm:$0xff]
        %v4327 = vld [vmem:[%s1676 + $0x40] sm:$0xff]
        %v4328 = vld [vmem:[%s1676 + $0x48] sm:$0xff]
        %v4329 = vld [vmem:[%s1676 + $0x50] sm:$0xff]
        %v4330 = vld [vmem:[%s1676 + $0x58] sm:$0xff]
        %v4331 = vld [vmem:[%s1676 + $0x60] sm:$0xff]
        %v4332 = vld [vmem:[%s1676 + $0x68] sm:$0xff]
        %v4333 = vld [vmem:[%s1676 + $0x70] sm:$0xff]
        %v4334 = vld [vmem:[%s1676 + $0x78] sm:$0xff]
        %v4335 = vld [vmem:[%s1676 + $0x80] sm:$0xff]
        %v4336 = vld [vmem:[%s1676 + $0x88] sm:$0xff]
        %v4337 = vld [vmem:[%s1676 + $0x90] sm:$0xff]
        %v4338 = vld [vmem:[%s1676 + $0x98] sm:$0xff]
        %v4339 = vld [vmem:[%s1676 + $0xa0] sm:$0xff]
        %v4340 = vld [vmem:[%s1676 + $0xa8] sm:$0xff]
        %v4341 = vld [vmem:[%s1676 + $0xb0] sm:$0xff]
        %v4342 = vld [vmem:[%s1676 + $0xb8] sm:$0xff]
        %v4343 = vld [vmem:[%s1676 + $0xc0] sm:$0xff]
        %v4344 = vld [vmem:[%s1676 + $0xc8] sm:$0xff]
        %v4345 = vld [vmem:[%s1676 + $0xd0] sm:$0xff]
        %v4346 = vld [vmem:[%s1676 + $0xd8] sm:$0xff]
        %v4347 = vld [vmem:[%s1676 + $0xe0] sm:$0xff]
        %v4348 = vld [vmem:[%s1676 + $0xe8] sm:$0xff]
        %v4349 = vld [vmem:[%s1676 + $0xf0] sm:$0xff]
        %v4350 = vld [vmem:[%s1676 + $0xf8] sm:$0xff]
        %v4383 = vunpack.c.l.b16 %v4319
        %v4384 = vunpack.c.h.b16 %v4319
        %v4385 = vunpack.c.l.b16 %v4320
        %v4386 = vunpack.c.h.b16 %v4320
        %v4387 = vunpack.c.l.b16 %v4321
        %v4388 = vunpack.c.h.b16 %v4321
        %v4389 = vunpack.c.l.b16 %v4322
        %v4390 = vunpack.c.h.b16 %v4322
        %v4391 = vunpack.c.l.b16 %v4323
        %v4392 = vunpack.c.h.b16 %v4323
        %v4393 = vunpack.c.l.b16 %v4324
        %v4394 = vunpack.c.h.b16 %v4324
        %v4395 = vunpack.c.l.b16 %v4325
        %v4396 = vunpack.c.h.b16 %v4325
        %v4397 = vunpack.c.l.b16 %v4326
        %v4398 = vunpack.c.h.b16 %v4326
        %v4399 = vunpack.c.l.b16 %v4327
        %v4400 = vunpack.c.h.b16 %v4327
        %v4401 = vunpack.c.l.b16 %v4328
        %v4402 = vunpack.c.h.b16 %v4328
        %v4403 = vunpack.c.l.b16 %v4329
        %v4404 = vunpack.c.h.b16 %v4329
        %v4405 = vunpack.c.l.b16 %v4330
        %v4406 = vunpack.c.h.b16 %v4330
        %v4407 = vunpack.c.l.b16 %v4331
        %v4408 = vunpack.c.h.b16 %v4331
        %v4409 = vunpack.c.l.b16 %v4332
        %v4410 = vunpack.c.h.b16 %v4332
        %v4411 = vunpack.c.l.b16 %v4333
        %v4412 = vunpack.c.h.b16 %v4333
        %v4413 = vunpack.c.l.b16 %v4334
        %v4414 = vunpack.c.h.b16 %v4334
        %v4415 = vunpack.c.l.b16 %v4335
        %v4416 = vunpack.c.h.b16 %v4335
        %v4417 = vunpack.c.l.b16 %v4336
        %v4418 = vunpack.c.h.b16 %v4336
        %v4419 = vunpack.c.l.b16 %v4337
        %v4420 = vunpack.c.h.b16 %v4337
        %v4421 = vunpack.c.l.b16 %v4338
        %v4422 = vunpack.c.h.b16 %v4338
        %v4423 = vunpack.c.l.b16 %v4339
        %v4424 = vunpack.c.h.b16 %v4339
        %v4425 = vunpack.c.l.b16 %v4340
        %v4426 = vunpack.c.h.b16 %v4340
        %v4427 = vunpack.c.l.b16 %v4341
        %v4428 = vunpack.c.h.b16 %v4341
        %v4429 = vunpack.c.l.b16 %v4342
        %v4430 = vunpack.c.h.b16 %v4342
        %v4431 = vunpack.c.l.b16 %v4343
        %v4432 = vunpack.c.h.b16 %v4343
        %v4433 = vunpack.c.l.b16 %v4344
        %v4434 = vunpack.c.h.b16 %v4344
        %v4435 = vunpack.c.l.b16 %v4345
        %v4436 = vunpack.c.h.b16 %v4345
        %v4437 = vunpack.c.l.b16 %v4346
        %v4438 = vunpack.c.h.b16 %v4346
        %v4439 = vunpack.c.l.b16 %v4347
        %v4440 = vunpack.c.h.b16 %v4347
        %v4441 = vunpack.c.l.b16 %v4348
        %v4442 = vunpack.c.h.b16 %v4348
        %v4443 = vunpack.c.l.b16 %v4349
        %v4444 = vunpack.c.h.b16 %v4349
        %v4445 = vunpack.c.l.b16 %v4350
        %v4446 = vunpack.c.h.b16 %v4350
        %v4447 = vpack.c.b16 %v4385, %v4383
        %v4448 = vpack.c.b16 %v4386, %v4384
        %v4449 = vpack.c.b16 %v4389, %v4387
        %v4450 = vpack.c.b16 %v4390, %v4388
        %v4451 = vpack.c.b16 %v4393, %v4391
        %v4452 = vpack.c.b16 %v4394, %v4392
        %v4453 = vpack.c.b16 %v4397, %v4395
        %v4454 = vpack.c.b16 %v4398, %v4396
        %v4455 = vpack.c.b16 %v4401, %v4399
        %v4456 = vpack.c.b16 %v4402, %v4400
        %v4457 = vpack.c.b16 %v4405, %v4403
        %v4458 = vpack.c.b16 %v4406, %v4404
        %v4459 = vpack.c.b16 %v4409, %v4407
        %v4460 = vpack.c.b16 %v4410, %v4408
        %v4461 = vpack.c.b16 %v4413, %v4411
        %v4462 = vpack.c.b16 %v4414, %v4412
        %v4463 = vpack.c.b16 %v4417, %v4415
        %v4464 = vpack.c.b16 %v4418, %v4416
        %v4465 = vpack.c.b16 %v4421, %v4419
        %v4466 = vpack.c.b16 %v4422, %v4420
        %v4467 = vpack.c.b16 %v4425, %v4423
        %v4468 = vpack.c.b16 %v4426, %v4424
        %v4469 = vpack.c.b16 %v4429, %v4427
        %v4470 = vpack.c.b16 %v4430, %v4428
        %v4471 = vpack.c.b16 %v4433, %v4431
        %v4472 = vpack.c.b16 %v4434, %v4432
        %v4473 = vpack.c.b16 %v4437, %v4435
        %v4474 = vpack.c.b16 %v4438, %v4436
        %v4475 = vpack.c.b16 %v4441, %v4439
        %v4476 = vpack.c.b16 %v4442, %v4440
        %v4477 = vpack.c.b16 %v4445, %v4443
        %v4478 = vpack.c.b16 %v4446, %v4444
        %4511 = vmatprep.subr.bf16.mxu0 %v4448
        %4512 = vmatpush1.bf16.msra.mxu0 %v4447
        %4513 = vmatprep.subr.bf16.mxu0 %v4450
        %4514 = vmatpush1.bf16.msra.mxu0 %v4449
        %4515 = vmatprep.subr.bf16.mxu0 %v4452
        %4516 = vmatpush1.bf16.msra.mxu0 %v4451
        %4517 = vmatprep.subr.bf16.mxu0 %v4454
        %4518 = vmatpush1.bf16.msra.mxu0 %v4453
        %4519 = vmatprep.subr.bf16.mxu0 %v4456
        %4520 = vmatpush1.bf16.msra.mxu0 %v4455
        %4521 = vmatprep.subr.bf16.mxu0 %v4458
        %4522 = vmatpush1.bf16.msra.mxu0 %v4457
        %4523 = vmatprep.subr.bf16.mxu0 %v4460
        %4524 = vmatpush1.bf16.msra.mxu0 %v4459
        %4525 = vmatprep.subr.bf16.mxu0 %v4462
        %4526 = vmatpush1.bf16.msra.mxu0 %v4461
        %4527 = vmatprep.subr.bf16.mxu0 %v4464
        %4528 = vmatpush1.bf16.msra.mxu0 %v4463
        %4529 = vmatprep.subr.bf16.mxu0 %v4466
        %4530 = vmatpush1.bf16.msra.mxu0 %v4465
        %4531 = vmatprep.subr.bf16.mxu0 %v4468
        %4532 = vmatpush1.bf16.msra.mxu0 %v4467
        %4533 = vmatprep.subr.bf16.mxu0 %v4470
        %4534 = vmatpush1.bf16.msra.mxu0 %v4469
        %4535 = vmatprep.subr.bf16.mxu0 %v4472
        %4536 = vmatpush1.bf16.msra.mxu0 %v4471
        %4537 = vmatprep.subr.bf16.mxu0 %v4474
        %4538 = vmatpush1.bf16.msra.mxu0 %v4473
        %4539 = vmatprep.subr.bf16.mxu0 %v4476
        %4540 = vmatpush1.bf16.msra.mxu0 %v4475
        %4541 = vmatprep.subr.bf16.mxu0 %v4478
        %4542 = vmatpush1.bf16.msra.mxu0 %v4477
        %4543 = vmatprep.mubr.bf16.mxu0 %v3204
        %4544 = vmatmul.mubr.bf16.gmra.mrb[0].mxu0 %v3203
        %v4545 = vpop.f32.mrb[0].mxu0
        %v4546 = vadd.f32 0.0, %v4545
        %v4547 = vpop.f32.mrb[0].mxu0
        %v4548 = vadd.f32 0.0, %v4547
        %v4549 = vpop.f32.mrb[0].mxu0
        %v4550 = vadd.f32 0.0, %v4549
        %v4551 = vpop.f32.mrb[0].mxu0
        %v4552 = vadd.f32 0.0, %v4551
        %4553 = vmatprep.mubr.bf16.mxu0 %v3206
        %4554 = vmatmul.mubr.bf16.gmra.mrb[0].mxu0 %v3205
        %v4555 = vpop.f32.mrb[0].mxu0
        %v4556 = vadd.f32 0.0, %v4555
        %v4557 = vpop.f32.mrb[0].mxu0
        %v4558 = vadd.f32 0.0, %v4557
        %v4559 = vpop.f32.mrb[0].mxu0
        %v4560 = vadd.f32 0.0, %v4559
        %v4561 = vpop.f32.mrb[0].mxu0
        %v4562 = vadd.f32 0.0, %v4561
        %4563 = vdwg.mxu0
        %4564 = vset.pattern.permute.xlu0 4
        %4565 = vperm.xlu0 %4564, %v431
        %v4566 = vpop.permute.xlu0 %4565
        %4568 = vset.pattern.permute.xlu0 4
        %4569 = vperm.xlu0 %4568, %v432
        %v4570 = vpop.permute.xlu0 %4569
        %4572 = vset.pattern.permute.xlu0 4
        %4573 = vperm.xlu0 %4572, %v433
        %v4574 = vpop.permute.xlu0 %4573
        %4576 = vset.pattern.permute.xlu0 4
        %4577 = vperm.xlu0 %4576, %v434
        %v4578 = vpop.permute.xlu0 %4577
        %v4580 = vmul.f32 %v4546, %v4566
        %v4581 = vmul.f32 %v4548, %v4566
        %v4582 = vmul.f32 %v4550, %v4570
        %v4583 = vmul.f32 %v4552, %v4570
        %v4584 = vmul.f32 %v4556, %v4574
        %v4585 = vmul.f32 %v4558, %v4574
        %v4586 = vmul.f32 %v4560, %v4578
        %v4587 = vmul.f32 %v4562, %v4578
        %v4588 = vadd.f32 %v4311, %v4580
        %v4589 = vadd.f32 %v4312, %v4581
        %v4590 = vadd.f32 %v4313, %v4582
        %v4591 = vadd.f32 %v4314, %v4583
        %v4592 = vadd.f32 %v4315, %v4584
        %v4593 = vadd.f32 %v4316, %v4585
        %v4594 = vadd.f32 %v4317, %v4586
        %v4595 = vadd.f32 %v4318, %v4587
        %v4596 = vld [vmem:[%s1954] sm:$0xff]
        %v4597 = vld [vmem:[%s1954 + $0x8] sm:$0xff]
        %v4598 = vld [vmem:[%s1954 + $0x10] sm:$0xff]
        %v4599 = vld [vmem:[%s1954 + $0x18] sm:$0xff]
        %v4600 = vld [vmem:[%s1954 + $0x20] sm:$0xff]
        %v4601 = vld [vmem:[%s1954 + $0x28] sm:$0xff]
        %v4602 = vld [vmem:[%s1954 + $0x30] sm:$0xff]
        %v4603 = vld [vmem:[%s1954 + $0x38] sm:$0xff]
        %v4604 = vld [vmem:[%s1954 + $0x40] sm:$0xff]
        %v4605 = vld [vmem:[%s1954 + $0x48] sm:$0xff]
        %v4606 = vld [vmem:[%s1954 + $0x50] sm:$0xff]
        %v4607 = vld [vmem:[%s1954 + $0x58] sm:$0xff]
        %v4608 = vld [vmem:[%s1954 + $0x60] sm:$0xff]
        %v4609 = vld [vmem:[%s1954 + $0x68] sm:$0xff]
        %v4610 = vld [vmem:[%s1954 + $0x70] sm:$0xff]
        %v4611 = vld [vmem:[%s1954 + $0x78] sm:$0xff]
        %v4612 = vld [vmem:[%s1954 + $0x80] sm:$0xff]
        %v4613 = vld [vmem:[%s1954 + $0x88] sm:$0xff]
        %v4614 = vld [vmem:[%s1954 + $0x90] sm:$0xff]
        %v4615 = vld [vmem:[%s1954 + $0x98] sm:$0xff]
        %v4616 = vld [vmem:[%s1954 + $0xa0] sm:$0xff]
        %v4617 = vld [vmem:[%s1954 + $0xa8] sm:$0xff]
        %v4618 = vld [vmem:[%s1954 + $0xb0] sm:$0xff]
        %v4619 = vld [vmem:[%s1954 + $0xb8] sm:$0xff]
        %v4620 = vld [vmem:[%s1954 + $0xc0] sm:$0xff]
        %v4621 = vld [vmem:[%s1954 + $0xc8] sm:$0xff]
        %v4622 = vld [vmem:[%s1954 + $0xd0] sm:$0xff]
        %v4623 = vld [vmem:[%s1954 + $0xd8] sm:$0xff]
        %v4624 = vld [vmem:[%s1954 + $0xe0] sm:$0xff]
        %v4625 = vld [vmem:[%s1954 + $0xe8] sm:$0xff]
        %v4626 = vld [vmem:[%s1954 + $0xf0] sm:$0xff]
        %v4627 = vld [vmem:[%s1954 + $0xf8] sm:$0xff]
        %v4660 = vunpack.c.l.b16 %v4596
        %v4661 = vunpack.c.h.b16 %v4596
        %v4662 = vunpack.c.l.b16 %v4597
        %v4663 = vunpack.c.h.b16 %v4597
        %v4664 = vunpack.c.l.b16 %v4598
        %v4665 = vunpack.c.h.b16 %v4598
        %v4666 = vunpack.c.l.b16 %v4599
        %v4667 = vunpack.c.h.b16 %v4599
        %v4668 = vunpack.c.l.b16 %v4600
        %v4669 = vunpack.c.h.b16 %v4600
        %v4670 = vunpack.c.l.b16 %v4601
        %v4671 = vunpack.c.h.b16 %v4601
        %v4672 = vunpack.c.l.b16 %v4602
        %v4673 = vunpack.c.h.b16 %v4602
        %v4674 = vunpack.c.l.b16 %v4603
        %v4675 = vunpack.c.h.b16 %v4603
        %v4676 = vunpack.c.l.b16 %v4604
        %v4677 = vunpack.c.h.b16 %v4604
        %v4678 = vunpack.c.l.b16 %v4605
        %v4679 = vunpack.c.h.b16 %v4605
        %v4680 = vunpack.c.l.b16 %v4606
        %v4681 = vunpack.c.h.b16 %v4606
        %v4682 = vunpack.c.l.b16 %v4607
        %v4683 = vunpack.c.h.b16 %v4607
        %v4684 = vunpack.c.l.b16 %v4608
        %v4685 = vunpack.c.h.b16 %v4608
        %v4686 = vunpack.c.l.b16 %v4609
        %v4687 = vunpack.c.h.b16 %v4609
        %v4688 = vunpack.c.l.b16 %v4610
        %v4689 = vunpack.c.h.b16 %v4610
        %v4690 = vunpack.c.l.b16 %v4611
        %v4691 = vunpack.c.h.b16 %v4611
        %v4692 = vunpack.c.l.b16 %v4612
        %v4693 = vunpack.c.h.b16 %v4612
        %v4694 = vunpack.c.l.b16 %v4613
        %v4695 = vunpack.c.h.b16 %v4613
        %v4696 = vunpack.c.l.b16 %v4614
        %v4697 = vunpack.c.h.b16 %v4614
        %v4698 = vunpack.c.l.b16 %v4615
        %v4699 = vunpack.c.h.b16 %v4615
        %v4700 = vunpack.c.l.b16 %v4616
        %v4701 = vunpack.c.h.b16 %v4616
        %v4702 = vunpack.c.l.b16 %v4617
        %v4703 = vunpack.c.h.b16 %v4617
        %v4704 = vunpack.c.l.b16 %v4618
        %v4705 = vunpack.c.h.b16 %v4618
        %v4706 = vunpack.c.l.b16 %v4619
        %v4707 = vunpack.c.h.b16 %v4619
        %v4708 = vunpack.c.l.b16 %v4620
        %v4709 = vunpack.c.h.b16 %v4620
        %v4710 = vunpack.c.l.b16 %v4621
        %v4711 = vunpack.c.h.b16 %v4621
        %v4712 = vunpack.c.l.b16 %v4622
        %v4713 = vunpack.c.h.b16 %v4622
        %v4714 = vunpack.c.l.b16 %v4623
        %v4715 = vunpack.c.h.b16 %v4623
        %v4716 = vunpack.c.l.b16 %v4624
        %v4717 = vunpack.c.h.b16 %v4624
        %v4718 = vunpack.c.l.b16 %v4625
        %v4719 = vunpack.c.h.b16 %v4625
        %v4720 = vunpack.c.l.b16 %v4626
        %v4721 = vunpack.c.h.b16 %v4626
        %v4722 = vunpack.c.l.b16 %v4627
        %v4723 = vunpack.c.h.b16 %v4627
        %v4724 = vpack.c.b16 %v4662, %v4660
        %v4725 = vpack.c.b16 %v4663, %v4661
        %v4726 = vpack.c.b16 %v4666, %v4664
        %v4727 = vpack.c.b16 %v4667, %v4665
        %v4728 = vpack.c.b16 %v4670, %v4668
        %v4729 = vpack.c.b16 %v4671, %v4669
        %v4730 = vpack.c.b16 %v4674, %v4672
        %v4731 = vpack.c.b16 %v4675, %v4673
        %v4732 = vpack.c.b16 %v4678, %v4676
        %v4733 = vpack.c.b16 %v4679, %v4677
        %v4734 = vpack.c.b16 %v4682, %v4680
        %v4735 = vpack.c.b16 %v4683, %v4681
        %v4736 = vpack.c.b16 %v4686, %v4684
        %v4737 = vpack.c.b16 %v4687, %v4685
        %v4738 = vpack.c.b16 %v4690, %v4688
        %v4739 = vpack.c.b16 %v4691, %v4689
        %v4740 = vpack.c.b16 %v4694, %v4692
        %v4741 = vpack.c.b16 %v4695, %v4693
        %v4742 = vpack.c.b16 %v4698, %v4696
        %v4743 = vpack.c.b16 %v4699, %v4697
        %v4744 = vpack.c.b16 %v4702, %v4700
        %v4745 = vpack.c.b16 %v4703, %v4701
        %v4746 = vpack.c.b16 %v4706, %v4704
        %v4747 = vpack.c.b16 %v4707, %v4705
        %v4748 = vpack.c.b16 %v4710, %v4708
        %v4749 = vpack.c.b16 %v4711, %v4709
        %v4750 = vpack.c.b16 %v4714, %v4712
        %v4751 = vpack.c.b16 %v4715, %v4713
        %v4752 = vpack.c.b16 %v4718, %v4716
        %v4753 = vpack.c.b16 %v4719, %v4717
        %v4754 = vpack.c.b16 %v4722, %v4720
        %v4755 = vpack.c.b16 %v4723, %v4721
        %4788 = vmatprep.subr.bf16.mxu0 %v4725
        %4789 = vmatpush1.bf16.msra.mxu0 %v4724
        %4790 = vmatprep.subr.bf16.mxu0 %v4727
        %4791 = vmatpush1.bf16.msra.mxu0 %v4726
        %4792 = vmatprep.subr.bf16.mxu0 %v4729
        %4793 = vmatpush1.bf16.msra.mxu0 %v4728
        %4794 = vmatprep.subr.bf16.mxu0 %v4731
        %4795 = vmatpush1.bf16.msra.mxu0 %v4730
        %4796 = vmatprep.subr.bf16.mxu0 %v4733
        %4797 = vmatpush1.bf16.msra.mxu0 %v4732
        %4798 = vmatprep.subr.bf16.mxu0 %v4735
        %4799 = vmatpush1.bf16.msra.mxu0 %v4734
        %4800 = vmatprep.subr.bf16.mxu0 %v4737
        %4801 = vmatpush1.bf16.msra.mxu0 %v4736
        %4802 = vmatprep.subr.bf16.mxu0 %v4739
        %4803 = vmatpush1.bf16.msra.mxu0 %v4738
        %4804 = vmatprep.subr.bf16.mxu0 %v4741
        %4805 = vmatpush1.bf16.msra.mxu0 %v4740
        %4806 = vmatprep.subr.bf16.mxu0 %v4743
        %4807 = vmatpush1.bf16.msra.mxu0 %v4742
        %4808 = vmatprep.subr.bf16.mxu0 %v4745
        %4809 = vmatpush1.bf16.msra.mxu0 %v4744
        %4810 = vmatprep.subr.bf16.mxu0 %v4747
        %4811 = vmatpush1.bf16.msra.mxu0 %v4746
        %4812 = vmatprep.subr.bf16.mxu0 %v4749
        %4813 = vmatpush1.bf16.msra.mxu0 %v4748
        %4814 = vmatprep.subr.bf16.mxu0 %v4751
        %4815 = vmatpush1.bf16.msra.mxu0 %v4750
        %4816 = vmatprep.subr.bf16.mxu0 %v4753
        %4817 = vmatpush1.bf16.msra.mxu0 %v4752
        %4818 = vmatprep.subr.bf16.mxu0 %v4755
        %4819 = vmatpush1.bf16.msra.mxu0 %v4754
        %4820 = vmatprep.mubr.bf16.mxu0 %v3204
        %4821 = vmatmul.mubr.bf16.gmra.mrb[0].mxu0 %v3203
        %v4822 = vpop.f32.mrb[0].mxu0
        %v4823 = vadd.f32 0.0, %v4822
        %v4824 = vpop.f32.mrb[0].mxu0
        %v4825 = vadd.f32 0.0, %v4824
        %v4826 = vpop.f32.mrb[0].mxu0
        %v4827 = vadd.f32 0.0, %v4826
        %v4828 = vpop.f32.mrb[0].mxu0
        %v4829 = vadd.f32 0.0, %v4828
        %4830 = vmatprep.mubr.bf16.mxu0 %v3206
        %4831 = vmatmul.mubr.bf16.gmra.mrb[0].mxu0 %v3205
        %v4832 = vpop.f32.mrb[0].mxu0
        %v4833 = vadd.f32 0.0, %v4832
        %v4834 = vpop.f32.mrb[0].mxu0
        %v4835 = vadd.f32 0.0, %v4834
        %v4836 = vpop.f32.mrb[0].mxu0
        %v4837 = vadd.f32 0.0, %v4836
        %v4838 = vpop.f32.mrb[0].mxu0
        %v4839 = vadd.f32 0.0, %v4838
        %4840 = vdwg.mxu0
        %4841 = vset.pattern.permute.xlu0 5
        %4842 = vperm.xlu0 %4841, %v431
        %v4843 = vpop.permute.xlu0 %4842
        %4845 = vset.pattern.permute.xlu0 5
        %4846 = vperm.xlu0 %4845, %v432
        %v4847 = vpop.permute.xlu0 %4846
        %4849 = vset.pattern.permute.xlu0 5
        %4850 = vperm.xlu0 %4849, %v433
        %v4851 = vpop.permute.xlu0 %4850
        %4853 = vset.pattern.permute.xlu0 5
        %4854 = vperm.xlu0 %4853, %v434
        %v4855 = vpop.permute.xlu0 %4854
        %v4857 = vmul.f32 %v4823, %v4843
        %v4858 = vmul.f32 %v4825, %v4843
        %v4859 = vmul.f32 %v4827, %v4847
        %v4860 = vmul.f32 %v4829, %v4847
        %v4861 = vmul.f32 %v4833, %v4851
        %v4862 = vmul.f32 %v4835, %v4851
        %v4863 = vmul.f32 %v4837, %v4855
        %v4864 = vmul.f32 %v4839, %v4855
        %v4865 = vadd.f32 %v4588, %v4857
        %v4866 = vadd.f32 %v4589, %v4858
        %v4867 = vadd.f32 %v4590, %v4859
        %v4868 = vadd.f32 %v4591, %v4860
        %v4869 = vadd.f32 %v4592, %v4861
        %v4870 = vadd.f32 %v4593, %v4862
        %v4871 = vadd.f32 %v4594, %v4863
        %v4872 = vadd.f32 %v4595, %v4864
        %v4873 = vld [vmem:[%s2232] sm:$0xff]
        %v4874 = vld [vmem:[%s2232 + $0x8] sm:$0xff]
        %v4875 = vld [vmem:[%s2232 + $0x10] sm:$0xff]
        %v4876 = vld [vmem:[%s2232 + $0x18] sm:$0xff]
        %v4877 = vld [vmem:[%s2232 + $0x20] sm:$0xff]
        %v4878 = vld [vmem:[%s2232 + $0x28] sm:$0xff]
        %v4879 = vld [vmem:[%s2232 + $0x30] sm:$0xff]
        %v4880 = vld [vmem:[%s2232 + $0x38] sm:$0xff]
        %v4881 = vld [vmem:[%s2232 + $0x40] sm:$0xff]
        %v4882 = vld [vmem:[%s2232 + $0x48] sm:$0xff]
        %v4883 = vld [vmem:[%s2232 + $0x50] sm:$0xff]
        %v4884 = vld [vmem:[%s2232 + $0x58] sm:$0xff]
        %v4885 = vld [vmem:[%s2232 + $0x60] sm:$0xff]
        %v4886 = vld [vmem:[%s2232 + $0x68] sm:$0xff]
        %v4887 = vld [vmem:[%s2232 + $0x70] sm:$0xff]
        %v4888 = vld [vmem:[%s2232 + $0x78] sm:$0xff]
        %v4889 = vld [vmem:[%s2232 + $0x80] sm:$0xff]
        %v4890 = vld [vmem:[%s2232 + $0x88] sm:$0xff]
        %v4891 = vld [vmem:[%s2232 + $0x90] sm:$0xff]
        %v4892 = vld [vmem:[%s2232 + $0x98] sm:$0xff]
        %v4893 = vld [vmem:[%s2232 + $0xa0] sm:$0xff]
        %v4894 = vld [vmem:[%s2232 + $0xa8] sm:$0xff]
        %v4895 = vld [vmem:[%s2232 + $0xb0] sm:$0xff]
        %v4896 = vld [vmem:[%s2232 + $0xb8] sm:$0xff]
        %v4897 = vld [vmem:[%s2232 + $0xc0] sm:$0xff]
        %v4898 = vld [vmem:[%s2232 + $0xc8] sm:$0xff]
        %v4899 = vld [vmem:[%s2232 + $0xd0] sm:$0xff]
        %v4900 = vld [vmem:[%s2232 + $0xd8] sm:$0xff]
        %v4901 = vld [vmem:[%s2232 + $0xe0] sm:$0xff]
        %v4902 = vld [vmem:[%s2232 + $0xe8] sm:$0xff]
        %v4903 = vld [vmem:[%s2232 + $0xf0] sm:$0xff]
        %v4904 = vld [vmem:[%s2232 + $0xf8] sm:$0xff]
        %v4937 = vunpack.c.l.b16 %v4873
        %v4938 = vunpack.c.h.b16 %v4873
        %v4939 = vunpack.c.l.b16 %v4874
        %v4940 = vunpack.c.h.b16 %v4874
        %v4941 = vunpack.c.l.b16 %v4875
        %v4942 = vunpack.c.h.b16 %v4875
        %v4943 = vunpack.c.l.b16 %v4876
        %v4944 = vunpack.c.h.b16 %v4876
        %v4945 = vunpack.c.l.b16 %v4877
        %v4946 = vunpack.c.h.b16 %v4877
        %v4947 = vunpack.c.l.b16 %v4878
        %v4948 = vunpack.c.h.b16 %v4878
        %v4949 = vunpack.c.l.b16 %v4879
        %v4950 = vunpack.c.h.b16 %v4879
        %v4951 = vunpack.c.l.b16 %v4880
        %v4952 = vunpack.c.h.b16 %v4880
        %v4953 = vunpack.c.l.b16 %v4881
        %v4954 = vunpack.c.h.b16 %v4881
        %v4955 = vunpack.c.l.b16 %v4882
        %v4956 = vunpack.c.h.b16 %v4882
        %v4957 = vunpack.c.l.b16 %v4883
        %v4958 = vunpack.c.h.b16 %v4883
        %v4959 = vunpack.c.l.b16 %v4884
        %v4960 = vunpack.c.h.b16 %v4884
        %v4961 = vunpack.c.l.b16 %v4885
        %v4962 = vunpack.c.h.b16 %v4885
        %v4963 = vunpack.c.l.b16 %v4886
        %v4964 = vunpack.c.h.b16 %v4886
        %v4965 = vunpack.c.l.b16 %v4887
        %v4966 = vunpack.c.h.b16 %v4887
        %v4967 = vunpack.c.l.b16 %v4888
        %v4968 = vunpack.c.h.b16 %v4888
        %v4969 = vunpack.c.l.b16 %v4889
        %v4970 = vunpack.c.h.b16 %v4889
        %v4971 = vunpack.c.l.b16 %v4890
        %v4972 = vunpack.c.h.b16 %v4890
        %v4973 = vunpack.c.l.b16 %v4891
        %v4974 = vunpack.c.h.b16 %v4891
        %v4975 = vunpack.c.l.b16 %v4892
        %v4976 = vunpack.c.h.b16 %v4892
        %v4977 = vunpack.c.l.b16 %v4893
        %v4978 = vunpack.c.h.b16 %v4893
        %v4979 = vunpack.c.l.b16 %v4894
        %v4980 = vunpack.c.h.b16 %v4894
        %v4981 = vunpack.c.l.b16 %v4895
        %v4982 = vunpack.c.h.b16 %v4895
        %v4983 = vunpack.c.l.b16 %v4896
        %v4984 = vunpack.c.h.b16 %v4896
        %v4985 = vunpack.c.l.b16 %v4897
        %v4986 = vunpack.c.h.b16 %v4897
        %v4987 = vunpack.c.l.b16 %v4898
        %v4988 = vunpack.c.h.b16 %v4898
        %v4989 = vunpack.c.l.b16 %v4899
        %v4990 = vunpack.c.h.b16 %v4899
        %v4991 = vunpack.c.l.b16 %v4900
        %v4992 = vunpack.c.h.b16 %v4900
        %v4993 = vunpack.c.l.b16 %v4901
        %v4994 = vunpack.c.h.b16 %v4901
        %v4995 = vunpack.c.l.b16 %v4902
        %v4996 = vunpack.c.h.b16 %v4902
        %v4997 = vunpack.c.l.b16 %v4903
        %v4998 = vunpack.c.h.b16 %v4903
        %v4999 = vunpack.c.l.b16 %v4904
        %v5000 = vunpack.c.h.b16 %v4904
        %v5001 = vpack.c.b16 %v4939, %v4937
        %v5002 = vpack.c.b16 %v4940, %v4938
        %v5003 = vpack.c.b16 %v4943, %v4941
        %v5004 = vpack.c.b16 %v4944, %v4942
        %v5005 = vpack.c.b16 %v4947, %v4945
        %v5006 = vpack.c.b16 %v4948, %v4946
        %v5007 = vpack.c.b16 %v4951, %v4949
        %v5008 = vpack.c.b16 %v4952, %v4950
        %v5009 = vpack.c.b16 %v4955, %v4953
        %v5010 = vpack.c.b16 %v4956, %v4954
        %v5011 = vpack.c.b16 %v4959, %v4957
        %v5012 = vpack.c.b16 %v4960, %v4958
        %v5013 = vpack.c.b16 %v4963, %v4961
        %v5014 = vpack.c.b16 %v4964, %v4962
        %v5015 = vpack.c.b16 %v4967, %v4965
        %v5016 = vpack.c.b16 %v4968, %v4966
        %v5017 = vpack.c.b16 %v4971, %v4969
        %v5018 = vpack.c.b16 %v4972, %v4970
        %v5019 = vpack.c.b16 %v4975, %v4973
        %v5020 = vpack.c.b16 %v4976, %v4974
        %v5021 = vpack.c.b16 %v4979, %v4977
        %v5022 = vpack.c.b16 %v4980, %v4978
        %v5023 = vpack.c.b16 %v4983, %v4981
        %v5024 = vpack.c.b16 %v4984, %v4982
        %v5025 = vpack.c.b16 %v4987, %v4985
        %v5026 = vpack.c.b16 %v4988, %v4986
        %v5027 = vpack.c.b16 %v4991, %v4989
        %v5028 = vpack.c.b16 %v4992, %v4990
        %v5029 = vpack.c.b16 %v4995, %v4993
        %v5030 = vpack.c.b16 %v4996, %v4994
        %v5031 = vpack.c.b16 %v4999, %v4997
        %v5032 = vpack.c.b16 %v5000, %v4998
        %5065 = vmatprep.subr.bf16.mxu0 %v5002
        %5066 = vmatpush1.bf16.msra.mxu0 %v5001
        %5067 = vmatprep.subr.bf16.mxu0 %v5004
        %5068 = vmatpush1.bf16.msra.mxu0 %v5003
        %5069 = vmatprep.subr.bf16.mxu0 %v5006
        %5070 = vmatpush1.bf16.msra.mxu0 %v5005
        %5071 = vmatprep.subr.bf16.mxu0 %v5008
        %5072 = vmatpush1.bf16.msra.mxu0 %v5007
        %5073 = vmatprep.subr.bf16.mxu0 %v5010
        %5074 = vmatpush1.bf16.msra.mxu0 %v5009
        %5075 = vmatprep.subr.bf16.mxu0 %v5012
        %5076 = vmatpush1.bf16.msra.mxu0 %v5011
        %5077 = vmatprep.subr.bf16.mxu0 %v5014
        %5078 = vmatpush1.bf16.msra.mxu0 %v5013
        %5079 = vmatprep.subr.bf16.mxu0 %v5016
        %5080 = vmatpush1.bf16.msra.mxu0 %v5015
        %5081 = vmatprep.subr.bf16.mxu0 %v5018
        %5082 = vmatpush1.bf16.msra.mxu0 %v5017
        %5083 = vmatprep.subr.bf16.mxu0 %v5020
        %5084 = vmatpush1.bf16.msra.mxu0 %v5019
        %5085 = vmatprep.subr.bf16.mxu0 %v5022
        %5086 = vmatpush1.bf16.msra.mxu0 %v5021
        %5087 = vmatprep.subr.bf16.mxu0 %v5024
        %5088 = vmatpush1.bf16.msra.mxu0 %v5023
        %5089 = vmatprep.subr.bf16.mxu0 %v5026
        %5090 = vmatpush1.bf16.msra.mxu0 %v5025
        %5091 = vmatprep.subr.bf16.mxu0 %v5028
        %5092 = vmatpush1.bf16.msra.mxu0 %v5027
        %5093 = vmatprep.subr.bf16.mxu0 %v5030
        %5094 = vmatpush1.bf16.msra.mxu0 %v5029
        %5095 = vmatprep.subr.bf16.mxu0 %v5032
        %5096 = vmatpush1.bf16.msra.mxu0 %v5031
        %5097 = vmatprep.mubr.bf16.mxu0 %v3204
        %5098 = vmatmul.mubr.bf16.gmra.mrb[0].mxu0 %v3203
        %v5099 = vpop.f32.mrb[0].mxu0
        %v5100 = vadd.f32 0.0, %v5099
        %v5101 = vpop.f32.mrb[0].mxu0
        %v5102 = vadd.f32 0.0, %v5101
        %v5103 = vpop.f32.mrb[0].mxu0
        %v5104 = vadd.f32 0.0, %v5103
        %v5105 = vpop.f32.mrb[0].mxu0
        %v5106 = vadd.f32 0.0, %v5105
        %5107 = vmatprep.mubr.bf16.mxu0 %v3206
        %5108 = vmatmul.mubr.bf16.gmra.mrb[0].mxu0 %v3205
        %v5109 = vpop.f32.mrb[0].mxu0
        %v5110 = vadd.f32 0.0, %v5109
        %v5111 = vpop.f32.mrb[0].mxu0
        %v5112 = vadd.f32 0.0, %v5111
        %v5113 = vpop.f32.mrb[0].mxu0
        %v5114 = vadd.f32 0.0, %v5113
        %v5115 = vpop.f32.mrb[0].mxu0
        %v5116 = vadd.f32 0.0, %v5115
        %5117 = vdwg.mxu0
        %5118 = vset.pattern.permute.xlu0 6
        %5119 = vperm.xlu0 %5118, %v431
        %v5120 = vpop.permute.xlu0 %5119
        %5122 = vset.pattern.permute.xlu0 6
        %5123 = vperm.xlu0 %5122, %v432
        %v5124 = vpop.permute.xlu0 %5123
        %5126 = vset.pattern.permute.xlu0 6
        %5127 = vperm.xlu0 %5126, %v433
        %v5128 = vpop.permute.xlu0 %5127
        %5130 = vset.pattern.permute.xlu0 6
        %5131 = vperm.xlu0 %5130, %v434
        %v5132 = vpop.permute.xlu0 %5131
        %v5134 = vmul.f32 %v5100, %v5120
        %v5135 = vmul.f32 %v5102, %v5120
        %v5136 = vmul.f32 %v5104, %v5124
        %v5137 = vmul.f32 %v5106, %v5124
        %v5138 = vmul.f32 %v5110, %v5128
        %v5139 = vmul.f32 %v5112, %v5128
        %v5140 = vmul.f32 %v5114, %v5132
        %v5141 = vmul.f32 %v5116, %v5132
        %v5142 = vadd.f32 %v4865, %v5134
        %v5143 = vadd.f32 %v4866, %v5135
        %v5144 = vadd.f32 %v4867, %v5136
        %v5145 = vadd.f32 %v4868, %v5137
        %v5146 = vadd.f32 %v4869, %v5138
        %v5147 = vadd.f32 %v4870, %v5139
        %v5148 = vadd.f32 %v4871, %v5140
        %v5149 = vadd.f32 %v4872, %v5141
        %v5150 = vld [vmem:[%s2510] sm:$0xff]
        %v5151 = vld [vmem:[%s2510 + $0x8] sm:$0xff]
        %v5152 = vld [vmem:[%s2510 + $0x10] sm:$0xff]
        %v5153 = vld [vmem:[%s2510 + $0x18] sm:$0xff]
        %v5154 = vld [vmem:[%s2510 + $0x20] sm:$0xff]
        %v5155 = vld [vmem:[%s2510 + $0x28] sm:$0xff]
        %v5156 = vld [vmem:[%s2510 + $0x30] sm:$0xff]
        %v5157 = vld [vmem:[%s2510 + $0x38] sm:$0xff]
        %v5158 = vld [vmem:[%s2510 + $0x40] sm:$0xff]
        %v5159 = vld [vmem:[%s2510 + $0x48] sm:$0xff]
        %v5160 = vld [vmem:[%s2510 + $0x50] sm:$0xff]
        %v5161 = vld [vmem:[%s2510 + $0x58] sm:$0xff]
        %v5162 = vld [vmem:[%s2510 + $0x60] sm:$0xff]
        %v5163 = vld [vmem:[%s2510 + $0x68] sm:$0xff]
        %v5164 = vld [vmem:[%s2510 + $0x70] sm:$0xff]
        %v5165 = vld [vmem:[%s2510 + $0x78] sm:$0xff]
        %v5166 = vld [vmem:[%s2510 + $0x80] sm:$0xff]
        %v5167 = vld [vmem:[%s2510 + $0x88] sm:$0xff]
        %v5168 = vld [vmem:[%s2510 + $0x90] sm:$0xff]
        %v5169 = vld [vmem:[%s2510 + $0x98] sm:$0xff]
        %v5170 = vld [vmem:[%s2510 + $0xa0] sm:$0xff]
        %v5171 = vld [vmem:[%s2510 + $0xa8] sm:$0xff]
        %v5172 = vld [vmem:[%s2510 + $0xb0] sm:$0xff]
        %v5173 = vld [vmem:[%s2510 + $0xb8] sm:$0xff]
        %v5174 = vld [vmem:[%s2510 + $0xc0] sm:$0xff]
        %v5175 = vld [vmem:[%s2510 + $0xc8] sm:$0xff]
        %v5176 = vld [vmem:[%s2510 + $0xd0] sm:$0xff]
        %v5177 = vld [vmem:[%s2510 + $0xd8] sm:$0xff]
        %v5178 = vld [vmem:[%s2510 + $0xe0] sm:$0xff]
        %v5179 = vld [vmem:[%s2510 + $0xe8] sm:$0xff]
        %v5180 = vld [vmem:[%s2510 + $0xf0] sm:$0xff]
        %v5181 = vld [vmem:[%s2510 + $0xf8] sm:$0xff]
        %v5214 = vunpack.c.l.b16 %v5150
        %v5215 = vunpack.c.h.b16 %v5150
        %v5216 = vunpack.c.l.b16 %v5151
        %v5217 = vunpack.c.h.b16 %v5151
        %v5218 = vunpack.c.l.b16 %v5152
        %v5219 = vunpack.c.h.b16 %v5152
        %v5220 = vunpack.c.l.b16 %v5153
        %v5221 = vunpack.c.h.b16 %v5153
        %v5222 = vunpack.c.l.b16 %v5154
        %v5223 = vunpack.c.h.b16 %v5154
        %v5224 = vunpack.c.l.b16 %v5155
        %v5225 = vunpack.c.h.b16 %v5155
        %v5226 = vunpack.c.l.b16 %v5156
        %v5227 = vunpack.c.h.b16 %v5156
        %v5228 = vunpack.c.l.b16 %v5157
        %v5229 = vunpack.c.h.b16 %v5157
        %v5230 = vunpack.c.l.b16 %v5158
        %v5231 = vunpack.c.h.b16 %v5158
        %v5232 = vunpack.c.l.b16 %v5159
        %v5233 = vunpack.c.h.b16 %v5159
        %v5234 = vunpack.c.l.b16 %v5160
        %v5235 = vunpack.c.h.b16 %v5160
        %v5236 = vunpack.c.l.b16 %v5161
        %v5237 = vunpack.c.h.b16 %v5161
        %v5238 = vunpack.c.l.b16 %v5162
        %v5239 = vunpack.c.h.b16 %v5162
        %v5240 = vunpack.c.l.b16 %v5163
        %v5241 = vunpack.c.h.b16 %v5163
        %v5242 = vunpack.c.l.b16 %v5164
        %v5243 = vunpack.c.h.b16 %v5164
        %v5244 = vunpack.c.l.b16 %v5165
        %v5245 = vunpack.c.h.b16 %v5165
        %v5246 = vunpack.c.l.b16 %v5166
        %v5247 = vunpack.c.h.b16 %v5166
        %v5248 = vunpack.c.l.b16 %v5167
        %v5249 = vunpack.c.h.b16 %v5167
        %v5250 = vunpack.c.l.b16 %v5168
        %v5251 = vunpack.c.h.b16 %v5168
        %v5252 = vunpack.c.l.b16 %v5169
        %v5253 = vunpack.c.h.b16 %v5169
        %v5254 = vunpack.c.l.b16 %v5170
        %v5255 = vunpack.c.h.b16 %v5170
        %v5256 = vunpack.c.l.b16 %v5171
        %v5257 = vunpack.c.h.b16 %v5171
        %v5258 = vunpack.c.l.b16 %v5172
        %v5259 = vunpack.c.h.b16 %v5172
        %v5260 = vunpack.c.l.b16 %v5173
        %v5261 = vunpack.c.h.b16 %v5173
        %v5262 = vunpack.c.l.b16 %v5174
        %v5263 = vunpack.c.h.b16 %v5174
        %v5264 = vunpack.c.l.b16 %v5175
        %v5265 = vunpack.c.h.b16 %v5175
        %v5266 = vunpack.c.l.b16 %v5176
        %v5267 = vunpack.c.h.b16 %v5176
        %v5268 = vunpack.c.l.b16 %v5177
        %v5269 = vunpack.c.h.b16 %v5177
        %v5270 = vunpack.c.l.b16 %v5178
        %v5271 = vunpack.c.h.b16 %v5178
        %v5272 = vunpack.c.l.b16 %v5179
        %v5273 = vunpack.c.h.b16 %v5179
        %v5274 = vunpack.c.l.b16 %v5180
        %v5275 = vunpack.c.h.b16 %v5180
        %v5276 = vunpack.c.l.b16 %v5181
        %v5277 = vunpack.c.h.b16 %v5181
        %v5278 = vpack.c.b16 %v5216, %v5214
        %v5279 = vpack.c.b16 %v5217, %v5215
        %v5280 = vpack.c.b16 %v5220, %v5218
        %v5281 = vpack.c.b16 %v5221, %v5219
        %v5282 = vpack.c.b16 %v5224, %v5222
        %v5283 = vpack.c.b16 %v5225, %v5223
        %v5284 = vpack.c.b16 %v5228, %v5226
        %v5285 = vpack.c.b16 %v5229, %v5227
        %v5286 = vpack.c.b16 %v5232, %v5230
        %v5287 = vpack.c.b16 %v5233, %v5231
        %v5288 = vpack.c.b16 %v5236, %v5234
        %v5289 = vpack.c.b16 %v5237, %v5235
        %v5290 = vpack.c.b16 %v5240, %v5238
        %v5291 = vpack.c.b16 %v5241, %v5239
        %v5292 = vpack.c.b16 %v5244, %v5242
        %v5293 = vpack.c.b16 %v5245, %v5243
        %v5294 = vpack.c.b16 %v5248, %v5246
        %v5295 = vpack.c.b16 %v5249, %v5247
        %v5296 = vpack.c.b16 %v5252, %v5250
        %v5297 = vpack.c.b16 %v5253, %v5251
        %v5298 = vpack.c.b16 %v5256, %v5254
        %v5299 = vpack.c.b16 %v5257, %v5255
        %v5300 = vpack.c.b16 %v5260, %v5258
        %v5301 = vpack.c.b16 %v5261, %v5259
        %v5302 = vpack.c.b16 %v5264, %v5262
        %v5303 = vpack.c.b16 %v5265, %v5263
        %v5304 = vpack.c.b16 %v5268, %v5266
        %v5305 = vpack.c.b16 %v5269, %v5267
        %v5306 = vpack.c.b16 %v5272, %v5270
        %v5307 = vpack.c.b16 %v5273, %v5271
        %v5308 = vpack.c.b16 %v5276, %v5274
        %v5309 = vpack.c.b16 %v5277, %v5275
        %5342 = vmatprep.subr.bf16.mxu0 %v5279
        %5343 = vmatpush1.bf16.msra.mxu0 %v5278
        %5344 = vmatprep.subr.bf16.mxu0 %v5281
        %5345 = vmatpush1.bf16.msra.mxu0 %v5280
        %5346 = vmatprep.subr.bf16.mxu0 %v5283
        %5347 = vmatpush1.bf16.msra.mxu0 %v5282
        %5348 = vmatprep.subr.bf16.mxu0 %v5285
        %5349 = vmatpush1.bf16.msra.mxu0 %v5284
        %5350 = vmatprep.subr.bf16.mxu0 %v5287
        %5351 = vmatpush1.bf16.msra.mxu0 %v5286
        %5352 = vmatprep.subr.bf16.mxu0 %v5289
        %5353 = vmatpush1.bf16.msra.mxu0 %v5288
        %5354 = vmatprep.subr.bf16.mxu0 %v5291
        %5355 = vmatpush1.bf16.msra.mxu0 %v5290
        %5356 = vmatprep.subr.bf16.mxu0 %v5293
        %5357 = vmatpush1.bf16.msra.mxu0 %v5292
        %5358 = vmatprep.subr.bf16.mxu0 %v5295
        %5359 = vmatpush1.bf16.msra.mxu0 %v5294
        %5360 = vmatprep.subr.bf16.mxu0 %v5297
        %5361 = vmatpush1.bf16.msra.mxu0 %v5296
        %5362 = vmatprep.subr.bf16.mxu0 %v5299
        %5363 = vmatpush1.bf16.msra.mxu0 %v5298
        %5364 = vmatprep.subr.bf16.mxu0 %v5301
        %5365 = vmatpush1.bf16.msra.mxu0 %v5300
        %5366 = vmatprep.subr.bf16.mxu0 %v5303
        %5367 = vmatpush1.bf16.msra.mxu0 %v5302
        %5368 = vmatprep.subr.bf16.mxu0 %v5305
        %5369 = vmatpush1.bf16.msra.mxu0 %v5304
        %5370 = vmatprep.subr.bf16.mxu0 %v5307
        %5371 = vmatpush1.bf16.msra.mxu0 %v5306
        %5372 = vmatprep.subr.bf16.mxu0 %v5309
        %5373 = vmatpush1.bf16.msra.mxu0 %v5308
        %5374 = vmatprep.mubr.bf16.mxu0 %v3204
        %5375 = vmatmul.mubr.bf16.gmra.mrb[0].mxu0 %v3203
        %v5376 = vpop.f32.mrb[0].mxu0
        %v5377 = vadd.f32 0.0, %v5376
        %v5378 = vpop.f32.mrb[0].mxu0
        %v5379 = vadd.f32 0.0, %v5378
        %v5380 = vpop.f32.mrb[0].mxu0
        %v5381 = vadd.f32 0.0, %v5380
        %v5382 = vpop.f32.mrb[0].mxu0
        %v5383 = vadd.f32 0.0, %v5382
        %5384 = vmatprep.mubr.bf16.mxu0 %v3206
        %5385 = vmatmul.mubr.bf16.gmra.mrb[0].mxu0 %v3205
        %v5386 = vpop.f32.mrb[0].mxu0
        %v5387 = vadd.f32 0.0, %v5386
        %v5388 = vpop.f32.mrb[0].mxu0
        %v5389 = vadd.f32 0.0, %v5388
        %v5390 = vpop.f32.mrb[0].mxu0
        %v5391 = vadd.f32 0.0, %v5390
        %v5392 = vpop.f32.mrb[0].mxu0
        %v5393 = vadd.f32 0.0, %v5392
        %5394 = vdwg.mxu0
        %5395 = vset.pattern.permute.xlu0 7
        %5396 = vperm.xlu0 %5395, %v431
        %v5397 = vpop.permute.xlu0 %5396
        %5399 = vset.pattern.permute.xlu0 7
        %5400 = vperm.xlu0 %5399, %v432
        %v5401 = vpop.permute.xlu0 %5400
        %5403 = vset.pattern.permute.xlu0 7
        %5404 = vperm.xlu0 %5403, %v433
        %v5405 = vpop.permute.xlu0 %5404
        %5407 = vset.pattern.permute.xlu0 7
        %5408 = vperm.xlu0 %5407, %v434
        %v5409 = vpop.permute.xlu0 %5408
        %v5411 = vmul.f32 %v5377, %v5397
        %v5412 = vmul.f32 %v5379, %v5397
        %v5413 = vmul.f32 %v5381, %v5401
        %v5414 = vmul.f32 %v5383, %v5401
        %v5415 = vmul.f32 %v5387, %v5405
        %v5416 = vmul.f32 %v5389, %v5405
        %v5417 = vmul.f32 %v5391, %v5409
        %v5418 = vmul.f32 %v5393, %v5409
        %v5419 = vadd.f32 %v5142, %v5411
        %v5420 = vadd.f32 %v5143, %v5412
        %v5421 = vadd.f32 %v5144, %v5413
        %v5422 = vadd.f32 %v5145, %v5414
        %v5423 = vadd.f32 %v5146, %v5415
        %v5424 = vadd.f32 %v5147, %v5416
        %v5425 = vadd.f32 %v5148, %v5417
        %v5426 = vadd.f32 %v5149, %v5418
        %v5427 = vld [vmem:[%s2788] sm:$0xff]
        %v5428 = vld [vmem:[%s2788 + $0x8] sm:$0xff]
        %v5429 = vld [vmem:[%s2788 + $0x10] sm:$0xff]
        %v5430 = vld [vmem:[%s2788 + $0x18] sm:$0xff]
        %v5431 = vld [vmem:[%s2788 + $0x20] sm:$0xff]
        %v5432 = vld [vmem:[%s2788 + $0x28] sm:$0xff]
        %v5433 = vld [vmem:[%s2788 + $0x30] sm:$0xff]
        %v5434 = vld [vmem:[%s2788 + $0x38] sm:$0xff]
        %v5435 = vld [vmem:[%s2788 + $0x40] sm:$0xff]
        %v5436 = vld [vmem:[%s2788 + $0x48] sm:$0xff]
        %v5437 = vld [vmem:[%s2788 + $0x50] sm:$0xff]
        %v5438 = vld [vmem:[%s2788 + $0x58] sm:$0xff]
        %v5439 = vld [vmem:[%s2788 + $0x60] sm:$0xff]
        %v5440 = vld [vmem:[%s2788 + $0x68] sm:$0xff]
        %v5441 = vld [vmem:[%s2788 + $0x70] sm:$0xff]
        %v5442 = vld [vmem:[%s2788 + $0x78] sm:$0xff]
        %v5443 = vld [vmem:[%s2788 + $0x80] sm:$0xff]
        %v5444 = vld [vmem:[%s2788 + $0x88] sm:$0xff]
        %v5445 = vld [vmem:[%s2788 + $0x90] sm:$0xff]
        %v5446 = vld [vmem:[%s2788 + $0x98] sm:$0xff]
        %v5447 = vld [vmem:[%s2788 + $0xa0] sm:$0xff]
        %v5448 = vld [vmem:[%s2788 + $0xa8] sm:$0xff]
        %v5449 = vld [vmem:[%s2788 + $0xb0] sm:$0xff]
        %v5450 = vld [vmem:[%s2788 + $0xb8] sm:$0xff]
        %v5451 = vld [vmem:[%s2788 + $0xc0] sm:$0xff]
        %v5452 = vld [vmem:[%s2788 + $0xc8] sm:$0xff]
        %v5453 = vld [vmem:[%s2788 + $0xd0] sm:$0xff]
        %v5454 = vld [vmem:[%s2788 + $0xd8] sm:$0xff]
        %v5455 = vld [vmem:[%s2788 + $0xe0] sm:$0xff]
        %v5456 = vld [vmem:[%s2788 + $0xe8] sm:$0xff]
        %v5457 = vld [vmem:[%s2788 + $0xf0] sm:$0xff]
        %v5458 = vld [vmem:[%s2788 + $0xf8] sm:$0xff]
        %v5491 = vunpack.c.l.b16 %v5427
        %v5492 = vunpack.c.h.b16 %v5427
        %v5493 = vunpack.c.l.b16 %v5428
        %v5494 = vunpack.c.h.b16 %v5428
        %v5495 = vunpack.c.l.b16 %v5429
        %v5496 = vunpack.c.h.b16 %v5429
        %v5497 = vunpack.c.l.b16 %v5430
        %v5498 = vunpack.c.h.b16 %v5430
        %v5499 = vunpack.c.l.b16 %v5431
        %v5500 = vunpack.c.h.b16 %v5431
        %v5501 = vunpack.c.l.b16 %v5432
        %v5502 = vunpack.c.h.b16 %v5432
        %v5503 = vunpack.c.l.b16 %v5433
        %v5504 = vunpack.c.h.b16 %v5433
        %v5505 = vunpack.c.l.b16 %v5434
        %v5506 = vunpack.c.h.b16 %v5434
        %v5507 = vunpack.c.l.b16 %v5435
        %v5508 = vunpack.c.h.b16 %v5435
        %v5509 = vunpack.c.l.b16 %v5436
        %v5510 = vunpack.c.h.b16 %v5436
        %v5511 = vunpack.c.l.b16 %v5437
        %v5512 = vunpack.c.h.b16 %v5437
        %v5513 = vunpack.c.l.b16 %v5438
        %v5514 = vunpack.c.h.b16 %v5438
        %v5515 = vunpack.c.l.b16 %v5439
        %v5516 = vunpack.c.h.b16 %v5439
        %v5517 = vunpack.c.l.b16 %v5440
        %v5518 = vunpack.c.h.b16 %v5440
        %v5519 = vunpack.c.l.b16 %v5441
        %v5520 = vunpack.c.h.b16 %v5441
        %v5521 = vunpack.c.l.b16 %v5442
        %v5522 = vunpack.c.h.b16 %v5442
        %v5523 = vunpack.c.l.b16 %v5443
        %v5524 = vunpack.c.h.b16 %v5443
        %v5525 = vunpack.c.l.b16 %v5444
        %v5526 = vunpack.c.h.b16 %v5444
        %v5527 = vunpack.c.l.b16 %v5445
        %v5528 = vunpack.c.h.b16 %v5445
        %v5529 = vunpack.c.l.b16 %v5446
        %v5530 = vunpack.c.h.b16 %v5446
        %v5531 = vunpack.c.l.b16 %v5447
        %v5532 = vunpack.c.h.b16 %v5447
        %v5533 = vunpack.c.l.b16 %v5448
        %v5534 = vunpack.c.h.b16 %v5448
        %v5535 = vunpack.c.l.b16 %v5449
        %v5536 = vunpack.c.h.b16 %v5449
        %v5537 = vunpack.c.l.b16 %v5450
        %v5538 = vunpack.c.h.b16 %v5450
        %v5539 = vunpack.c.l.b16 %v5451
        %v5540 = vunpack.c.h.b16 %v5451
        %v5541 = vunpack.c.l.b16 %v5452
        %v5542 = vunpack.c.h.b16 %v5452
        %v5543 = vunpack.c.l.b16 %v5453
        %v5544 = vunpack.c.h.b16 %v5453
        %v5545 = vunpack.c.l.b16 %v5454
        %v5546 = vunpack.c.h.b16 %v5454
        %v5547 = vunpack.c.l.b16 %v5455
        %v5548 = vunpack.c.h.b16 %v5455
        %v5549 = vunpack.c.l.b16 %v5456
        %v5550 = vunpack.c.h.b16 %v5456
        %v5551 = vunpack.c.l.b16 %v5457
        %v5552 = vunpack.c.h.b16 %v5457
        %v5553 = vunpack.c.l.b16 %v5458
        %v5554 = vunpack.c.h.b16 %v5458
        %v5555 = vpack.c.b16 %v5493, %v5491
        %v5556 = vpack.c.b16 %v5494, %v5492
        %v5557 = vpack.c.b16 %v5497, %v5495
        %v5558 = vpack.c.b16 %v5498, %v5496
        %v5559 = vpack.c.b16 %v5501, %v5499
        %v5560 = vpack.c.b16 %v5502, %v5500
        %v5561 = vpack.c.b16 %v5505, %v5503
        %v5562 = vpack.c.b16 %v5506, %v5504
        %v5563 = vpack.c.b16 %v5509, %v5507
        %v5564 = vpack.c.b16 %v5510, %v5508
        %v5565 = vpack.c.b16 %v5513, %v5511
        %v5566 = vpack.c.b16 %v5514, %v5512
        %v5567 = vpack.c.b16 %v5517, %v5515
        %v5568 = vpack.c.b16 %v5518, %v5516
        %v5569 = vpack.c.b16 %v5521, %v5519
        %v5570 = vpack.c.b16 %v5522, %v5520
        %v5571 = vpack.c.b16 %v5525, %v5523
        %v5572 = vpack.c.b16 %v5526, %v5524
        %v5573 = vpack.c.b16 %v5529, %v5527
        %v5574 = vpack.c.b16 %v5530, %v5528
        %v5575 = vpack.c.b16 %v5533, %v5531
        %v5576 = vpack.c.b16 %v5534, %v5532
        %v5577 = vpack.c.b16 %v5537, %v5535
        %v5578 = vpack.c.b16 %v5538, %v5536
        %v5579 = vpack.c.b16 %v5541, %v5539
        %v5580 = vpack.c.b16 %v5542, %v5540
        %v5581 = vpack.c.b16 %v5545, %v5543
        %v5582 = vpack.c.b16 %v5546, %v5544
        %v5583 = vpack.c.b16 %v5549, %v5547
        %v5584 = vpack.c.b16 %v5550, %v5548
        %v5585 = vpack.c.b16 %v5553, %v5551
        %v5586 = vpack.c.b16 %v5554, %v5552
        %5619 = vmatprep.subr.bf16.mxu0 %v5556
        %5620 = vmatpush1.bf16.msra.mxu0 %v5555
        %5621 = vmatprep.subr.bf16.mxu0 %v5558
        %5622 = vmatpush1.bf16.msra.mxu0 %v5557
        %5623 = vmatprep.subr.bf16.mxu0 %v5560
        %5624 = vmatpush1.bf16.msra.mxu0 %v5559
        %5625 = vmatprep.subr.bf16.mxu0 %v5562
        %5626 = vmatpush1.bf16.msra.mxu0 %v5561
        %5627 = vmatprep.subr.bf16.mxu0 %v5564
        %5628 = vmatpush1.bf16.msra.mxu0 %v5563
        %5629 = vmatprep.subr.bf16.mxu0 %v5566
        %5630 = vmatpush1.bf16.msra.mxu0 %v5565
        %5631 = vmatprep.subr.bf16.mxu0 %v5568
        %5632 = vmatpush1.bf16.msra.mxu0 %v5567
        %5633 = vmatprep.subr.bf16.mxu0 %v5570
        %5634 = vmatpush1.bf16.msra.mxu0 %v5569
        %5635 = vmatprep.subr.bf16.mxu0 %v5572
        %5636 = vmatpush1.bf16.msra.mxu0 %v5571
        %5637 = vmatprep.subr.bf16.mxu0 %v5574
        %5638 = vmatpush1.bf16.msra.mxu0 %v5573
        %5639 = vmatprep.subr.bf16.mxu0 %v5576
        %5640 = vmatpush1.bf16.msra.mxu0 %v5575
        %5641 = vmatprep.subr.bf16.mxu0 %v5578
        %5642 = vmatpush1.bf16.msra.mxu0 %v5577
        %5643 = vmatprep.subr.bf16.mxu0 %v5580
        %5644 = vmatpush1.bf16.msra.mxu0 %v5579
        %5645 = vmatprep.subr.bf16.mxu0 %v5582
        %5646 = vmatpush1.bf16.msra.mxu0 %v5581
        %5647 = vmatprep.subr.bf16.mxu0 %v5584
        %5648 = vmatpush1.bf16.msra.mxu0 %v5583
        %5649 = vmatprep.subr.bf16.mxu0 %v5586
        %5650 = vmatpush1.bf16.msra.mxu0 %v5585
        %5651 = vmatprep.mubr.bf16.mxu0 %v3204
        %5652 = vmatmul.mubr.bf16.gmra.mrb[0].mxu0 %v3203
        %v5653 = vpop.f32.mrb[0].mxu0
        %v5654 = vadd.f32 0.0, %v5653
        %v5655 = vpop.f32.mrb[0].mxu0
        %v5656 = vadd.f32 0.0, %v5655
        %v5657 = vpop.f32.mrb[0].mxu0
        %v5658 = vadd.f32 0.0, %v5657
        %v5659 = vpop.f32.mrb[0].mxu0
        %v5660 = vadd.f32 0.0, %v5659
        %5661 = vmatprep.mubr.bf16.mxu0 %v3206
        %5662 = vmatmul.mubr.bf16.gmra.mrb[0].mxu0 %v3205
        %v5663 = vpop.f32.mrb[0].mxu0
        %v5664 = vadd.f32 0.0, %v5663
        %v5665 = vpop.f32.mrb[0].mxu0
        %v5666 = vadd.f32 0.0, %v5665
        %v5667 = vpop.f32.mrb[0].mxu0
        %v5668 = vadd.f32 0.0, %v5667
        %v5669 = vpop.f32.mrb[0].mxu0
        %v5670 = vadd.f32 0.0, %v5669
        %5671 = vdwg.mxu0
        %5672 = vset.pattern.permute.xlu0 8
        %5673 = vperm.xlu0 %5672, %v431
        %v5674 = vpop.permute.xlu0 %5673
        %5676 = vset.pattern.permute.xlu0 8
        %5677 = vperm.xlu0 %5676, %v432
        %v5678 = vpop.permute.xlu0 %5677
        %5680 = vset.pattern.permute.xlu0 8
        %5681 = vperm.xlu0 %5680, %v433
        %v5682 = vpop.permute.xlu0 %5681
        %5684 = vset.pattern.permute.xlu0 8
        %5685 = vperm.xlu0 %5684, %v434
        %v5686 = vpop.permute.xlu0 %5685
        %v5688 = vmul.f32 %v5654, %v5674
        %v5689 = vmul.f32 %v5656, %v5674
        %v5690 = vmul.f32 %v5658, %v5678
        %v5691 = vmul.f32 %v5660, %v5678
        %v5692 = vmul.f32 %v5664, %v5682
        %v5693 = vmul.f32 %v5666, %v5682
        %v5694 = vmul.f32 %v5668, %v5686
        %v5695 = vmul.f32 %v5670, %v5686
        %v5696 = vadd.f32 %v5419, %v5688
        %v5697 = vadd.f32 %v5420, %v5689
        %v5698 = vadd.f32 %v5421, %v5690
        %v5699 = vadd.f32 %v5422, %v5691
        %v5700 = vadd.f32 %v5423, %v5692
        %v5701 = vadd.f32 %v5424, %v5693
        %v5702 = vadd.f32 %v5425, %v5694
        %v5703 = vadd.f32 %v5426, %v5695
        %v5704 = vld [vmem:[%s5 + $0x20] sm:$0xff]
        %v5705 = vld [vmem:[%s5 + $0x28] sm:$0xff]
        %v5706 = vld [vmem:[%s5 + $0x30] sm:$0xff]
        %v5707 = vld [vmem:[%s5 + $0x38] sm:$0xff]
        %5709 = vset.pattern.permute.xlu0 0
        %5710 = vperm.xlu0 %5709, %v5704
        %v5711 = vpop.permute.xlu0 %5710
        %5714 = vset.pattern.permute.xlu0 0
        %5715 = vperm.xlu0 %5714, %v5705
        %v5716 = vpop.permute.xlu0 %5715
        %5719 = vset.pattern.permute.xlu0 0
        %5720 = vperm.xlu0 %5719, %v5706
        %v5721 = vpop.permute.xlu0 %5720
        %5724 = vset.pattern.permute.xlu0 0
        %5725 = vperm.xlu0 %5724, %v5707
        %v5726 = vpop.permute.xlu0 %5725
        %v5728 = vadd.f32 %v5696, %v5711
        %v5729 = vadd.f32 %v5697, %v5711
        %v5730 = vadd.f32 %v5698, %v5716
        %v5731 = vadd.f32 %v5699, %v5716
        %v5732 = vadd.f32 %v5700, %v5721
        %v5733 = vadd.f32 %v5701, %v5721
        %v5734 = vadd.f32 %v5702, %v5726
        %v5735 = vadd.f32 %v5703, %v5726
        %5736 = vst [vmem:[#allocation2 + $0x40] sm:$0xff] %v5728
        %5737 = vst [vmem:[#allocation2 + $0x48] sm:$0xff] %v5729
        %5738 = vst [vmem:[#allocation2 + $0x50] sm:$0xff] %v5730
        %5739 = vst [vmem:[#allocation2 + $0x58] sm:$0xff] %v5731
        %5740 = vst [vmem:[#allocation2 + $0x60] sm:$0xff] %v5732
        %5741 = vst [vmem:[#allocation2 + $0x68] sm:$0xff] %v5733
        %5742 = vst [vmem:[#allocation2 + $0x70] sm:$0xff] %v5734
        %5743 = vst [vmem:[#allocation2 + $0x78] sm:$0xff] %v5735
        %v5744 = vld [vmem:[%s1 + $0x20] sm:$0xf]
        %v5745 = vld [vmem:[%s1 + $0x24] sm:$0xf]
        %v5746 = vld [vmem:[%s1 + $0x28] sm:$0xf]
        %v5747 = vld [vmem:[%s1 + $0x2c] sm:$0xf]
        %v5748 = vld [vmem:[%s2 + $0x40] sm:$0xff]
        %v5749 = vld [vmem:[%s2 + $0x48] sm:$0xff]
        %v5750 = vld [vmem:[%s2 + $0x50] sm:$0xff]
        %v5751 = vld [vmem:[%s2 + $0x58] sm:$0xff]
        %5753 = vset.pattern.permute.xlu0 0
        %5754 = vperm.xlu0 %5753, %v5748
        %v5755 = vpop.permute.xlu0 %5754
        %5758 = vset.pattern.permute.xlu0 0
        %5759 = vperm.xlu0 %5758, %v5749
        %v5760 = vpop.permute.xlu0 %5759
        %5763 = vset.pattern.permute.xlu0 0
        %5764 = vperm.xlu0 %5763, %v5750
        %v5765 = vpop.permute.xlu0 %5764
        %5768 = vset.pattern.permute.xlu0 0
        %5769 = vperm.xlu0 %5768, %v5751
        %v5770 = vpop.permute.xlu0 %5769
        %v5776 = vunpack.c.l.b16 %v5744
        %v5777 = vunpack.c.l.b16 %v5745
        %v5778 = vunpack.c.l.b16 %v5746
        %v5779 = vunpack.c.l.b16 %v5747
        %v5780 = vpack.c.b16 %v5777, %v5776
        %v5781 = vpack.c.b16 %v5779, %v5778
        %v5783 = vsel %vm497, %v5780, 0
        %v5786 = vsel %vm497, %v5781, 0
        %5788 = vmatprep.subr.bf16.mxu0 %v490
        %5789 = vmatpush1.bf16.msra.mxu0 %v489
        %5790 = vmatprep.subr.bf16.mxu0 %v492
        %5791 = vmatpush1.bf16.msra.mxu0 %v491
        %5792 = vmatprep.subr.bf16.mxu0 0
        %5793 = vmatpush1.bf16.msra.mxu0 0
        %5794 = vmatprep.subr.bf16.mxu0 0
        %5795 = vmatpush1.bf16.msra.mxu0 0
        %5796 = vmatprep.subr.bf16.mxu0 0
        %5797 = vmatpush1.bf16.msra.mxu0 0
        %5798 = vmatprep.subr.bf16.mxu0 0
        %5799 = vmatpush1.bf16.msra.mxu0 0
        %5800 = vmatprep.subr.bf16.mxu0 0
        %5801 = vmatpush1.bf16.msra.mxu0 0
        %5802 = vmatprep.subr.bf16.mxu0 0
        %5803 = vmatpush1.bf16.msra.mxu0 0
        %5804 = vmatprep.subr.bf16.mxu0 0
        %5805 = vmatpush1.bf16.msra.mxu0 0
        %5806 = vmatprep.subr.bf16.mxu0 0
        %5807 = vmatpush1.bf16.msra.mxu0 0
        %5808 = vmatprep.subr.bf16.mxu0 0
        %5809 = vmatpush1.bf16.msra.mxu0 0
        %5810 = vmatprep.subr.bf16.mxu0 0
        %5811 = vmatpush1.bf16.msra.mxu0 0
        %5812 = vmatprep.subr.bf16.mxu0 0
        %5813 = vmatpush1.bf16.msra.mxu0 0
        %5814 = vmatprep.subr.bf16.mxu0 0
        %5815 = vmatpush1.bf16.msra.mxu0 0
        %5816 = vmatprep.subr.bf16.mxu0 0
        %5817 = vmatpush1.bf16.msra.mxu0 0
        %5818 = vmatprep.subr.bf16.mxu0 0
        %5819 = vmatpush1.bf16.msra.mxu0 0
        %5820 = vmatprep.mubr.bf16.mxu0 0
        %5821 = vmatmul.mubr.bf16.gmra.mrb[0].mxu0 %v5783
        %v5822 = vpop.f32.mrb[0].mxu0
        %v5823 = vadd.f32 %v5755, %v5822
        %v5824 = vpop.f32.mrb[0].mxu0
        %v5825 = vadd.f32 %v5755, %v5824
        %v5826 = vpop.f32.mrb[0].mxu0
        %v5827 = vadd.f32 %v5760, %v5826
        %v5828 = vpop.f32.mrb[0].mxu0
        %v5829 = vadd.f32 %v5760, %v5828
        %5830 = vmatprep.mubr.bf16.mxu0 0
        %5831 = vmatmul.mubr.bf16.gmra.mrb[0].mxu0 %v5786
        %v5832 = vpop.f32.mrb[0].mxu0
        %v5833 = vadd.f32 %v5765, %v5832
        %v5834 = vpop.f32.mrb[0].mxu0
        %v5835 = vadd.f32 %v5765, %v5834
        %v5836 = vpop.f32.mrb[0].mxu0
        %v5837 = vadd.f32 %v5770, %v5836
        %v5838 = vpop.f32.mrb[0].mxu0
        %v5839 = vadd.f32 %v5770, %v5838
        %5840 = vdwg.mxu0
        %v5841 = vpack.c.bf16 %v5827, %v5823
        %v5842 = vpack.c.bf16 %v5829, %v5825
        %v5843 = vpack.c.bf16 %v5837, %v5833
        %v5844 = vpack.c.bf16 %v5839, %v5835
        %v5845 = vld [vmem:[#allocation6] sm:$0xff]
        %v5846 = vld [vmem:[#allocation6 + $0x8] sm:$0xff]
        %v5847 = vld [vmem:[#allocation6 + $0x10] sm:$0xff]
        %v5848 = vld [vmem:[#allocation6 + $0x18] sm:$0xff]
        %v5849 = vld [vmem:[#allocation6 + $0x20] sm:$0xff]
        %v5850 = vld [vmem:[#allocation6 + $0x28] sm:$0xff]
        %v5851 = vld [vmem:[#allocation6 + $0x30] sm:$0xff]
        %v5852 = vld [vmem:[#allocation6 + $0x38] sm:$0xff]
        %v5853 = vld [vmem:[#allocation6 + $0x40] sm:$0xff]
        %v5854 = vld [vmem:[#allocation6 + $0x48] sm:$0xff]
        %v5855 = vld [vmem:[#allocation6 + $0x50] sm:$0xff]
        %v5856 = vld [vmem:[#allocation6 + $0x58] sm:$0xff]
        %v5857 = vld [vmem:[#allocation6 + $0x60] sm:$0xff]
        %v5858 = vld [vmem:[#allocation6 + $0x68] sm:$0xff]
        %v5859 = vld [vmem:[#allocation6 + $0x70] sm:$0xff]
        %v5860 = vld [vmem:[#allocation6 + $0x78] sm:$0xff]
        %v5861 = vld [vmem:[#allocation6 + $0x80] sm:$0xff]
        %v5862 = vld [vmem:[#allocation6 + $0x88] sm:$0xff]
        %v5863 = vld [vmem:[#allocation6 + $0x90] sm:$0xff]
        %v5864 = vld [vmem:[#allocation6 + $0x98] sm:$0xff]
        %v5865 = vld [vmem:[#allocation6 + $0xa0] sm:$0xff]
        %v5866 = vld [vmem:[#allocation6 + $0xa8] sm:$0xff]
        %v5867 = vld [vmem:[#allocation6 + $0xb0] sm:$0xff]
        %v5868 = vld [vmem:[#allocation6 + $0xb8] sm:$0xff]
        %v5869 = vld [vmem:[#allocation6 + $0xc0] sm:$0xff]
        %v5870 = vld [vmem:[#allocation6 + $0xc8] sm:$0xff]
        %v5871 = vld [vmem:[#allocation6 + $0xd0] sm:$0xff]
        %v5872 = vld [vmem:[#allocation6 + $0xd8] sm:$0xff]
        %v5873 = vld [vmem:[#allocation6 + $0xe0] sm:$0xff]
        %v5874 = vld [vmem:[#allocation6 + $0xe8] sm:$0xff]
        %v5875 = vld [vmem:[#allocation6 + $0xf0] sm:$0xff]
        %v5876 = vld [vmem:[#allocation6 + $0xf8] sm:$0xff]
        %v5909 = vunpack.c.l.b16 %v5845
        %v5910 = vunpack.c.h.b16 %v5845
        %v5911 = vunpack.c.l.b16 %v5846
        %v5912 = vunpack.c.h.b16 %v5846
        %v5913 = vunpack.c.l.b16 %v5847
        %v5914 = vunpack.c.h.b16 %v5847
        %v5915 = vunpack.c.l.b16 %v5848
        %v5916 = vunpack.c.h.b16 %v5848
        %v5917 = vunpack.c.l.b16 %v5849
        %v5918 = vunpack.c.h.b16 %v5849
        %v5919 = vunpack.c.l.b16 %v5850
        %v5920 = vunpack.c.h.b16 %v5850
        %v5921 = vunpack.c.l.b16 %v5851
        %v5922 = vunpack.c.h.b16 %v5851
        %v5923 = vunpack.c.l.b16 %v5852
        %v5924 = vunpack.c.h.b16 %v5852
        %v5925 = vunpack.c.l.b16 %v5853
        %v5926 = vunpack.c.h.b16 %v5853
        %v5927 = vunpack.c.l.b16 %v5854
        %v5928 = vunpack.c.h.b16 %v5854
        %v5929 = vunpack.c.l.b16 %v5855
        %v5930 = vunpack.c.h.b16 %v5855
        %v5931 = vunpack.c.l.b16 %v5856
        %v5932 = vunpack.c.h.b16 %v5856
        %v5933 = vunpack.c.l.b16 %v5857
        %v5934 = vunpack.c.h.b16 %v5857
        %v5935 = vunpack.c.l.b16 %v5858
        %v5936 = vunpack.c.h.b16 %v5858
        %v5937 = vunpack.c.l.b16 %v5859
        %v5938 = vunpack.c.h.b16 %v5859
        %v5939 = vunpack.c.l.b16 %v5860
        %v5940 = vunpack.c.h.b16 %v5860
        %v5941 = vunpack.c.l.b16 %v5861
        %v5942 = vunpack.c.h.b16 %v5861
        %v5943 = vunpack.c.l.b16 %v5862
        %v5944 = vunpack.c.h.b16 %v5862
        %v5945 = vunpack.c.l.b16 %v5863
        %v5946 = vunpack.c.h.b16 %v5863
        %v5947 = vunpack.c.l.b16 %v5864
        %v5948 = vunpack.c.h.b16 %v5864
        %v5949 = vunpack.c.l.b16 %v5865
        %v5950 = vunpack.c.h.b16 %v5865
        %v5951 = vunpack.c.l.b16 %v5866
        %v5952 = vunpack.c.h.b16 %v5866
        %v5953 = vunpack.c.l.b16 %v5867
        %v5954 = vunpack.c.h.b16 %v5867
        %v5955 = vunpack.c.l.b16 %v5868
        %v5956 = vunpack.c.h.b16 %v5868
        %v5957 = vunpack.c.l.b16 %v5869
        %v5958 = vunpack.c.h.b16 %v5869
        %v5959 = vunpack.c.l.b16 %v5870
        %v5960 = vunpack.c.h.b16 %v5870
        %v5961 = vunpack.c.l.b16 %v5871
        %v5962 = vunpack.c.h.b16 %v5871
        %v5963 = vunpack.c.l.b16 %v5872
        %v5964 = vunpack.c.h.b16 %v5872
        %v5965 = vunpack.c.l.b16 %v5873
        %v5966 = vunpack.c.h.b16 %v5873
        %v5967 = vunpack.c.l.b16 %v5874
        %v5968 = vunpack.c.h.b16 %v5874
        %v5969 = vunpack.c.l.b16 %v5875
        %v5970 = vunpack.c.h.b16 %v5875
        %v5971 = vunpack.c.l.b16 %v5876
        %v5972 = vunpack.c.h.b16 %v5876
        %v5973 = vpack.c.b16 %v5911, %v5909
        %v5974 = vpack.c.b16 %v5912, %v5910
        %v5975 = vpack.c.b16 %v5915, %v5913
        %v5976 = vpack.c.b16 %v5916, %v5914
        %v5977 = vpack.c.b16 %v5919, %v5917
        %v5978 = vpack.c.b16 %v5920, %v5918
        %v5979 = vpack.c.b16 %v5923, %v5921
        %v5980 = vpack.c.b16 %v5924, %v5922
        %v5981 = vpack.c.b16 %v5927, %v5925
        %v5982 = vpack.c.b16 %v5928, %v5926
        %v5983 = vpack.c.b16 %v5931, %v5929
        %v5984 = vpack.c.b16 %v5932, %v5930
        %v5985 = vpack.c.b16 %v5935, %v5933
        %v5986 = vpack.c.b16 %v5936, %v5934
        %v5987 = vpack.c.b16 %v5939, %v5937
        %v5988 = vpack.c.b16 %v5940, %v5938
        %v5989 = vpack.c.b16 %v5943, %v5941
        %v5990 = vpack.c.b16 %v5944, %v5942
        %v5991 = vpack.c.b16 %v5947, %v5945
        %v5992 = vpack.c.b16 %v5948, %v5946
        %v5993 = vpack.c.b16 %v5951, %v5949
        %v5994 = vpack.c.b16 %v5952, %v5950
        %v5995 = vpack.c.b16 %v5955, %v5953
        %v5996 = vpack.c.b16 %v5956, %v5954
        %v5997 = vpack.c.b16 %v5959, %v5957
        %v5998 = vpack.c.b16 %v5960, %v5958
        %v5999 = vpack.c.b16 %v5963, %v5961
        %v6000 = vpack.c.b16 %v5964, %v5962
        %v6001 = vpack.c.b16 %v5967, %v5965
        %v6002 = vpack.c.b16 %v5968, %v5966
        %v6003 = vpack.c.b16 %v5971, %v5969
        %v6004 = vpack.c.b16 %v5972, %v5970
        %6037 = vmatprep.subr.bf16.mxu0 %v5974
        %6038 = vmatpush1.bf16.msra.mxu0 %v5973
        %6039 = vmatprep.subr.bf16.mxu0 %v5976
        %6040 = vmatpush1.bf16.msra.mxu0 %v5975
        %6041 = vmatprep.subr.bf16.mxu0 %v5978
        %6042 = vmatpush1.bf16.msra.mxu0 %v5977
        %6043 = vmatprep.subr.bf16.mxu0 %v5980
        %6044 = vmatpush1.bf16.msra.mxu0 %v5979
        %6045 = vmatprep.subr.bf16.mxu0 %v5982
        %6046 = vmatpush1.bf16.msra.mxu0 %v5981
        %6047 = vmatprep.subr.bf16.mxu0 %v5984
        %6048 = vmatpush1.bf16.msra.mxu0 %v5983
        %6049 = vmatprep.subr.bf16.mxu0 %v5986
        %6050 = vmatpush1.bf16.msra.mxu0 %v5985
        %6051 = vmatprep.subr.bf16.mxu0 %v5988
        %6052 = vmatpush1.bf16.msra.mxu0 %v5987
        %6053 = vmatprep.subr.bf16.mxu0 %v5990
        %6054 = vmatpush1.bf16.msra.mxu0 %v5989
        %6055 = vmatprep.subr.bf16.mxu0 %v5992
        %6056 = vmatpush1.bf16.msra.mxu0 %v5991
        %6057 = vmatprep.subr.bf16.mxu0 %v5994
        %6058 = vmatpush1.bf16.msra.mxu0 %v5993
        %6059 = vmatprep.subr.bf16.mxu0 %v5996
        %6060 = vmatpush1.bf16.msra.mxu0 %v5995
        %6061 = vmatprep.subr.bf16.mxu0 %v5998
        %6062 = vmatpush1.bf16.msra.mxu0 %v5997
        %6063 = vmatprep.subr.bf16.mxu0 %v6000
        %6064 = vmatpush1.bf16.msra.mxu0 %v5999
        %6065 = vmatprep.subr.bf16.mxu0 %v6002
        %6066 = vmatpush1.bf16.msra.mxu0 %v6001
        %6067 = vmatprep.subr.bf16.mxu0 %v6004
        %6068 = vmatpush1.bf16.msra.mxu0 %v6003
        %6069 = vmatprep.mubr.bf16.mxu0 %v5842
        %6070 = vmatmul.mubr.bf16.gmra.mrb[0].mxu0 %v5841
        %v6071 = vpop.f32.mrb[0].mxu0
        %v6072 = vadd.f32 0.0, %v6071
        %v6073 = vpop.f32.mrb[0].mxu0
        %v6074 = vadd.f32 0.0, %v6073
        %v6075 = vpop.f32.mrb[0].mxu0
        %v6076 = vadd.f32 0.0, %v6075
        %v6077 = vpop.f32.mrb[0].mxu0
        %v6078 = vadd.f32 0.0, %v6077
        %6079 = vmatprep.mubr.bf16.mxu0 %v5844
        %6080 = vmatmul.mubr.bf16.gmra.mrb[0].mxu0 %v5843
        %v6081 = vpop.f32.mrb[0].mxu0
        %v6082 = vadd.f32 0.0, %v6081
        %v6083 = vpop.f32.mrb[0].mxu0
        %v6084 = vadd.f32 0.0, %v6083
        %v6085 = vpop.f32.mrb[0].mxu0
        %v6086 = vadd.f32 0.0, %v6085
        %v6087 = vpop.f32.mrb[0].mxu0
        %v6088 = vadd.f32 0.0, %v6087
        %6089 = vdwg.mxu0
        %6091 = vset.pattern.permute.xlu0 0
        %6092 = vperm.xlu0 %6091, %v435
        %v6093 = vpop.permute.xlu0 %6092
        %6096 = vset.pattern.permute.xlu0 0
        %6097 = vperm.xlu0 %6096, %v436
        %v6098 = vpop.permute.xlu0 %6097
        %6101 = vset.pattern.permute.xlu0 0
        %6102 = vperm.xlu0 %6101, %v437
        %v6103 = vpop.permute.xlu0 %6102
        %6106 = vset.pattern.permute.xlu0 0
        %6107 = vperm.xlu0 %6106, %v438
        %v6108 = vpop.permute.xlu0 %6107
        %v6110 = vmul.f32 %v6072, %v6093
        %v6111 = vmul.f32 %v6074, %v6093
        %v6112 = vmul.f32 %v6076, %v6098
        %v6113 = vmul.f32 %v6078, %v6098
        %v6114 = vmul.f32 %v6082, %v6103
        %v6115 = vmul.f32 %v6084, %v6103
        %v6116 = vmul.f32 %v6086, %v6108
        %v6117 = vmul.f32 %v6088, %v6108
        %v6118 = vadd.f32 %v6110, 0.0
        %v6119 = vadd.f32 %v6111, 0.0
        %v6120 = vadd.f32 %v6112, 0.0
        %v6121 = vadd.f32 %v6113, 0.0
        %v6122 = vadd.f32 %v6114, 0.0
        %v6123 = vadd.f32 %v6115, 0.0
        %v6124 = vadd.f32 %v6116, 0.0
        %v6125 = vadd.f32 %v6117, 0.0
        %v6126 = vld [vmem:[%s842] sm:$0xff]
        %v6127 = vld [vmem:[%s842 + $0x8] sm:$0xff]
        %v6128 = vld [vmem:[%s842 + $0x10] sm:$0xff]
        %v6129 = vld [vmem:[%s842 + $0x18] sm:$0xff]
        %v6130 = vld [vmem:[%s842 + $0x20] sm:$0xff]
        %v6131 = vld [vmem:[%s842 + $0x28] sm:$0xff]
        %v6132 = vld [vmem:[%s842 + $0x30] sm:$0xff]
        %v6133 = vld [vmem:[%s842 + $0x38] sm:$0xff]
        %v6134 = vld [vmem:[%s842 + $0x40] sm:$0xff]
        %v6135 = vld [vmem:[%s842 + $0x48] sm:$0xff]
        %v6136 = vld [vmem:[%s842 + $0x50] sm:$0xff]
        %v6137 = vld [vmem:[%s842 + $0x58] sm:$0xff]
        %v6138 = vld [vmem:[%s842 + $0x60] sm:$0xff]
        %v6139 = vld [vmem:[%s842 + $0x68] sm:$0xff]
        %v6140 = vld [vmem:[%s842 + $0x70] sm:$0xff]
        %v6141 = vld [vmem:[%s842 + $0x78] sm:$0xff]
        %v6142 = vld [vmem:[%s842 + $0x80] sm:$0xff]
        %v6143 = vld [vmem:[%s842 + $0x88] sm:$0xff]
        %v6144 = vld [vmem:[%s842 + $0x90] sm:$0xff]
        %v6145 = vld [vmem:[%s842 + $0x98] sm:$0xff]
        %v6146 = vld [vmem:[%s842 + $0xa0] sm:$0xff]
        %v6147 = vld [vmem:[%s842 + $0xa8] sm:$0xff]
        %v6148 = vld [vmem:[%s842 + $0xb0] sm:$0xff]
        %v6149 = vld [vmem:[%s842 + $0xb8] sm:$0xff]
        %v6150 = vld [vmem:[%s842 + $0xc0] sm:$0xff]
        %v6151 = vld [vmem:[%s842 + $0xc8] sm:$0xff]
        %v6152 = vld [vmem:[%s842 + $0xd0] sm:$0xff]
        %v6153 = vld [vmem:[%s842 + $0xd8] sm:$0xff]
        %v6154 = vld [vmem:[%s842 + $0xe0] sm:$0xff]
        %v6155 = vld [vmem:[%s842 + $0xe8] sm:$0xff]
        %v6156 = vld [vmem:[%s842 + $0xf0] sm:$0xff]
        %v6157 = vld [vmem:[%s842 + $0xf8] sm:$0xff]
        %v6190 = vunpack.c.l.b16 %v6126
        %v6191 = vunpack.c.h.b16 %v6126
        %v6192 = vunpack.c.l.b16 %v6127
        %v6193 = vunpack.c.h.b16 %v6127
        %v6194 = vunpack.c.l.b16 %v6128
        %v6195 = vunpack.c.h.b16 %v6128
        %v6196 = vunpack.c.l.b16 %v6129
        %v6197 = vunpack.c.h.b16 %v6129
        %v6198 = vunpack.c.l.b16 %v6130
        %v6199 = vunpack.c.h.b16 %v6130
        %v6200 = vunpack.c.l.b16 %v6131
        %v6201 = vunpack.c.h.b16 %v6131
        %v6202 = vunpack.c.l.b16 %v6132
        %v6203 = vunpack.c.h.b16 %v6132
        %v6204 = vunpack.c.l.b16 %v6133
        %v6205 = vunpack.c.h.b16 %v6133
        %v6206 = vunpack.c.l.b16 %v6134
        %v6207 = vunpack.c.h.b16 %v6134
        %v6208 = vunpack.c.l.b16 %v6135
        %v6209 = vunpack.c.h.b16 %v6135
        %v6210 = vunpack.c.l.b16 %v6136
        %v6211 = vunpack.c.h.b16 %v6136
        %v6212 = vunpack.c.l.b16 %v6137
        %v6213 = vunpack.c.h.b16 %v6137
        %v6214 = vunpack.c.l.b16 %v6138
        %v6215 = vunpack.c.h.b16 %v6138
        %v6216 = vunpack.c.l.b16 %v6139
        %v6217 = vunpack.c.h.b16 %v6139
        %v6218 = vunpack.c.l.b16 %v6140
        %v6219 = vunpack.c.h.b16 %v6140
        %v6220 = vunpack.c.l.b16 %v6141
        %v6221 = vunpack.c.h.b16 %v6141
        %v6222 = vunpack.c.l.b16 %v6142
        %v6223 = vunpack.c.h.b16 %v6142
        %v6224 = vunpack.c.l.b16 %v6143
        %v6225 = vunpack.c.h.b16 %v6143
        %v6226 = vunpack.c.l.b16 %v6144
        %v6227 = vunpack.c.h.b16 %v6144
        %v6228 = vunpack.c.l.b16 %v6145
        %v6229 = vunpack.c.h.b16 %v6145
        %v6230 = vunpack.c.l.b16 %v6146
        %v6231 = vunpack.c.h.b16 %v6146
        %v6232 = vunpack.c.l.b16 %v6147
        %v6233 = vunpack.c.h.b16 %v6147
        %v6234 = vunpack.c.l.b16 %v6148
        %v6235 = vunpack.c.h.b16 %v6148
        %v6236 = vunpack.c.l.b16 %v6149
        %v6237 = vunpack.c.h.b16 %v6149
        %v6238 = vunpack.c.l.b16 %v6150
        %v6239 = vunpack.c.h.b16 %v6150
        %v6240 = vunpack.c.l.b16 %v6151
        %v6241 = vunpack.c.h.b16 %v6151
        %v6242 = vunpack.c.l.b16 %v6152
        %v6243 = vunpack.c.h.b16 %v6152
        %v6244 = vunpack.c.l.b16 %v6153
        %v6245 = vunpack.c.h.b16 %v6153
        %v6246 = vunpack.c.l.b16 %v6154
        %v6247 = vunpack.c.h.b16 %v6154
        %v6248 = vunpack.c.l.b16 %v6155
        %v6249 = vunpack.c.h.b16 %v6155
        %v6250 = vunpack.c.l.b16 %v6156
        %v6251 = vunpack.c.h.b16 %v6156
        %v6252 = vunpack.c.l.b16 %v6157
        %v6253 = vunpack.c.h.b16 %v6157
        %v6254 = vpack.c.b16 %v6192, %v6190
        %v6255 = vpack.c.b16 %v6193, %v6191
        %v6256 = vpack.c.b16 %v6196, %v6194
        %v6257 = vpack.c.b16 %v6197, %v6195
        %v6258 = vpack.c.b16 %v6200, %v6198
        %v6259 = vpack.c.b16 %v6201, %v6199
        %v6260 = vpack.c.b16 %v6204, %v6202
        %v6261 = vpack.c.b16 %v6205, %v6203
        %v6262 = vpack.c.b16 %v6208, %v6206
        %v6263 = vpack.c.b16 %v6209, %v6207
        %v6264 = vpack.c.b16 %v6212, %v6210
        %v6265 = vpack.c.b16 %v6213, %v6211
        %v6266 = vpack.c.b16 %v6216, %v6214
        %v6267 = vpack.c.b16 %v6217, %v6215
        %v6268 = vpack.c.b16 %v6220, %v6218
        %v6269 = vpack.c.b16 %v6221, %v6219
        %v6270 = vpack.c.b16 %v6224, %v6222
        %v6271 = vpack.c.b16 %v6225, %v6223
        %v6272 = vpack.c.b16 %v6228, %v6226
        %v6273 = vpack.c.b16 %v6229, %v6227
        %v6274 = vpack.c.b16 %v6232, %v6230
        %v6275 = vpack.c.b16 %v6233, %v6231
        %v6276 = vpack.c.b16 %v6236, %v6234
        %v6277 = vpack.c.b16 %v6237, %v6235
        %v6278 = vpack.c.b16 %v6240, %v6238
        %v6279 = vpack.c.b16 %v6241, %v6239
        %v6280 = vpack.c.b16 %v6244, %v6242
        %v6281 = vpack.c.b16 %v6245, %v6243
        %v6282 = vpack.c.b16 %v6248, %v6246
        %v6283 = vpack.c.b16 %v6249, %v6247
        %v6284 = vpack.c.b16 %v6252, %v6250
        %v6285 = vpack.c.b16 %v6253, %v6251
        %6318 = vmatprep.subr.bf16.mxu0 %v6255
        %6319 = vmatpush1.bf16.msra.mxu0 %v6254
        %6320 = vmatprep.subr.bf16.mxu0 %v6257
        %6321 = vmatpush1.bf16.msra.mxu0 %v6256
        %6322 = vmatprep.subr.bf16.mxu0 %v6259
        %6323 = vmatpush1.bf16.msra.mxu0 %v6258
        %6324 = vmatprep.subr.bf16.mxu0 %v6261
        %6325 = vmatpush1.bf16.msra.mxu0 %v6260
        %6326 = vmatprep.subr.bf16.mxu0 %v6263
        %6327 = vmatpush1.bf16.msra.mxu0 %v6262
        %6328 = vmatprep.subr.bf16.mxu0 %v6265
        %6329 = vmatpush1.bf16.msra.mxu0 %v6264
        %6330 = vmatprep.subr.bf16.mxu0 %v6267
        %6331 = vmatpush1.bf16.msra.mxu0 %v6266
        %6332 = vmatprep.subr.bf16.mxu0 %v6269
        %6333 = vmatpush1.bf16.msra.mxu0 %v6268
        %6334 = vmatprep.subr.bf16.mxu0 %v6271
        %6335 = vmatpush1.bf16.msra.mxu0 %v6270
        %6336 = vmatprep.subr.bf16.mxu0 %v6273
        %6337 = vmatpush1.bf16.msra.mxu0 %v6272
        %6338 = vmatprep.subr.bf16.mxu0 %v6275
        %6339 = vmatpush1.bf16.msra.mxu0 %v6274
        %6340 = vmatprep.subr.bf16.mxu0 %v6277
        %6341 = vmatpush1.bf16.msra.mxu0 %v6276
        %6342 = vmatprep.subr.bf16.mxu0 %v6279
        %6343 = vmatpush1.bf16.msra.mxu0 %v6278
        %6344 = vmatprep.subr.bf16.mxu0 %v6281
        %6345 = vmatpush1.bf16.msra.mxu0 %v6280
        %6346 = vmatprep.subr.bf16.mxu0 %v6283
        %6347 = vmatpush1.bf16.msra.mxu0 %v6282
        %6348 = vmatprep.subr.bf16.mxu0 %v6285
        %6349 = vmatpush1.bf16.msra.mxu0 %v6284
        %6350 = vmatprep.mubr.bf16.mxu0 %v5842
        %6351 = vmatmul.mubr.bf16.gmra.mrb[0].mxu0 %v5841
        %v6352 = vpop.f32.mrb[0].mxu0
        %v6353 = vadd.f32 0.0, %v6352
        %v6354 = vpop.f32.mrb[0].mxu0
        %v6355 = vadd.f32 0.0, %v6354
        %v6356 = vpop.f32.mrb[0].mxu0
        %v6357 = vadd.f32 0.0, %v6356
        %v6358 = vpop.f32.mrb[0].mxu0
        %v6359 = vadd.f32 0.0, %v6358
        %6360 = vmatprep.mubr.bf16.mxu0 %v5844
        %6361 = vmatmul.mubr.bf16.gmra.mrb[0].mxu0 %v5843
        %v6362 = vpop.f32.mrb[0].mxu0
        %v6363 = vadd.f32 0.0, %v6362
        %v6364 = vpop.f32.mrb[0].mxu0
        %v6365 = vadd.f32 0.0, %v6364
        %v6366 = vpop.f32.mrb[0].mxu0
        %v6367 = vadd.f32 0.0, %v6366
        %v6368 = vpop.f32.mrb[0].mxu0
        %v6369 = vadd.f32 0.0, %v6368
        %6370 = vdwg.mxu0
        %6371 = vset.pattern.permute.xlu0 1
        %6372 = vperm.xlu0 %6371, %v435
        %v6373 = vpop.permute.xlu0 %6372
        %6375 = vset.pattern.permute.xlu0 1
        %6376 = vperm.xlu0 %6375, %v436
        %v6377 = vpop.permute.xlu0 %6376
        %6379 = vset.pattern.permute.xlu0 1
        %6380 = vperm.xlu0 %6379, %v437
        %v6381 = vpop.permute.xlu0 %6380
        %6383 = vset.pattern.permute.xlu0 1
        %6384 = vperm.xlu0 %6383, %v438
        %v6385 = vpop.permute.xlu0 %6384
        %v6387 = vmul.f32 %v6353, %v6373
        %v6388 = vmul.f32 %v6355, %v6373
        %v6389 = vmul.f32 %v6357, %v6377
        %v6390 = vmul.f32 %v6359, %v6377
        %v6391 = vmul.f32 %v6363, %v6381
        %v6392 = vmul.f32 %v6365, %v6381
        %v6393 = vmul.f32 %v6367, %v6385
        %v6394 = vmul.f32 %v6369, %v6385
        %v6395 = vadd.f32 %v6118, %v6387
        %v6396 = vadd.f32 %v6119, %v6388
        %v6397 = vadd.f32 %v6120, %v6389
        %v6398 = vadd.f32 %v6121, %v6390
        %v6399 = vadd.f32 %v6122, %v6391
        %v6400 = vadd.f32 %v6123, %v6392
        %v6401 = vadd.f32 %v6124, %v6393
        %v6402 = vadd.f32 %v6125, %v6394
        %v6403 = vld [vmem:[%s1120] sm:$0xff]
        %v6404 = vld [vmem:[%s1120 + $0x8] sm:$0xff]
        %v6405 = vld [vmem:[%s1120 + $0x10] sm:$0xff]
        %v6406 = vld [vmem:[%s1120 + $0x18] sm:$0xff]
        %v6407 = vld [vmem:[%s1120 + $0x20] sm:$0xff]
        %v6408 = vld [vmem:[%s1120 + $0x28] sm:$0xff]
        %v6409 = vld [vmem:[%s1120 + $0x30] sm:$0xff]
        %v6410 = vld [vmem:[%s1120 + $0x38] sm:$0xff]
        %v6411 = vld [vmem:[%s1120 + $0x40] sm:$0xff]
        %v6412 = vld [vmem:[%s1120 + $0x48] sm:$0xff]
        %v6413 = vld [vmem:[%s1120 + $0x50] sm:$0xff]
        %v6414 = vld [vmem:[%s1120 + $0x58] sm:$0xff]
        %v6415 = vld [vmem:[%s1120 + $0x60] sm:$0xff]
        %v6416 = vld [vmem:[%s1120 + $0x68] sm:$0xff]
        %v6417 = vld [vmem:[%s1120 + $0x70] sm:$0xff]
        %v6418 = vld [vmem:[%s1120 + $0x78] sm:$0xff]
        %v6419 = vld [vmem:[%s1120 + $0x80] sm:$0xff]
        %v6420 = vld [vmem:[%s1120 + $0x88] sm:$0xff]
        %v6421 = vld [vmem:[%s1120 + $0x90] sm:$0xff]
        %v6422 = vld [vmem:[%s1120 + $0x98] sm:$0xff]
        %v6423 = vld [vmem:[%s1120 + $0xa0] sm:$0xff]
        %v6424 = vld [vmem:[%s1120 + $0xa8] sm:$0xff]
        %v6425 = vld [vmem:[%s1120 + $0xb0] sm:$0xff]
        %v6426 = vld [vmem:[%s1120 + $0xb8] sm:$0xff]
        %v6427 = vld [vmem:[%s1120 + $0xc0] sm:$0xff]
        %v6428 = vld [vmem:[%s1120 + $0xc8] sm:$0xff]
        %v6429 = vld [vmem:[%s1120 + $0xd0] sm:$0xff]
        %v6430 = vld [vmem:[%s1120 + $0xd8] sm:$0xff]
        %v6431 = vld [vmem:[%s1120 + $0xe0] sm:$0xff]
        %v6432 = vld [vmem:[%s1120 + $0xe8] sm:$0xff]
        %v6433 = vld [vmem:[%s1120 + $0xf0] sm:$0xff]
        %v6434 = vld [vmem:[%s1120 + $0xf8] sm:$0xff]
        %v6467 = vunpack.c.l.b16 %v6403
        %v6468 = vunpack.c.h.b16 %v6403
        %v6469 = vunpack.c.l.b16 %v6404
        %v6470 = vunpack.c.h.b16 %v6404
        %v6471 = vunpack.c.l.b16 %v6405
        %v6472 = vunpack.c.h.b16 %v6405
        %v6473 = vunpack.c.l.b16 %v6406
        %v6474 = vunpack.c.h.b16 %v6406
        %v6475 = vunpack.c.l.b16 %v6407
        %v6476 = vunpack.c.h.b16 %v6407
        %v6477 = vunpack.c.l.b16 %v6408
        %v6478 = vunpack.c.h.b16 %v6408
        %v6479 = vunpack.c.l.b16 %v6409
        %v6480 = vunpack.c.h.b16 %v6409
        %v6481 = vunpack.c.l.b16 %v6410
        %v6482 = vunpack.c.h.b16 %v6410
        %v6483 = vunpack.c.l.b16 %v6411
        %v6484 = vunpack.c.h.b16 %v6411
        %v6485 = vunpack.c.l.b16 %v6412
        %v6486 = vunpack.c.h.b16 %v6412
        %v6487 = vunpack.c.l.b16 %v6413
        %v6488 = vunpack.c.h.b16 %v6413
        %v6489 = vunpack.c.l.b16 %v6414
        %v6490 = vunpack.c.h.b16 %v6414
        %v6491 = vunpack.c.l.b16 %v6415
        %v6492 = vunpack.c.h.b16 %v6415
        %v6493 = vunpack.c.l.b16 %v6416
        %v6494 = vunpack.c.h.b16 %v6416
        %v6495 = vunpack.c.l.b16 %v6417
        %v6496 = vunpack.c.h.b16 %v6417
        %v6497 = vunpack.c.l.b16 %v6418
        %v6498 = vunpack.c.h.b16 %v6418
        %v6499 = vunpack.c.l.b16 %v6419
        %v6500 = vunpack.c.h.b16 %v6419
        %v6501 = vunpack.c.l.b16 %v6420
        %v6502 = vunpack.c.h.b16 %v6420
        %v6503 = vunpack.c.l.b16 %v6421
        %v6504 = vunpack.c.h.b16 %v6421
        %v6505 = vunpack.c.l.b16 %v6422
        %v6506 = vunpack.c.h.b16 %v6422
        %v6507 = vunpack.c.l.b16 %v6423
        %v6508 = vunpack.c.h.b16 %v6423
        %v6509 = vunpack.c.l.b16 %v6424
        %v6510 = vunpack.c.h.b16 %v6424
        %v6511 = vunpack.c.l.b16 %v6425
        %v6512 = vunpack.c.h.b16 %v6425
        %v6513 = vunpack.c.l.b16 %v6426
        %v6514 = vunpack.c.h.b16 %v6426
        %v6515 = vunpack.c.l.b16 %v6427
        %v6516 = vunpack.c.h.b16 %v6427
        %v6517 = vunpack.c.l.b16 %v6428
        %v6518 = vunpack.c.h.b16 %v6428
        %v6519 = vunpack.c.l.b16 %v6429
        %v6520 = vunpack.c.h.b16 %v6429
        %v6521 = vunpack.c.l.b16 %v6430
        %v6522 = vunpack.c.h.b16 %v6430
        %v6523 = vunpack.c.l.b16 %v6431
        %v6524 = vunpack.c.h.b16 %v6431
        %v6525 = vunpack.c.l.b16 %v6432
        %v6526 = vunpack.c.h.b16 %v6432
        %v6527 = vunpack.c.l.b16 %v6433
        %v6528 = vunpack.c.h.b16 %v6433
        %v6529 = vunpack.c.l.b16 %v6434
        %v6530 = vunpack.c.h.b16 %v6434
        %v6531 = vpack.c.b16 %v6469, %v6467
        %v6532 = vpack.c.b16 %v6470, %v6468
        %v6533 = vpack.c.b16 %v6473, %v6471
        %v6534 = vpack.c.b16 %v6474, %v6472
        %v6535 = vpack.c.b16 %v6477, %v6475
        %v6536 = vpack.c.b16 %v6478, %v6476
        %v6537 = vpack.c.b16 %v6481, %v6479
        %v6538 = vpack.c.b16 %v6482, %v6480
        %v6539 = vpack.c.b16 %v6485, %v6483
        %v6540 = vpack.c.b16 %v6486, %v6484
        %v6541 = vpack.c.b16 %v6489, %v6487
        %v6542 = vpack.c.b16 %v6490, %v6488
        %v6543 = vpack.c.b16 %v6493, %v6491
        %v6544 = vpack.c.b16 %v6494, %v6492
        %v6545 = vpack.c.b16 %v6497, %v6495
        %v6546 = vpack.c.b16 %v6498, %v6496
        %v6547 = vpack.c.b16 %v6501, %v6499
        %v6548 = vpack.c.b16 %v6502, %v6500
        %v6549 = vpack.c.b16 %v6505, %v6503
        %v6550 = vpack.c.b16 %v6506, %v6504
        %v6551 = vpack.c.b16 %v6509, %v6507
        %v6552 = vpack.c.b16 %v6510, %v6508
        %v6553 = vpack.c.b16 %v6513, %v6511
        %v6554 = vpack.c.b16 %v6514, %v6512
        %v6555 = vpack.c.b16 %v6517, %v6515
        %v6556 = vpack.c.b16 %v6518, %v6516
        %v6557 = vpack.c.b16 %v6521, %v6519
        %v6558 = vpack.c.b16 %v6522, %v6520
        %v6559 = vpack.c.b16 %v6525, %v6523
        %v6560 = vpack.c.b16 %v6526, %v6524
        %v6561 = vpack.c.b16 %v6529, %v6527
        %v6562 = vpack.c.b16 %v6530, %v6528
        %6595 = vmatprep.subr.bf16.mxu0 %v6532
        %6596 = vmatpush1.bf16.msra.mxu0 %v6531
        %6597 = vmatprep.subr.bf16.mxu0 %v6534
        %6598 = vmatpush1.bf16.msra.mxu0 %v6533
        %6599 = vmatprep.subr.bf16.mxu0 %v6536
        %6600 = vmatpush1.bf16.msra.mxu0 %v6535
        %6601 = vmatprep.subr.bf16.mxu0 %v6538
        %6602 = vmatpush1.bf16.msra.mxu0 %v6537
        %6603 = vmatprep.subr.bf16.mxu0 %v6540
        %6604 = vmatpush1.bf16.msra.mxu0 %v6539
        %6605 = vmatprep.subr.bf16.mxu0 %v6542
        %6606 = vmatpush1.bf16.msra.mxu0 %v6541
        %6607 = vmatprep.subr.bf16.mxu0 %v6544
        %6608 = vmatpush1.bf16.msra.mxu0 %v6543
        %6609 = vmatprep.subr.bf16.mxu0 %v6546
        %6610 = vmatpush1.bf16.msra.mxu0 %v6545
        %6611 = vmatprep.subr.bf16.mxu0 %v6548
        %6612 = vmatpush1.bf16.msra.mxu0 %v6547
        %6613 = vmatprep.subr.bf16.mxu0 %v6550
        %6614 = vmatpush1.bf16.msra.mxu0 %v6549
        %6615 = vmatprep.subr.bf16.mxu0 %v6552
        %6616 = vmatpush1.bf16.msra.mxu0 %v6551
        %6617 = vmatprep.subr.bf16.mxu0 %v6554
        %6618 = vmatpush1.bf16.msra.mxu0 %v6553
        %6619 = vmatprep.subr.bf16.mxu0 %v6556
        %6620 = vmatpush1.bf16.msra.mxu0 %v6555
        %6621 = vmatprep.subr.bf16.mxu0 %v6558
        %6622 = vmatpush1.bf16.msra.mxu0 %v6557
        %6623 = vmatprep.subr.bf16.mxu0 %v6560
        %6624 = vmatpush1.bf16.msra.mxu0 %v6559
        %6625 = vmatprep.subr.bf16.mxu0 %v6562
        %6626 = vmatpush1.bf16.msra.mxu0 %v6561
        %6627 = vmatprep.mubr.bf16.mxu0 %v5842
        %6628 = vmatmul.mubr.bf16.gmra.mrb[0].mxu0 %v5841
        %v6629 = vpop.f32.mrb[0].mxu0
        %v6630 = vadd.f32 0.0, %v6629
        %v6631 = vpop.f32.mrb[0].mxu0
        %v6632 = vadd.f32 0.0, %v6631
        %v6633 = vpop.f32.mrb[0].mxu0
        %v6634 = vadd.f32 0.0, %v6633
        %v6635 = vpop.f32.mrb[0].mxu0
        %v6636 = vadd.f32 0.0, %v6635
        %6637 = vmatprep.mubr.bf16.mxu0 %v5844
        %6638 = vmatmul.mubr.bf16.gmra.mrb[0].mxu0 %v5843
        %v6639 = vpop.f32.mrb[0].mxu0
        %v6640 = vadd.f32 0.0, %v6639
        %v6641 = vpop.f32.mrb[0].mxu0
        %v6642 = vadd.f32 0.0, %v6641
        %v6643 = vpop.f32.mrb[0].mxu0
        %v6644 = vadd.f32 0.0, %v6643
        %v6645 = vpop.f32.mrb[0].mxu0
        %v6646 = vadd.f32 0.0, %v6645
        %6647 = vdwg.mxu0
        %6648 = vset.pattern.permute.xlu0 2
        %6649 = vperm.xlu0 %6648, %v435
        %v6650 = vpop.permute.xlu0 %6649
        %6652 = vset.pattern.permute.xlu0 2
        %6653 = vperm.xlu0 %6652, %v436
        %v6654 = vpop.permute.xlu0 %6653
        %6656 = vset.pattern.permute.xlu0 2
        %6657 = vperm.xlu0 %6656, %v437
        %v6658 = vpop.permute.xlu0 %6657
        %6660 = vset.pattern.permute.xlu0 2
        %6661 = vperm.xlu0 %6660, %v438
        %v6662 = vpop.permute.xlu0 %6661
        %v6664 = vmul.f32 %v6630, %v6650
        %v6665 = vmul.f32 %v6632, %v6650
        %v6666 = vmul.f32 %v6634, %v6654
        %v6667 = vmul.f32 %v6636, %v6654
        %v6668 = vmul.f32 %v6640, %v6658
        %v6669 = vmul.f32 %v6642, %v6658
        %v6670 = vmul.f32 %v6644, %v6662
        %v6671 = vmul.f32 %v6646, %v6662
        %v6672 = vadd.f32 %v6395, %v6664
        %v6673 = vadd.f32 %v6396, %v6665
        %v6674 = vadd.f32 %v6397, %v6666
        %v6675 = vadd.f32 %v6398, %v6667
        %v6676 = vadd.f32 %v6399, %v6668
        %v6677 = vadd.f32 %v6400, %v6669
        %v6678 = vadd.f32 %v6401, %v6670
        %v6679 = vadd.f32 %v6402, %v6671
        %v6680 = vld [vmem:[%s1398] sm:$0xff]
        %v6681 = vld [vmem:[%s1398 + $0x8] sm:$0xff]
        %v6682 = vld [vmem:[%s1398 + $0x10] sm:$0xff]
        %v6683 = vld [vmem:[%s1398 + $0x18] sm:$0xff]
        %v6684 = vld [vmem:[%s1398 + $0x20] sm:$0xff]
        %v6685 = vld [vmem:[%s1398 + $0x28] sm:$0xff]
        %v6686 = vld [vmem:[%s1398 + $0x30] sm:$0xff]
        %v6687 = vld [vmem:[%s1398 + $0x38] sm:$0xff]
        %v6688 = vld [vmem:[%s1398 + $0x40] sm:$0xff]
        %v6689 = vld [vmem:[%s1398 + $0x48] sm:$0xff]
        %v6690 = vld [vmem:[%s1398 + $0x50] sm:$0xff]
        %v6691 = vld [vmem:[%s1398 + $0x58] sm:$0xff]
        %v6692 = vld [vmem:[%s1398 + $0x60] sm:$0xff]
        %v6693 = vld [vmem:[%s1398 + $0x68] sm:$0xff]
        %v6694 = vld [vmem:[%s1398 + $0x70] sm:$0xff]
        %v6695 = vld [vmem:[%s1398 + $0x78] sm:$0xff]
        %v6696 = vld [vmem:[%s1398 + $0x80] sm:$0xff]
        %v6697 = vld [vmem:[%s1398 + $0x88] sm:$0xff]
        %v6698 = vld [vmem:[%s1398 + $0x90] sm:$0xff]
        %v6699 = vld [vmem:[%s1398 + $0x98] sm:$0xff]
        %v6700 = vld [vmem:[%s1398 + $0xa0] sm:$0xff]
        %v6701 = vld [vmem:[%s1398 + $0xa8] sm:$0xff]
        %v6702 = vld [vmem:[%s1398 + $0xb0] sm:$0xff]
        %v6703 = vld [vmem:[%s1398 + $0xb8] sm:$0xff]
        %v6704 = vld [vmem:[%s1398 + $0xc0] sm:$0xff]
        %v6705 = vld [vmem:[%s1398 + $0xc8] sm:$0xff]
        %v6706 = vld [vmem:[%s1398 + $0xd0] sm:$0xff]
        %v6707 = vld [vmem:[%s1398 + $0xd8] sm:$0xff]
        %v6708 = vld [vmem:[%s1398 + $0xe0] sm:$0xff]
        %v6709 = vld [vmem:[%s1398 + $0xe8] sm:$0xff]
        %v6710 = vld [vmem:[%s1398 + $0xf0] sm:$0xff]
        %v6711 = vld [vmem:[%s1398 + $0xf8] sm:$0xff]
        %v6744 = vunpack.c.l.b16 %v6680
        %v6745 = vunpack.c.h.b16 %v6680
        %v6746 = vunpack.c.l.b16 %v6681
        %v6747 = vunpack.c.h.b16 %v6681
        %v6748 = vunpack.c.l.b16 %v6682
        %v6749 = vunpack.c.h.b16 %v6682
        %v6750 = vunpack.c.l.b16 %v6683
        %v6751 = vunpack.c.h.b16 %v6683
        %v6752 = vunpack.c.l.b16 %v6684
        %v6753 = vunpack.c.h.b16 %v6684
        %v6754 = vunpack.c.l.b16 %v6685
        %v6755 = vunpack.c.h.b16 %v6685
        %v6756 = vunpack.c.l.b16 %v6686
        %v6757 = vunpack.c.h.b16 %v6686
        %v6758 = vunpack.c.l.b16 %v6687
        %v6759 = vunpack.c.h.b16 %v6687
        %v6760 = vunpack.c.l.b16 %v6688
        %v6761 = vunpack.c.h.b16 %v6688
        %v6762 = vunpack.c.l.b16 %v6689
        %v6763 = vunpack.c.h.b16 %v6689
        %v6764 = vunpack.c.l.b16 %v6690
        %v6765 = vunpack.c.h.b16 %v6690
        %v6766 = vunpack.c.l.b16 %v6691
        %v6767 = vunpack.c.h.b16 %v6691
        %v6768 = vunpack.c.l.b16 %v6692
        %v6769 = vunpack.c.h.b16 %v6692
        %v6770 = vunpack.c.l.b16 %v6693
        %v6771 = vunpack.c.h.b16 %v6693
        %v6772 = vunpack.c.l.b16 %v6694
        %v6773 = vunpack.c.h.b16 %v6694
        %v6774 = vunpack.c.l.b16 %v6695
        %v6775 = vunpack.c.h.b16 %v6695
        %v6776 = vunpack.c.l.b16 %v6696
        %v6777 = vunpack.c.h.b16 %v6696
        %v6778 = vunpack.c.l.b16 %v6697
        %v6779 = vunpack.c.h.b16 %v6697
        %v6780 = vunpack.c.l.b16 %v6698
        %v6781 = vunpack.c.h.b16 %v6698
        %v6782 = vunpack.c.l.b16 %v6699
        %v6783 = vunpack.c.h.b16 %v6699
        %v6784 = vunpack.c.l.b16 %v6700
        %v6785 = vunpack.c.h.b16 %v6700
        %v6786 = vunpack.c.l.b16 %v6701
        %v6787 = vunpack.c.h.b16 %v6701
        %v6788 = vunpack.c.l.b16 %v6702
        %v6789 = vunpack.c.h.b16 %v6702
        %v6790 = vunpack.c.l.b16 %v6703
        %v6791 = vunpack.c.h.b16 %v6703
        %v6792 = vunpack.c.l.b16 %v6704
        %v6793 = vunpack.c.h.b16 %v6704
        %v6794 = vunpack.c.l.b16 %v6705
        %v6795 = vunpack.c.h.b16 %v6705
        %v6796 = vunpack.c.l.b16 %v6706
        %v6797 = vunpack.c.h.b16 %v6706
        %v6798 = vunpack.c.l.b16 %v6707
        %v6799 = vunpack.c.h.b16 %v6707
        %v6800 = vunpack.c.l.b16 %v6708
        %v6801 = vunpack.c.h.b16 %v6708
        %v6802 = vunpack.c.l.b16 %v6709
        %v6803 = vunpack.c.h.b16 %v6709
        %v6804 = vunpack.c.l.b16 %v6710
        %v6805 = vunpack.c.h.b16 %v6710
        %v6806 = vunpack.c.l.b16 %v6711
        %v6807 = vunpack.c.h.b16 %v6711
        %v6808 = vpack.c.b16 %v6746, %v6744
        %v6809 = vpack.c.b16 %v6747, %v6745
        %v6810 = vpack.c.b16 %v6750, %v6748
        %v6811 = vpack.c.b16 %v6751, %v6749
        %v6812 = vpack.c.b16 %v6754, %v6752
        %v6813 = vpack.c.b16 %v6755, %v6753
        %v6814 = vpack.c.b16 %v6758, %v6756
        %v6815 = vpack.c.b16 %v6759, %v6757
        %v6816 = vpack.c.b16 %v6762, %v6760
        %v6817 = vpack.c.b16 %v6763, %v6761
        %v6818 = vpack.c.b16 %v6766, %v6764
        %v6819 = vpack.c.b16 %v6767, %v6765
        %v6820 = vpack.c.b16 %v6770, %v6768
        %v6821 = vpack.c.b16 %v6771, %v6769
        %v6822 = vpack.c.b16 %v6774, %v6772
        %v6823 = vpack.c.b16 %v6775, %v6773
        %v6824 = vpack.c.b16 %v6778, %v6776
        %v6825 = vpack.c.b16 %v6779, %v6777
        %v6826 = vpack.c.b16 %v6782, %v6780
        %v6827 = vpack.c.b16 %v6783, %v6781
        %v6828 = vpack.c.b16 %v6786, %v6784
        %v6829 = vpack.c.b16 %v6787, %v6785
        %v6830 = vpack.c.b16 %v6790, %v6788
        %v6831 = vpack.c.b16 %v6791, %v6789
        %v6832 = vpack.c.b16 %v6794, %v6792
        %v6833 = vpack.c.b16 %v6795, %v6793
        %v6834 = vpack.c.b16 %v6798, %v6796
        %v6835 = vpack.c.b16 %v6799, %v6797
        %v6836 = vpack.c.b16 %v6802, %v6800
        %v6837 = vpack.c.b16 %v6803, %v6801
        %v6838 = vpack.c.b16 %v6806, %v6804
        %v6839 = vpack.c.b16 %v6807, %v6805
        %6872 = vmatprep.subr.bf16.mxu0 %v6809
        %6873 = vmatpush1.bf16.msra.mxu0 %v6808
        %6874 = vmatprep.subr.bf16.mxu0 %v6811
        %6875 = vmatpush1.bf16.msra.mxu0 %v6810
        %6876 = vmatprep.subr.bf16.mxu0 %v6813
        %6877 = vmatpush1.bf16.msra.mxu0 %v6812
        %6878 = vmatprep.subr.bf16.mxu0 %v6815
        %6879 = vmatpush1.bf16.msra.mxu0 %v6814
        %6880 = vmatprep.subr.bf16.mxu0 %v6817
        %6881 = vmatpush1.bf16.msra.mxu0 %v6816
        %6882 = vmatprep.subr.bf16.mxu0 %v6819
        %6883 = vmatpush1.bf16.msra.mxu0 %v6818
        %6884 = vmatprep.subr.bf16.mxu0 %v6821
        %6885 = vmatpush1.bf16.msra.mxu0 %v6820
        %6886 = vmatprep.subr.bf16.mxu0 %v6823
        %6887 = vmatpush1.bf16.msra.mxu0 %v6822
        %6888 = vmatprep.subr.bf16.mxu0 %v6825
        %6889 = vmatpush1.bf16.msra.mxu0 %v6824
        %6890 = vmatprep.subr.bf16.mxu0 %v6827
        %6891 = vmatpush1.bf16.msra.mxu0 %v6826
        %6892 = vmatprep.subr.bf16.mxu0 %v6829
        %6893 = vmatpush1.bf16.msra.mxu0 %v6828
        %6894 = vmatprep.subr.bf16.mxu0 %v6831
        %6895 = vmatpush1.bf16.msra.mxu0 %v6830
        %6896 = vmatprep.subr.bf16.mxu0 %v6833
        %6897 = vmatpush1.bf16.msra.mxu0 %v6832
        %6898 = vmatprep.subr.bf16.mxu0 %v6835
        %6899 = vmatpush1.bf16.msra.mxu0 %v6834
        %6900 = vmatprep.subr.bf16.mxu0 %v6837
        %6901 = vmatpush1.bf16.msra.mxu0 %v6836
        %6902 = vmatprep.subr.bf16.mxu0 %v6839
        %6903 = vmatpush1.bf16.msra.mxu0 %v6838
        %6904 = vmatprep.mubr.bf16.mxu0 %v5842
        %6905 = vmatmul.mubr.bf16.gmra.mrb[0].mxu0 %v5841
        %v6906 = vpop.f32.mrb[0].mxu0
        %v6907 = vadd.f32 0.0, %v6906
        %v6908 = vpop.f32.mrb[0].mxu0
        %v6909 = vadd.f32 0.0, %v6908
        %v6910 = vpop.f32.mrb[0].mxu0
        %v6911 = vadd.f32 0.0, %v6910
        %v6912 = vpop.f32.mrb[0].mxu0
        %v6913 = vadd.f32 0.0, %v6912
        %6914 = vmatprep.mubr.bf16.mxu0 %v5844
        %6915 = vmatmul.mubr.bf16.gmra.mrb[0].mxu0 %v5843
        %v6916 = vpop.f32.mrb[0].mxu0
        %v6917 = vadd.f32 0.0, %v6916
        %v6918 = vpop.f32.mrb[0].mxu0
        %v6919 = vadd.f32 0.0, %v6918
        %v6920 = vpop.f32.mrb[0].mxu0
        %v6921 = vadd.f32 0.0, %v6920
        %v6922 = vpop.f32.mrb[0].mxu0
        %v6923 = vadd.f32 0.0, %v6922
        %6924 = vdwg.mxu0
        %6925 = vset.pattern.permute.xlu0 3
        %6926 = vperm.xlu0 %6925, %v435
        %v6927 = vpop.permute.xlu0 %6926
        %6929 = vset.pattern.permute.xlu0 3
        %6930 = vperm.xlu0 %6929, %v436
        %v6931 = vpop.permute.xlu0 %6930
        %6933 = vset.pattern.permute.xlu0 3
        %6934 = vperm.xlu0 %6933, %v437
        %v6935 = vpop.permute.xlu0 %6934
        %6937 = vset.pattern.permute.xlu0 3
        %6938 = vperm.xlu0 %6937, %v438
        %v6939 = vpop.permute.xlu0 %6938
        %v6941 = vmul.f32 %v6907, %v6927
        %v6942 = vmul.f32 %v6909, %v6927
        %v6943 = vmul.f32 %v6911, %v6931
        %v6944 = vmul.f32 %v6913, %v6931
        %v6945 = vmul.f32 %v6917, %v6935
        %v6946 = vmul.f32 %v6919, %v6935
        %v6947 = vmul.f32 %v6921, %v6939
        %v6948 = vmul.f32 %v6923, %v6939
        %v6949 = vadd.f32 %v6672, %v6941
        %v6950 = vadd.f32 %v6673, %v6942
        %v6951 = vadd.f32 %v6674, %v6943
        %v6952 = vadd.f32 %v6675, %v6944
        %v6953 = vadd.f32 %v6676, %v6945
        %v6954 = vadd.f32 %v6677, %v6946
        %v6955 = vadd.f32 %v6678, %v6947
        %v6956 = vadd.f32 %v6679, %v6948
        %v6957 = vld [vmem:[%s1676] sm:$0xff]
        %v6958 = vld [vmem:[%s1676 + $0x8] sm:$0xff]
        %v6959 = vld [vmem:[%s1676 + $0x10] sm:$0xff]
        %v6960 = vld [vmem:[%s1676 + $0x18] sm:$0xff]
        %v6961 = vld [vmem:[%s1676 + $0x20] sm:$0xff]
        %v6962 = vld [vmem:[%s1676 + $0x28] sm:$0xff]
        %v6963 = vld [vmem:[%s1676 + $0x30] sm:$0xff]
        %v6964 = vld [vmem:[%s1676 + $0x38] sm:$0xff]
        %v6965 = vld [vmem:[%s1676 + $0x40] sm:$0xff]
        %v6966 = vld [vmem:[%s1676 + $0x48] sm:$0xff]
        %v6967 = vld [vmem:[%s1676 + $0x50] sm:$0xff]
        %v6968 = vld [vmem:[%s1676 + $0x58] sm:$0xff]
        %v6969 = vld [vmem:[%s1676 + $0x60] sm:$0xff]
        %v6970 = vld [vmem:[%s1676 + $0x68] sm:$0xff]
        %v6971 = vld [vmem:[%s1676 + $0x70] sm:$0xff]
        %v6972 = vld [vmem:[%s1676 + $0x78] sm:$0xff]
        %v6973 = vld [vmem:[%s1676 + $0x80] sm:$0xff]
        %v6974 = vld [vmem:[%s1676 + $0x88] sm:$0xff]
        %v6975 = vld [vmem:[%s1676 + $0x90] sm:$0xff]
        %v6976 = vld [vmem:[%s1676 + $0x98] sm:$0xff]
        %v6977 = vld [vmem:[%s1676 + $0xa0] sm:$0xff]
        %v6978 = vld [vmem:[%s1676 + $0xa8] sm:$0xff]
        %v6979 = vld [vmem:[%s1676 + $0xb0] sm:$0xff]
        %v6980 = vld [vmem:[%s1676 + $0xb8] sm:$0xff]
        %v6981 = vld [vmem:[%s1676 + $0xc0] sm:$0xff]
        %v6982 = vld [vmem:[%s1676 + $0xc8] sm:$0xff]
        %v6983 = vld [vmem:[%s1676 + $0xd0] sm:$0xff]
        %v6984 = vld [vmem:[%s1676 + $0xd8] sm:$0xff]
        %v6985 = vld [vmem:[%s1676 + $0xe0] sm:$0xff]
        %v6986 = vld [vmem:[%s1676 + $0xe8] sm:$0xff]
        %v6987 = vld [vmem:[%s1676 + $0xf0] sm:$0xff]
        %v6988 = vld [vmem:[%s1676 + $0xf8] sm:$0xff]
        %v7021 = vunpack.c.l.b16 %v6957
        %v7022 = vunpack.c.h.b16 %v6957
        %v7023 = vunpack.c.l.b16 %v6958
        %v7024 = vunpack.c.h.b16 %v6958
        %v7025 = vunpack.c.l.b16 %v6959
        %v7026 = vunpack.c.h.b16 %v6959
        %v7027 = vunpack.c.l.b16 %v6960
        %v7028 = vunpack.c.h.b16 %v6960
        %v7029 = vunpack.c.l.b16 %v6961
        %v7030 = vunpack.c.h.b16 %v6961
        %v7031 = vunpack.c.l.b16 %v6962
        %v7032 = vunpack.c.h.b16 %v6962
        %v7033 = vunpack.c.l.b16 %v6963
        %v7034 = vunpack.c.h.b16 %v6963
        %v7035 = vunpack.c.l.b16 %v6964
        %v7036 = vunpack.c.h.b16 %v6964
        %v7037 = vunpack.c.l.b16 %v6965
        %v7038 = vunpack.c.h.b16 %v6965
        %v7039 = vunpack.c.l.b16 %v6966
        %v7040 = vunpack.c.h.b16 %v6966
        %v7041 = vunpack.c.l.b16 %v6967
        %v7042 = vunpack.c.h.b16 %v6967
        %v7043 = vunpack.c.l.b16 %v6968
        %v7044 = vunpack.c.h.b16 %v6968
        %v7045 = vunpack.c.l.b16 %v6969
        %v7046 = vunpack.c.h.b16 %v6969
        %v7047 = vunpack.c.l.b16 %v6970
        %v7048 = vunpack.c.h.b16 %v6970
        %v7049 = vunpack.c.l.b16 %v6971
        %v7050 = vunpack.c.h.b16 %v6971
        %v7051 = vunpack.c.l.b16 %v6972
        %v7052 = vunpack.c.h.b16 %v6972
        %v7053 = vunpack.c.l.b16 %v6973
        %v7054 = vunpack.c.h.b16 %v6973
        %v7055 = vunpack.c.l.b16 %v6974
        %v7056 = vunpack.c.h.b16 %v6974
        %v7057 = vunpack.c.l.b16 %v6975
        %v7058 = vunpack.c.h.b16 %v6975
        %v7059 = vunpack.c.l.b16 %v6976
        %v7060 = vunpack.c.h.b16 %v6976
        %v7061 = vunpack.c.l.b16 %v6977
        %v7062 = vunpack.c.h.b16 %v6977
        %v7063 = vunpack.c.l.b16 %v6978
        %v7064 = vunpack.c.h.b16 %v6978
        %v7065 = vunpack.c.l.b16 %v6979
        %v7066 = vunpack.c.h.b16 %v6979
        %v7067 = vunpack.c.l.b16 %v6980
        %v7068 = vunpack.c.h.b16 %v6980
        %v7069 = vunpack.c.l.b16 %v6981
        %v7070 = vunpack.c.h.b16 %v6981
        %v7071 = vunpack.c.l.b16 %v6982
        %v7072 = vunpack.c.h.b16 %v6982
        %v7073 = vunpack.c.l.b16 %v6983
        %v7074 = vunpack.c.h.b16 %v6983
        %v7075 = vunpack.c.l.b16 %v6984
        %v7076 = vunpack.c.h.b16 %v6984
        %v7077 = vunpack.c.l.b16 %v6985
        %v7078 = vunpack.c.h.b16 %v6985
        %v7079 = vunpack.c.l.b16 %v6986
        %v7080 = vunpack.c.h.b16 %v6986
        %v7081 = vunpack.c.l.b16 %v6987
        %v7082 = vunpack.c.h.b16 %v6987
        %v7083 = vunpack.c.l.b16 %v6988
        %v7084 = vunpack.c.h.b16 %v6988
        %v7085 = vpack.c.b16 %v7023, %v7021
        %v7086 = vpack.c.b16 %v7024, %v7022
        %v7087 = vpack.c.b16 %v7027, %v7025
        %v7088 = vpack.c.b16 %v7028, %v7026
        %v7089 = vpack.c.b16 %v7031, %v7029
        %v7090 = vpack.c.b16 %v7032, %v7030
        %v7091 = vpack.c.b16 %v7035, %v7033
        %v7092 = vpack.c.b16 %v7036, %v7034
        %v7093 = vpack.c.b16 %v7039, %v7037
        %v7094 = vpack.c.b16 %v7040, %v7038
        %v7095 = vpack.c.b16 %v7043, %v7041
        %v7096 = vpack.c.b16 %v7044, %v7042
        %v7097 = vpack.c.b16 %v7047, %v7045
        %v7098 = vpack.c.b16 %v7048, %v7046
        %v7099 = vpack.c.b16 %v7051, %v7049
        %v7100 = vpack.c.b16 %v7052, %v7050
        %v7101 = vpack.c.b16 %v7055, %v7053
        %v7102 = vpack.c.b16 %v7056, %v7054
        %v7103 = vpack.c.b16 %v7059, %v7057
        %v7104 = vpack.c.b16 %v7060, %v7058
        %v7105 = vpack.c.b16 %v7063, %v7061
        %v7106 = vpack.c.b16 %v7064, %v7062
        %v7107 = vpack.c.b16 %v7067, %v7065
        %v7108 = vpack.c.b16 %v7068, %v7066
        %v7109 = vpack.c.b16 %v7071, %v7069
        %v7110 = vpack.c.b16 %v7072, %v7070
        %v7111 = vpack.c.b16 %v7075, %v7073
        %v7112 = vpack.c.b16 %v7076, %v7074
        %v7113 = vpack.c.b16 %v7079, %v7077
        %v7114 = vpack.c.b16 %v7080, %v7078
        %v7115 = vpack.c.b16 %v7083, %v7081
        %v7116 = vpack.c.b16 %v7084, %v7082
        %7149 = vmatprep.subr.bf16.mxu0 %v7086
        %7150 = vmatpush1.bf16.msra.mxu0 %v7085
        %7151 = vmatprep.subr.bf16.mxu0 %v7088
        %7152 = vmatpush1.bf16.msra.mxu0 %v7087
        %7153 = vmatprep.subr.bf16.mxu0 %v7090
        %7154 = vmatpush1.bf16.msra.mxu0 %v7089
        %7155 = vmatprep.subr.bf16.mxu0 %v7092
        %7156 = vmatpush1.bf16.msra.mxu0 %v7091
        %7157 = vmatprep.subr.bf16.mxu0 %v7094
        %7158 = vmatpush1.bf16.msra.mxu0 %v7093
        %7159 = vmatprep.subr.bf16.mxu0 %v7096
        %7160 = vmatpush1.bf16.msra.mxu0 %v7095
        %7161 = vmatprep.subr.bf16.mxu0 %v7098
        %7162 = vmatpush1.bf16.msra.mxu0 %v7097
        %7163 = vmatprep.subr.bf16.mxu0 %v7100
        %7164 = vmatpush1.bf16.msra.mxu0 %v7099
        %7165 = vmatprep.subr.bf16.mxu0 %v7102
        %7166 = vmatpush1.bf16.msra.mxu0 %v7101
        %7167 = vmatprep.subr.bf16.mxu0 %v7104
        %7168 = vmatpush1.bf16.msra.mxu0 %v7103
        %7169 = vmatprep.subr.bf16.mxu0 %v7106
        %7170 = vmatpush1.bf16.msra.mxu0 %v7105
        %7171 = vmatprep.subr.bf16.mxu0 %v7108
        %7172 = vmatpush1.bf16.msra.mxu0 %v7107
        %7173 = vmatprep.subr.bf16.mxu0 %v7110
        %7174 = vmatpush1.bf16.msra.mxu0 %v7109
        %7175 = vmatprep.subr.bf16.mxu0 %v7112
        %7176 = vmatpush1.bf16.msra.mxu0 %v7111
        %7177 = vmatprep.subr.bf16.mxu0 %v7114
        %7178 = vmatpush1.bf16.msra.mxu0 %v7113
        %7179 = vmatprep.subr.bf16.mxu0 %v7116
        %7180 = vmatpush1.bf16.msra.mxu0 %v7115
        %7181 = vmatprep.mubr.bf16.mxu0 %v5842
        %7182 = vmatmul.mubr.bf16.gmra.mrb[0].mxu0 %v5841
        %v7183 = vpop.f32.mrb[0].mxu0
        %v7184 = vadd.f32 0.0, %v7183
        %v7185 = vpop.f32.mrb[0].mxu0
        %v7186 = vadd.f32 0.0, %v7185
        %v7187 = vpop.f32.mrb[0].mxu0
        %v7188 = vadd.f32 0.0, %v7187
        %v7189 = vpop.f32.mrb[0].mxu0
        %v7190 = vadd.f32 0.0, %v7189
        %7191 = vmatprep.mubr.bf16.mxu0 %v5844
        %7192 = vmatmul.mubr.bf16.gmra.mrb[0].mxu0 %v5843
        %v7193 = vpop.f32.mrb[0].mxu0
        %v7194 = vadd.f32 0.0, %v7193
        %v7195 = vpop.f32.mrb[0].mxu0
        %v7196 = vadd.f32 0.0, %v7195
        %v7197 = vpop.f32.mrb[0].mxu0
        %v7198 = vadd.f32 0.0, %v7197
        %v7199 = vpop.f32.mrb[0].mxu0
        %v7200 = vadd.f32 0.0, %v7199
        %7201 = vdwg.mxu0
        %7202 = vset.pattern.permute.xlu0 4
        %7203 = vperm.xlu0 %7202, %v435
        %v7204 = vpop.permute.xlu0 %7203
        %7206 = vset.pattern.permute.xlu0 4
        %7207 = vperm.xlu0 %7206, %v436
        %v7208 = vpop.permute.xlu0 %7207
        %7210 = vset.pattern.permute.xlu0 4
        %7211 = vperm.xlu0 %7210, %v437
        %v7212 = vpop.permute.xlu0 %7211
        %7214 = vset.pattern.permute.xlu0 4
        %7215 = vperm.xlu0 %7214, %v438
        %v7216 = vpop.permute.xlu0 %7215
        %v7218 = vmul.f32 %v7184, %v7204
        %v7219 = vmul.f32 %v7186, %v7204
        %v7220 = vmul.f32 %v7188, %v7208
        %v7221 = vmul.f32 %v7190, %v7208
        %v7222 = vmul.f32 %v7194, %v7212
        %v7223 = vmul.f32 %v7196, %v7212
        %v7224 = vmul.f32 %v7198, %v7216
        %v7225 = vmul.f32 %v7200, %v7216
        %v7226 = vadd.f32 %v6949, %v7218
        %v7227 = vadd.f32 %v6950, %v7219
        %v7228 = vadd.f32 %v6951, %v7220
        %v7229 = vadd.f32 %v6952, %v7221
        %v7230 = vadd.f32 %v6953, %v7222
        %v7231 = vadd.f32 %v6954, %v7223
        %v7232 = vadd.f32 %v6955, %v7224
        %v7233 = vadd.f32 %v6956, %v7225
        %v7234 = vld [vmem:[%s1954] sm:$0xff]
        %v7235 = vld [vmem:[%s1954 + $0x8] sm:$0xff]
        %v7236 = vld [vmem:[%s1954 + $0x10] sm:$0xff]
        %v7237 = vld [vmem:[%s1954 + $0x18] sm:$0xff]
        %v7238 = vld [vmem:[%s1954 + $0x20] sm:$0xff]
        %v7239 = vld [vmem:[%s1954 + $0x28] sm:$0xff]
        %v7240 = vld [vmem:[%s1954 + $0x30] sm:$0xff]
        %v7241 = vld [vmem:[%s1954 + $0x38] sm:$0xff]
        %v7242 = vld [vmem:[%s1954 + $0x40] sm:$0xff]
        %v7243 = vld [vmem:[%s1954 + $0x48] sm:$0xff]
        %v7244 = vld [vmem:[%s1954 + $0x50] sm:$0xff]
        %v7245 = vld [vmem:[%s1954 + $0x58] sm:$0xff]
        %v7246 = vld [vmem:[%s1954 + $0x60] sm:$0xff]
        %v7247 = vld [vmem:[%s1954 + $0x68] sm:$0xff]
        %v7248 = vld [vmem:[%s1954 + $0x70] sm:$0xff]
        %v7249 = vld [vmem:[%s1954 + $0x78] sm:$0xff]
        %v7250 = vld [vmem:[%s1954 + $0x80] sm:$0xff]
        %v7251 = vld [vmem:[%s1954 + $0x88] sm:$0xff]
        %v7252 = vld [vmem:[%s1954 + $0x90] sm:$0xff]
        %v7253 = vld [vmem:[%s1954 + $0x98] sm:$0xff]
        %v7254 = vld [vmem:[%s1954 + $0xa0] sm:$0xff]
        %v7255 = vld [vmem:[%s1954 + $0xa8] sm:$0xff]
        %v7256 = vld [vmem:[%s1954 + $0xb0] sm:$0xff]
        %v7257 = vld [vmem:[%s1954 + $0xb8] sm:$0xff]
        %v7258 = vld [vmem:[%s1954 + $0xc0] sm:$0xff]
        %v7259 = vld [vmem:[%s1954 + $0xc8] sm:$0xff]
        %v7260 = vld [vmem:[%s1954 + $0xd0] sm:$0xff]
        %v7261 = vld [vmem:[%s1954 + $0xd8] sm:$0xff]
        %v7262 = vld [vmem:[%s1954 + $0xe0] sm:$0xff]
        %v7263 = vld [vmem:[%s1954 + $0xe8] sm:$0xff]
        %v7264 = vld [vmem:[%s1954 + $0xf0] sm:$0xff]
        %v7265 = vld [vmem:[%s1954 + $0xf8] sm:$0xff]
        %v7298 = vunpack.c.l.b16 %v7234
        %v7299 = vunpack.c.h.b16 %v7234
        %v7300 = vunpack.c.l.b16 %v7235
        %v7301 = vunpack.c.h.b16 %v7235
        %v7302 = vunpack.c.l.b16 %v7236
        %v7303 = vunpack.c.h.b16 %v7236
        %v7304 = vunpack.c.l.b16 %v7237
        %v7305 = vunpack.c.h.b16 %v7237
        %v7306 = vunpack.c.l.b16 %v7238
        %v7307 = vunpack.c.h.b16 %v7238
        %v7308 = vunpack.c.l.b16 %v7239
        %v7309 = vunpack.c.h.b16 %v7239
        %v7310 = vunpack.c.l.b16 %v7240
        %v7311 = vunpack.c.h.b16 %v7240
        %v7312 = vunpack.c.l.b16 %v7241
        %v7313 = vunpack.c.h.b16 %v7241
        %v7314 = vunpack.c.l.b16 %v7242
        %v7315 = vunpack.c.h.b16 %v7242
        %v7316 = vunpack.c.l.b16 %v7243
        %v7317 = vunpack.c.h.b16 %v7243
        %v7318 = vunpack.c.l.b16 %v7244
        %v7319 = vunpack.c.h.b16 %v7244
        %v7320 = vunpack.c.l.b16 %v7245
        %v7321 = vunpack.c.h.b16 %v7245
        %v7322 = vunpack.c.l.b16 %v7246
        %v7323 = vunpack.c.h.b16 %v7246
        %v7324 = vunpack.c.l.b16 %v7247
        %v7325 = vunpack.c.h.b16 %v7247
        %v7326 = vunpack.c.l.b16 %v7248
        %v7327 = vunpack.c.h.b16 %v7248
        %v7328 = vunpack.c.l.b16 %v7249
        %v7329 = vunpack.c.h.b16 %v7249
        %v7330 = vunpack.c.l.b16 %v7250
        %v7331 = vunpack.c.h.b16 %v7250
        %v7332 = vunpack.c.l.b16 %v7251
        %v7333 = vunpack.c.h.b16 %v7251
        %v7334 = vunpack.c.l.b16 %v7252
        %v7335 = vunpack.c.h.b16 %v7252
        %v7336 = vunpack.c.l.b16 %v7253
        %v7337 = vunpack.c.h.b16 %v7253
        %v7338 = vunpack.c.l.b16 %v7254
        %v7339 = vunpack.c.h.b16 %v7254
        %v7340 = vunpack.c.l.b16 %v7255
        %v7341 = vunpack.c.h.b16 %v7255
        %v7342 = vunpack.c.l.b16 %v7256
        %v7343 = vunpack.c.h.b16 %v7256
        %v7344 = vunpack.c.l.b16 %v7257
        %v7345 = vunpack.c.h.b16 %v7257
        %v7346 = vunpack.c.l.b16 %v7258
        %v7347 = vunpack.c.h.b16 %v7258
        %v7348 = vunpack.c.l.b16 %v7259
        %v7349 = vunpack.c.h.b16 %v7259
        %v7350 = vunpack.c.l.b16 %v7260
        %v7351 = vunpack.c.h.b16 %v7260
        %v7352 = vunpack.c.l.b16 %v7261
        %v7353 = vunpack.c.h.b16 %v7261
        %v7354 = vunpack.c.l.b16 %v7262
        %v7355 = vunpack.c.h.b16 %v7262
        %v7356 = vunpack.c.l.b16 %v7263
        %v7357 = vunpack.c.h.b16 %v7263
        %v7358 = vunpack.c.l.b16 %v7264
        %v7359 = vunpack.c.h.b16 %v7264
        %v7360 = vunpack.c.l.b16 %v7265
        %v7361 = vunpack.c.h.b16 %v7265
        %v7362 = vpack.c.b16 %v7300, %v7298
        %v7363 = vpack.c.b16 %v7301, %v7299
        %v7364 = vpack.c.b16 %v7304, %v7302
        %v7365 = vpack.c.b16 %v7305, %v7303
        %v7366 = vpack.c.b16 %v7308, %v7306
        %v7367 = vpack.c.b16 %v7309, %v7307
        %v7368 = vpack.c.b16 %v7312, %v7310
        %v7369 = vpack.c.b16 %v7313, %v7311
        %v7370 = vpack.c.b16 %v7316, %v7314
        %v7371 = vpack.c.b16 %v7317, %v7315
        %v7372 = vpack.c.b16 %v7320, %v7318
        %v7373 = vpack.c.b16 %v7321, %v7319
        %v7374 = vpack.c.b16 %v7324, %v7322
        %v7375 = vpack.c.b16 %v7325, %v7323
        %v7376 = vpack.c.b16 %v7328, %v7326
        %v7377 = vpack.c.b16 %v7329, %v7327
        %v7378 = vpack.c.b16 %v7332, %v7330
        %v7379 = vpack.c.b16 %v7333, %v7331
        %v7380 = vpack.c.b16 %v7336, %v7334
        %v7381 = vpack.c.b16 %v7337, %v7335
        %v7382 = vpack.c.b16 %v7340, %v7338
        %v7383 = vpack.c.b16 %v7341, %v7339
        %v7384 = vpack.c.b16 %v7344, %v7342
        %v7385 = vpack.c.b16 %v7345, %v7343
        %v7386 = vpack.c.b16 %v7348, %v7346
        %v7387 = vpack.c.b16 %v7349, %v7347
        %v7388 = vpack.c.b16 %v7352, %v7350
        %v7389 = vpack.c.b16 %v7353, %v7351
        %v7390 = vpack.c.b16 %v7356, %v7354
        %v7391 = vpack.c.b16 %v7357, %v7355
        %v7392 = vpack.c.b16 %v7360, %v7358
        %v7393 = vpack.c.b16 %v7361, %v7359
        %7426 = vmatprep.subr.bf16.mxu0 %v7363
        %7427 = vmatpush1.bf16.msra.mxu0 %v7362
        %7428 = vmatprep.subr.bf16.mxu0 %v7365
        %7429 = vmatpush1.bf16.msra.mxu0 %v7364
        %7430 = vmatprep.subr.bf16.mxu0 %v7367
        %7431 = vmatpush1.bf16.msra.mxu0 %v7366
        %7432 = vmatprep.subr.bf16.mxu0 %v7369
        %7433 = vmatpush1.bf16.msra.mxu0 %v7368
        %7434 = vmatprep.subr.bf16.mxu0 %v7371
        %7435 = vmatpush1.bf16.msra.mxu0 %v7370
        %7436 = vmatprep.subr.bf16.mxu0 %v7373
        %7437 = vmatpush1.bf16.msra.mxu0 %v7372
        %7438 = vmatprep.subr.bf16.mxu0 %v7375
        %7439 = vmatpush1.bf16.msra.mxu0 %v7374
        %7440 = vmatprep.subr.bf16.mxu0 %v7377
        %7441 = vmatpush1.bf16.msra.mxu0 %v7376
        %7442 = vmatprep.subr.bf16.mxu0 %v7379
        %7443 = vmatpush1.bf16.msra.mxu0 %v7378
        %7444 = vmatprep.subr.bf16.mxu0 %v7381
        %7445 = vmatpush1.bf16.msra.mxu0 %v7380
        %7446 = vmatprep.subr.bf16.mxu0 %v7383
        %7447 = vmatpush1.bf16.msra.mxu0 %v7382
        %7448 = vmatprep.subr.bf16.mxu0 %v7385
        %7449 = vmatpush1.bf16.msra.mxu0 %v7384
        %7450 = vmatprep.subr.bf16.mxu0 %v7387
        %7451 = vmatpush1.bf16.msra.mxu0 %v7386
        %7452 = vmatprep.subr.bf16.mxu0 %v7389
        %7453 = vmatpush1.bf16.msra.mxu0 %v7388
        %7454 = vmatprep.subr.bf16.mxu0 %v7391
        %7455 = vmatpush1.bf16.msra.mxu0 %v7390
        %7456 = vmatprep.subr.bf16.mxu0 %v7393
        %7457 = vmatpush1.bf16.msra.mxu0 %v7392
        %7458 = vmatprep.mubr.bf16.mxu0 %v5842
        %7459 = vmatmul.mubr.bf16.gmra.mrb[0].mxu0 %v5841
        %v7460 = vpop.f32.mrb[0].mxu0
        %v7461 = vadd.f32 0.0, %v7460
        %v7462 = vpop.f32.mrb[0].mxu0
        %v7463 = vadd.f32 0.0, %v7462
        %v7464 = vpop.f32.mrb[0].mxu0
        %v7465 = vadd.f32 0.0, %v7464
        %v7466 = vpop.f32.mrb[0].mxu0
        %v7467 = vadd.f32 0.0, %v7466
        %7468 = vmatprep.mubr.bf16.mxu0 %v5844
        %7469 = vmatmul.mubr.bf16.gmra.mrb[0].mxu0 %v5843
        %v7470 = vpop.f32.mrb[0].mxu0
        %v7471 = vadd.f32 0.0, %v7470
        %v7472 = vpop.f32.mrb[0].mxu0
        %v7473 = vadd.f32 0.0, %v7472
        %v7474 = vpop.f32.mrb[0].mxu0
        %v7475 = vadd.f32 0.0, %v7474
        %v7476 = vpop.f32.mrb[0].mxu0
        %v7477 = vadd.f32 0.0, %v7476
        %7478 = vdwg.mxu0
        %7479 = vset.pattern.permute.xlu0 5
        %7480 = vperm.xlu0 %7479, %v435
        %v7481 = vpop.permute.xlu0 %7480
        %7483 = vset.pattern.permute.xlu0 5
        %7484 = vperm.xlu0 %7483, %v436
        %v7485 = vpop.permute.xlu0 %7484
        %7487 = vset.pattern.permute.xlu0 5
        %7488 = vperm.xlu0 %7487, %v437
        %v7489 = vpop.permute.xlu0 %7488
        %7491 = vset.pattern.permute.xlu0 5
        %7492 = vperm.xlu0 %7491, %v438
        %v7493 = vpop.permute.xlu0 %7492
        %v7495 = vmul.f32 %v7461, %v7481
        %v7496 = vmul.f32 %v7463, %v7481
        %v7497 = vmul.f32 %v7465, %v7485
        %v7498 = vmul.f32 %v7467, %v7485
        %v7499 = vmul.f32 %v7471, %v7489
        %v7500 = vmul.f32 %v7473, %v7489
        %v7501 = vmul.f32 %v7475, %v7493
        %v7502 = vmul.f32 %v7477, %v7493
        %v7503 = vadd.f32 %v7226, %v7495
        %v7504 = vadd.f32 %v7227, %v7496
        %v7505 = vadd.f32 %v7228, %v7497
        %v7506 = vadd.f32 %v7229, %v7498
        %v7507 = vadd.f32 %v7230, %v7499
        %v7508 = vadd.f32 %v7231, %v7500
        %v7509 = vadd.f32 %v7232, %v7501
        %v7510 = vadd.f32 %v7233, %v7502
        %v7511 = vld [vmem:[%s2232] sm:$0xff]
        %v7512 = vld [vmem:[%s2232 + $0x8] sm:$0xff]
        %v7513 = vld [vmem:[%s2232 + $0x10] sm:$0xff]
        %v7514 = vld [vmem:[%s2232 + $0x18] sm:$0xff]
        %v7515 = vld [vmem:[%s2232 + $0x20] sm:$0xff]
        %v7516 = vld [vmem:[%s2232 + $0x28] sm:$0xff]
        %v7517 = vld [vmem:[%s2232 + $0x30] sm:$0xff]
        %v7518 = vld [vmem:[%s2232 + $0x38] sm:$0xff]
        %v7519 = vld [vmem:[%s2232 + $0x40] sm:$0xff]
        %v7520 = vld [vmem:[%s2232 + $0x48] sm:$0xff]
        %v7521 = vld [vmem:[%s2232 + $0x50] sm:$0xff]
        %v7522 = vld [vmem:[%s2232 + $0x58] sm:$0xff]
        %v7523 = vld [vmem:[%s2232 + $0x60] sm:$0xff]
        %v7524 = vld [vmem:[%s2232 + $0x68] sm:$0xff]
        %v7525 = vld [vmem:[%s2232 + $0x70] sm:$0xff]
        %v7526 = vld [vmem:[%s2232 + $0x78] sm:$0xff]
        %v7527 = vld [vmem:[%s2232 + $0x80] sm:$0xff]
        %v7528 = vld [vmem:[%s2232 + $0x88] sm:$0xff]
        %v7529 = vld [vmem:[%s2232 + $0x90] sm:$0xff]
        %v7530 = vld [vmem:[%s2232 + $0x98] sm:$0xff]
        %v7531 = vld [vmem:[%s2232 + $0xa0] sm:$0xff]
        %v7532 = vld [vmem:[%s2232 + $0xa8] sm:$0xff]
        %v7533 = vld [vmem:[%s2232 + $0xb0] sm:$0xff]
        %v7534 = vld [vmem:[%s2232 + $0xb8] sm:$0xff]
        %v7535 = vld [vmem:[%s2232 + $0xc0] sm:$0xff]
        %v7536 = vld [vmem:[%s2232 + $0xc8] sm:$0xff]
        %v7537 = vld [vmem:[%s2232 + $0xd0] sm:$0xff]
        %v7538 = vld [vmem:[%s2232 + $0xd8] sm:$0xff]
        %v7539 = vld [vmem:[%s2232 + $0xe0] sm:$0xff]
        %v7540 = vld [vmem:[%s2232 + $0xe8] sm:$0xff]
        %v7541 = vld [vmem:[%s2232 + $0xf0] sm:$0xff]
        %v7542 = vld [vmem:[%s2232 + $0xf8] sm:$0xff]
        %v7575 = vunpack.c.l.b16 %v7511
        %v7576 = vunpack.c.h.b16 %v7511
        %v7577 = vunpack.c.l.b16 %v7512
        %v7578 = vunpack.c.h.b16 %v7512
        %v7579 = vunpack.c.l.b16 %v7513
        %v7580 = vunpack.c.h.b16 %v7513
        %v7581 = vunpack.c.l.b16 %v7514
        %v7582 = vunpack.c.h.b16 %v7514
        %v7583 = vunpack.c.l.b16 %v7515
        %v7584 = vunpack.c.h.b16 %v7515
        %v7585 = vunpack.c.l.b16 %v7516
        %v7586 = vunpack.c.h.b16 %v7516
        %v7587 = vunpack.c.l.b16 %v7517
        %v7588 = vunpack.c.h.b16 %v7517
        %v7589 = vunpack.c.l.b16 %v7518
        %v7590 = vunpack.c.h.b16 %v7518
        %v7591 = vunpack.c.l.b16 %v7519
        %v7592 = vunpack.c.h.b16 %v7519
        %v7593 = vunpack.c.l.b16 %v7520
        %v7594 = vunpack.c.h.b16 %v7520
        %v7595 = vunpack.c.l.b16 %v7521
        %v7596 = vunpack.c.h.b16 %v7521
        %v7597 = vunpack.c.l.b16 %v7522
        %v7598 = vunpack.c.h.b16 %v7522
        %v7599 = vunpack.c.l.b16 %v7523
        %v7600 = vunpack.c.h.b16 %v7523
        %v7601 = vunpack.c.l.b16 %v7524
        %v7602 = vunpack.c.h.b16 %v7524
        %v7603 = vunpack.c.l.b16 %v7525
        %v7604 = vunpack.c.h.b16 %v7525
        %v7605 = vunpack.c.l.b16 %v7526
        %v7606 = vunpack.c.h.b16 %v7526
        %v7607 = vunpack.c.l.b16 %v7527
        %v7608 = vunpack.c.h.b16 %v7527
        %v7609 = vunpack.c.l.b16 %v7528
        %v7610 = vunpack.c.h.b16 %v7528
        %v7611 = vunpack.c.l.b16 %v7529
        %v7612 = vunpack.c.h.b16 %v7529
        %v7613 = vunpack.c.l.b16 %v7530
        %v7614 = vunpack.c.h.b16 %v7530
        %v7615 = vunpack.c.l.b16 %v7531
        %v7616 = vunpack.c.h.b16 %v7531
        %v7617 = vunpack.c.l.b16 %v7532
        %v7618 = vunpack.c.h.b16 %v7532
        %v7619 = vunpack.c.l.b16 %v7533
        %v7620 = vunpack.c.h.b16 %v7533
        %v7621 = vunpack.c.l.b16 %v7534
        %v7622 = vunpack.c.h.b16 %v7534
        %v7623 = vunpack.c.l.b16 %v7535
        %v7624 = vunpack.c.h.b16 %v7535
        %v7625 = vunpack.c.l.b16 %v7536
        %v7626 = vunpack.c.h.b16 %v7536
        %v7627 = vunpack.c.l.b16 %v7537
        %v7628 = vunpack.c.h.b16 %v7537
        %v7629 = vunpack.c.l.b16 %v7538
        %v7630 = vunpack.c.h.b16 %v7538
        %v7631 = vunpack.c.l.b16 %v7539
        %v7632 = vunpack.c.h.b16 %v7539
        %v7633 = vunpack.c.l.b16 %v7540
        %v7634 = vunpack.c.h.b16 %v7540
        %v7635 = vunpack.c.l.b16 %v7541
        %v7636 = vunpack.c.h.b16 %v7541
        %v7637 = vunpack.c.l.b16 %v7542
        %v7638 = vunpack.c.h.b16 %v7542
        %v7639 = vpack.c.b16 %v7577, %v7575
        %v7640 = vpack.c.b16 %v7578, %v7576
        %v7641 = vpack.c.b16 %v7581, %v7579
        %v7642 = vpack.c.b16 %v7582, %v7580
        %v7643 = vpack.c.b16 %v7585, %v7583
        %v7644 = vpack.c.b16 %v7586, %v7584
        %v7645 = vpack.c.b16 %v7589, %v7587
        %v7646 = vpack.c.b16 %v7590, %v7588
        %v7647 = vpack.c.b16 %v7593, %v7591
        %v7648 = vpack.c.b16 %v7594, %v7592
        %v7649 = vpack.c.b16 %v7597, %v7595
        %v7650 = vpack.c.b16 %v7598, %v7596
        %v7651 = vpack.c.b16 %v7601, %v7599
        %v7652 = vpack.c.b16 %v7602, %v7600
        %v7653 = vpack.c.b16 %v7605, %v7603
        %v7654 = vpack.c.b16 %v7606, %v7604
        %v7655 = vpack.c.b16 %v7609, %v7607
        %v7656 = vpack.c.b16 %v7610, %v7608
        %v7657 = vpack.c.b16 %v7613, %v7611
        %v7658 = vpack.c.b16 %v7614, %v7612
        %v7659 = vpack.c.b16 %v7617, %v7615
        %v7660 = vpack.c.b16 %v7618, %v7616
        %v7661 = vpack.c.b16 %v7621, %v7619
        %v7662 = vpack.c.b16 %v7622, %v7620
        %v7663 = vpack.c.b16 %v7625, %v7623
        %v7664 = vpack.c.b16 %v7626, %v7624
        %v7665 = vpack.c.b16 %v7629, %v7627
        %v7666 = vpack.c.b16 %v7630, %v7628
        %v7667 = vpack.c.b16 %v7633, %v7631
        %v7668 = vpack.c.b16 %v7634, %v7632
        %v7669 = vpack.c.b16 %v7637, %v7635
        %v7670 = vpack.c.b16 %v7638, %v7636
        %7703 = vmatprep.subr.bf16.mxu0 %v7640
        %7704 = vmatpush1.bf16.msra.mxu0 %v7639
        %7705 = vmatprep.subr.bf16.mxu0 %v7642
        %7706 = vmatpush1.bf16.msra.mxu0 %v7641
        %7707 = vmatprep.subr.bf16.mxu0 %v7644
        %7708 = vmatpush1.bf16.msra.mxu0 %v7643
        %7709 = vmatprep.subr.bf16.mxu0 %v7646
        %7710 = vmatpush1.bf16.msra.mxu0 %v7645
        %7711 = vmatprep.subr.bf16.mxu0 %v7648
        %7712 = vmatpush1.bf16.msra.mxu0 %v7647
        %7713 = vmatprep.subr.bf16.mxu0 %v7650
        %7714 = vmatpush1.bf16.msra.mxu0 %v7649
        %7715 = vmatprep.subr.bf16.mxu0 %v7652
        %7716 = vmatpush1.bf16.msra.mxu0 %v7651
        %7717 = vmatprep.subr.bf16.mxu0 %v7654
        %7718 = vmatpush1.bf16.msra.mxu0 %v7653
        %7719 = vmatprep.subr.bf16.mxu0 %v7656
        %7720 = vmatpush1.bf16.msra.mxu0 %v7655
        %7721 = vmatprep.subr.bf16.mxu0 %v7658
        %7722 = vmatpush1.bf16.msra.mxu0 %v7657
        %7723 = vmatprep.subr.bf16.mxu0 %v7660
        %7724 = vmatpush1.bf16.msra.mxu0 %v7659
        %7725 = vmatprep.subr.bf16.mxu0 %v7662
        %7726 = vmatpush1.bf16.msra.mxu0 %v7661
        %7727 = vmatprep.subr.bf16.mxu0 %v7664
        %7728 = vmatpush1.bf16.msra.mxu0 %v7663
        %7729 = vmatprep.subr.bf16.mxu0 %v7666
        %7730 = vmatpush1.bf16.msra.mxu0 %v7665
        %7731 = vmatprep.subr.bf16.mxu0 %v7668
        %7732 = vmatpush1.bf16.msra.mxu0 %v7667
        %7733 = vmatprep.subr.bf16.mxu0 %v7670
        %7734 = vmatpush1.bf16.msra.mxu0 %v7669
        %7735 = vmatprep.mubr.bf16.mxu0 %v5842
        %7736 = vmatmul.mubr.bf16.gmra.mrb[0].mxu0 %v5841
        %v7737 = vpop.f32.mrb[0].mxu0
        %v7738 = vadd.f32 0.0, %v7737
        %v7739 = vpop.f32.mrb[0].mxu0
        %v7740 = vadd.f32 0.0, %v7739
        %v7741 = vpop.f32.mrb[0].mxu0
        %v7742 = vadd.f32 0.0, %v7741
        %v7743 = vpop.f32.mrb[0].mxu0
        %v7744 = vadd.f32 0.0, %v7743
        %7745 = vmatprep.mubr.bf16.mxu0 %v5844
        %7746 = vmatmul.mubr.bf16.gmra.mrb[0].mxu0 %v5843
        %v7747 = vpop.f32.mrb[0].mxu0
        %v7748 = vadd.f32 0.0, %v7747
        %v7749 = vpop.f32.mrb[0].mxu0
        %v7750 = vadd.f32 0.0, %v7749
        %v7751 = vpop.f32.mrb[0].mxu0
        %v7752 = vadd.f32 0.0, %v7751
        %v7753 = vpop.f32.mrb[0].mxu0
        %v7754 = vadd.f32 0.0, %v7753
        %7755 = vdwg.mxu0
        %7756 = vset.pattern.permute.xlu0 6
        %7757 = vperm.xlu0 %7756, %v435
        %v7758 = vpop.permute.xlu0 %7757
        %7760 = vset.pattern.permute.xlu0 6
        %7761 = vperm.xlu0 %7760, %v436
        %v7762 = vpop.permute.xlu0 %7761
        %7764 = vset.pattern.permute.xlu0 6
        %7765 = vperm.xlu0 %7764, %v437
        %v7766 = vpop.permute.xlu0 %7765
        %7768 = vset.pattern.permute.xlu0 6
        %7769 = vperm.xlu0 %7768, %v438
        %v7770 = vpop.permute.xlu0 %7769
        %v7772 = vmul.f32 %v7738, %v7758
        %v7773 = vmul.f32 %v7740, %v7758
        %v7774 = vmul.f32 %v7742, %v7762
        %v7775 = vmul.f32 %v7744, %v7762
        %v7776 = vmul.f32 %v7748, %v7766
        %v7777 = vmul.f32 %v7750, %v7766
        %v7778 = vmul.f32 %v7752, %v7770
        %v7779 = vmul.f32 %v7754, %v7770
        %v7780 = vadd.f32 %v7503, %v7772
        %v7781 = vadd.f32 %v7504, %v7773
        %v7782 = vadd.f32 %v7505, %v7774
        %v7783 = vadd.f32 %v7506, %v7775
        %v7784 = vadd.f32 %v7507, %v7776
        %v7785 = vadd.f32 %v7508, %v7777
        %v7786 = vadd.f32 %v7509, %v7778
        %v7787 = vadd.f32 %v7510, %v7779
        %v7788 = vld [vmem:[%s2510] sm:$0xff]
        %v7789 = vld [vmem:[%s2510 + $0x8] sm:$0xff]
        %v7790 = vld [vmem:[%s2510 + $0x10] sm:$0xff]
        %v7791 = vld [vmem:[%s2510 + $0x18] sm:$0xff]
        %v7792 = vld [vmem:[%s2510 + $0x20] sm:$0xff]
        %v7793 = vld [vmem:[%s2510 + $0x28] sm:$0xff]
        %v7794 = vld [vmem:[%s2510 + $0x30] sm:$0xff]
        %v7795 = vld [vmem:[%s2510 + $0x38] sm:$0xff]
        %v7796 = vld [vmem:[%s2510 + $0x40] sm:$0xff]
        %v7797 = vld [vmem:[%s2510 + $0x48] sm:$0xff]
        %v7798 = vld [vmem:[%s2510 + $0x50] sm:$0xff]
        %v7799 = vld [vmem:[%s2510 + $0x58] sm:$0xff]
        %v7800 = vld [vmem:[%s2510 + $0x60] sm:$0xff]
        %v7801 = vld [vmem:[%s2510 + $0x68] sm:$0xff]
        %v7802 = vld [vmem:[%s2510 + $0x70] sm:$0xff]
        %v7803 = vld [vmem:[%s2510 + $0x78] sm:$0xff]
        %v7804 = vld [vmem:[%s2510 + $0x80] sm:$0xff]
        %v7805 = vld [vmem:[%s2510 + $0x88] sm:$0xff]
        %v7806 = vld [vmem:[%s2510 + $0x90] sm:$0xff]
        %v7807 = vld [vmem:[%s2510 + $0x98] sm:$0xff]
        %v7808 = vld [vmem:[%s2510 + $0xa0] sm:$0xff]
        %v7809 = vld [vmem:[%s2510 + $0xa8] sm:$0xff]
        %v7810 = vld [vmem:[%s2510 + $0xb0] sm:$0xff]
        %v7811 = vld [vmem:[%s2510 + $0xb8] sm:$0xff]
        %v7812 = vld [vmem:[%s2510 + $0xc0] sm:$0xff]
        %v7813 = vld [vmem:[%s2510 + $0xc8] sm:$0xff]
        %v7814 = vld [vmem:[%s2510 + $0xd0] sm:$0xff]
        %v7815 = vld [vmem:[%s2510 + $0xd8] sm:$0xff]
        %v7816 = vld [vmem:[%s2510 + $0xe0] sm:$0xff]
        %v7817 = vld [vmem:[%s2510 + $0xe8] sm:$0xff]
        %v7818 = vld [vmem:[%s2510 + $0xf0] sm:$0xff]
        %v7819 = vld [vmem:[%s2510 + $0xf8] sm:$0xff]
        %v7852 = vunpack.c.l.b16 %v7788
        %v7853 = vunpack.c.h.b16 %v7788
        %v7854 = vunpack.c.l.b16 %v7789
        %v7855 = vunpack.c.h.b16 %v7789
        %v7856 = vunpack.c.l.b16 %v7790
        %v7857 = vunpack.c.h.b16 %v7790
        %v7858 = vunpack.c.l.b16 %v7791
        %v7859 = vunpack.c.h.b16 %v7791
        %v7860 = vunpack.c.l.b16 %v7792
        %v7861 = vunpack.c.h.b16 %v7792
        %v7862 = vunpack.c.l.b16 %v7793
        %v7863 = vunpack.c.h.b16 %v7793
        %v7864 = vunpack.c.l.b16 %v7794
        %v7865 = vunpack.c.h.b16 %v7794
        %v7866 = vunpack.c.l.b16 %v7795
        %v7867 = vunpack.c.h.b16 %v7795
        %v7868 = vunpack.c.l.b16 %v7796
        %v7869 = vunpack.c.h.b16 %v7796
        %v7870 = vunpack.c.l.b16 %v7797
        %v7871 = vunpack.c.h.b16 %v7797
        %v7872 = vunpack.c.l.b16 %v7798
        %v7873 = vunpack.c.h.b16 %v7798
        %v7874 = vunpack.c.l.b16 %v7799
        %v7875 = vunpack.c.h.b16 %v7799
        %v7876 = vunpack.c.l.b16 %v7800
        %v7877 = vunpack.c.h.b16 %v7800
        %v7878 = vunpack.c.l.b16 %v7801
        %v7879 = vunpack.c.h.b16 %v7801
        %v7880 = vunpack.c.l.b16 %v7802
        %v7881 = vunpack.c.h.b16 %v7802
        %v7882 = vunpack.c.l.b16 %v7803
        %v7883 = vunpack.c.h.b16 %v7803
        %v7884 = vunpack.c.l.b16 %v7804
        %v7885 = vunpack.c.h.b16 %v7804
        %v7886 = vunpack.c.l.b16 %v7805
        %v7887 = vunpack.c.h.b16 %v7805
        %v7888 = vunpack.c.l.b16 %v7806
        %v7889 = vunpack.c.h.b16 %v7806
        %v7890 = vunpack.c.l.b16 %v7807
        %v7891 = vunpack.c.h.b16 %v7807
        %v7892 = vunpack.c.l.b16 %v7808
        %v7893 = vunpack.c.h.b16 %v7808
        %v7894 = vunpack.c.l.b16 %v7809
        %v7895 = vunpack.c.h.b16 %v7809
        %v7896 = vunpack.c.l.b16 %v7810
        %v7897 = vunpack.c.h.b16 %v7810
        %v7898 = vunpack.c.l.b16 %v7811
        %v7899 = vunpack.c.h.b16 %v7811
        %v7900 = vunpack.c.l.b16 %v7812
        %v7901 = vunpack.c.h.b16 %v7812
        %v7902 = vunpack.c.l.b16 %v7813
        %v7903 = vunpack.c.h.b16 %v7813
        %v7904 = vunpack.c.l.b16 %v7814
        %v7905 = vunpack.c.h.b16 %v7814
        %v7906 = vunpack.c.l.b16 %v7815
        %v7907 = vunpack.c.h.b16 %v7815
        %v7908 = vunpack.c.l.b16 %v7816
        %v7909 = vunpack.c.h.b16 %v7816
        %v7910 = vunpack.c.l.b16 %v7817
        %v7911 = vunpack.c.h.b16 %v7817
        %v7912 = vunpack.c.l.b16 %v7818
        %v7913 = vunpack.c.h.b16 %v7818
        %v7914 = vunpack.c.l.b16 %v7819
        %v7915 = vunpack.c.h.b16 %v7819
        %v7916 = vpack.c.b16 %v7854, %v7852
        %v7917 = vpack.c.b16 %v7855, %v7853
        %v7918 = vpack.c.b16 %v7858, %v7856
        %v7919 = vpack.c.b16 %v7859, %v7857
        %v7920 = vpack.c.b16 %v7862, %v7860
        %v7921 = vpack.c.b16 %v7863, %v7861
        %v7922 = vpack.c.b16 %v7866, %v7864
        %v7923 = vpack.c.b16 %v7867, %v7865
        %v7924 = vpack.c.b16 %v7870, %v7868
        %v7925 = vpack.c.b16 %v7871, %v7869
        %v7926 = vpack.c.b16 %v7874, %v7872
        %v7927 = vpack.c.b16 %v7875, %v7873
        %v7928 = vpack.c.b16 %v7878, %v7876
        %v7929 = vpack.c.b16 %v7879, %v7877
        %v7930 = vpack.c.b16 %v7882, %v7880
        %v7931 = vpack.c.b16 %v7883, %v7881
        %v7932 = vpack.c.b16 %v7886, %v7884
        %v7933 = vpack.c.b16 %v7887, %v7885
        %v7934 = vpack.c.b16 %v7890, %v7888
        %v7935 = vpack.c.b16 %v7891, %v7889
        %v7936 = vpack.c.b16 %v7894, %v7892
        %v7937 = vpack.c.b16 %v7895, %v7893
        %v7938 = vpack.c.b16 %v7898, %v7896
        %v7939 = vpack.c.b16 %v7899, %v7897
        %v7940 = vpack.c.b16 %v7902, %v7900
        %v7941 = vpack.c.b16 %v7903, %v7901
        %v7942 = vpack.c.b16 %v7906, %v7904
        %v7943 = vpack.c.b16 %v7907, %v7905
        %v7944 = vpack.c.b16 %v7910, %v7908
        %v7945 = vpack.c.b16 %v7911, %v7909
        %v7946 = vpack.c.b16 %v7914, %v7912
        %v7947 = vpack.c.b16 %v7915, %v7913
        %7980 = vmatprep.subr.bf16.mxu0 %v7917
        %7981 = vmatpush1.bf16.msra.mxu0 %v7916
        %7982 = vmatprep.subr.bf16.mxu0 %v7919
        %7983 = vmatpush1.bf16.msra.mxu0 %v7918
        %7984 = vmatprep.subr.bf16.mxu0 %v7921
        %7985 = vmatpush1.bf16.msra.mxu0 %v7920
        %7986 = vmatprep.subr.bf16.mxu0 %v7923
        %7987 = vmatpush1.bf16.msra.mxu0 %v7922
        %7988 = vmatprep.subr.bf16.mxu0 %v7925
        %7989 = vmatpush1.bf16.msra.mxu0 %v7924
        %7990 = vmatprep.subr.bf16.mxu0 %v7927
        %7991 = vmatpush1.bf16.msra.mxu0 %v7926
        %7992 = vmatprep.subr.bf16.mxu0 %v7929
        %7993 = vmatpush1.bf16.msra.mxu0 %v7928
        %7994 = vmatprep.subr.bf16.mxu0 %v7931
        %7995 = vmatpush1.bf16.msra.mxu0 %v7930
        %7996 = vmatprep.subr.bf16.mxu0 %v7933
        %7997 = vmatpush1.bf16.msra.mxu0 %v7932
        %7998 = vmatprep.subr.bf16.mxu0 %v7935
        %7999 = vmatpush1.bf16.msra.mxu0 %v7934
        %8000 = vmatprep.subr.bf16.mxu0 %v7937
        %8001 = vmatpush1.bf16.msra.mxu0 %v7936
        %8002 = vmatprep.subr.bf16.mxu0 %v7939
        %8003 = vmatpush1.bf16.msra.mxu0 %v7938
        %8004 = vmatprep.subr.bf16.mxu0 %v7941
        %8005 = vmatpush1.bf16.msra.mxu0 %v7940
        %8006 = vmatprep.subr.bf16.mxu0 %v7943
        %8007 = vmatpush1.bf16.msra.mxu0 %v7942
        %8008 = vmatprep.subr.bf16.mxu0 %v7945
        %8009 = vmatpush1.bf16.msra.mxu0 %v7944
        %8010 = vmatprep.subr.bf16.mxu0 %v7947
        %8011 = vmatpush1.bf16.msra.mxu0 %v7946
        %8012 = vmatprep.mubr.bf16.mxu0 %v5842
        %8013 = vmatmul.mubr.bf16.gmra.mrb[0].mxu0 %v5841
        %v8014 = vpop.f32.mrb[0].mxu0
        %v8015 = vadd.f32 0.0, %v8014
        %v8016 = vpop.f32.mrb[0].mxu0
        %v8017 = vadd.f32 0.0, %v8016
        %v8018 = vpop.f32.mrb[0].mxu0
        %v8019 = vadd.f32 0.0, %v8018
        %v8020 = vpop.f32.mrb[0].mxu0
        %v8021 = vadd.f32 0.0, %v8020
        %8022 = vmatprep.mubr.bf16.mxu0 %v5844
        %8023 = vmatmul.mubr.bf16.gmra.mrb[0].mxu0 %v5843
        %v8024 = vpop.f32.mrb[0].mxu0
        %v8025 = vadd.f32 0.0, %v8024
        %v8026 = vpop.f32.mrb[0].mxu0
        %v8027 = vadd.f32 0.0, %v8026
        %v8028 = vpop.f32.mrb[0].mxu0
        %v8029 = vadd.f32 0.0, %v8028
        %v8030 = vpop.f32.mrb[0].mxu0
        %v8031 = vadd.f32 0.0, %v8030
        %8032 = vdwg.mxu0
        %8033 = vset.pattern.permute.xlu0 7
        %8034 = vperm.xlu0 %8033, %v435
        %v8035 = vpop.permute.xlu0 %8034
        %8037 = vset.pattern.permute.xlu0 7
        %8038 = vperm.xlu0 %8037, %v436
        %v8039 = vpop.permute.xlu0 %8038
        %8041 = vset.pattern.permute.xlu0 7
        %8042 = vperm.xlu0 %8041, %v437
        %v8043 = vpop.permute.xlu0 %8042
        %8045 = vset.pattern.permute.xlu0 7
        %8046 = vperm.xlu0 %8045, %v438
        %v8047 = vpop.permute.xlu0 %8046
        %v8049 = vmul.f32 %v8015, %v8035
        %v8050 = vmul.f32 %v8017, %v8035
        %v8051 = vmul.f32 %v8019, %v8039
        %v8052 = vmul.f32 %v8021, %v8039
        %v8053 = vmul.f32 %v8025, %v8043
        %v8054 = vmul.f32 %v8027, %v8043
        %v8055 = vmul.f32 %v8029, %v8047
        %v8056 = vmul.f32 %v8031, %v8047
        %v8057 = vadd.f32 %v7780, %v8049
        %v8058 = vadd.f32 %v7781, %v8050
        %v8059 = vadd.f32 %v7782, %v8051
        %v8060 = vadd.f32 %v7783, %v8052
        %v8061 = vadd.f32 %v7784, %v8053
        %v8062 = vadd.f32 %v7785, %v8054
        %v8063 = vadd.f32 %v7786, %v8055
        %v8064 = vadd.f32 %v7787, %v8056
        %v8065 = vld [vmem:[%s2788] sm:$0xff]
        %v8066 = vld [vmem:[%s2788 + $0x8] sm:$0xff]
        %v8067 = vld [vmem:[%s2788 + $0x10] sm:$0xff]
        %v8068 = vld [vmem:[%s2788 + $0x18] sm:$0xff]
        %v8069 = vld [vmem:[%s2788 + $0x20] sm:$0xff]
        %v8070 = vld [vmem:[%s2788 + $0x28] sm:$0xff]
        %v8071 = vld [vmem:[%s2788 + $0x30] sm:$0xff]
        %v8072 = vld [vmem:[%s2788 + $0x38] sm:$0xff]
        %v8073 = vld [vmem:[%s2788 + $0x40] sm:$0xff]
        %v8074 = vld [vmem:[%s2788 + $0x48] sm:$0xff]
        %v8075 = vld [vmem:[%s2788 + $0x50] sm:$0xff]
        %v8076 = vld [vmem:[%s2788 + $0x58] sm:$0xff]
        %v8077 = vld [vmem:[%s2788 + $0x60] sm:$0xff]
        %v8078 = vld [vmem:[%s2788 + $0x68] sm:$0xff]
        %v8079 = vld [vmem:[%s2788 + $0x70] sm:$0xff]
        %v8080 = vld [vmem:[%s2788 + $0x78] sm:$0xff]
        %v8081 = vld [vmem:[%s2788 + $0x80] sm:$0xff]
        %v8082 = vld [vmem:[%s2788 + $0x88] sm:$0xff]
        %v8083 = vld [vmem:[%s2788 + $0x90] sm:$0xff]
        %v8084 = vld [vmem:[%s2788 + $0x98] sm:$0xff]
        %v8085 = vld [vmem:[%s2788 + $0xa0] sm:$0xff]
        %v8086 = vld [vmem:[%s2788 + $0xa8] sm:$0xff]
        %v8087 = vld [vmem:[%s2788 + $0xb0] sm:$0xff]
        %v8088 = vld [vmem:[%s2788 + $0xb8] sm:$0xff]
        %v8089 = vld [vmem:[%s2788 + $0xc0] sm:$0xff]
        %v8090 = vld [vmem:[%s2788 + $0xc8] sm:$0xff]
        %v8091 = vld [vmem:[%s2788 + $0xd0] sm:$0xff]
        %v8092 = vld [vmem:[%s2788 + $0xd8] sm:$0xff]
        %v8093 = vld [vmem:[%s2788 + $0xe0] sm:$0xff]
        %v8094 = vld [vmem:[%s2788 + $0xe8] sm:$0xff]
        %v8095 = vld [vmem:[%s2788 + $0xf0] sm:$0xff]
        %v8096 = vld [vmem:[%s2788 + $0xf8] sm:$0xff]
        %v8129 = vunpack.c.l.b16 %v8065
        %v8130 = vunpack.c.h.b16 %v8065
        %v8131 = vunpack.c.l.b16 %v8066
        %v8132 = vunpack.c.h.b16 %v8066
        %v8133 = vunpack.c.l.b16 %v8067
        %v8134 = vunpack.c.h.b16 %v8067
        %v8135 = vunpack.c.l.b16 %v8068
        %v8136 = vunpack.c.h.b16 %v8068
        %v8137 = vunpack.c.l.b16 %v8069
        %v8138 = vunpack.c.h.b16 %v8069
        %v8139 = vunpack.c.l.b16 %v8070
        %v8140 = vunpack.c.h.b16 %v8070
        %v8141 = vunpack.c.l.b16 %v8071
        %v8142 = vunpack.c.h.b16 %v8071
        %v8143 = vunpack.c.l.b16 %v8072
        %v8144 = vunpack.c.h.b16 %v8072
        %v8145 = vunpack.c.l.b16 %v8073
        %v8146 = vunpack.c.h.b16 %v8073
        %v8147 = vunpack.c.l.b16 %v8074
        %v8148 = vunpack.c.h.b16 %v8074
        %v8149 = vunpack.c.l.b16 %v8075
        %v8150 = vunpack.c.h.b16 %v8075
        %v8151 = vunpack.c.l.b16 %v8076
        %v8152 = vunpack.c.h.b16 %v8076
        %v8153 = vunpack.c.l.b16 %v8077
        %v8154 = vunpack.c.h.b16 %v8077
        %v8155 = vunpack.c.l.b16 %v8078
        %v8156 = vunpack.c.h.b16 %v8078
        %v8157 = vunpack.c.l.b16 %v8079
        %v8158 = vunpack.c.h.b16 %v8079
        %v8159 = vunpack.c.l.b16 %v8080
        %v8160 = vunpack.c.h.b16 %v8080
        %v8161 = vunpack.c.l.b16 %v8081
        %v8162 = vunpack.c.h.b16 %v8081
        %v8163 = vunpack.c.l.b16 %v8082
        %v8164 = vunpack.c.h.b16 %v8082
        %v8165 = vunpack.c.l.b16 %v8083
        %v8166 = vunpack.c.h.b16 %v8083
        %v8167 = vunpack.c.l.b16 %v8084
        %v8168 = vunpack.c.h.b16 %v8084
        %v8169 = vunpack.c.l.b16 %v8085
        %v8170 = vunpack.c.h.b16 %v8085
        %v8171 = vunpack.c.l.b16 %v8086
        %v8172 = vunpack.c.h.b16 %v8086
        %v8173 = vunpack.c.l.b16 %v8087
        %v8174 = vunpack.c.h.b16 %v8087
        %v8175 = vunpack.c.l.b16 %v8088
        %v8176 = vunpack.c.h.b16 %v8088
        %v8177 = vunpack.c.l.b16 %v8089
        %v8178 = vunpack.c.h.b16 %v8089
        %v8179 = vunpack.c.l.b16 %v8090
        %v8180 = vunpack.c.h.b16 %v8090
        %v8181 = vunpack.c.l.b16 %v8091
        %v8182 = vunpack.c.h.b16 %v8091
        %v8183 = vunpack.c.l.b16 %v8092
        %v8184 = vunpack.c.h.b16 %v8092
        %v8185 = vunpack.c.l.b16 %v8093
        %v8186 = vunpack.c.h.b16 %v8093
        %v8187 = vunpack.c.l.b16 %v8094
        %v8188 = vunpack.c.h.b16 %v8094
        %v8189 = vunpack.c.l.b16 %v8095
        %v8190 = vunpack.c.h.b16 %v8095
        %v8191 = vunpack.c.l.b16 %v8096
        %v8192 = vunpack.c.h.b16 %v8096
        %v8193 = vpack.c.b16 %v8131, %v8129
        %v8194 = vpack.c.b16 %v8132, %v8130
        %v8195 = vpack.c.b16 %v8135, %v8133
        %v8196 = vpack.c.b16 %v8136, %v8134
        %v8197 = vpack.c.b16 %v8139, %v8137
        %v8198 = vpack.c.b16 %v8140, %v8138
        %v8199 = vpack.c.b16 %v8143, %v8141
        %v8200 = vpack.c.b16 %v8144, %v8142
        %v8201 = vpack.c.b16 %v8147, %v8145
        %v8202 = vpack.c.b16 %v8148, %v8146
        %v8203 = vpack.c.b16 %v8151, %v8149
        %v8204 = vpack.c.b16 %v8152, %v8150
        %v8205 = vpack.c.b16 %v8155, %v8153
        %v8206 = vpack.c.b16 %v8156, %v8154
        %v8207 = vpack.c.b16 %v8159, %v8157
        %v8208 = vpack.c.b16 %v8160, %v8158
        %v8209 = vpack.c.b16 %v8163, %v8161
        %v8210 = vpack.c.b16 %v8164, %v8162
        %v8211 = vpack.c.b16 %v8167, %v8165
        %v8212 = vpack.c.b16 %v8168, %v8166
        %v8213 = vpack.c.b16 %v8171, %v8169
        %v8214 = vpack.c.b16 %v8172, %v8170
        %v8215 = vpack.c.b16 %v8175, %v8173
        %v8216 = vpack.c.b16 %v8176, %v8174
        %v8217 = vpack.c.b16 %v8179, %v8177
        %v8218 = vpack.c.b16 %v8180, %v8178
        %v8219 = vpack.c.b16 %v8183, %v8181
        %v8220 = vpack.c.b16 %v8184, %v8182
        %v8221 = vpack.c.b16 %v8187, %v8185
        %v8222 = vpack.c.b16 %v8188, %v8186
        %v8223 = vpack.c.b16 %v8191, %v8189
        %v8224 = vpack.c.b16 %v8192, %v8190
        %8257 = vmatprep.subr.bf16.mxu0 %v8194
        %8258 = vmatpush1.bf16.msra.mxu0 %v8193
        %8259 = vmatprep.subr.bf16.mxu0 %v8196
        %8260 = vmatpush1.bf16.msra.mxu0 %v8195
        %8261 = vmatprep.subr.bf16.mxu0 %v8198
        %8262 = vmatpush1.bf16.msra.mxu0 %v8197
        %8263 = vmatprep.subr.bf16.mxu0 %v8200
        %8264 = vmatpush1.bf16.msra.mxu0 %v8199
        %8265 = vmatprep.subr.bf16.mxu0 %v8202
        %8266 = vmatpush1.bf16.msra.mxu0 %v8201
        %8267 = vmatprep.subr.bf16.mxu0 %v8204
        %8268 = vmatpush1.bf16.msra.mxu0 %v8203
        %8269 = vmatprep.subr.bf16.mxu0 %v8206
        %8270 = vmatpush1.bf16.msra.mxu0 %v8205
        %8271 = vmatprep.subr.bf16.mxu0 %v8208
        %8272 = vmatpush1.bf16.msra.mxu0 %v8207
        %8273 = vmatprep.subr.bf16.mxu0 %v8210
        %8274 = vmatpush1.bf16.msra.mxu0 %v8209
        %8275 = vmatprep.subr.bf16.mxu0 %v8212
        %8276 = vmatpush1.bf16.msra.mxu0 %v8211
        %8277 = vmatprep.subr.bf16.mxu0 %v8214
        %8278 = vmatpush1.bf16.msra.mxu0 %v8213
        %8279 = vmatprep.subr.bf16.mxu0 %v8216
        %8280 = vmatpush1.bf16.msra.mxu0 %v8215
        %8281 = vmatprep.subr.bf16.mxu0 %v8218
        %8282 = vmatpush1.bf16.msra.mxu0 %v8217
        %8283 = vmatprep.subr.bf16.mxu0 %v8220
        %8284 = vmatpush1.bf16.msra.mxu0 %v8219
        %8285 = vmatprep.subr.bf16.mxu0 %v8222
        %8286 = vmatpush1.bf16.msra.mxu0 %v8221
        %8287 = vmatprep.subr.bf16.mxu0 %v8224
        %8288 = vmatpush1.bf16.msra.mxu0 %v8223
        %8289 = vmatprep.mubr.bf16.mxu0 %v5842
        %8290 = vmatmul.mubr.bf16.gmra.mrb[0].mxu0 %v5841
        %v8291 = vpop.f32.mrb[0].mxu0
        %v8292 = vadd.f32 0.0, %v8291
        %v8293 = vpop.f32.mrb[0].mxu0
        %v8294 = vadd.f32 0.0, %v8293
        %v8295 = vpop.f32.mrb[0].mxu0
        %v8296 = vadd.f32 0.0, %v8295
        %v8297 = vpop.f32.mrb[0].mxu0
        %v8298 = vadd.f32 0.0, %v8297
        %8299 = vmatprep.mubr.bf16.mxu0 %v5844
        %8300 = vmatmul.mubr.bf16.gmra.mrb[0].mxu0 %v5843
        %v8301 = vpop.f32.mrb[0].mxu0
        %v8302 = vadd.f32 0.0, %v8301
        %v8303 = vpop.f32.mrb[0].mxu0
        %v8304 = vadd.f32 0.0, %v8303
        %v8305 = vpop.f32.mrb[0].mxu0
        %v8306 = vadd.f32 0.0, %v8305
        %v8307 = vpop.f32.mrb[0].mxu0
        %v8308 = vadd.f32 0.0, %v8307
        %8309 = vdwg.mxu0
        %8310 = vset.pattern.permute.xlu0 8
        %8311 = vperm.xlu0 %8310, %v435
        %v8312 = vpop.permute.xlu0 %8311
        %8314 = vset.pattern.permute.xlu0 8
        %8315 = vperm.xlu0 %8314, %v436
        %v8316 = vpop.permute.xlu0 %8315
        %8318 = vset.pattern.permute.xlu0 8
        %8319 = vperm.xlu0 %8318, %v437
        %v8320 = vpop.permute.xlu0 %8319
        %8322 = vset.pattern.permute.xlu0 8
        %8323 = vperm.xlu0 %8322, %v438
        %v8324 = vpop.permute.xlu0 %8323
        %v8326 = vmul.f32 %v8292, %v8312
        %v8327 = vmul.f32 %v8294, %v8312
        %v8328 = vmul.f32 %v8296, %v8316
        %v8329 = vmul.f32 %v8298, %v8316
        %v8330 = vmul.f32 %v8302, %v8320
        %v8331 = vmul.f32 %v8304, %v8320
        %v8332 = vmul.f32 %v8306, %v8324
        %v8333 = vmul.f32 %v8308, %v8324
        %v8334 = vadd.f32 %v8057, %v8326
        %v8335 = vadd.f32 %v8058, %v8327
        %v8336 = vadd.f32 %v8059, %v8328
        %v8337 = vadd.f32 %v8060, %v8329
        %v8338 = vadd.f32 %v8061, %v8330
        %v8339 = vadd.f32 %v8062, %v8331
        %v8340 = vadd.f32 %v8063, %v8332
        %v8341 = vadd.f32 %v8064, %v8333
        %v8342 = vld [vmem:[%s5 + $0x40] sm:$0xff]
        %v8343 = vld [vmem:[%s5 + $0x48] sm:$0xff]
        %v8344 = vld [vmem:[%s5 + $0x50] sm:$0xff]
        %v8345 = vld [vmem:[%s5 + $0x58] sm:$0xff]
        %8347 = vset.pattern.permute.xlu0 0
        %8348 = vperm.xlu0 %8347, %v8342
        %v8349 = vpop.permute.xlu0 %8348
        %8352 = vset.pattern.permute.xlu0 0
        %8353 = vperm.xlu0 %8352, %v8343
        %v8354 = vpop.permute.xlu0 %8353
        %8357 = vset.pattern.permute.xlu0 0
        %8358 = vperm.xlu0 %8357, %v8344
        %v8359 = vpop.permute.xlu0 %8358
        %8362 = vset.pattern.permute.xlu0 0
        %8363 = vperm.xlu0 %8362, %v8345
        %v8364 = vpop.permute.xlu0 %8363
        %v8366 = vadd.f32 %v8334, %v8349
        %v8367 = vadd.f32 %v8335, %v8349
        %v8368 = vadd.f32 %v8336, %v8354
        %v8369 = vadd.f32 %v8337, %v8354
        %v8370 = vadd.f32 %v8338, %v8359
        %v8371 = vadd.f32 %v8339, %v8359
        %v8372 = vadd.f32 %v8340, %v8364
        %v8373 = vadd.f32 %v8341, %v8364
        %8374 = vst [vmem:[#allocation2 + $0x80] sm:$0xff] %v8366
        %8375 = vst [vmem:[#allocation2 + $0x88] sm:$0xff] %v8367
        %8376 = vst [vmem:[#allocation2 + $0x90] sm:$0xff] %v8368
        %8377 = vst [vmem:[#allocation2 + $0x98] sm:$0xff] %v8369
        %8378 = vst [vmem:[#allocation2 + $0xa0] sm:$0xff] %v8370
        %8379 = vst [vmem:[#allocation2 + $0xa8] sm:$0xff] %v8371
        %8380 = vst [vmem:[#allocation2 + $0xb0] sm:$0xff] %v8372
        %8381 = vst [vmem:[#allocation2 + $0xb8] sm:$0xff] %v8373
        %v8382 = vld [vmem:[#allocation2] sm:$0xff]
        %v8383 = vld [vmem:[#allocation2 + $0x8] sm:$0xff]
        %v8384 = vld [vmem:[#allocation2 + $0x10] sm:$0xff]
        %v8385 = vld [vmem:[#allocation2 + $0x18] sm:$0xff]
        %v8386 = vld [vmem:[#allocation2 + $0x20] sm:$0xff]
        %v8387 = vld [vmem:[#allocation2 + $0x28] sm:$0xff]
        %v8388 = vld [vmem:[#allocation2 + $0x30] sm:$0xff]
        %v8389 = vld [vmem:[#allocation2 + $0x38] sm:$0xff]
        %v8390 = vld [vmem:[#allocation2 + $0x40] sm:$0xff]
        %v8391 = vld [vmem:[#allocation2 + $0x48] sm:$0xff]
        %v8392 = vld [vmem:[#allocation2 + $0x50] sm:$0xff]
        %v8393 = vld [vmem:[#allocation2 + $0x58] sm:$0xff]
        %v8394 = vld [vmem:[#allocation2 + $0x60] sm:$0xff]
        %v8395 = vld [vmem:[#allocation2 + $0x68] sm:$0xff]
        %v8396 = vld [vmem:[#allocation2 + $0x70] sm:$0xff]
        %v8397 = vld [vmem:[#allocation2 + $0x78] sm:$0xff]
        %v8398 = vld [vmem:[#allocation2 + $0x80] sm:$0xff]
        %v8399 = vld [vmem:[#allocation2 + $0x88] sm:$0xff]
        %v8400 = vld [vmem:[#allocation2 + $0x90] sm:$0xff]
        %v8401 = vld [vmem:[#allocation2 + $0x98] sm:$0xff]
        %v8402 = vld [vmem:[#allocation2 + $0xa0] sm:$0xff]
        %v8403 = vld [vmem:[#allocation2 + $0xa8] sm:$0xff]
        %v8404 = vld [vmem:[#allocation2 + $0xb0] sm:$0xff]
        %v8405 = vld [vmem:[#allocation2 + $0xb8] sm:$0xff]
        %v8406 = vmul.f32 %v8382, %v8382
        %v8407 = vmul.f32 %v8383, %v8383
        %v8408 = vmul.f32 %v8384, %v8384
        %v8409 = vmul.f32 %v8385, %v8385
        %v8410 = vmul.f32 %v8386, %v8386
        %v8411 = vmul.f32 %v8387, %v8387
        %v8412 = vmul.f32 %v8388, %v8388
        %v8413 = vmul.f32 %v8389, %v8389
        %v8414 = vadd.f32 %v8406, %v8407
        %8415 = vadd.xlane.f32.xlu0 %v8414
        %v8416 = vpop.xlane.xlu0 %8415
        %v8417 = vadd.f32 %v8408, %v8409
        %8418 = vadd.xlane.f32.xlu0 %v8417
        %v8419 = vpop.xlane.xlu0 %8418
        %v8420 = vadd.f32 %v8410, %v8411
        %8421 = vadd.xlane.f32.xlu0 %v8420
        %v8422 = vpop.xlane.xlu0 %8421
        %v8423 = vadd.f32 %v8412, %v8413
        %8424 = vadd.xlane.f32.xlu0 %v8423
        %v8425 = vpop.xlane.xlu0 %8424
        %v8426 = vmax.f32 %v8416, 1e-24
        %v8427 = vmax.f32 %v8419, 1e-24
        %v8428 = vmax.f32 %v8422, 1e-24
        %v8429 = vmax.f32 %v8425, 1e-24
        %v8430 = vrsqrt.pop %v8426
        %v8431 = vrsqrt.pop %v8427
        %v8432 = vrsqrt.pop %v8428
        %v8433 = vrsqrt.pop %v8429
        %v8434 = vmul.f32 %v8390, %v8390
        %v8435 = vmul.f32 %v8391, %v8391
        %v8436 = vmul.f32 %v8392, %v8392
        %v8437 = vmul.f32 %v8393, %v8393
        %v8438 = vmul.f32 %v8394, %v8394
        %v8439 = vmul.f32 %v8395, %v8395
        %v8440 = vmul.f32 %v8396, %v8396
        %v8441 = vmul.f32 %v8397, %v8397
        %v8442 = vadd.f32 %v8434, %v8435
        %8443 = vadd.xlane.f32.xlu0 %v8442
        %v8444 = vpop.xlane.xlu0 %8443
        %v8445 = vadd.f32 %v8436, %v8437
        %8446 = vadd.xlane.f32.xlu0 %v8445
        %v8447 = vpop.xlane.xlu0 %8446
        %v8448 = vadd.f32 %v8438, %v8439
        %8449 = vadd.xlane.f32.xlu0 %v8448
        %v8450 = vpop.xlane.xlu0 %8449
        %v8451 = vadd.f32 %v8440, %v8441
        %8452 = vadd.xlane.f32.xlu0 %v8451
        %v8453 = vpop.xlane.xlu0 %8452
        %v8454 = vmax.f32 %v8444, 1e-24
        %v8455 = vmax.f32 %v8447, 1e-24
        %v8456 = vmax.f32 %v8450, 1e-24
        %v8457 = vmax.f32 %v8453, 1e-24
        %v8458 = vrsqrt.pop %v8454
        %v8459 = vrsqrt.pop %v8455
        %v8460 = vrsqrt.pop %v8456
        %v8461 = vrsqrt.pop %v8457
        %v8462 = vmul.f32 %v8382, %v8430
        %v8463 = vmul.f32 %v8383, %v8430
        %v8464 = vmul.f32 %v8384, %v8431
        %v8465 = vmul.f32 %v8385, %v8431
        %v8466 = vmul.f32 %v8386, %v8432
        %v8467 = vmul.f32 %v8387, %v8432
        %v8468 = vmul.f32 %v8388, %v8433
        %v8469 = vmul.f32 %v8389, %v8433
        %v8470 = vpack.c.bf16 %v8464, %v8462
        %v8471 = vpack.c.bf16 %v8465, %v8463
        %v8472 = vpack.c.bf16 %v8468, %v8466
        %v8473 = vpack.c.bf16 %v8469, %v8467
        %v8474 = vmul.f32 %v8390, %v8458
        %v8475 = vmul.f32 %v8391, %v8458
        %v8476 = vmul.f32 %v8392, %v8459
        %v8477 = vmul.f32 %v8393, %v8459
        %v8478 = vmul.f32 %v8394, %v8460
        %v8479 = vmul.f32 %v8395, %v8460
        %v8480 = vmul.f32 %v8396, %v8461
        %v8481 = vmul.f32 %v8397, %v8461
        %v8482 = vpack.c.bf16 %v8476, %v8474
        %v8483 = vpack.c.bf16 %v8477, %v8475
        %v8484 = vpack.c.bf16 %v8480, %v8478
        %v8485 = vpack.c.bf16 %v8481, %v8479
        %8486 = vmatprep.subr.bf16.mxu0 %v8483
        %8487 = vmatpush1.bf16.xpose.msra.mxu0 %v8482
        %8488 = vmatprep.subr.bf16.mxu0 %v8485
        %8489 = vmatpush1.bf16.xpose.msra.mxu0 %v8484
        %8490 = vmatprep.subr.bf16.mxu0 0
        %8491 = vmatpush1.bf16.xpose.msra.mxu0 0
        %8492 = vmatprep.subr.bf16.mxu0 0
        %8493 = vmatpush1.bf16.xpose.msra.mxu0 0
        %8494 = vmatprep.subr.bf16.mxu0 0
        %8495 = vmatpush1.bf16.xpose.msra.mxu0 0
        %8496 = vmatprep.subr.bf16.mxu0 0
        %8497 = vmatpush1.bf16.xpose.msra.mxu0 0
        %8498 = vmatprep.subr.bf16.mxu0 0
        %8499 = vmatpush1.bf16.xpose.msra.mxu0 0
        %8500 = vmatprep.subr.bf16.mxu0 0
        %8501 = vmatpush1.bf16.xpose.msra.mxu0 0
        %8502 = vmatprep.subr.bf16.mxu0 0
        %8503 = vmatpush1.bf16.xpose.msra.mxu0 0
        %8504 = vmatprep.subr.bf16.mxu0 0
        %8505 = vmatpush1.bf16.xpose.msra.mxu0 0
        %8506 = vmatprep.subr.bf16.mxu0 0
        %8507 = vmatpush1.bf16.xpose.msra.mxu0 0
        %8508 = vmatprep.subr.bf16.mxu0 0
        %8509 = vmatpush1.bf16.xpose.msra.mxu0 0
        %8510 = vmatprep.subr.bf16.mxu0 0
        %8511 = vmatpush1.bf16.xpose.msra.mxu0 0
        %8512 = vmatprep.subr.bf16.mxu0 0
        %8513 = vmatpush1.bf16.xpose.msra.mxu0 0
        %8514 = vmatprep.subr.bf16.mxu0 0
        %8515 = vmatpush1.bf16.xpose.msra.mxu0 0
        %8516 = vmatprep.subr.bf16.mxu0 0
        %8517 = vmatpush1.bf16.xpose.msra.mxu0 0
        %8518 = vmatprep.mubr.bf16.mxu0 %v8471
        %8519 = vmatmul.mubr.bf16.gmra.mrb[0].mxu0 %v8470
        %v8520 = vpop.f32.mrb[0].mxu0
        %v8521 = vadd.f32 0.0, %v8520
        %v8522 = vpop.f32.mrb[0].mxu0
        %v8523 = vpop.f32.mrb[0].mxu0
        %v8524 = vadd.f32 0.0, %v8523
        %v8525 = vpop.f32.mrb[0].mxu0
        %8526 = vmatprep.mubr.bf16.mxu0 %v8473
        %8527 = vmatmul.mubr.bf16.gmra.mrb[0].mxu0 %v8472
        %v8528 = vpop.f32.mrb[0].mxu0
        %v8529 = vadd.f32 0.0, %v8528
        %v8530 = vpop.f32.mrb[0].mxu0
        %v8531 = vpop.f32.mrb[0].mxu0
        %v8532 = vadd.f32 0.0, %v8531
        %v8533 = vpop.f32.mrb[0].mxu0
        %8534 = vdwg.mxu0
        %v8535 = vld [vmem:[%s8] sm:$0xff]
        %v8536 = vld [vmem:[%s8 + $0x8] sm:$0xff]
        %v8537 = vld [vmem:[%s8 + $0x10] sm:$0xff]
        %v8538 = vld [vmem:[%s8 + $0x18] sm:$0xff]
        %8540 = vset.pattern.permute.xlu0 0
        %8541 = vperm.xlu0 %8540, %v8535
        %v8542 = vpop.permute.xlu0 %8541
        %8545 = vset.pattern.permute.xlu0 0
        %8546 = vperm.xlu0 %8545, %v8536
        %v8547 = vpop.permute.xlu0 %8546
        %8550 = vset.pattern.permute.xlu0 0
        %8551 = vperm.xlu0 %8550, %v8537
        %v8552 = vpop.permute.xlu0 %8551
        %8555 = vset.pattern.permute.xlu0 0
        %8556 = vperm.xlu0 %8555, %v8538
        %v8557 = vpop.permute.xlu0 %8556
        %v8559 = vmul.f32 %v8521, %v8542
        %v8560 = vmul.f32 %v8524, %v8547
        %v8561 = vmul.f32 %v8529, %v8552
        %v8562 = vmul.f32 %v8532, %v8557
        %v8563 = vld [vmem:[#allocation9] sm:$0xff]
        %v8564 = vld [vmem:[#allocation9 + $0x8] sm:$0xff]
        %v8565 = vld [vmem:[#allocation9 + $0x10] sm:$0xff]
        %v8566 = vld [vmem:[#allocation9 + $0x18] sm:$0xff]
        %v8567 = vadd.f32 %v8559, %v8563
        %v8568 = vadd.f32 %v8560, %v8564
        %v8569 = vadd.f32 %v8561, %v8565
        %v8570 = vadd.f32 %v8562, %v8566
        %v8571 = vsel %vm497, %v8567, -inf
        %8572 = vmax.xlane.f32.xlu0 %v8571
        %v8573 = vpop.xlane.xlu0 %8572
        %v8574 = vsel %vm497, %v8568, -inf
        %8575 = vmax.xlane.f32.xlu0 %v8574
        %v8576 = vpop.xlane.xlu0 %8575
        %v8577 = vsel %vm497, %v8569, -inf
        %8578 = vmax.xlane.f32.xlu0 %v8577
        %v8579 = vpop.xlane.xlu0 %8578
        %v8580 = vsel %vm497, %v8570, -inf
        %8581 = vmax.xlane.f32.xlu0 %v8580
        %v8582 = vpop.xlane.xlu0 %8581
        %v8583 = vsub.f32 %v8567, %v8573
        %v8584 = vsub.f32 %v8568, %v8576
        %v8585 = vsub.f32 %v8569, %v8579
        %v8586 = vsub.f32 %v8570, %v8582
        %v8587 = vmul.f32 %v8583, 1.442695
        %v8588 = vpow.pop %v8587
        %v8589 = vmul.f32 %v8584, 1.442695
        %v8590 = vpow.pop %v8589
        %v8591 = vmul.f32 %v8585, 1.442695
        %v8592 = vpow.pop %v8591
        %v8593 = vmul.f32 %v8586, 1.442695
        %v8594 = vpow.pop %v8593
        %v8595 = vsel %vm497, %v8588, 0.0
        %8596 = vadd.xlane.f32.xlu0 %v8595
        %v8597 = vpop.xlane.xlu0 %8596
        %v8598 = vsel %vm497, %v8590, 0.0
        %8599 = vadd.xlane.f32.xlu0 %v8598
        %v8600 = vpop.xlane.xlu0 %8599
        %v8601 = vsel %vm497, %v8592, 0.0
        %8602 = vadd.xlane.f32.xlu0 %v8601
        %v8603 = vpop.xlane.xlu0 %8602
        %v8604 = vsel %vm497, %v8594, 0.0
        %8605 = vadd.xlane.f32.xlu0 %v8604
        %v8606 = vpop.xlane.xlu0 %8605
        %v8607 = vrcp.pop %v8597
        %v8608 = vrcp.pop %v8600
        %v8609 = vrcp.pop %v8603
        %v8610 = vrcp.pop %v8606
        %v8611 = vmul.f32 %v8588, %v8607
        %v8612 = vmul.f32 %v8590, %v8608
        %v8613 = vmul.f32 %v8592, %v8609
        %v8614 = vmul.f32 %v8594, %v8610
        %v8615 = vpack.c.bf16 %v8612, %v8611
        %v8616 = vpack.c.bf16 %v8614, %v8613
        %v8617 = vpack.c.bf16 %v8400, %v8398
        %v8618 = vpack.c.bf16 %v8401, %v8399
        %v8619 = vpack.c.bf16 %v8404, %v8402
        %v8620 = vpack.c.bf16 %v8405, %v8403
        %v8622 = vsel %vm497, %v8615, 0
        %v8625 = vsel %vm497, %v8616, 0
        %8627 = vmatprep.subr.bf16.mxu0 %v8618
        %8628 = vmatpush1.bf16.msra.mxu0 %v8617
        %8629 = vmatprep.subr.bf16.mxu0 %v8620
        %8630 = vmatpush1.bf16.msra.mxu0 %v8619
        %8631 = vmatprep.subr.bf16.mxu0 0
        %8632 = vmatpush1.bf16.msra.mxu0 0
        %8633 = vmatprep.subr.bf16.mxu0 0
        %8634 = vmatpush1.bf16.msra.mxu0 0
        %8635 = vmatprep.subr.bf16.mxu0 0
        %8636 = vmatpush1.bf16.msra.mxu0 0
        %8637 = vmatprep.subr.bf16.mxu0 0
        %8638 = vmatpush1.bf16.msra.mxu0 0
        %8639 = vmatprep.subr.bf16.mxu0 0
        %8640 = vmatpush1.bf16.msra.mxu0 0
        %8641 = vmatprep.subr.bf16.mxu0 0
        %8642 = vmatpush1.bf16.msra.mxu0 0
        %8643 = vmatprep.subr.bf16.mxu0 0
        %8644 = vmatpush1.bf16.msra.mxu0 0
        %8645 = vmatprep.subr.bf16.mxu0 0
        %8646 = vmatpush1.bf16.msra.mxu0 0
        %8647 = vmatprep.subr.bf16.mxu0 0
        %8648 = vmatpush1.bf16.msra.mxu0 0
        %8649 = vmatprep.subr.bf16.mxu0 0
        %8650 = vmatpush1.bf16.msra.mxu0 0
        %8651 = vmatprep.subr.bf16.mxu0 0
        %8652 = vmatpush1.bf16.msra.mxu0 0
        %8653 = vmatprep.subr.bf16.mxu0 0
        %8654 = vmatpush1.bf16.msra.mxu0 0
        %8655 = vmatprep.subr.bf16.mxu0 0
        %8656 = vmatpush1.bf16.msra.mxu0 0
        %8657 = vmatprep.subr.bf16.mxu0 0
        %8658 = vmatpush1.bf16.msra.mxu0 0
        %8659 = vmatprep.mubr.bf16.mxu0 0
        %8660 = vmatmul.mubr.bf16.gmra.mrb[0].mxu0 %v8622
        %v8661 = vpop.f32.mrb[0].mxu0
        %v8662 = vadd.f32 0.0, %v8661
        %v8663 = vpop.f32.mrb[0].mxu0
        %v8664 = vadd.f32 0.0, %v8663
        %v8665 = vpop.f32.mrb[0].mxu0
        %v8666 = vadd.f32 0.0, %v8665
        %v8667 = vpop.f32.mrb[0].mxu0
        %v8668 = vadd.f32 0.0, %v8667
        %8669 = vmatprep.mubr.bf16.mxu0 0
        %8670 = vmatmul.mubr.bf16.gmra.mrb[0].mxu0 %v8625
        %v8671 = vpop.f32.mrb[0].mxu0
        %v8672 = vadd.f32 0.0, %v8671
        %v8673 = vpop.f32.mrb[0].mxu0
        %v8674 = vadd.f32 0.0, %v8673
        %v8675 = vpop.f32.mrb[0].mxu0
        %v8676 = vadd.f32 0.0, %v8675
        %v8677 = vpop.f32.mrb[0].mxu0
        %v8678 = vadd.f32 0.0, %v8677
        %8679 = vdwg.mxu0
        %v8680 = vld [vmem:[#allocation8] sm:$0xf]
        %v8681 = vld [vmem:[#allocation8 + $0x4] sm:$0xf]
        %v8682 = vld [vmem:[#allocation8 + $0x8] sm:$0xf]
        %v8683 = vld [vmem:[#allocation8 + $0xc] sm:$0xf]
        %v8684 = vpack.c.bf16 %v8666, %v8662
        %v8685 = vpack.c.bf16 %v8668, %v8664
        %v8686 = vpack.c.bf16 %v8676, %v8672
        %v8687 = vpack.c.bf16 %v8678, %v8674
        %v8688 = vld [vmem:[%s7] sm:$0xff]
        %v8689 = vld [vmem:[%s7 + $0x8] sm:$0xff]
        %v8690 = vld [vmem:[%s7 + $0x10] sm:$0xff]
        %v8691 = vld [vmem:[%s7 + $0x18] sm:$0xff]
        %8693 = vset.pattern.permute.xlu0 0
        %8694 = vperm.xlu0 %8693, %v8688
        %v8695 = vpop.permute.xlu0 %8694
        %8698 = vset.pattern.permute.xlu0 0
        %8699 = vperm.xlu0 %8698, %v8689
        %v8700 = vpop.permute.xlu0 %8699
        %8703 = vset.pattern.permute.xlu0 0
        %8704 = vperm.xlu0 %8703, %v8690
        %v8705 = vpop.permute.xlu0 %8704
        %8708 = vset.pattern.permute.xlu0 0
        %8709 = vperm.xlu0 %8708, %v8691
        %v8710 = vpop.permute.xlu0 %8709
        %v8716 = vunpack.c.l.b16 %v8680
        %v8717 = vunpack.c.l.b16 %v8681
        %v8718 = vunpack.c.l.b16 %v8682
        %v8719 = vunpack.c.l.b16 %v8683
        %v8720 = vpack.c.b16 %v8717, %v8716
        %v8721 = vpack.c.b16 %v8719, %v8718
        %v8723 = vsel %vm497, %v8720, 0
        %v8726 = vsel %vm497, %v8721, 0
        %8728 = vmatprep.subr.bf16.mxu0 %v8685
        %8729 = vmatpush1.bf16.msra.mxu0 %v8684
        %8730 = vmatprep.subr.bf16.mxu0 %v8687
        %8731 = vmatpush1.bf16.msra.mxu0 %v8686
        %8732 = vmatprep.subr.bf16.mxu0 0
        %8733 = vmatpush1.bf16.msra.mxu0 0
        %8734 = vmatprep.subr.bf16.mxu0 0
        %8735 = vmatpush1.bf16.msra.mxu0 0
        %8736 = vmatprep.subr.bf16.mxu0 0
        %8737 = vmatpush1.bf16.msra.mxu0 0
        %8738 = vmatprep.subr.bf16.mxu0 0
        %8739 = vmatpush1.bf16.msra.mxu0 0
        %8740 = vmatprep.subr.bf16.mxu0 0
        %8741 = vmatpush1.bf16.msra.mxu0 0
        %8742 = vmatprep.subr.bf16.mxu0 0
        %8743 = vmatpush1.bf16.msra.mxu0 0
        %8744 = vmatprep.subr.bf16.mxu0 0
        %8745 = vmatpush1.bf16.msra.mxu0 0
        %8746 = vmatprep.subr.bf16.mxu0 0
        %8747 = vmatpush1.bf16.msra.mxu0 0
        %8748 = vmatprep.subr.bf16.mxu0 0
        %8749 = vmatpush1.bf16.msra.mxu0 0
        %8750 = vmatprep.subr.bf16.mxu0 0
        %8751 = vmatpush1.bf16.msra.mxu0 0
        %8752 = vmatprep.subr.bf16.mxu0 0
        %8753 = vmatpush1.bf16.msra.mxu0 0
        %8754 = vmatprep.subr.bf16.mxu0 0
        %8755 = vmatpush1.bf16.msra.mxu0 0
        %8756 = vmatprep.subr.bf16.mxu0 0
        %8757 = vmatpush1.bf16.msra.mxu0 0
        %8758 = vmatprep.subr.bf16.mxu0 0
        %8759 = vmatpush1.bf16.msra.mxu0 0
        %8760 = vmatprep.mubr.bf16.mxu0 0
        %8761 = vmatmul.mubr.bf16.gmra.mrb[0].mxu0 %v8723
        %v8762 = vpop.f32.mrb[0].mxu0
        %v8763 = vadd.f32 %v8695, %v8762
        %v8764 = vpop.f32.mrb[0].mxu0
        %v8765 = vadd.f32 %v8695, %v8764
        %v8766 = vpop.f32.mrb[0].mxu0
        %v8767 = vadd.f32 %v8700, %v8766
        %v8768 = vpop.f32.mrb[0].mxu0
        %v8769 = vadd.f32 %v8700, %v8768
        %8770 = vmatprep.mubr.bf16.mxu0 0
        %8771 = vmatmul.mubr.bf16.gmra.mrb[0].mxu0 %v8726
        %v8772 = vpop.f32.mrb[0].mxu0
        %v8773 = vadd.f32 %v8705, %v8772
        %v8774 = vpop.f32.mrb[0].mxu0
        %v8775 = vadd.f32 %v8705, %v8774
        %v8776 = vpop.f32.mrb[0].mxu0
        %v8777 = vadd.f32 %v8710, %v8776
        %v8778 = vpop.f32.mrb[0].mxu0
        %v8779 = vadd.f32 %v8710, %v8778
        %8780 = vdwg.mxu0
        %8781 = vst [vmem:[%s421] sm:$0xff] %v8763
        %8782 = vst [vmem:[%s421 + $0x8] sm:$0xff] %v8765
        %8783 = vst [vmem:[%s421 + $0x10] sm:$0xff] %v8767
        %8784 = vst [vmem:[%s421 + $0x18] sm:$0xff] %v8769
        %8785 = vst [vmem:[%s421 + $0x20] sm:$0xff] %v8773
        %8786 = vst [vmem:[%s421 + $0x28] sm:$0xff] %v8775
        %8787 = vst [vmem:[%s421 + $0x30] sm:$0xff] %v8777
        %8788 = vst [vmem:[%s421 + $0x38] sm:$0xff] %v8779
        %s8789 = sand.u32 %s252, 1
        %s8790 = scalar_lea.sflag [#allocation5], %s8789
        %s8791 = sand.u32 %s252, 1
        %s8792 = smul.addr %s8791, 64
        %s8793 = scalar_lea.vmem [#allocation11], %s8792
        // Predicated region
        $region77: #{tpu_custom_call.1} parent=59 // pred_check
          %p8794 = pneg %p262
        $region78: #{tpu_custom_call.1} parent=59 // pred_check_branch
          %8796 = sbr.rel (%p8794) target = $region80
        $region79: #{tpu_custom_call.1} parent=59 // pred_region
          %s8798 = ssub.s32 1024, 1024
          %8799 = vsyncadd %s8790, %s8798
          %s8800 = smul.addr %s29, 8
          %s8801 = smul.addr %s8800, 128
          %s8802 = scalar_lea.hbm %s10, %s8801
          %s8803 = sshll.u32 %s8793, 4
          %s8804 = int_to_ptr.vmem [resolvable:$true] %s8803
          %8809 = dma.vmem_to_hbm [thread:$0]  %s8804, 1024, %s8802, %s8790, 256, 256, 16
        $region80: #{tpu_custom_call.1} parent=59 // pred_fallthru
          _
      $region60: #{tpu_custom_call.1} parent=5 // pred_fallthru
        _
      %p8810 = scmp.le.s32.totalorder 2, %s24
      // Predicated region
      $region81: #{tpu_custom_call.1} parent=5 // pred_check
        %p8811 = pneg %p8810
      $region82: #{tpu_custom_call.1} parent=5 // pred_check_branch
        %8813 = sbr.rel (%p8811) target = $region84
      $region83: #{tpu_custom_call.1} parent=5 // pred_region
        %s8814 = ssub.s32 %s24, 2
        // Predicated region
        $region85: #{tpu_custom_call.1} parent=83 // pred_check
          %p8815 = pneg %p268
        $region86: #{tpu_custom_call.1} parent=83 // pred_check_branch
          %8817 = sbr.rel (%p8815) target = $region88
        $region87: #{tpu_custom_call.1} parent=83 // pred_region
          %s8818 = sand.u32 %s253, 1
          %s8819 = scalar_lea.sflag [#allocation5], %s8818
          %s8820 = sand.u32 %s253, 1
          %s8821 = smul.addr %s8820, 64
          %s8822 = scalar_lea.vmem [#allocation11], %s8821
          %8823 = dma.done %s8819, 1024
        $region88: #{tpu_custom_call.1} parent=83 // pred_fallthru
          _
      $region84: #{tpu_custom_call.1} parent=5 // pred_fallthru
        _
    $region6: #{tpu_custom_call.1} parent=1 // loop_footer
      %s28 = sadd.s32 1, %s24
    $region7: #{tpu_custom_call.1} parent=1 // loop_footer_branch
      %23 = sbr.rel target = $region3
    $region8: #{tpu_custom_call.1} parent=1 // loop_exit
      _
    %8824 = vsyncpa [#allocation4], 1
    %s8825 = scalar_lea.sflag [#allocation4], 1
    %8826 = vsyncpa %s8825, 1
    %8827 = vsyncpa [#allocation7], 1
    %8828 = vsyncpa [#allocation10], 1
    %8829 = vsyncpa [#allocation5], 1
    %s8830 = scalar_lea.sflag [#allocation5], 1
    %8831 = vsyncpa %s8830, 1

</llo_original>
